<compile_context>
chip_gen: v7x
topology: tpu7x:2x2x1
jax: 0.10.0
libtpu: 0.0.40
codegen_flags: <defaults>
</compile_context>

<pallas_src>
import functools

import jax
import jax.numpy as jnp
from jax.experimental import pallas as pl
from jax.experimental.pallas import tpu as pltpu

LANE = 128


def _round_up(x, m):
    return ((x + m - 1) // m) * m


def _device_config():
    """Per-generation knobs. Defaults are sized for v7x (64 MiB physical VMEM);
    v5e/v6e (128 MiB VMEM) get a bigger scoped-VMEM budget and K-tile cap so
    fc1's weight DMAs are larger / fewer."""
    kind = ""
    try:
        kind = jax.devices()[0].device_kind.lower()
    except Exception:
        pass
    if "v5" in kind or "v6" in kind:
        return {"vmem": 96 * 1024 * 1024, "k_cap": 8192}
    return {"vmem": 40 * 1024 * 1024, "k_cap": 4096}


_CFG = _device_config()


def _choose_tile(dim, cap, align):
    """Return (tile, padded_dim): tile divides padded_dim and is either the
    full extent (dim <= cap) or an `align`-multiple <= cap.  Never falls back
    to a huge full-extent block for dim > cap (robustness fix)."""
    if dim <= cap:
        return dim, dim
    t = (cap // align) * align
    while t >= align and dim % t:
        t -= align
    if t >= align:
        return t, dim
    t = (cap // align) * align
    return t, _round_up(dim, t)


# ----------------------------------------------------------------------------
# Tiled matmul (+bias, +optional ReLU) — used for conv-as-matmul and fc1
# ----------------------------------------------------------------------------
def _matmul_kernel(x_ref, w_ref, b_ref, o_ref, acc_ref, *, relu):
    @pl.when(pl.program_id(2) == 0)
    def _():
        acc_ref[...] = jnp.zeros_like(acc_ref)

    acc_ref[...] += jnp.dot(x_ref[...], w_ref[...],
                            preferred_element_type=jnp.float32)

    @pl.when(pl.program_id(2) == pl.num_programs(2) - 1)
    def _():
        r = acc_ref[...] + b_ref[...]
        if relu:
            r = jnp.maximum(r, 0.0)
        o_ref[...] = r.astype(o_ref.dtype)


def linear(x, w, b, *, relu, out_dtype=jnp.bfloat16,
           m_cap=512, n_cap=640, k_cap=None):
    """x: (M, K) bf16, w: (K, N) bf16, b: (1, N) f32 -> (M, N) out_dtype."""
    if k_cap is None:
        k_cap = _CFG["k_cap"]
    M, K = x.shape
    K2, N = w.shape
    assert K == K2 and b.shape == (1, N)

    tm, Mp = _choose_tile(M, m_cap, 8)
    tk, Kp = _choose_tile(K, k_cap, LANE)
    tn, Np = _choose_tile(N, n_cap, LANE)
    if Mp != M or Kp != K:
        x = jnp.pad(x, ((0, Mp - M), (0, Kp - K)))
    if Kp != K or Np != N:
        w = jnp.pad(w, ((0, Kp - K), (0, Np - N)))
    if Np != N:
        b = jnp.pad(b, ((0, 0), (0, Np - N)))

    grid = (Mp // tm, Np // tn, Kp // tk)
    out = pl.pallas_call(
        functools.partial(_matmul_kernel, relu=relu),
        out_shape=jax.ShapeDtypeStruct((Mp, Np), out_dtype),
        grid_spec=pltpu.PrefetchScalarGridSpec(
            num_scalar_prefetch=0,
            grid=grid,
            in_specs=[
                pl.BlockSpec((tm, tk), lambda i, j, k: (i, k)),
                pl.BlockSpec((tk, tn), lambda i, j, k: (k, j)),
                pl.BlockSpec((1, tn), lambda i, j, k: (0, j)),
            ],
            out_specs=pl.BlockSpec((tm, tn), lambda i, j, k: (i, j)),
            scratch_shapes=[pltpu.VMEM((tm, tn), jnp.float32)],
        ),
        compiler_params=pltpu.CompilerParams(
            dimension_semantics=("parallel", "parallel", "arbitrary"),
            vmem_limit_bytes=_CFG["vmem"],
        ),
    )(x, w, b)
    if Mp != M or Np != N:
        out = out[:M, :N]
    return out


# ----------------------------------------------------------------------------
# AvgPool2d(kernel_size=2, stride=2), floor mode — tiled over output rows,
# bf16 in/out (f32 math), output sliced to the real channel count.
# ----------------------------------------------------------------------------
def _pool_h_tile(hp, cap=16):
    t = min(hp, cap)
    while hp % t:
        t -= 1
    return t


def _avgpool_kernel(x_ref, o_ref, tmp_ref):
    ht, wp, c = o_ref.shape[1], o_ref.shape[2], o_ref.shape[3]
    w_in, c_in = x_ref.shape[2], x_ref.shape[3]
    # Pool H on the loaded value: splitting the (major) row dim is a free,
    # layout-preserving reshape — no scratch pass needed for the H taps.
    xf = x_ref[...].astype(jnp.float32).reshape(1, ht, 2, w_in, c_in)
    tmp_ref[...] = xf[:, :, 0] + xf[:, :, 1]
    # Pool W with stride-2 f32 ref loads (proven pattern) from the scratch.
    out = (tmp_ref[:, :, pl.ds(0, wp, 2), :]
           + tmp_ref[:, :, pl.ds(1, wp, 2), :]) * 0.25
    # Slice away the lane-padded conv channels so downstream layers only see
    # (and only stream) the real feature maps.
    o_ref[...] = out[..., :c].astype(o_ref.dtype)


def avgpool2(x, c_out):
    """x: (N, H, W, C) -> (N, H//2, W//2, c_out) bf16, c_out = real channels."""
    N, H, W, C = x.shape
    Hp, Wp = H // 2, W // 2
    ht = _pool_h_tile(Hp)
    return pl.pallas_call(
        _avgpool_kernel,
        out_shape=jax.ShapeDtypeStruct((N, Hp, Wp, c_out), jnp.bfloat16),
        grid_spec=pltpu.PrefetchScalarGridSpec(
            num_scalar_prefetch=0,
            grid=(N, Hp // ht),
            in_specs=[pl.BlockSpec((1, 2 * ht, W, C), lambda n, h: (n, h, 0, 0))],
            out_specs=pl.BlockSpec((1, ht, Wp, c_out), lambda n, h: (n, h, 0, 0)),
            scratch_shapes=[pltpu.VMEM((1, ht, W, C), jnp.float32)],
        ),
        compiler_params=pltpu.CompilerParams(
            dimension_semantics=("parallel", "parallel"),
            vmem_limit_bytes=_CFG["vmem"],
        ),
    )(x)


# ----------------------------------------------------------------------------
# Fused classifier head: fc2 + ReLU + fc3 + softmax (lane-padded to 128)
# ----------------------------------------------------------------------------
def _head_kernel(x_ref, w2_ref, b2_ref, w3_ref, b3_ref,
                 logits_ref, probs_ref, *, n_valid):
    h = jnp.dot(x_ref[...], w2_ref[...], preferred_element_type=jnp.float32)
    h = jnp.maximum(h + b2_ref[...], 0.0)
    logits = jnp.dot(h.astype(w3_ref.dtype), w3_ref[...],
                     preferred_element_type=jnp.float32) + b3_ref[...]
    logits_ref[...] = logits
    # Mask the lane padding so softmax matches PyTorch exactly over the real
    # classes; exact (non-approx) reciprocal — the head is tiny.
    lane = jax.lax.broadcasted_iota(jnp.int32, logits.shape, 1)
    masked = jnp.where(lane < n_valid, logits, -jnp.inf)
    m = jnp.max(masked, axis=-1, keepdims=True)
    e = jnp.exp(masked - m)
    probs_ref[...] = e / jnp.sum(e, axis=-1, keepdims=True)


def classifier_head(h, w2, b2, w3, b3, n_classes):
    M = h.shape[0]
    npad = w3.shape[1]
    logits, probs = pl.pallas_call(
        functools.partial(_head_kernel, n_valid=n_classes),
        out_shape=(jax.ShapeDtypeStruct((M, npad), jnp.float32),
                   jax.ShapeDtypeStruct((M, npad), jnp.float32)),
        compiler_params=pltpu.CompilerParams(vmem_limit_bytes=_CFG["vmem"]),
    )(h, w2, b2, w3, b3)
    return logits[:, :n_classes], probs[:, :n_classes]


# ----------------------------------------------------------------------------
# Conv 3x3 (stride 1, valid) + ReLU: im2col glue (real Cin) + tiled matmul
# ----------------------------------------------------------------------------
def conv3x3_relu(x, w, b):
    """x: (N,H,W,Cin_real) bf16, w: (9*Cin_real, 128) bf16, b: (1, 128) f32."""
    N, H, W, Cin = x.shape
    K, Cout = w.shape
    assert K == 9 * Cin
    Ho, Wo = H - 2, W - 2
    # im2col glue over the REAL input channels: tap-major / channel-minor.
    # TODO(synk): replace with an in-kernel shifted-tap accumulation (9x
    # jnp.dot over a resident NHWC tile) to remove the remaining 9x
    # duplication of the (now small, real-channel) conv inputs.
    cols = [x[:, dy:dy + Ho, dx:dx + Wo, :] for dy in range(3) for dx in range(3)]
    patches = jnp.concatenate(cols, axis=-1).reshape(N * Ho * Wo, K)
    y = linear(patches, w, b, relu=True, out_dtype=jnp.bfloat16)
    return y.reshape(N, Ho, Wo, Cout)


# ----------------------------------------------------------------------------
# Full forward (NCHW input, matching the PyTorch module semantics)
# ----------------------------------------------------------------------------
def lenet5_forward(x_nchw, kp, n_classes):
    x = jnp.transpose(x_nchw, (0, 2, 3, 1)).astype(jnp.bfloat16)   # NHWC

    x = conv3x3_relu(x, kp["conv1_w"], kp["conv1_b"])   # (N,H-2,W-2,128) bf16
    x = avgpool2(x, 16)                                 # real 16 channels
    x = conv3x3_relu(x, kp["conv2_w"], kp["conv2_b"])
    x = avgpool2(x, 32)                                 # real 32 channels
    x = conv3x3_relu(x, kp["conv3_w"], kp["conv3_b"])
    x = x[..., :64]                                     # real conv3 channels

    # NHWC flatten; fc1_w was permuted at setup to match torch.flatten on
    # NCHW over the real 64 channels (K is NOT padded -> half the weight
    # stream of the previous version).
    feat = x.reshape(x.shape[0], -1)
    h = linear(feat, kp["fc1_w"], kp["fc1_b"], relu=True, out_dtype=jnp.bfloat16)
    # TODO(synk): optional int8 (v5e) / fp8 (v7x) fc1 weight quantization with
    # an in-kernel dequant epilogue would further halve the fc1 weight stream.
    return classifier_head(h, kp["fc2_w"], kp["fc2_b"],
                           kp["fc3_w"], kp["fc3_b"], n_classes)


# ----------------------------------------------------------------------------
# Parameter creation (torch layout) and host-side preparation
# ----------------------------------------------------------------------------
def feature_spatial(s):
    s = s - 2          # conv1
    s = s // 2         # pool1
    s = s - 2          # conv2
    s = s // 2         # pool2
    s = s - 2          # conv3
    return s


def make_torch_params(key, n_channels, n_classes, spatial):
    # Shapes follow the module's __init__ (the original 331776 in_features is
    # ~302x302 inputs; here scaled to the small test spatial size).
    s3 = feature_spatial(spatial)
    flat_dim = 64 * s3 * s3
    ks = jax.random.split(key, 12)

    def w(k, shape, fan_in):
        return jax.random.normal(k, shape, jnp.float32) / jnp.sqrt(fan_in)

    return {
        "conv1_w": w(ks[0], (16, n_channels, 3, 3), 9 * n_channels),
        "conv1_b": w(ks[1], (16,), 9 * n_channels),
        "conv2_w": w(ks[2], (32, 16, 3, 3), 9 * 16),
        "conv2_b": w(ks[3], (32,), 9 * 16),
        "conv3_w": w(ks[4], (64, 32, 3, 3), 9 * 32),
        "conv3_b": w(ks[5], (64,), 9 * 32),
        "fc1_w": w(ks[6], (3200, flat_dim), flat_dim),     # torch (out, in)
        "fc1_b": w(ks[7], (3200,), flat_dim),
        "fc2_w": w(ks[8], (80, 3200), 3200),
        "fc2_b": w(ks[9], (80,), 3200),
        "fc3_w": w(ks[10], (n_classes, 80), 80),
        "fc3_b": w(ks[11], (80,), 80)[:n_classes],
    }


def _prep_conv(w_t, b_t, cout_pad=LANE):
    """(Cout,Cin,3,3) torch -> (9*Cin_real, cout_pad) bf16; Cin NOT padded."""
    cout, cin, kh, kw = w_t.shape
    w = jnp.transpose(w_t, (2, 3, 1, 0))                       # (ky,kx,Cin,Cout)
    w = jnp.pad(w, ((0, 0), (0, 0), (0, 0), (0, cout_pad - cout)))
    w = w.reshape(kh * kw * cin, cout_pad)
    b = jnp.pad(b_t, (0, cout_pad - cout))
    return w.astype(jnp.bfloat16), b.astype(jnp.float32).reshape(1, cout_pad)


def _prep_fc1(w_t, b_t, c, h, w_sp):
    """Permute fc1 to NHWC-flatten order over the REAL channels (no K pad)."""
    out_f = w_t.shape[0]
    wr = w_t.reshape(out_f, c, h, w_sp)            # torch flatten order (C,H,W)
    wr = jnp.transpose(wr, (2, 3, 1, 0))           # -> (H, W, C, out)
    wr = wr.reshape(h * w_sp * c, out_f)
    return wr.astype(jnp.bfloat16), b_t.astype(jnp.float32).reshape(1, out_f)


def _prep_fc(w_t, b_t, n_pad=None, k_pad=None):
    w = jnp.transpose(w_t, (1, 0))                 # (in, out)
    if k_pad is not None and w.shape[0] < k_pad:
        w = jnp.pad(w, ((0, k_pad - w.shape[0]), (0, 0)))
    if n_pad is not None and w.shape[1] < n_pad:
        w = jnp.pad(w, ((0, 0), (0, n_pad - w.shape[1])))
    b = b_t
    if n_pad is not None and b.shape[0] < n_pad:
        b = jnp.pad(b, (0, n_pad - b.shape[0]))
    return w.astype(jnp.bfloat16), b.astype(jnp.float32).reshape(1, -1)


def prepare_params(p, n_channels, spatial):
    s3 = feature_spatial(spatial)
    kp = {}
    kp["conv1_w"], kp["conv1_b"] = _prep_conv(p["conv1_w"], p["conv1_b"])
    kp["conv2_w"], kp["conv2_b"] = _prep_conv(p["conv2_w"], p["conv2_b"])
    kp["conv3_w"], kp["conv3_b"] = _prep_conv(p["conv3_w"], p["conv3_b"])
    kp["fc1_w"], kp["fc1_b"] = _prep_fc1(p["fc1_w"], p["fc1_b"], 64, s3, s3)
    kp["fc2_w"], kp["fc2_b"] = _prep_fc(p["fc2_w"], p["fc2_b"], n_pad=LANE)
    kp["fc3_w"], kp["fc3_b"] = _prep_fc(p["fc3_w"], p["fc3_b"],
                                        n_pad=LANE, k_pad=LANE)
    return kp


if __name__ == "__main__":
    n_classes, n_channels, spatial, batch = 3, 4, 32, 2

    key = jax.random.PRNGKey(0)
    kx, kparam = jax.random.split(key)
    x = jax.random.normal(kx, (batch, n_channels, spatial, spatial), jnp.float32)

    torch_params = make_torch_params(kparam, n_channels, n_classes, spatial)
    kparams = prepare_params(torch_params, n_channels, spatial)   # one-time prep

    fwd = jax.jit(functools.partial(lenet5_forward, n_classes=n_classes))
    logits, probs = fwd(x, kparams)
    jax.block_until_ready((logits, probs))

    assert logits.shape == (batch, n_classes)
    assert probs.shape == (batch, n_classes)
    print("KERNEL_OK")
</pallas_src>

<mosaic_0001>
module attributes {stable_mosaic.version = 11 : i64} {
  func.func @_matmul_kernel(%arg0: i32, %arg1: i32, %arg2: i32, %arg3: memref<360x36xbf16, #tpu.memory_space<vmem>>, %arg4: memref<36x128xbf16, #tpu.memory_space<vmem>>, %arg5: memref<1x128xf32, #tpu.memory_space<vmem>>, %arg6: memref<360x128xbf16, #tpu.memory_space<vmem>>, %arg7: memref<360x128xf32, #tpu.memory_space<vmem>>) attributes {dimension_semantics = [#tpu.dimension_semantics<parallel>, #tpu.dimension_semantics<parallel>, #tpu.dimension_semantics<arbitrary>], iteration_bounds = array<i64: 5, 1, 1>, scalar_prefetch = 0 : i64, scratch_operands = 1 : i64, tpu.core_type = #tpu.core_type<tc>, window_params = [{transform_indices = @transform_0, window_bounds = array<i64: 360, 36>}, {transform_indices = @transform_1, window_bounds = array<i64: 36, 128>}, {transform_indices = @transform_2, window_bounds = array<i64: 1, 128>}, {transform_indices = @transform_3, window_bounds = array<i64: 360, 128>}]} {
    %c0_i32 = arith.constant 0 : i32
    %0 = arith.cmpi eq, %arg2, %c0_i32 : i32
    %1 = arith.extui %0 : i1 to i32
    %c0_i32_0 = arith.constant 0 : i32
    %2 = arith.cmpi ne, %1, %c0_i32_0 : i32
    scf.if %2 {
      %cst_10 = arith.constant 0.000000e+00 : f32
      %12 = vector.broadcast %cst_10 : f32 to vector<360x128xf32>
      %c0_11 = arith.constant 0 : index
      %c0_12 = arith.constant 0 : index
      %13 = vector.load %arg7[%c0_11, %c0_12] : memref<360x128xf32, #tpu.memory_space<vmem>>, vector<360x128xf32>
      tpu.vector_store %arg7[%c0_11, %c0_12], %12 {strides = array<i32>} : memref<360x128xf32, #tpu.memory_space<vmem>>, vector<360x128xf32>,
    } else {
    }
    %c0 = arith.constant 0 : index
    %c0_1 = arith.constant 0 : index
    %3 = vector.load %arg7[%c0, %c0_1] : memref<360x128xf32, #tpu.memory_space<vmem>>, vector<360x128xf32>
    %c0_2 = arith.constant 0 : index
    %c0_3 = arith.constant 0 : index
    %4 = vector.load %arg3[%c0_2, %c0_3] : memref<360x36xbf16, #tpu.memory_space<vmem>>, vector<360x36xbf16>
    %c0_4 = arith.constant 0 : index
    %c0_5 = arith.constant 0 : index
    %5 = vector.load %arg4[%c0_4, %c0_5] : memref<36x128xbf16, #tpu.memory_space<vmem>>, vector<36x128xbf16>
    %cst = arith.constant dense<0.000000e+00> : vector<360x128xf32>
    %6 = tpu.matmul %4, %5, %cst {dimension_numbers = #tpu.dot_dimension_numbers<[1], [0], [0], [1], [0, 0, 1, 1], [], []>} : vector<360x36xbf16>, vector<36x128xbf16>, vector<360x128xf32> -> vector<360x128xf32>
    %7 = arith.addf %3, %6 : vector<360x128xf32>
    %c0_6 = arith.constant 0 : index
    %c0_7 = arith.constant 0 : index
    %8 = vector.load %arg7[%c0_6, %c0_7] : memref<360x128xf32, #tpu.memory_space<vmem>>, vector<360x128xf32>
    tpu.vector_store %arg7[%c0_6, %c0_7], %7 {strides = array<i32>} : memref<360x128xf32, #tpu.memory_space<vmem>>, vector<360x128xf32>,
    %c0_i32_8 = arith.constant 0 : i32
    %9 = arith.cmpi eq, %arg2, %c0_i32_8 : i32
    %10 = arith.extui %9 : i1 to i32
    %c0_i32_9 = arith.constant 0 : i32
    %11 = arith.cmpi ne, %10, %c0_i32_9 : i32
    scf.if %11 {
      %c0_10 = arith.constant 0 : index
      %c0_11 = arith.constant 0 : index
      %12 = vector.load %arg7[%c0_10, %c0_11] : memref<360x128xf32, #tpu.memory_space<vmem>>, vector<360x128xf32>
      %c0_12 = arith.constant 0 : index
      %c0_13 = arith.constant 0 : index
      %13 = vector.load %arg5[%c0_12, %c0_13] : memref<1x128xf32, #tpu.memory_space<vmem>>, vector<1x128xf32>
      %14 = vector.broadcast %13 : vector<1x128xf32> to vector<360x128xf32>
      %15 = arith.addf %12, %14 : vector<360x128xf32>
      %cst_14 = arith.constant 0.000000e+00 : f32
      %16 = vector.broadcast %cst_14 : f32 to vector<360x128xf32>
      %17 = arith.maximumf %15, %16 : vector<360x128xf32>
      %18 = arith.truncf %17 : vector<360x128xf32> to vector<360x128xbf16>
      %c0_15 = arith.constant 0 : index
      %c0_16 = arith.constant 0 : index
      %19 = vector.load %arg6[%c0_15, %c0_16] : memref<360x128xbf16, #tpu.memory_space<vmem>>, vector<360x128xbf16>
      tpu.vector_store %arg6[%c0_15, %c0_16], %18 {strides = array<i32>} : memref<360x128xbf16, #tpu.memory_space<vmem>>, vector<360x128xbf16>,
    } else {
    }
    return
  }
  func.func @transform_0(%arg0: i32, %arg1: i32, %arg2: i32) -> (i32, i32) {
    %c0_i32 = arith.constant 0 : i32
    return %arg0, %arg2 : i32, i32
  }
  func.func @transform_1(%arg0: i32, %arg1: i32, %arg2: i32) -> (i32, i32) {
    %c0_i32 = arith.constant 0 : i32
    return %arg2, %arg1 : i32, i32
  }
  func.func @transform_2(%arg0: i32, %arg1: i32, %arg2: i32) -> (i32, i32) {
    %c0_i32 = arith.constant 0 : i32
    %c0_i32_0 = arith.constant 0 : i32
    return %c0_i32, %arg1 : i32, i32
  }
  func.func @transform_3(%arg0: i32, %arg1: i32, %arg2: i32) -> (i32, i32) {
    %c0_i32 = arith.constant 0 : i32
    return %arg0, %arg1 : i32, i32
  }
}

module attributes {stable_mosaic.version = 11 : i64} {
  func.func @_avgpool_kernel(%arg0: i32, %arg1: i32, %arg2: memref<1x30x30x128xbf16, #tpu.memory_space<vmem>>, %arg3: memref<1x15x15x16xbf16, #tpu.memory_space<vmem>>, %arg4: memref<1x15x30x128xf32, #tpu.memory_space<vmem>>) attributes {dimension_semantics = [#tpu.dimension_semantics<parallel>, #tpu.dimension_semantics<parallel>], iteration_bounds = array<i64: 2, 1>, scalar_prefetch = 0 : i64, scratch_operands = 1 : i64, tpu.core_type = #tpu.core_type<tc>, window_params = [{transform_indices = @transform_0, window_bounds = array<i64: 1, 30, 30, 128>}, {transform_indices = @transform_1, window_bounds = array<i64: 1, 15, 15, 16>}]} {
    %c0 = arith.constant 0 : index
    %c0_0 = arith.constant 0 : index
    %c0_1 = arith.constant 0 : index
    %c0_2 = arith.constant 0 : index
    %0 = vector.load %arg2[%c0, %c0_0, %c0_1, %c0_2] : memref<1x30x30x128xbf16, #tpu.memory_space<vmem>>, vector<1x30x30x128xbf16>
    %1 = arith.extf %0 : vector<1x30x30x128xbf16> to vector<1x30x30x128xf32>
    %2 = vector.shape_cast %1 : vector<1x30x30x128xf32> to vector<1x15x2x30x128xf32>
    %3 = vector.extract_strided_slice %2 {offsets = [0, 0, 0, 0, 0], sizes = [1, 15, 1, 30, 128], strides = [1, 1, 1, 1, 1]} : vector<1x15x2x30x128xf32> to vector<1x15x1x30x128xf32>
    %4 = vector.shape_cast %3 : vector<1x15x1x30x128xf32> to vector<1x15x30x128xf32>
    %5 = vector.extract_strided_slice %2 {offsets = [0, 0, 1, 0, 0], sizes = [1, 15, 1, 30, 128], strides = [1, 1, 1, 1, 1]} : vector<1x15x2x30x128xf32> to vector<1x15x1x30x128xf32>
    %6 = vector.shape_cast %5 : vector<1x15x1x30x128xf32> to vector<1x15x30x128xf32>
    %7 = arith.addf %4, %6 : vector<1x15x30x128xf32>
    %c0_3 = arith.constant 0 : index
    %c0_4 = arith.constant 0 : index
    %c0_5 = arith.constant 0 : index
    %c0_6 = arith.constant 0 : index
    %8 = vector.load %arg4[%c0_3, %c0_4, %c0_5, %c0_6] : memref<1x15x30x128xf32, #tpu.memory_space<vmem>>, vector<1x15x30x128xf32>
    tpu.vector_store %arg4[%c0_3, %c0_4, %c0_5, %c0_6], %7 {strides = array<i32>} : memref<1x15x30x128xf32, #tpu.memory_space<vmem>>, vector<1x15x30x128xf32>,
    %c0_7 = arith.constant 0 : index
    %c0_8 = arith.constant 0 : index
    %c0_9 = arith.constant 0 : index
    %c0_10 = arith.constant 0 : index
    %9 = tpu.strided_load %arg4[%c0_7, %c0_8, %c0_9, %c0_10] {strides = array<i32: 1, 1, 2, 1>} : memref<1x15x30x128xf32, #tpu.memory_space<vmem>>, vector<1x15x15x128xf32>
    %c0_11 = arith.constant 0 : index
    %c0_12 = arith.constant 0 : index
    %c1 = arith.constant 1 : index
    %c0_13 = arith.constant 0 : index
    %10 = tpu.strided_load %arg4[%c0_11, %c0_12, %c1, %c0_13] {strides = array<i32: 1, 1, 2, 1>} : memref<1x15x30x128xf32, #tpu.memory_space<vmem>>, vector<1x15x15x128xf32>
    %11 = arith.addf %9, %10 : vector<1x15x15x128xf32>
    %cst = arith.constant 2.500000e-01 : f32
    %12 = vector.broadcast %cst : f32 to vector<1x15x15x128xf32>
    %13 = arith.mulf %11, %12 : vector<1x15x15x128xf32>
    %14 = vector.extract_strided_slice %13 {offsets = [0, 0, 0, 0], sizes = [1, 15, 15, 16], strides = [1, 1, 1, 1]} : vector<1x15x15x128xf32> to vector<1x15x15x16xf32>
    %15 = arith.truncf %14 : vector<1x15x15x16xf32> to vector<1x15x15x16xbf16>
    %c0_14 = arith.constant 0 : index
    %c0_15 = arith.constant 0 : index
    %c0_16 = arith.constant 0 : index
    %c0_17 = arith.constant 0 : index
    %16 = vector.load %arg3[%c0_14, %c0_15, %c0_16, %c0_17] : memref<1x15x15x16xbf16, #tpu.memory_space<vmem>>, vector<1x15x15x16xbf16>
    tpu.vector_store %arg3[%c0_14, %c0_15, %c0_16, %c0_17], %15 {strides = array<i32>} : memref<1x15x15x16xbf16, #tpu.memory_space<vmem>>, vector<1x15x15x16xbf16>,
    return
  }
  func.func @transform_0(%arg0: i32, %arg1: i32) -> (i32, i32, i32, i32) {
    %c0_i32 = arith.constant 0 : i32
    %c0_i32_0 = arith.constant 0 : i32
    %c0_i32_1 = arith.constant 0 : i32
    return %arg0, %arg1, %c0_i32, %c0_i32_0 : i32, i32, i32, i32
  }
  func.func @transform_1(%arg0: i32, %arg1: i32) -> (i32, i32, i32, i32) {
    %c0_i32 = arith.constant 0 : i32
    %c0_i32_0 = arith.constant 0 : i32
    %c0_i32_1 = arith.constant 0 : i32
    return %arg0, %arg1, %c0_i32, %c0_i32_0 : i32, i32, i32, i32
  }
}

module attributes {stable_mosaic.version = 11 : i64} {
  func.func @_matmul_kernel(%arg0: i32, %arg1: i32, %arg2: i32, %arg3: memref<338x144xbf16, #tpu.memory_space<vmem>>, %arg4: memref<144x128xbf16, #tpu.memory_space<vmem>>, %arg5: memref<1x128xf32, #tpu.memory_space<vmem>>, %arg6: memref<338x128xbf16, #tpu.memory_space<vmem>>, %arg7: memref<338x128xf32, #tpu.memory_space<vmem>>) attributes {dimension_semantics = [#tpu.dimension_semantics<parallel>, #tpu.dimension_semantics<parallel>, #tpu.dimension_semantics<arbitrary>], iteration_bounds = array<i64: 1, 1, 1>, scalar_prefetch = 0 : i64, scratch_operands = 1 : i64, tpu.core_type = #tpu.core_type<tc>, window_params = [{transform_indices = @transform_0, window_bounds = array<i64: 338, 144>}, {transform_indices = @transform_1, window_bounds = array<i64: 144, 128>}, {transform_indices = @transform_2, window_bounds = array<i64: 1, 128>}, {transform_indices = @transform_3, window_bounds = array<i64: 338, 128>}]} {
    %c0_i32 = arith.constant 0 : i32
    %0 = arith.cmpi eq, %arg2, %c0_i32 : i32
    %1 = arith.extui %0 : i1 to i32
    %c0_i32_0 = arith.constant 0 : i32
    %2 = arith.cmpi ne, %1, %c0_i32_0 : i32
    scf.if %2 {
      %cst_10 = arith.constant 0.000000e+00 : f32
      %12 = vector.broadcast %cst_10 : f32 to vector<338x128xf32>
      %c0_11 = arith.constant 0 : index
      %c0_12 = arith.constant 0 : index
      %13 = vector.load %arg7[%c0_11, %c0_12] : memref<338x128xf32, #tpu.memory_space<vmem>>, vector<338x128xf32>
      tpu.vector_store %arg7[%c0_11, %c0_12], %12 {strides = array<i32>} : memref<338x128xf32, #tpu.memory_space<vmem>>, vector<338x128xf32>,
    } else {
    }
    %c0 = arith.constant 0 : index
    %c0_1 = arith.constant 0 : index
    %3 = vector.load %arg7[%c0, %c0_1] : memref<338x128xf32, #tpu.memory_space<vmem>>, vector<338x128xf32>
    %c0_2 = arith.constant 0 : index
    %c0_3 = arith.constant 0 : index
    %4 = vector.load %arg3[%c0_2, %c0_3] : memref<338x144xbf16, #tpu.memory_space<vmem>>, vector<338x144xbf16>
    %c0_4 = arith.constant 0 : index
    %c0_5 = arith.constant 0 : index
    %5 = vector.load %arg4[%c0_4, %c0_5] : memref<144x128xbf16, #tpu.memory_space<vmem>>, vector<144x128xbf16>
    %cst = arith.constant dense<0.000000e+00> : vector<338x128xf32>
    %6 = tpu.matmul %4, %5, %cst {dimension_numbers = #tpu.dot_dimension_numbers<[1], [0], [0], [1], [0, 0, 1, 1], [], []>} : vector<338x144xbf16>, vector<144x128xbf16>, vector<338x128xf32> -> vector<338x128xf32>
    %7 = arith.addf %3, %6 : vector<338x128xf32>
    %c0_6 = arith.constant 0 : index
    %c0_7 = arith.constant 0 : index
    %8 = vector.load %arg7[%c0_6, %c0_7] : memref<338x128xf32, #tpu.memory_space<vmem>>, vector<338x128xf32>
    tpu.vector_store %arg7[%c0_6, %c0_7], %7 {strides = array<i32>} : memref<338x128xf32, #tpu.memory_space<vmem>>, vector<338x128xf32>,
    %c0_i32_8 = arith.constant 0 : i32
    %9 = arith.cmpi eq, %arg2, %c0_i32_8 : i32
    %10 = arith.extui %9 : i1 to i32
    %c0_i32_9 = arith.constant 0 : i32
    %11 = arith.cmpi ne, %10, %c0_i32_9 : i32
    scf.if %11 {
      %c0_10 = arith.constant 0 : index
      %c0_11 = arith.constant 0 : index
      %12 = vector.load %arg7[%c0_10, %c0_11] : memref<338x128xf32, #tpu.memory_space<vmem>>, vector<338x128xf32>
      %c0_12 = arith.constant 0 : index
      %c0_13 = arith.constant 0 : index
      %13 = vector.load %arg5[%c0_12, %c0_13] : memref<1x128xf32, #tpu.memory_space<vmem>>, vector<1x128xf32>
      %14 = vector.broadcast %13 : vector<1x128xf32> to vector<338x128xf32>
      %15 = arith.addf %12, %14 : vector<338x128xf32>
      %cst_14 = arith.constant 0.000000e+00 : f32
      %16 = vector.broadcast %cst_14 : f32 to vector<338x128xf32>
      %17 = arith.maximumf %15, %16 : vector<338x128xf32>
      %18 = arith.truncf %17 : vector<338x128xf32> to vector<338x128xbf16>
      %c0_15 = arith.constant 0 : index
      %c0_16 = arith.constant 0 : index
      %19 = vector.load %arg6[%c0_15, %c0_16] : memref<338x128xbf16, #tpu.memory_space<vmem>>, vector<338x128xbf16>
      tpu.vector_store %arg6[%c0_15, %c0_16], %18 {strides = array<i32>} : memref<338x128xbf16, #tpu.memory_space<vmem>>, vector<338x128xbf16>,
    } else {
    }
    return
  }
  func.func @transform_0(%arg0: i32, %arg1: i32, %arg2: i32) -> (i32, i32) {
    %c0_i32 = arith.constant 0 : i32
    return %arg0, %arg2 : i32, i32
  }
  func.func @transform_1(%arg0: i32, %arg1: i32, %arg2: i32) -> (i32, i32) {
    %c0_i32 = arith.constant 0 : i32
    return %arg2, %arg1 : i32, i32
  }
  func.func @transform_2(%arg0: i32, %arg1: i32, %arg2: i32) -> (i32, i32) {
    %c0_i32 = arith.constant 0 : i32
    %c0_i32_0 = arith.constant 0 : i32
    return %c0_i32, %arg1 : i32, i32
  }
  func.func @transform_3(%arg0: i32, %arg1: i32, %arg2: i32) -> (i32, i32) {
    %c0_i32 = arith.constant 0 : i32
    return %arg0, %arg1 : i32, i32
  }
}

module attributes {stable_mosaic.version = 11 : i64} {
  func.func @_avgpool_kernel(%arg0: i32, %arg1: i32, %arg2: memref<1x12x13x128xbf16, #tpu.memory_space<vmem>>, %arg3: memref<1x6x6x32xbf16, #tpu.memory_space<vmem>>, %arg4: memref<1x6x13x128xf32, #tpu.memory_space<vmem>>) attributes {dimension_semantics = [#tpu.dimension_semantics<parallel>, #tpu.dimension_semantics<parallel>], iteration_bounds = array<i64: 2, 1>, scalar_prefetch = 0 : i64, scratch_operands = 1 : i64, tpu.core_type = #tpu.core_type<tc>, window_params = [{transform_indices = @transform_0, window_bounds = array<i64: 1, 12, 13, 128>}, {transform_indices = @transform_1, window_bounds = array<i64: 1, 6, 6, 32>}]} {
    %c0 = arith.constant 0 : index
    %c0_0 = arith.constant 0 : index
    %c0_1 = arith.constant 0 : index
    %c0_2 = arith.constant 0 : index
    %0 = vector.load %arg2[%c0, %c0_0, %c0_1, %c0_2] : memref<1x12x13x128xbf16, #tpu.memory_space<vmem>>, vector<1x12x13x128xbf16>
    %1 = arith.extf %0 : vector<1x12x13x128xbf16> to vector<1x12x13x128xf32>
    %2 = vector.shape_cast %1 : vector<1x12x13x128xf32> to vector<1x6x2x13x128xf32>
    %3 = vector.extract_strided_slice %2 {offsets = [0, 0, 0, 0, 0], sizes = [1, 6, 1, 13, 128], strides = [1, 1, 1, 1, 1]} : vector<1x6x2x13x128xf32> to vector<1x6x1x13x128xf32>
    %4 = vector.shape_cast %3 : vector<1x6x1x13x128xf32> to vector<1x6x13x128xf32>
    %5 = vector.extract_strided_slice %2 {offsets = [0, 0, 1, 0, 0], sizes = [1, 6, 1, 13, 128], strides = [1, 1, 1, 1, 1]} : vector<1x6x2x13x128xf32> to vector<1x6x1x13x128xf32>
    %6 = vector.shape_cast %5 : vector<1x6x1x13x128xf32> to vector<1x6x13x128xf32>
    %7 = arith.addf %4, %6 : vector<1x6x13x128xf32>
    %c0_3 = arith.constant 0 : index
    %c0_4 = arith.constant 0 : index
    %c0_5 = arith.constant 0 : index
    %c0_6 = arith.constant 0 : index
    %8 = vector.load %arg4[%c0_3, %c0_4, %c0_5, %c0_6] : memref<1x6x13x128xf32, #tpu.memory_space<vmem>>, vector<1x6x13x128xf32>
    tpu.vector_store %arg4[%c0_3, %c0_4, %c0_5, %c0_6], %7 {strides = array<i32>} : memref<1x6x13x128xf32, #tpu.memory_space<vmem>>, vector<1x6x13x128xf32>,
    %c0_7 = arith.constant 0 : index
    %c0_8 = arith.constant 0 : index
    %c0_9 = arith.constant 0 : index
    %c0_10 = arith.constant 0 : index
    %9 = tpu.strided_load %arg4[%c0_7, %c0_8, %c0_9, %c0_10] {strides = array<i32: 1, 1, 2, 1>} : memref<1x6x13x128xf32, #tpu.memory_space<vmem>>, vector<1x6x6x128xf32>
    %c0_11 = arith.constant 0 : index
    %c0_12 = arith.constant 0 : index
    %c1 = arith.constant 1 : index
    %c0_13 = arith.constant 0 : index
    %10 = tpu.strided_load %arg4[%c0_11, %c0_12, %c1, %c0_13] {strides = array<i32: 1, 1, 2, 1>} : memref<1x6x13x128xf32, #tpu.memory_space<vmem>>, vector<1x6x6x128xf32>
    %11 = arith.addf %9, %10 : vector<1x6x6x128xf32>
    %cst = arith.constant 2.500000e-01 : f32
    %12 = vector.broadcast %cst : f32 to vector<1x6x6x128xf32>
    %13 = arith.mulf %11, %12 : vector<1x6x6x128xf32>
    %14 = vector.extract_strided_slice %13 {offsets = [0, 0, 0, 0], sizes = [1, 6, 6, 32], strides = [1, 1, 1, 1]} : vector<1x6x6x128xf32> to vector<1x6x6x32xf32>
    %15 = arith.truncf %14 : vector<1x6x6x32xf32> to vector<1x6x6x32xbf16>
    %c0_14 = arith.constant 0 : index
    %c0_15 = arith.constant 0 : index
    %c0_16 = arith.constant 0 : index
    %c0_17 = arith.constant 0 : index
    %16 = vector.load %arg3[%c0_14, %c0_15, %c0_16, %c0_17] : memref<1x6x6x32xbf16, #tpu.memory_space<vmem>>, vector<1x6x6x32xbf16>
    tpu.vector_store %arg3[%c0_14, %c0_15, %c0_16, %c0_17], %15 {strides = array<i32>} : memref<1x6x6x32xbf16, #tpu.memory_space<vmem>>, vector<1x6x6x32xbf16>,
    return
  }
  func.func @transform_0(%arg0: i32, %arg1: i32) -> (i32, i32, i32, i32) {
    %c0_i32 = arith.constant 0 : i32
    %c0_i32_0 = arith.constant 0 : i32
    %c0_i32_1 = arith.constant 0 : i32
    return %arg0, %arg1, %c0_i32, %c0_i32_0 : i32, i32, i32, i32
  }
  func.func @transform_1(%arg0: i32, %arg1: i32) -> (i32, i32, i32, i32) {
    %c0_i32 = arith.constant 0 : i32
    %c0_i32_0 = arith.constant 0 : i32
    %c0_i32_1 = arith.constant 0 : i32
    return %arg0, %arg1, %c0_i32, %c0_i32_0 : i32, i32, i32, i32
  }
}

module attributes {stable_mosaic.version = 11 : i64} {
  func.func @_matmul_kernel(%arg0: i32, %arg1: i32, %arg2: i32, %arg3: memref<32x288xbf16, #tpu.memory_space<vmem>>, %arg4: memref<288x128xbf16, #tpu.memory_space<vmem>>, %arg5: memref<1x128xf32, #tpu.memory_space<vmem>>, %arg6: memref<32x128xbf16, #tpu.memory_space<vmem>>, %arg7: memref<32x128xf32, #tpu.memory_space<vmem>>) attributes {dimension_semantics = [#tpu.dimension_semantics<parallel>, #tpu.dimension_semantics<parallel>, #tpu.dimension_semantics<arbitrary>], iteration_bounds = array<i64: 1, 1, 1>, scalar_prefetch = 0 : i64, scratch_operands = 1 : i64, tpu.core_type = #tpu.core_type<tc>, window_params = [{transform_indices = @transform_0, window_bounds = array<i64: 32, 288>}, {transform_indices = @transform_1, window_bounds = array<i64: 288, 128>}, {transform_indices = @transform_2, window_bounds = array<i64: 1, 128>}, {transform_indices = @transform_3, window_bounds = array<i64: 32, 128>}]} {
    %c0_i32 = arith.constant 0 : i32
    %0 = arith.cmpi eq, %arg2, %c0_i32 : i32
    %1 = arith.extui %0 : i1 to i32
    %c0_i32_0 = arith.constant 0 : i32
    %2 = arith.cmpi ne, %1, %c0_i32_0 : i32
    scf.if %2 {
      %cst_10 = arith.constant 0.000000e+00 : f32
      %12 = vector.broadcast %cst_10 : f32 to vector<32x128xf32>
      %c0_11 = arith.constant 0 : index
      %c0_12 = arith.constant 0 : index
      %13 = vector.load %arg7[%c0_11, %c0_12] : memref<32x128xf32, #tpu.memory_space<vmem>>, vector<32x128xf32>
      tpu.vector_store %arg7[%c0_11, %c0_12], %12 {strides = array<i32>} : memref<32x128xf32, #tpu.memory_space<vmem>>, vector<32x128xf32>,
    } else {
    }
    %c0 = arith.constant 0 : index
    %c0_1 = arith.constant 0 : index
    %3 = vector.load %arg7[%c0, %c0_1] : memref<32x128xf32, #tpu.memory_space<vmem>>, vector<32x128xf32>
    %c0_2 = arith.constant 0 : index
    %c0_3 = arith.constant 0 : index
    %4 = vector.load %arg3[%c0_2, %c0_3] : memref<32x288xbf16, #tpu.memory_space<vmem>>, vector<32x288xbf16>
    %c0_4 = arith.constant 0 : index
    %c0_5 = arith.constant 0 : index
    %5 = vector.load %arg4[%c0_4, %c0_5] : memref<288x128xbf16, #tpu.memory_space<vmem>>, vector<288x128xbf16>
    %cst = arith.constant dense<0.000000e+00> : vector<32x128xf32>
    %6 = tpu.matmul %4, %5, %cst {dimension_numbers = #tpu.dot_dimension_numbers<[1], [0], [0], [1], [0, 0, 1, 1], [], []>} : vector<32x288xbf16>, vector<288x128xbf16>, vector<32x128xf32> -> vector<32x128xf32>
    %7 = arith.addf %3, %6 : vector<32x128xf32>
    %c0_6 = arith.constant 0 : index
    %c0_7 = arith.constant 0 : index
    %8 = vector.load %arg7[%c0_6, %c0_7] : memref<32x128xf32, #tpu.memory_space<vmem>>, vector<32x128xf32>
    tpu.vector_store %arg7[%c0_6, %c0_7], %7 {strides = array<i32>} : memref<32x128xf32, #tpu.memory_space<vmem>>, vector<32x128xf32>,
    %c0_i32_8 = arith.constant 0 : i32
    %9 = arith.cmpi eq, %arg2, %c0_i32_8 : i32
    %10 = arith.extui %9 : i1 to i32
    %c0_i32_9 = arith.constant 0 : i32
    %11 = arith.cmpi ne, %10, %c0_i32_9 : i32
    scf.if %11 {
      %c0_10 = arith.constant 0 : index
      %c0_11 = arith.constant 0 : index
      %12 = vector.load %arg7[%c0_10, %c0_11] : memref<32x128xf32, #tpu.memory_space<vmem>>, vector<32x128xf32>
      %c0_12 = arith.constant 0 : index
      %c0_13 = arith.constant 0 : index
      %13 = vector.load %arg5[%c0_12, %c0_13] : memref<1x128xf32, #tpu.memory_space<vmem>>, vector<1x128xf32>
      %14 = vector.broadcast %13 : vector<1x128xf32> to vector<32x128xf32>
      %15 = arith.addf %12, %14 : vector<32x128xf32>
      %cst_14 = arith.constant 0.000000e+00 : f32
      %16 = vector.broadcast %cst_14 : f32 to vector<32x128xf32>
      %17 = arith.maximumf %15, %16 : vector<32x128xf32>
      %18 = arith.truncf %17 : vector<32x128xf32> to vector<32x128xbf16>
      %c0_15 = arith.constant 0 : index
      %c0_16 = arith.constant 0 : index
      %19 = vector.load %arg6[%c0_15, %c0_16] : memref<32x128xbf16, #tpu.memory_space<vmem>>, vector<32x128xbf16>
      tpu.vector_store %arg6[%c0_15, %c0_16], %18 {strides = array<i32>} : memref<32x128xbf16, #tpu.memory_space<vmem>>, vector<32x128xbf16>,
    } else {
    }
    return
  }
  func.func @transform_0(%arg0: i32, %arg1: i32, %arg2: i32) -> (i32, i32) {
    %c0_i32 = arith.constant 0 : i32
    return %arg0, %arg2 : i32, i32
  }
  func.func @transform_1(%arg0: i32, %arg1: i32, %arg2: i32) -> (i32, i32) {
    %c0_i32 = arith.constant 0 : i32
    return %arg2, %arg1 : i32, i32
  }
  func.func @transform_2(%arg0: i32, %arg1: i32, %arg2: i32) -> (i32, i32) {
    %c0_i32 = arith.constant 0 : i32
    %c0_i32_0 = arith.constant 0 : i32
    return %c0_i32, %arg1 : i32, i32
  }
  func.func @transform_3(%arg0: i32, %arg1: i32, %arg2: i32) -> (i32, i32) {
    %c0_i32 = arith.constant 0 : i32
    return %arg0, %arg1 : i32, i32
  }
}

module attributes {stable_mosaic.version = 11 : i64} {
  func.func @_head_kernel(%arg0: memref<2x3200xbf16, #tpu.memory_space<vmem>>, %arg1: memref<3200x128xbf16, #tpu.memory_space<vmem>>, %arg2: memref<1x128xf32, #tpu.memory_space<vmem>>, %arg3: memref<128x128xbf16, #tpu.memory_space<vmem>>, %arg4: memref<1x128xf32, #tpu.memory_space<vmem>>, %arg5: memref<2x128xf32, #tpu.memory_space<vmem>>, %arg6: memref<2x128xf32, #tpu.memory_space<vmem>>) attributes {dimension_semantics = [], scalar_prefetch = 0 : i64, scratch_operands = 0 : i64, tpu.core_type = #tpu.core_type<tc>} {
    %c0 = arith.constant 0 : index
    %c0_0 = arith.constant 0 : index
    %0 = vector.load %arg0[%c0, %c0_0] : memref<2x3200xbf16, #tpu.memory_space<vmem>>, vector<2x3200xbf16>
    %c0_1 = arith.constant 0 : index
    %c0_2 = arith.constant 0 : index
    %1 = vector.load %arg1[%c0_1, %c0_2] : memref<3200x128xbf16, #tpu.memory_space<vmem>>, vector<3200x128xbf16>
    %cst = arith.constant dense<0.000000e+00> : vector<2x128xf32>
    %2 = tpu.matmul %0, %1, %cst {dimension_numbers = #tpu.dot_dimension_numbers<[1], [0], [0], [1], [0, 0, 1, 1], [], []>} : vector<2x3200xbf16>, vector<3200x128xbf16>, vector<2x128xf32> -> vector<2x128xf32>
    %c0_3 = arith.constant 0 : index
    %c0_4 = arith.constant 0 : index
    %3 = vector.load %arg2[%c0_3, %c0_4] : memref<1x128xf32, #tpu.memory_space<vmem>>, vector<1x128xf32>
    %4 = vector.broadcast %3 : vector<1x128xf32> to vector<2x128xf32>
    %5 = arith.addf %2, %4 : vector<2x128xf32>
    %cst_5 = arith.constant 0.000000e+00 : f32
    %6 = vector.broadcast %cst_5 : f32 to vector<2x128xf32>
    %7 = arith.maximumf %5, %6 : vector<2x128xf32>
    %8 = arith.truncf %7 : vector<2x128xf32> to vector<2x128xbf16>
    %c0_6 = arith.constant 0 : index
    %c0_7 = arith.constant 0 : index
    %9 = vector.load %arg3[%c0_6, %c0_7] : memref<128x128xbf16, #tpu.memory_space<vmem>>, vector<128x128xbf16>
    %cst_8 = arith.constant dense<0.000000e+00> : vector<2x128xf32>
    %10 = tpu.matmul %8, %9, %cst_8 {dimension_numbers = #tpu.dot_dimension_numbers<[1], [0], [0], [1], [0, 0, 1, 1], [], []>} : vector<2x128xbf16>, vector<128x128xbf16>, vector<2x128xf32> -> vector<2x128xf32>
    %c0_9 = arith.constant 0 : index
    %c0_10 = arith.constant 0 : index
    %11 = vector.load %arg4[%c0_9, %c0_10] : memref<1x128xf32, #tpu.memory_space<vmem>>, vector<1x128xf32>
    %12 = vector.broadcast %11 : vector<1x128xf32> to vector<2x128xf32>
    %13 = arith.addf %10, %12 : vector<2x128xf32>
    %c0_11 = arith.constant 0 : index
    %c0_12 = arith.constant 0 : index
    %14 = vector.load %arg5[%c0_11, %c0_12] : memref<2x128xf32, #tpu.memory_space<vmem>>, vector<2x128xf32>
    tpu.vector_store %arg5[%c0_11, %c0_12], %13 {strides = array<i32>} : memref<2x128xf32, #tpu.memory_space<vmem>>, vector<2x128xf32>,
    %15 = tpu.iota {dimensions = array<i32: 1>} : vector<2x128xi32>
    %c3_i32 = arith.constant 3 : i32
    %16 = vector.broadcast %c3_i32 : i32 to vector<2x128xi32>
    %17 = arith.cmpi slt, %15, %16 : vector<2x128xi32>
    %cst_13 = arith.constant 0xFF800000 : f32
    %18 = vector.broadcast %cst_13 : f32 to vector<2x128xf32>
    %19 = arith.select %17, %13, %18 : vector<2x128xi1>, vector<2x128xf32>
    %cst_14 = arith.constant dense<0xFF800000> : vector<2xf32>
    %20 = vector.multi_reduction <maximumf>, %19, %cst_14 [1] : vector<2x128xf32> to vector<2xf32>
    %21 = vector.shape_cast %20 : vector<2xf32> to vector<2x1xf32>
    %22 = vector.broadcast %21 : vector<2x1xf32> to vector<2x128xf32>
    %23 = arith.subf %19, %22 : vector<2x128xf32>
    %24 = math.exp %23 : vector<2x128xf32>
    %cst_15 = arith.constant dense<0.000000e+00> : vector<2xf32>
    %25 = vector.multi_reduction <add>, %24, %cst_15 [1] : vector<2x128xf32> to vector<2xf32>
    %26 = vector.shape_cast %25 : vector<2xf32> to vector<2x1xf32>
    %27 = vector.broadcast %26 : vector<2x1xf32> to vector<2x128xf32>
    %28 = arith.divf %24, %27 : vector<2x128xf32>
    %c0_16 = arith.constant 0 : index
    %c0_17 = arith.constant 0 : index
    %29 = vector.load %arg6[%c0_16, %c0_17] : memref<2x128xf32, #tpu.memory_space<vmem>>, vector<2x128xf32>
    tpu.vector_store %arg6[%c0_16, %c0_17], %28 {strides = array<i32>} : memref<2x128xf32, #tpu.memory_space<vmem>>, vector<2x128xf32>,
    return
  }
}

module attributes {stable_mosaic.version = 11 : i64} {
  func.func @_matmul_kernel(%arg0: i32, %arg1: i32, %arg2: i32, %arg3: memref<2x1024xbf16, #tpu.memory_space<vmem>>, %arg4: memref<1024x640xbf16, #tpu.memory_space<vmem>>, %arg5: memref<1x640xf32, #tpu.memory_space<vmem>>, %arg6: memref<2x640xbf16, #tpu.memory_space<vmem>>, %arg7: memref<2x640xf32, #tpu.memory_space<vmem>>) attributes {dimension_semantics = [#tpu.dimension_semantics<parallel>, #tpu.dimension_semantics<parallel>, #tpu.dimension_semantics<arbitrary>], iteration_bounds = array<i64: 1, 5, 1>, scalar_prefetch = 0 : i64, scratch_operands = 1 : i64, tpu.core_type = #tpu.core_type<tc>, window_params = [{transform_indices = @transform_0, window_bounds = array<i64: 2, 1024>}, {transform_indices = @transform_1, window_bounds = array<i64: 1024, 640>}, {transform_indices = @transform_2, window_bounds = array<i64: 1, 640>}, {transform_indices = @transform_3, window_bounds = array<i64: 2, 640>}]} {
    %c0_i32 = arith.constant 0 : i32
    %0 = arith.cmpi eq, %arg2, %c0_i32 : i32
    %1 = arith.extui %0 : i1 to i32
    %c0_i32_0 = arith.constant 0 : i32
    %2 = arith.cmpi ne, %1, %c0_i32_0 : i32
    scf.if %2 {
      %cst_10 = arith.constant 0.000000e+00 : f32
      %12 = vector.broadcast %cst_10 : f32 to vector<2x640xf32>
      %c0_11 = arith.constant 0 : index
      %c0_12 = arith.constant 0 : index
      %13 = vector.load %arg7[%c0_11, %c0_12] : memref<2x640xf32, #tpu.memory_space<vmem>>, vector<2x640xf32>
      tpu.vector_store %arg7[%c0_11, %c0_12], %12 {strides = array<i32>} : memref<2x640xf32, #tpu.memory_space<vmem>>, vector<2x640xf32>,
    } else {
    }
    %c0 = arith.constant 0 : index
    %c0_1 = arith.constant 0 : index
    %3 = vector.load %arg7[%c0, %c0_1] : memref<2x640xf32, #tpu.memory_space<vmem>>, vector<2x640xf32>
    %c0_2 = arith.constant 0 : index
    %c0_3 = arith.constant 0 : index
    %4 = vector.load %arg3[%c0_2, %c0_3] : memref<2x1024xbf16, #tpu.memory_space<vmem>>, vector<2x1024xbf16>
    %c0_4 = arith.constant 0 : index
    %c0_5 = arith.constant 0 : index
    %5 = vector.load %arg4[%c0_4, %c0_5] : memref<1024x640xbf16, #tpu.memory_space<vmem>>, vector<1024x640xbf16>
    %cst = arith.constant dense<0.000000e+00> : vector<2x640xf32>
    %6 = tpu.matmul %4, %5, %cst {dimension_numbers = #tpu.dot_dimension_numbers<[1], [0], [0], [1], [0, 0, 1, 1], [], []>} : vector<2x1024xbf16>, vector<1024x640xbf16>, vector<2x640xf32> -> vector<2x640xf32>
    %7 = arith.addf %3, %6 : vector<2x640xf32>
    %c0_6 = arith.constant 0 : index
    %c0_7 = arith.constant 0 : index
    %8 = vector.load %arg7[%c0_6, %c0_7] : memref<2x640xf32, #tpu.memory_space<vmem>>, vector<2x640xf32>
    tpu.vector_store %arg7[%c0_6, %c0_7], %7 {strides = array<i32>} : memref<2x640xf32, #tpu.memory_space<vmem>>, vector<2x640xf32>,
    %c0_i32_8 = arith.constant 0 : i32
    %9 = arith.cmpi eq, %arg2, %c0_i32_8 : i32
    %10 = arith.extui %9 : i1 to i32
    %c0_i32_9 = arith.constant 0 : i32
    %11 = arith.cmpi ne, %10, %c0_i32_9 : i32
    scf.if %11 {
      %c0_10 = arith.constant 0 : index
      %c0_11 = arith.constant 0 : index
      %12 = vector.load %arg7[%c0_10, %c0_11] : memref<2x640xf32, #tpu.memory_space<vmem>>, vector<2x640xf32>
      %c0_12 = arith.constant 0 : index
      %c0_13 = arith.constant 0 : index
      %13 = vector.load %arg5[%c0_12, %c0_13] : memref<1x640xf32, #tpu.memory_space<vmem>>, vector<1x640xf32>
      %14 = vector.broadcast %13 : vector<1x640xf32> to vector<2x640xf32>
      %15 = arith.addf %12, %14 : vector<2x640xf32>
      %cst_14 = arith.constant 0.000000e+00 : f32
      %16 = vector.broadcast %cst_14 : f32 to vector<2x640xf32>
      %17 = arith.maximumf %15, %16 : vector<2x640xf32>
      %18 = arith.truncf %17 : vector<2x640xf32> to vector<2x640xbf16>
      %c0_15 = arith.constant 0 : index
      %c0_16 = arith.constant 0 : index
      %19 = vector.load %arg6[%c0_15, %c0_16] : memref<2x640xbf16, #tpu.memory_space<vmem>>, vector<2x640xbf16>
      tpu.vector_store %arg6[%c0_15, %c0_16], %18 {strides = array<i32>} : memref<2x640xbf16, #tpu.memory_space<vmem>>, vector<2x640xbf16>,
    } else {
    }
    return
  }
  func.func @transform_0(%arg0: i32, %arg1: i32, %arg2: i32) -> (i32, i32) {
    %c0_i32 = arith.constant 0 : i32
    return %arg0, %arg2 : i32, i32
  }
  func.func @transform_1(%arg0: i32, %arg1: i32, %arg2: i32) -> (i32, i32) {
    %c0_i32 = arith.constant 0 : i32
    return %arg2, %arg1 : i32, i32
  }
  func.func @transform_2(%arg0: i32, %arg1: i32, %arg2: i32) -> (i32, i32) {
    %c0_i32 = arith.constant 0 : i32
    %c0_i32_0 = arith.constant 0 : i32
    return %c0_i32, %arg1 : i32, i32
  }
  func.func @transform_3(%arg0: i32, %arg1: i32, %arg2: i32) -> (i32, i32) {
    %c0_i32 = arith.constant 0 : i32
    return %arg0, %arg1 : i32, i32
  }
}

</mosaic_0001>

<llo_original>
// kernel: lenet5_forward.7
$region0: #{lenet5_forward.7}
  #allocation0 [shape = 'u32[]', space=smem, size = 0x4, offset = 0x4, fixed_abs, tag = 'smem constant byte address 0x4 - core index']
  #allocation1 [shape = 'u32[144,128]{1,0:T(1,128)}', space=vmem, size = 0x12000, scoped, tag = 'internal scratch']
  #allocation2 [shape = 'f32[360,128]{1,0:T(8,128)}', space=vmem, size = 0x2d000, scoped, tag = 'scratch operand']
  %s0 = inlined_call_operand.vmem [shape: bf16[1800,36], index: 0, kind: input, shape index: {}]
  %s1 = inlined_call_operand.hbm [shape: bf16[36,128], index: 1, kind: input, shape index: {}]
  %s2 = inlined_call_operand.hbm [shape: f32[1,128], index: 2, kind: input, shape index: {}]
  %s3 = inlined_call_operand.vmem [shape: bf16[1800,128], index: 3, kind: output, shape index: {}]
  %s4 = sld [smem:[#allocation0]]
  $region61: #{lenet5_forward.7} parent=0
    _
  %s6 = ssub.s32 1, %s4
  %s7 = scalar_select 0, %s6, %s4
  $region1: #{lenet5_forward.7} parent=0
    #allocation3 [shape = 'u8[10240]{0}', space=vmem, size = 0x2800, scoped, tag = 'input window, operand 1, single buffered']
    #allocation4 [shape = 's32[2]{0}', space=sflag, size = 0x8, scoped, tag = 'scoped memory for lenet5_forward.7']
    #allocation5 [shape = 'u8[512]{0}', space=vmem, size = 0x400, scoped, tag = 'input window, operand 2, single buffered']
    #allocation6 [shape = 's32[1]{0}', space=sflag, size = 0x4, scoped, tag = 'scoped memory for lenet5_forward.7']
    %8 = vsyncpa [#allocation4], 0
    %9 = vsyncpa [#allocation6], 0
    loop: start=0, step=1, limit=7
    $region2: #{lenet5_forward.7} parent=1 // loop_pre_header
      _
    $region3: #{lenet5_forward.7} parent=1 // loop_header
      %s11 = sphi 0, %s15
      %p12 = scmp.ge.s32.totalorder %s11, 7
      %s18 = sphi 0, %s37
      %s19 = sphi 0, %s33
      %s20 = sphi 0, %s29
      %s21 = sphi 0, %s18
      %s22 = sphi 0, %s19
      %s23 = sphi 0, %s20
      %s24 = sphi 0, %s21
      %s25 = sphi 0, %s22
      %s26 = sphi 0, %s23
      %s42 = sphi 0, %s44
      %s45 = sphi 0, %s42
      %s46 = sphi 0, %s45
      %s62 = sphi 0, %s46
      %s70 = sphi 0, %s72
      %s73 = sphi 0, %s70
      %s74 = sphi 0, %s73
      %s90 = sphi 0, %s74
      %s96 = sphi 0, %s98
      %s99 = sphi 0, %s96
      %s100 = sphi 0, %s99
      %s116 = sphi 0, %s100
      %s124 = sphi 0, %s126
      %s127 = sphi 0, %s124
      %s128 = sphi 0, %s127
      %s144 = sphi 0, %s128
    $region4: #{lenet5_forward.7} parent=1 // loop_header_branch
      %14 = sbr.rel (%p12) target = $region8
    $region5: #{lenet5_forward.7} parent=1 // loop_body
      %s16 = ssub.s32 %s11, 1
      %s17 = ssub.s32 %s11, 2
      %s27 = sadd.s32 1, %s20
      %p28 = scmp.ge.s32.totalorder %s27, 1
      %s29 = scalar_select %p28, 0, %s27
      %s30 = sadd.s32 1, %s19
      %s31 = scalar_select %p28, %s30, %s19
      %p32 = scmp.ge.s32.totalorder %s31, 1
      %s33 = scalar_select %p32, 0, %s31
      %s34 = sadd.s32 1, %s18
      %s35 = scalar_select %p32, %s34, %s18
      %p36 = scmp.ge.s32.totalorder %s35, 5
      %s37 = scalar_select %p36, 0, %s35
      %s38 = ssub.s32 %s18, %s37
      %s39 = ssub.s32 %s20, %s29
      %s40 = sor.u32 %s38, %s39
      %p41 = scmp.eq.s32.totalorder %s40, 0
      %s43 = sadd.s32 %s42, 1
      %s44 = scalar_select %p41, %s42, %s43
      %p47 = pneg %p41
      %p48 = scmp.eq.s32.totalorder %s11, 4
      %p49 = por %p47, %p48
      %p50 = scmp.ne.s32.totalorder %s42, %s45
      %p51 = scmp.eq.s32.totalorder %s11, 0
      %p52 = por %p50, %p51
      %p53 = scmp.ne.s32.totalorder %s42, %s45
      %p54 = scmp.eq.s32.totalorder %s16, 4
      %p55 = por %p53, %p54
      %p56 = scmp.ne.s32.totalorder %s45, %s46
      %p57 = scmp.eq.s32.totalorder %s16, 0
      %p58 = por %p56, %p57
      %p59 = scmp.ne.s32.totalorder %s45, %s46
      %p60 = scmp.eq.s32.totalorder %s17, 4
      %p61 = por %p59, %p60
      %p63 = scmp.ne.s32.totalorder %s46, %s62
      %p64 = scmp.eq.s32.totalorder %s17, 0
      %p65 = por %p63, %p64
      %s66 = ssub.s32 %s20, %s29
      %s67 = ssub.s32 %s19, %s33
      %s68 = sor.u32 %s66, %s67
      %p69 = scmp.eq.s32.totalorder %s68, 0
      %s71 = sadd.s32 %s70, 1
      %s72 = scalar_select %p69, %s70, %s71
      %p75 = pneg %p69
      %p76 = scmp.eq.s32.totalorder %s11, 4
      %p77 = por %p75, %p76
      %p78 = scmp.ne.s32.totalorder %s70, %s73
      %p79 = scmp.eq.s32.totalorder %s11, 0
      %p80 = por %p78, %p79
      %p81 = scmp.ne.s32.totalorder %s70, %s73
      %p82 = scmp.eq.s32.totalorder %s16, 4
      %p83 = por %p81, %p82
      %p84 = scmp.ne.s32.totalorder %s73, %s74
      %p85 = scmp.eq.s32.totalorder %s16, 0
      %p86 = por %p84, %p85
      %p87 = scmp.ne.s32.totalorder %s73, %s74
      %p88 = scmp.eq.s32.totalorder %s17, 4
      %p89 = por %p87, %p88
      %p91 = scmp.ne.s32.totalorder %s74, %s90
      %p92 = scmp.eq.s32.totalorder %s17, 0
      %p93 = por %p91, %p92
      %s94 = ssub.s32 %s19, %s33
      %p95 = scmp.eq.s32.totalorder %s94, 0
      %s97 = sadd.s32 %s96, 1
      %s98 = scalar_select %p95, %s96, %s97
      %p101 = pneg %p95
      %p102 = scmp.eq.s32.totalorder %s11, 4
      %p103 = por %p101, %p102
      %p104 = scmp.ne.s32.totalorder %s96, %s99
      %p105 = scmp.eq.s32.totalorder %s11, 0
      %p106 = por %p104, %p105
      %p107 = scmp.ne.s32.totalorder %s96, %s99
      %p108 = scmp.eq.s32.totalorder %s16, 4
      %p109 = por %p107, %p108
      %p110 = scmp.ne.s32.totalorder %s99, %s100
      %p111 = scmp.eq.s32.totalorder %s16, 0
      %p112 = por %p110, %p111
      %p113 = scmp.ne.s32.totalorder %s99, %s100
      %p114 = scmp.eq.s32.totalorder %s17, 4
      %p115 = por %p113, %p114
      %p117 = scmp.ne.s32.totalorder %s100, %s116
      %p118 = scmp.eq.s32.totalorder %s17, 0
      %p119 = por %p117, %p118
      %s120 = ssub.s32 %s18, %s37
      %s121 = ssub.s32 %s19, %s33
      %s122 = sor.u32 %s120, %s121
      %p123 = scmp.eq.s32.totalorder %s122, 0
      %s125 = sadd.s32 %s124, 1
      %s126 = scalar_select %p123, %s124, %s125
      %p129 = pneg %p123
      %p130 = scmp.eq.s32.totalorder %s11, 4
      %p131 = por %p129, %p130
      %p132 = scmp.ne.s32.totalorder %s124, %s127
      %p133 = scmp.eq.s32.totalorder %s11, 0
      %p134 = por %p132, %p133
      %p135 = scmp.ne.s32.totalorder %s124, %s127
      %p136 = scmp.eq.s32.totalorder %s16, 4
      %p137 = por %p135, %p136
      %p138 = scmp.ne.s32.totalorder %s127, %s128
      %p139 = scmp.eq.s32.totalorder %s16, 0
      %p140 = por %p138, %p139
      %p141 = scmp.ne.s32.totalorder %s127, %s128
      %p142 = scmp.eq.s32.totalorder %s17, 4
      %p143 = por %p141, %p142
      %p145 = scmp.ne.s32.totalorder %s128, %s144
      %p146 = scmp.eq.s32.totalorder %s17, 0
      %p147 = por %p145, %p146
      %p148 = scmp.le.s32.totalorder 1, %s11
      %p149 = scmp.lt.s32.totalorder %s11, 6
      %p150 = pnand %p148, %p149
      %p151 = pneg %p150
      // Predicated region
      $region9: #{lenet5_forward.7} parent=5 // pred_check
        _
      $region10: #{lenet5_forward.7} parent=5 // pred_check_branch
        %153 = sbr.rel (%p150) target = $region12
      $region11: #{lenet5_forward.7} parent=5 // pred_region
        %s154 = ssub.s32 %s11, 1
        // Predicated region
        $region13: #{lenet5_forward.7} parent=11 // pred_check
          %p155 = pneg %p86
        $region14: #{lenet5_forward.7} parent=11 // pred_check_branch
          %157 = sbr.rel (%p155) target = $region16
        $region15: #{lenet5_forward.7} parent=11 // pred_region
          %s158 = smul.u32 5, %s23
          %s160 = ssub.s32 320, 320
          %161 = vsyncadd [#allocation4], %s160
          %s162 = sadd.s32 %s22, %s158
          %s163 = smul.addr %s162, 64
          %s164 = scalar_lea.hbm %s1, %s163
          %s165 = sshll.u32 [#allocation3], 4
          %s166 = int_to_ptr.vmem [resolvable:$true] %s165
          %171 = dma.hbm_to_vmem [thread:$0]  %s164, 320, %s166, [#allocation4], 64, 64, 4
        $region16: #{lenet5_forward.7} parent=11 // pred_fallthru
          _
        // Predicated region
        $region17: #{lenet5_forward.7} parent=11 // pred_check
          %p172 = pneg %p112
        $region18: #{lenet5_forward.7} parent=11 // pred_check_branch
          %174 = sbr.rel (%p172) target = $region20
        $region19: #{lenet5_forward.7} parent=11 // pred_region
          %s176 = ssub.s32 16, 16
          %177 = vsyncadd [#allocation6], %s176
          %s178 = smul.addr %s22, 16
          %s179 = scalar_lea.hbm %s2, %s178
          %s181 = sshll.u32 [#allocation5], 4
          %s182 = int_to_ptr.vmem [resolvable:$true] %s181
          %184 = dma.hbm_to_vmem [thread:$0]  %s179, 16, %s182, [#allocation6]
        $region20: #{lenet5_forward.7} parent=11 // pred_fallthru
          _
      $region12: #{lenet5_forward.7} parent=5 // pred_fallthru
        _
      %p185 = scmp.lt.s32.totalorder %s11, 5
      // Predicated region
      $region21: #{lenet5_forward.7} parent=5 // pred_check
        %p186 = pneg %p185
      $region22: #{lenet5_forward.7} parent=5 // pred_check_branch
        %188 = sbr.rel (%p186) target = $region24
      $region23: #{lenet5_forward.7} parent=5 // pred_region
        // Predicated region
        $region25: #{lenet5_forward.7} parent=23 // pred_check
          %p189 = pneg %p52
        $region26: #{lenet5_forward.7} parent=23 // pred_check_branch
          %191 = sbr.rel (%p189) target = $region28
        $region27: #{lenet5_forward.7} parent=23 // pred_region
          %s192 = smul.u32 45, %s18
          %p193 = scmp.lt.s32.totalorder %s192, 224
          %s194 = scalar_select %p193, %s192, 224
          %p195 = scmp.lt.s32.totalorder %s20, 0
          %s196 = scalar_select %p195, %s20, 0
          %s197 = sadd.s32 %s196, %s194
          %s198 = smul.addr %s197, 4
          %s199 = scalar_lea.vmem %s0, %s198
          %s200 = smul.u32 45, %s18
        $region28: #{lenet5_forward.7} parent=23 // pred_fallthru
          _
      $region24: #{lenet5_forward.7} parent=5 // pred_fallthru
        _
      %p201 = scmp.le.s32.totalorder 1, %s11
      %p202 = scmp.lt.s32.totalorder %s11, 6
      %p203 = pnand %p201, %p202
      %p204 = pneg %p203
      // Predicated region
      $region29: #{lenet5_forward.7} parent=5 // pred_check
        _
      $region30: #{lenet5_forward.7} parent=5 // pred_check_branch
        %206 = sbr.rel (%p203) target = $region32
      $region31: #{lenet5_forward.7} parent=5 // pred_region
        %s207 = ssub.s32 %s11, 1
        // Predicated region
        $region33: #{lenet5_forward.7} parent=31 // pred_check
          %p208 = pneg %p86
        $region34: #{lenet5_forward.7} parent=31 // pred_check_branch
          %210 = sbr.rel (%p208) target = $region36
        $region35: #{lenet5_forward.7} parent=31 // pred_region
          %211 = dma.done [#allocation4], 320
        $region36: #{lenet5_forward.7} parent=31 // pred_fallthru
          _
        // Predicated region
        $region37: #{lenet5_forward.7} parent=31 // pred_check
          %p212 = pneg %p112
        $region38: #{lenet5_forward.7} parent=31 // pred_check_branch
          %214 = sbr.rel (%p212) target = $region40
        $region39: #{lenet5_forward.7} parent=31 // pred_region
          %215 = dma.done [#allocation6], 16
        $region40: #{lenet5_forward.7} parent=31 // pred_fallthru
          _
        %s216 = smul.u32 45, %s21
        %p217 = scmp.lt.s32.totalorder %s216, 224
        %s218 = scalar_select %p217, %s216, 224
        %p219 = scmp.lt.s32.totalorder %s23, 0
        %s220 = scalar_select %p219, %s23, 0
        %s221 = sadd.s32 %s220, %s218
        %s222 = smul.addr %s221, 4
        %s223 = scalar_lea.vmem %s0, %s222
        %p224 = pneg %p58
        %p225 = pneg %p55
        %p226 = pneg %p86
        %p227 = pneg %p83
        %p228 = pneg %p112
        %p229 = pneg %p109
        %p230 = pneg %p140
        %p231 = pneg %p137
        %s232 = smul.u32 45, %s21
        %p233 = scmp.lt.s32.totalorder %s232, 224
        %s234 = scalar_select %p233, %s232, 224
        %p235 = scmp.lt.s32.totalorder %s22, 0
        %s236 = scalar_select %p235, %s22, 0
        %s237 = sadd.s32 %s236, %s234
        %s238 = smul.addr %s237, 4
        %s239 = scalar_lea.vmem %s3, %s238
        %s240 = smul.u32 45, %s21
        %p241 = scmp.lt.s32.totalorder %s240, 224
        %s242 = scalar_select %p241, %s240, 224
        %p243 = scmp.lt.s32.totalorder %s23, 0
        %s244 = scalar_select %p243, %s23, 0
        %s245 = sadd.s32 %s244, %s242
        %s246 = smul.addr %s245, 4
        %s247 = scalar_lea.vmem %s0, %s246
        %s248 = smul.u32 45, %s21
        %s249 = smul.u32 5, %s23
        %s250 = smul.u32 45, %s21
        %p251 = scmp.lt.s32.totalorder %s250, 224
        %s252 = scalar_select %p251, %s250, 224
        %p253 = scmp.lt.s32.totalorder %s22, 0
        %s254 = scalar_select %p253, %s22, 0
        %s255 = sadd.s32 %s254, %s252
        %s256 = smul.addr %s255, 4
        %s257 = scalar_lea.vmem %s3, %s256
        %s258 = smul.u32 45, %s21
        %p260 = scmp.eq.s32.totalorder %s23, 0
        // Predicated region
        $region41: #{lenet5_forward.7} parent=31 // pred_check
          %p261 = pneg %p260
        $region42: #{lenet5_forward.7} parent=31 // pred_check_branch
          %263 = sbr.rel (%p261) target = $region44
        $region43: #{lenet5_forward.7} parent=31 // pred_region
          %264 = vst [vmem:[#allocation2] sm:$0xff] 0.0
          %265 = vst [vmem:[#allocation2 + $0x8] sm:$0xff] 0.0
          %266 = vst [vmem:[#allocation2 + $0x10] sm:$0xff] 0.0
          %267 = vst [vmem:[#allocation2 + $0x18] sm:$0xff] 0.0
          %268 = vst [vmem:[#allocation2 + $0x20] sm:$0xff] 0.0
          %269 = vst [vmem:[#allocation2 + $0x28] sm:$0xff] 0.0
          %270 = vst [vmem:[#allocation2 + $0x30] sm:$0xff] 0.0
          %271 = vst [vmem:[#allocation2 + $0x38] sm:$0xff] 0.0
          %272 = vst [vmem:[#allocation2 + $0x40] sm:$0xff] 0.0
          %273 = vst [vmem:[#allocation2 + $0x48] sm:$0xff] 0.0
          %274 = vst [vmem:[#allocation2 + $0x50] sm:$0xff] 0.0
          %275 = vst [vmem:[#allocation2 + $0x58] sm:$0xff] 0.0
          %276 = vst [vmem:[#allocation2 + $0x60] sm:$0xff] 0.0
          %277 = vst [vmem:[#allocation2 + $0x68] sm:$0xff] 0.0
          %278 = vst [vmem:[#allocation2 + $0x70] sm:$0xff] 0.0
          %279 = vst [vmem:[#allocation2 + $0x78] sm:$0xff] 0.0
          %280 = vst [vmem:[#allocation2 + $0x80] sm:$0xff] 0.0
          %281 = vst [vmem:[#allocation2 + $0x88] sm:$0xff] 0.0
          %282 = vst [vmem:[#allocation2 + $0x90] sm:$0xff] 0.0
          %283 = vst [vmem:[#allocation2 + $0x98] sm:$0xff] 0.0
          %284 = vst [vmem:[#allocation2 + $0xa0] sm:$0xff] 0.0
          %285 = vst [vmem:[#allocation2 + $0xa8] sm:$0xff] 0.0
          %286 = vst [vmem:[#allocation2 + $0xb0] sm:$0xff] 0.0
          %287 = vst [vmem:[#allocation2 + $0xb8] sm:$0xff] 0.0
          %288 = vst [vmem:[#allocation2 + $0xc0] sm:$0xff] 0.0
          %289 = vst [vmem:[#allocation2 + $0xc8] sm:$0xff] 0.0
          %290 = vst [vmem:[#allocation2 + $0xd0] sm:$0xff] 0.0
          %291 = vst [vmem:[#allocation2 + $0xd8] sm:$0xff] 0.0
          %292 = vst [vmem:[#allocation2 + $0xe0] sm:$0xff] 0.0
          %293 = vst [vmem:[#allocation2 + $0xe8] sm:$0xff] 0.0
          %294 = vst [vmem:[#allocation2 + $0xf0] sm:$0xff] 0.0
          %295 = vst [vmem:[#allocation2 + $0xf8] sm:$0xff] 0.0
          %296 = vst [vmem:[#allocation2 + $0x100] sm:$0xff] 0.0
          %297 = vst [vmem:[#allocation2 + $0x108] sm:$0xff] 0.0
          %298 = vst [vmem:[#allocation2 + $0x110] sm:$0xff] 0.0
          %299 = vst [vmem:[#allocation2 + $0x118] sm:$0xff] 0.0
          %300 = vst [vmem:[#allocation2 + $0x120] sm:$0xff] 0.0
          %301 = vst [vmem:[#allocation2 + $0x128] sm:$0xff] 0.0
          %302 = vst [vmem:[#allocation2 + $0x130] sm:$0xff] 0.0
          %303 = vst [vmem:[#allocation2 + $0x138] sm:$0xff] 0.0
          %304 = vst [vmem:[#allocation2 + $0x140] sm:$0xff] 0.0
          %305 = vst [vmem:[#allocation2 + $0x148] sm:$0xff] 0.0
          %306 = vst [vmem:[#allocation2 + $0x150] sm:$0xff] 0.0
          %307 = vst [vmem:[#allocation2 + $0x158] sm:$0xff] 0.0
          %308 = vst [vmem:[#allocation2 + $0x160] sm:$0xff] 0.0
        $region44: #{lenet5_forward.7} parent=31 // pred_fallthru
          _
        %v309 = vld [vmem:[#allocation2] sm:$0xff]
        %v310 = vld [vmem:[#allocation2 + $0x8] sm:$0xff]
        %v311 = vld [vmem:[#allocation2 + $0x10] sm:$0xff]
        %v312 = vld [vmem:[#allocation2 + $0x18] sm:$0xff]
        %v313 = vld [vmem:[#allocation2 + $0x20] sm:$0xff]
        %v314 = vld [vmem:[#allocation2 + $0x28] sm:$0xff]
        %v315 = vld [vmem:[#allocation2 + $0x30] sm:$0xff]
        %v316 = vld [vmem:[#allocation2 + $0x38] sm:$0xff]
        %v317 = vld [vmem:[#allocation2 + $0x40] sm:$0xff]
        %v318 = vld [vmem:[#allocation2 + $0x48] sm:$0xff]
        %v319 = vld [vmem:[#allocation2 + $0x50] sm:$0xff]
        %v320 = vld [vmem:[#allocation2 + $0x58] sm:$0xff]
        %v321 = vld [vmem:[#allocation2 + $0x60] sm:$0xff]
        %v322 = vld [vmem:[#allocation2 + $0x68] sm:$0xff]
        %v323 = vld [vmem:[#allocation2 + $0x70] sm:$0xff]
        %v324 = vld [vmem:[#allocation2 + $0x78] sm:$0xff]
        %v325 = vld [vmem:[#allocation2 + $0x80] sm:$0xff]
        %v326 = vld [vmem:[#allocation2 + $0x88] sm:$0xff]
        %v327 = vld [vmem:[#allocation2 + $0x90] sm:$0xff]
        %v328 = vld [vmem:[#allocation2 + $0x98] sm:$0xff]
        %v329 = vld [vmem:[#allocation2 + $0xa0] sm:$0xff]
        %v330 = vld [vmem:[#allocation2 + $0xa8] sm:$0xff]
        %v331 = vld [vmem:[#allocation2 + $0xb0] sm:$0xff]
        %v332 = vld [vmem:[#allocation2 + $0xb8] sm:$0xff]
        %v333 = vld [vmem:[#allocation2 + $0xc0] sm:$0xff]
        %v334 = vld [vmem:[#allocation2 + $0xc8] sm:$0xff]
        %v335 = vld [vmem:[#allocation2 + $0xd0] sm:$0xff]
        %v336 = vld [vmem:[#allocation2 + $0xd8] sm:$0xff]
        %v337 = vld [vmem:[#allocation2 + $0xe0] sm:$0xff]
        %v338 = vld [vmem:[#allocation2 + $0xe8] sm:$0xff]
        %v339 = vld [vmem:[#allocation2 + $0xf0] sm:$0xff]
        %v340 = vld [vmem:[#allocation2 + $0xf8] sm:$0xff]
        %v341 = vld [vmem:[#allocation2 + $0x100] sm:$0xff]
        %v342 = vld [vmem:[#allocation2 + $0x108] sm:$0xff]
        %v343 = vld [vmem:[#allocation2 + $0x110] sm:$0xff]
        %v344 = vld [vmem:[#allocation2 + $0x118] sm:$0xff]
        %v345 = vld [vmem:[#allocation2 + $0x120] sm:$0xff]
        %v346 = vld [vmem:[#allocation2 + $0x128] sm:$0xff]
        %v347 = vld [vmem:[#allocation2 + $0x130] sm:$0xff]
        %v348 = vld [vmem:[#allocation2 + $0x138] sm:$0xff]
        %v349 = vld [vmem:[#allocation2 + $0x140] sm:$0xff]
        %v350 = vld [vmem:[#allocation2 + $0x148] sm:$0xff]
        %v351 = vld [vmem:[#allocation2 + $0x150] sm:$0xff]
        %v352 = vld [vmem:[#allocation2 + $0x158] sm:$0xff]
        %v353 = vld [vmem:[#allocation2 + $0x160] sm:$0xff]
        %v354 = vld [vmem:[%s247] sm:$0xf]
        %v355 = vld [vmem:[%s247 + $0x4] sm:$0xf]
        %v356 = vld [vmem:[%s247 + $0x8] sm:$0xf]
        %v357 = vld [vmem:[%s247 + $0xc] sm:$0xf]
        %v358 = vld [vmem:[%s247 + $0x10] sm:$0xf]
        %v359 = vld [vmem:[%s247 + $0x14] sm:$0xf]
        %v360 = vld [vmem:[%s247 + $0x18] sm:$0xf]
        %v361 = vld [vmem:[%s247 + $0x1c] sm:$0xf]
        %v362 = vld [vmem:[%s247 + $0x20] sm:$0xf]
        %v363 = vld [vmem:[%s247 + $0x24] sm:$0xf]
        %v364 = vld [vmem:[%s247 + $0x28] sm:$0xf]
        %v365 = vld [vmem:[%s247 + $0x2c] sm:$0xf]
        %v366 = vld [vmem:[%s247 + $0x30] sm:$0xf]
        %v367 = vld [vmem:[%s247 + $0x34] sm:$0xf]
        %v368 = vld [vmem:[%s247 + $0x38] sm:$0xf]
        %v369 = vld [vmem:[%s247 + $0x3c] sm:$0xf]
        %v370 = vld [vmem:[%s247 + $0x40] sm:$0xf]
        %v371 = vld [vmem:[%s247 + $0x44] sm:$0xf]
        %v372 = vld [vmem:[%s247 + $0x48] sm:$0xf]
        %v373 = vld [vmem:[%s247 + $0x4c] sm:$0xf]
        %v374 = vld [vmem:[%s247 + $0x50] sm:$0xf]
        %v375 = vld [vmem:[%s247 + $0x54] sm:$0xf]
        %v376 = vld [vmem:[%s247 + $0x58] sm:$0xf]
        %v377 = vld [vmem:[%s247 + $0x5c] sm:$0xf]
        %v378 = vld [vmem:[%s247 + $0x60] sm:$0xf]
        %v379 = vld [vmem:[%s247 + $0x64] sm:$0xf]
        %v380 = vld [vmem:[%s247 + $0x68] sm:$0xf]
        %v381 = vld [vmem:[%s247 + $0x6c] sm:$0xf]
        %v382 = vld [vmem:[%s247 + $0x70] sm:$0xf]
        %v383 = vld [vmem:[%s247 + $0x74] sm:$0xf]
        %v384 = vld [vmem:[%s247 + $0x78] sm:$0xf]
        %v385 = vld [vmem:[%s247 + $0x7c] sm:$0xf]
        %v386 = vld [vmem:[%s247 + $0x80] sm:$0xf]
        %v387 = vld [vmem:[%s247 + $0x84] sm:$0xf]
        %v388 = vld [vmem:[%s247 + $0x88] sm:$0xf]
        %v389 = vld [vmem:[%s247 + $0x8c] sm:$0xf]
        %v390 = vld [vmem:[%s247 + $0x90] sm:$0xf]
        %v391 = vld [vmem:[%s247 + $0x94] sm:$0xf]
        %v392 = vld [vmem:[%s247 + $0x98] sm:$0xf]
        %v393 = vld [vmem:[%s247 + $0x9c] sm:$0xf]
        %v394 = vld [vmem:[%s247 + $0xa0] sm:$0xf]
        %v395 = vld [vmem:[%s247 + $0xa4] sm:$0xf]
        %v396 = vld [vmem:[%s247 + $0xa8] sm:$0xf]
        %v397 = vld [vmem:[%s247 + $0xac] sm:$0xf]
        %v398 = vld [vmem:[%s247 + $0xb0] sm:$0xf]
        %v399 = vld [vmem:[#allocation3] sm:$0xf]
        %v400 = vld [vmem:[#allocation3 + $0x4] sm:$0xf]
        %v401 = vld [vmem:[#allocation3 + $0x8] sm:$0xf]
        %v402 = vld [vmem:[#allocation3 + $0xc] sm:$0xf]
        %v403 = vld [vmem:[#allocation3 + $0x10] sm:$0x3]
        %v449 = vunpack.c.l.b16 %v354
        %v450 = vunpack.c.l.b16 %v355
        %v451 = vunpack.c.l.b16 %v356
        %v452 = vunpack.c.l.b16 %v357
        %v453 = vunpack.c.l.b16 %v358
        %v454 = vunpack.c.l.b16 %v359
        %v455 = vunpack.c.l.b16 %v360
        %v456 = vunpack.c.l.b16 %v361
        %v457 = vunpack.c.l.b16 %v362
        %v458 = vunpack.c.l.b16 %v363
        %v459 = vunpack.c.l.b16 %v364
        %v460 = vunpack.c.l.b16 %v365
        %v461 = vunpack.c.l.b16 %v366
        %v462 = vunpack.c.l.b16 %v367
        %v463 = vunpack.c.l.b16 %v368
        %v464 = vunpack.c.l.b16 %v369
        %v465 = vunpack.c.l.b16 %v370
        %v466 = vunpack.c.l.b16 %v371
        %v467 = vunpack.c.l.b16 %v372
        %v468 = vunpack.c.l.b16 %v373
        %v469 = vunpack.c.l.b16 %v374
        %v470 = vunpack.c.l.b16 %v375
        %v471 = vunpack.c.l.b16 %v376
        %v472 = vunpack.c.l.b16 %v377
        %v473 = vunpack.c.l.b16 %v378
        %v474 = vunpack.c.l.b16 %v379
        %v475 = vunpack.c.l.b16 %v380
        %v476 = vunpack.c.l.b16 %v381
        %v477 = vunpack.c.l.b16 %v382
        %v478 = vunpack.c.l.b16 %v383
        %v479 = vunpack.c.l.b16 %v384
        %v480 = vunpack.c.l.b16 %v385
        %v481 = vunpack.c.l.b16 %v386
        %v482 = vunpack.c.l.b16 %v387
        %v483 = vunpack.c.l.b16 %v388
        %v484 = vunpack.c.l.b16 %v389
        %v485 = vunpack.c.l.b16 %v390
        %v486 = vunpack.c.l.b16 %v391
        %v487 = vunpack.c.l.b16 %v392
        %v488 = vunpack.c.l.b16 %v393
        %v489 = vunpack.c.l.b16 %v394
        %v490 = vunpack.c.l.b16 %v395
        %v491 = vunpack.c.l.b16 %v396
        %v492 = vunpack.c.l.b16 %v397
        %v493 = vunpack.c.l.b16 %v398
        %v494 = vpack.c.b16 %v450, %v449
        %v495 = vpack.c.b16 %v452, %v451
        %v496 = vpack.c.b16 %v454, %v453
        %v497 = vpack.c.b16 %v456, %v455
        %v498 = vpack.c.b16 %v458, %v457
        %v499 = vpack.c.b16 %v460, %v459
        %v500 = vpack.c.b16 %v462, %v461
        %v501 = vpack.c.b16 %v464, %v463
        %v502 = vpack.c.b16 %v466, %v465
        %v503 = vpack.c.b16 %v468, %v467
        %v504 = vpack.c.b16 %v470, %v469
        %v505 = vpack.c.b16 %v472, %v471
        %v506 = vpack.c.b16 %v474, %v473
        %v507 = vpack.c.b16 %v476, %v475
        %v508 = vpack.c.b16 %v478, %v477
        %v509 = vpack.c.b16 %v480, %v479
        %v510 = vpack.c.b16 %v482, %v481
        %v511 = vpack.c.b16 %v484, %v483
        %v512 = vpack.c.b16 %v486, %v485
        %v513 = vpack.c.b16 %v488, %v487
        %v514 = vpack.c.b16 %v490, %v489
        %v515 = vpack.c.b16 %v492, %v491
        %v516 = vpack.c.b16 %v493, %v493
        %v522 = vunpack.c.l.b16 %v399
        %v523 = vunpack.c.l.b16 %v400
        %v524 = vunpack.c.l.b16 %v401
        %v525 = vunpack.c.l.b16 %v402
        %v526 = vunpack.c.l.b16 %v403
        %v527 = vpack.c.b16 %v523, %v522
        %v528 = vpack.c.b16 %v525, %v524
        %v529 = vpack.c.b16 %v526, %v526
        %vm532 = vcmask 293888
        %v534 = vsel %vm532, %v494, 0
        %v537 = vsel %vm532, %v495, 0
        %v540 = vsel %vm532, %v496, 0
        %v543 = vsel %vm532, %v497, 0
        %v546 = vsel %vm532, %v498, 0
        %v549 = vsel %vm532, %v499, 0
        %v552 = vsel %vm532, %v500, 0
        %v555 = vsel %vm532, %v501, 0
        %v558 = vsel %vm532, %v502, 0
        %v561 = vsel %vm532, %v503, 0
        %v564 = vsel %vm532, %v504, 0
        %v567 = vsel %vm532, %v505, 0
        %v570 = vsel %vm532, %v506, 0
        %v573 = vsel %vm532, %v507, 0
        %v576 = vsel %vm532, %v508, 0
        %v579 = vsel %vm532, %v509, 0
        %v582 = vsel %vm532, %v510, 0
        %v585 = vsel %vm532, %v511, 0
        %v588 = vsel %vm532, %v512, 0
        %v591 = vsel %vm532, %v513, 0
        %v594 = vsel %vm532, %v514, 0
        %v597 = vsel %vm532, %v515, 0
        %v600 = vsel %vm532, %v516, 0
        %vm602 = vcmask 1041408
        %v604 = vsel %vm602, %v529, 0
        %606 = vmatprep.subr.bf16.mxu0 0
        %607 = vmatpush1.bf16.msra.mxu0 %v527
        %608 = vmatprep.subr.bf16.mxu0 0
        %609 = vmatpush1.bf16.msra.mxu0 %v528
        %610 = vmatprep.subr.bf16.mxu0 0
        %611 = vmatpush1.bf16.msra.mxu0 %v604
        %612 = vmatprep.subr.bf16.mxu0 0
        %613 = vmatpush1.bf16.msra.mxu0 0
        %614 = vmatprep.subr.bf16.mxu0 0
        %615 = vmatpush1.bf16.msra.mxu0 0
        %616 = vmatprep.subr.bf16.mxu0 0
        %617 = vmatpush1.bf16.msra.mxu0 0
        %618 = vmatprep.subr.bf16.mxu0 0
        %619 = vmatpush1.bf16.msra.mxu0 0
        %620 = vmatprep.subr.bf16.mxu0 0
        %621 = vmatpush1.bf16.msra.mxu0 0
        %622 = vmatprep.subr.bf16.mxu0 0
        %623 = vmatpush1.bf16.msra.mxu0 0
        %624 = vmatprep.subr.bf16.mxu0 0
        %625 = vmatpush1.bf16.msra.mxu0 0
        %626 = vmatprep.subr.bf16.mxu0 0
        %627 = vmatpush1.bf16.msra.mxu0 0
        %628 = vmatprep.subr.bf16.mxu0 0
        %629 = vmatpush1.bf16.msra.mxu0 0
        %630 = vmatprep.subr.bf16.mxu0 0
        %631 = vmatpush1.bf16.msra.mxu0 0
        %632 = vmatprep.subr.bf16.mxu0 0
        %633 = vmatpush1.bf16.msra.mxu0 0
        %634 = vmatprep.subr.bf16.mxu0 0
        %635 = vmatpush1.bf16.msra.mxu0 0
        %636 = vmatprep.subr.bf16.mxu0 0
        %637 = vmatpush1.bf16.msra.mxu0 0
        %638 = vmatprep.mubr.bf16.mxu0 0
        %639 = vmatmul.mubr.bf16.gmra.mrb[0].mxu0 %v534
        %v640 = vpop.f32.mrb[0].mxu0
        %v641 = vadd.f32 0.0, %v640
        %v642 = vpop.f32.mrb[0].mxu0
        %v643 = vpop.f32.mrb[0].mxu0
        %v644 = vadd.f32 0.0, %v643
        %v645 = vpop.f32.mrb[0].mxu0
        %646 = vmatprep.mubr.bf16.mxu0 0
        %647 = vmatmul.mubr.bf16.gmra.mrb[0].mxu0 %v537
        %v648 = vpop.f32.mrb[0].mxu0
        %v649 = vadd.f32 0.0, %v648
        %v650 = vpop.f32.mrb[0].mxu0
        %v651 = vpop.f32.mrb[0].mxu0
        %v652 = vadd.f32 0.0, %v651
        %v653 = vpop.f32.mrb[0].mxu0
        %654 = vmatprep.mubr.bf16.mxu0 0
        %655 = vmatmul.mubr.bf16.gmra.mrb[0].mxu0 %v540
        %v656 = vpop.f32.mrb[0].mxu0
        %v657 = vadd.f32 0.0, %v656
        %v658 = vpop.f32.mrb[0].mxu0
        %v659 = vpop.f32.mrb[0].mxu0
        %v660 = vadd.f32 0.0, %v659
        %v661 = vpop.f32.mrb[0].mxu0
        %662 = vmatprep.mubr.bf16.mxu0 0
        %663 = vmatmul.mubr.bf16.gmra.mrb[0].mxu0 %v543
        %v664 = vpop.f32.mrb[0].mxu0
        %v665 = vadd.f32 0.0, %v664
        %v666 = vpop.f32.mrb[0].mxu0
        %v667 = vpop.f32.mrb[0].mxu0
        %v668 = vadd.f32 0.0, %v667
        %v669 = vpop.f32.mrb[0].mxu0
        %670 = vmatprep.mubr.bf16.mxu0 0
        %671 = vmatmul.mubr.bf16.gmra.mrb[0].mxu0 %v546
        %v672 = vpop.f32.mrb[0].mxu0
        %v673 = vadd.f32 0.0, %v672
        %v674 = vpop.f32.mrb[0].mxu0
        %v675 = vpop.f32.mrb[0].mxu0
        %v676 = vadd.f32 0.0, %v675
        %v677 = vpop.f32.mrb[0].mxu0
        %678 = vmatprep.mubr.bf16.mxu0 0
        %679 = vmatmul.mubr.bf16.gmra.mrb[0].mxu0 %v549
        %v680 = vpop.f32.mrb[0].mxu0
        %v681 = vadd.f32 0.0, %v680
        %v682 = vpop.f32.mrb[0].mxu0
        %v683 = vpop.f32.mrb[0].mxu0
        %v684 = vadd.f32 0.0, %v683
        %v685 = vpop.f32.mrb[0].mxu0
        %686 = vmatprep.mubr.bf16.mxu0 0
        %687 = vmatmul.mubr.bf16.gmra.mrb[0].mxu0 %v552
        %v688 = vpop.f32.mrb[0].mxu0
        %v689 = vadd.f32 0.0, %v688
        %v690 = vpop.f32.mrb[0].mxu0
        %v691 = vpop.f32.mrb[0].mxu0
        %v692 = vadd.f32 0.0, %v691
        %v693 = vpop.f32.mrb[0].mxu0
        %694 = vmatprep.mubr.bf16.mxu0 0
        %695 = vmatmul.mubr.bf16.gmra.mrb[0].mxu0 %v555
        %v696 = vpop.f32.mrb[0].mxu0
        %v697 = vadd.f32 0.0, %v696
        %v698 = vpop.f32.mrb[0].mxu0
        %v699 = vpop.f32.mrb[0].mxu0
        %v700 = vadd.f32 0.0, %v699
        %v701 = vpop.f32.mrb[0].mxu0
        %702 = vmatprep.mubr.bf16.mxu0 0
        %703 = vmatmul.mubr.bf16.gmra.mrb[0].mxu0 %v558
        %v704 = vpop.f32.mrb[0].mxu0
        %v705 = vadd.f32 0.0, %v704
        %v706 = vpop.f32.mrb[0].mxu0
        %v707 = vpop.f32.mrb[0].mxu0
        %v708 = vadd.f32 0.0, %v707
        %v709 = vpop.f32.mrb[0].mxu0
        %710 = vmatprep.mubr.bf16.mxu0 0
        %711 = vmatmul.mubr.bf16.gmra.mrb[0].mxu0 %v561
        %v712 = vpop.f32.mrb[0].mxu0
        %v713 = vadd.f32 0.0, %v712
        %v714 = vpop.f32.mrb[0].mxu0
        %v715 = vpop.f32.mrb[0].mxu0
        %v716 = vadd.f32 0.0, %v715
        %v717 = vpop.f32.mrb[0].mxu0
        %718 = vmatprep.mubr.bf16.mxu0 0
        %719 = vmatmul.mubr.bf16.gmra.mrb[0].mxu0 %v564
        %v720 = vpop.f32.mrb[0].mxu0
        %v721 = vadd.f32 0.0, %v720
        %v722 = vpop.f32.mrb[0].mxu0
        %v723 = vpop.f32.mrb[0].mxu0
        %v724 = vadd.f32 0.0, %v723
        %v725 = vpop.f32.mrb[0].mxu0
        %726 = vmatprep.mubr.bf16.mxu0 0
        %727 = vmatmul.mubr.bf16.gmra.mrb[0].mxu0 %v567
        %v728 = vpop.f32.mrb[0].mxu0
        %v729 = vadd.f32 0.0, %v728
        %v730 = vpop.f32.mrb[0].mxu0
        %v731 = vpop.f32.mrb[0].mxu0
        %v732 = vadd.f32 0.0, %v731
        %v733 = vpop.f32.mrb[0].mxu0
        %734 = vmatprep.mubr.bf16.mxu0 0
        %735 = vmatmul.mubr.bf16.gmra.mrb[0].mxu0 %v570
        %v736 = vpop.f32.mrb[0].mxu0
        %v737 = vadd.f32 0.0, %v736
        %v738 = vpop.f32.mrb[0].mxu0
        %v739 = vpop.f32.mrb[0].mxu0
        %v740 = vadd.f32 0.0, %v739
        %v741 = vpop.f32.mrb[0].mxu0
        %742 = vmatprep.mubr.bf16.mxu0 0
        %743 = vmatmul.mubr.bf16.gmra.mrb[0].mxu0 %v573
        %v744 = vpop.f32.mrb[0].mxu0
        %v745 = vadd.f32 0.0, %v744
        %v746 = vpop.f32.mrb[0].mxu0
        %v747 = vpop.f32.mrb[0].mxu0
        %v748 = vadd.f32 0.0, %v747
        %v749 = vpop.f32.mrb[0].mxu0
        %750 = vmatprep.mubr.bf16.mxu0 0
        %751 = vmatmul.mubr.bf16.gmra.mrb[0].mxu0 %v576
        %v752 = vpop.f32.mrb[0].mxu0
        %v753 = vadd.f32 0.0, %v752
        %v754 = vpop.f32.mrb[0].mxu0
        %v755 = vpop.f32.mrb[0].mxu0
        %v756 = vadd.f32 0.0, %v755
        %v757 = vpop.f32.mrb[0].mxu0
        %758 = vmatprep.mubr.bf16.mxu0 0
        %759 = vmatmul.mubr.bf16.gmra.mrb[0].mxu0 %v579
        %v760 = vpop.f32.mrb[0].mxu0
        %v761 = vadd.f32 0.0, %v760
        %v762 = vpop.f32.mrb[0].mxu0
        %v763 = vpop.f32.mrb[0].mxu0
        %v764 = vadd.f32 0.0, %v763
        %v765 = vpop.f32.mrb[0].mxu0
        %766 = vmatprep.mubr.bf16.mxu0 0
        %767 = vmatmul.mubr.bf16.gmra.mrb[0].mxu0 %v582
        %v768 = vpop.f32.mrb[0].mxu0
        %v769 = vadd.f32 0.0, %v768
        %v770 = vpop.f32.mrb[0].mxu0
        %v771 = vpop.f32.mrb[0].mxu0
        %v772 = vadd.f32 0.0, %v771
        %v773 = vpop.f32.mrb[0].mxu0
        %774 = vmatprep.mubr.bf16.mxu0 0
        %775 = vmatmul.mubr.bf16.gmra.mrb[0].mxu0 %v585
        %v776 = vpop.f32.mrb[0].mxu0
        %v777 = vadd.f32 0.0, %v776
        %v778 = vpop.f32.mrb[0].mxu0
        %v779 = vpop.f32.mrb[0].mxu0
        %v780 = vadd.f32 0.0, %v779
        %v781 = vpop.f32.mrb[0].mxu0
        %782 = vmatprep.mubr.bf16.mxu0 0
        %783 = vmatmul.mubr.bf16.gmra.mrb[0].mxu0 %v588
        %v784 = vpop.f32.mrb[0].mxu0
        %v785 = vadd.f32 0.0, %v784
        %v786 = vpop.f32.mrb[0].mxu0
        %v787 = vpop.f32.mrb[0].mxu0
        %v788 = vadd.f32 0.0, %v787
        %v789 = vpop.f32.mrb[0].mxu0
        %790 = vmatprep.mubr.bf16.mxu0 0
        %791 = vmatmul.mubr.bf16.gmra.mrb[0].mxu0 %v591
        %v792 = vpop.f32.mrb[0].mxu0
        %v793 = vadd.f32 0.0, %v792
        %v794 = vpop.f32.mrb[0].mxu0
        %v795 = vpop.f32.mrb[0].mxu0
        %v796 = vadd.f32 0.0, %v795
        %v797 = vpop.f32.mrb[0].mxu0
        %798 = vmatprep.mubr.bf16.mxu0 0
        %799 = vmatmul.mubr.bf16.gmra.mrb[0].mxu0 %v594
        %v800 = vpop.f32.mrb[0].mxu0
        %v801 = vadd.f32 0.0, %v800
        %v802 = vpop.f32.mrb[0].mxu0
        %v803 = vpop.f32.mrb[0].mxu0
        %v804 = vadd.f32 0.0, %v803
        %v805 = vpop.f32.mrb[0].mxu0
        %806 = vmatprep.mubr.bf16.mxu0 0
        %807 = vmatmul.mubr.bf16.gmra.mrb[0].mxu0 %v597
        %v808 = vpop.f32.mrb[0].mxu0
        %v809 = vadd.f32 0.0, %v808
        %v810 = vpop.f32.mrb[0].mxu0
        %v811 = vpop.f32.mrb[0].mxu0
        %v812 = vadd.f32 0.0, %v811
        %v813 = vpop.f32.mrb[0].mxu0
        %814 = vmatprep.mubr.bf16.mxu0 0
        %815 = vmatmul.mubr.bf16.gmra.mrb[0].mxu0 %v600
        %v816 = vpop.f32.mrb[0].mxu0
        %v817 = vadd.f32 0.0, %v816
        %v818 = vpop.f32.mrb[0].mxu0
        %v819 = vpop.f32.mrb[0].mxu0
        %v820 = vpop.f32.mrb[0].mxu0
        %821 = vdwg.mxu0
        %v822 = vadd.f32 %v309, %v641
        %v823 = vadd.f32 %v310, %v644
        %v824 = vadd.f32 %v311, %v649
        %v825 = vadd.f32 %v312, %v652
        %v826 = vadd.f32 %v313, %v657
        %v827 = vadd.f32 %v314, %v660
        %v828 = vadd.f32 %v315, %v665
        %v829 = vadd.f32 %v316, %v668
        %v830 = vadd.f32 %v317, %v673
        %v831 = vadd.f32 %v318, %v676
        %v832 = vadd.f32 %v319, %v681
        %v833 = vadd.f32 %v320, %v684
        %v834 = vadd.f32 %v321, %v689
        %v835 = vadd.f32 %v322, %v692
        %v836 = vadd.f32 %v323, %v697
        %v837 = vadd.f32 %v324, %v700
        %v838 = vadd.f32 %v325, %v705
        %v839 = vadd.f32 %v326, %v708
        %v840 = vadd.f32 %v327, %v713
        %v841 = vadd.f32 %v328, %v716
        %v842 = vadd.f32 %v329, %v721
        %v843 = vadd.f32 %v330, %v724
        %v844 = vadd.f32 %v331, %v729
        %v845 = vadd.f32 %v332, %v732
        %v846 = vadd.f32 %v333, %v737
        %v847 = vadd.f32 %v334, %v740
        %v848 = vadd.f32 %v335, %v745
        %v849 = vadd.f32 %v336, %v748
        %v850 = vadd.f32 %v337, %v753
        %v851 = vadd.f32 %v338, %v756
        %v852 = vadd.f32 %v339, %v761
        %v853 = vadd.f32 %v340, %v764
        %v854 = vadd.f32 %v341, %v769
        %v855 = vadd.f32 %v342, %v772
        %v856 = vadd.f32 %v343, %v777
        %v857 = vadd.f32 %v344, %v780
        %v858 = vadd.f32 %v345, %v785
        %v859 = vadd.f32 %v346, %v788
        %v860 = vadd.f32 %v347, %v793
        %v861 = vadd.f32 %v348, %v796
        %v862 = vadd.f32 %v349, %v801
        %v863 = vadd.f32 %v350, %v804
        %v864 = vadd.f32 %v351, %v809
        %v865 = vadd.f32 %v352, %v812
        %v866 = vadd.f32 %v353, %v817
        %867 = vst [vmem:[#allocation2] sm:$0xff] %v822
        %868 = vst [vmem:[#allocation2 + $0x8] sm:$0xff] %v823
        %869 = vst [vmem:[#allocation2 + $0x10] sm:$0xff] %v824
        %870 = vst [vmem:[#allocation2 + $0x18] sm:$0xff] %v825
        %871 = vst [vmem:[#allocation2 + $0x20] sm:$0xff] %v826
        %872 = vst [vmem:[#allocation2 + $0x28] sm:$0xff] %v827
        %873 = vst [vmem:[#allocation2 + $0x30] sm:$0xff] %v828
        %874 = vst [vmem:[#allocation2 + $0x38] sm:$0xff] %v829
        %875 = vst [vmem:[#allocation2 + $0x40] sm:$0xff] %v830
        %876 = vst [vmem:[#allocation2 + $0x48] sm:$0xff] %v831
        %877 = vst [vmem:[#allocation2 + $0x50] sm:$0xff] %v832
        %878 = vst [vmem:[#allocation2 + $0x58] sm:$0xff] %v833
        %879 = vst [vmem:[#allocation2 + $0x60] sm:$0xff] %v834
        %880 = vst [vmem:[#allocation2 + $0x68] sm:$0xff] %v835
        %881 = vst [vmem:[#allocation2 + $0x70] sm:$0xff] %v836
        %882 = vst [vmem:[#allocation2 + $0x78] sm:$0xff] %v837
        %883 = vst [vmem:[#allocation2 + $0x80] sm:$0xff] %v838
        %884 = vst [vmem:[#allocation2 + $0x88] sm:$0xff] %v839
        %885 = vst [vmem:[#allocation2 + $0x90] sm:$0xff] %v840
        %886 = vst [vmem:[#allocation2 + $0x98] sm:$0xff] %v841
        %887 = vst [vmem:[#allocation2 + $0xa0] sm:$0xff] %v842
        %888 = vst [vmem:[#allocation2 + $0xa8] sm:$0xff] %v843
        %889 = vst [vmem:[#allocation2 + $0xb0] sm:$0xff] %v844
        %890 = vst [vmem:[#allocation2 + $0xb8] sm:$0xff] %v845
        %891 = vst [vmem:[#allocation2 + $0xc0] sm:$0xff] %v846
        %892 = vst [vmem:[#allocation2 + $0xc8] sm:$0xff] %v847
        %893 = vst [vmem:[#allocation2 + $0xd0] sm:$0xff] %v848
        %894 = vst [vmem:[#allocation2 + $0xd8] sm:$0xff] %v849
        %895 = vst [vmem:[#allocation2 + $0xe0] sm:$0xff] %v850
        %896 = vst [vmem:[#allocation2 + $0xe8] sm:$0xff] %v851
        %897 = vst [vmem:[#allocation2 + $0xf0] sm:$0xff] %v852
        %898 = vst [vmem:[#allocation2 + $0xf8] sm:$0xff] %v853
        %899 = vst [vmem:[#allocation2 + $0x100] sm:$0xff] %v854
        %900 = vst [vmem:[#allocation2 + $0x108] sm:$0xff] %v855
        %901 = vst [vmem:[#allocation2 + $0x110] sm:$0xff] %v856
        %902 = vst [vmem:[#allocation2 + $0x118] sm:$0xff] %v857
        %903 = vst [vmem:[#allocation2 + $0x120] sm:$0xff] %v858
        %904 = vst [vmem:[#allocation2 + $0x128] sm:$0xff] %v859
        %905 = vst [vmem:[#allocation2 + $0x130] sm:$0xff] %v860
        %906 = vst [vmem:[#allocation2 + $0x138] sm:$0xff] %v861
        %907 = vst [vmem:[#allocation2 + $0x140] sm:$0xff] %v862
        %908 = vst [vmem:[#allocation2 + $0x148] sm:$0xff] %v863
        %909 = vst [vmem:[#allocation2 + $0x150] sm:$0xff] %v864
        %910 = vst [vmem:[#allocation2 + $0x158] sm:$0xff] %v865
        %911 = vst [vmem:[#allocation2 + $0x160] sm:$0xff] %v866
        // Predicated region
        $region45: #{lenet5_forward.7} parent=31 // pred_check
          %p912 = pneg %p260
        $region46: #{lenet5_forward.7} parent=31 // pred_check_branch
          %914 = sbr.rel (%p912) target = $region48
        $region47: #{lenet5_forward.7} parent=31 // pred_region
          %v915 = vld [vmem:[#allocation2] sm:$0xff]
          %v916 = vld [vmem:[#allocation2 + $0x8] sm:$0xff]
          %v917 = vld [vmem:[#allocation2 + $0x10] sm:$0xff]
          %v918 = vld [vmem:[#allocation2 + $0x18] sm:$0xff]
          %v919 = vld [vmem:[#allocation2 + $0x20] sm:$0xff]
          %v920 = vld [vmem:[#allocation2 + $0x28] sm:$0xff]
          %v921 = vld [vmem:[#allocation2 + $0x30] sm:$0xff]
          %v922 = vld [vmem:[#allocation2 + $0x38] sm:$0xff]
          %v923 = vld [vmem:[#allocation2 + $0x40] sm:$0xff]
          %v924 = vld [vmem:[#allocation2 + $0x48] sm:$0xff]
          %v925 = vld [vmem:[#allocation2 + $0x50] sm:$0xff]
          %v926 = vld [vmem:[#allocation2 + $0x58] sm:$0xff]
          %v927 = vld [vmem:[#allocation2 + $0x60] sm:$0xff]
          %v928 = vld [vmem:[#allocation2 + $0x68] sm:$0xff]
          %v929 = vld [vmem:[#allocation2 + $0x70] sm:$0xff]
          %v930 = vld [vmem:[#allocation2 + $0x78] sm:$0xff]
          %v931 = vld [vmem:[#allocation2 + $0x80] sm:$0xff]
          %v932 = vld [vmem:[#allocation2 + $0x88] sm:$0xff]
          %v933 = vld [vmem:[#allocation2 + $0x90] sm:$0xff]
          %v934 = vld [vmem:[#allocation2 + $0x98] sm:$0xff]
          %v935 = vld [vmem:[#allocation2 + $0xa0] sm:$0xff]
          %v936 = vld [vmem:[#allocation2 + $0xa8] sm:$0xff]
          %v937 = vld [vmem:[#allocation2 + $0xb0] sm:$0xff]
          %v938 = vld [vmem:[#allocation2 + $0xb8] sm:$0xff]
          %v939 = vld [vmem:[#allocation2 + $0xc0] sm:$0xff]
          %v940 = vld [vmem:[#allocation2 + $0xc8] sm:$0xff]
          %v941 = vld [vmem:[#allocation2 + $0xd0] sm:$0xff]
          %v942 = vld [vmem:[#allocation2 + $0xd8] sm:$0xff]
          %v943 = vld [vmem:[#allocation2 + $0xe0] sm:$0xff]
          %v944 = vld [vmem:[#allocation2 + $0xe8] sm:$0xff]
          %v945 = vld [vmem:[#allocation2 + $0xf0] sm:$0xff]
          %v946 = vld [vmem:[#allocation2 + $0xf8] sm:$0xff]
          %v947 = vld [vmem:[#allocation2 + $0x100] sm:$0xff]
          %v948 = vld [vmem:[#allocation2 + $0x108] sm:$0xff]
          %v949 = vld [vmem:[#allocation2 + $0x110] sm:$0xff]
          %v950 = vld [vmem:[#allocation2 + $0x118] sm:$0xff]
          %v951 = vld [vmem:[#allocation2 + $0x120] sm:$0xff]
          %v952 = vld [vmem:[#allocation2 + $0x128] sm:$0xff]
          %v953 = vld [vmem:[#allocation2 + $0x130] sm:$0xff]
          %v954 = vld [vmem:[#allocation2 + $0x138] sm:$0xff]
          %v955 = vld [vmem:[#allocation2 + $0x140] sm:$0xff]
          %v956 = vld [vmem:[#allocation2 + $0x148] sm:$0xff]
          %v957 = vld [vmem:[#allocation2 + $0x150] sm:$0xff]
          %v958 = vld [vmem:[#allocation2 + $0x158] sm:$0xff]
          %v959 = vld [vmem:[#allocation2 + $0x160] sm:$0xff]
          %v960 = vld [vmem:[#allocation5] sm:$0x1]
          %v962 = vlaneseq
          %v963 = vshrl.u32 %v962, 7
          %v964 = vsub.s32 0, %v963
          %v965 = vrot.slane %v960, %v964
          %v967 = vadd.f32 %v915, %v965
          %v968 = vadd.f32 %v916, %v965
          %v969 = vadd.f32 %v917, %v965
          %v970 = vadd.f32 %v918, %v965
          %v971 = vadd.f32 %v919, %v965
          %v972 = vadd.f32 %v920, %v965
          %v973 = vadd.f32 %v921, %v965
          %v974 = vadd.f32 %v922, %v965
          %v975 = vadd.f32 %v923, %v965
          %v976 = vadd.f32 %v924, %v965
          %v977 = vadd.f32 %v925, %v965
          %v978 = vadd.f32 %v926, %v965
          %v979 = vadd.f32 %v927, %v965
          %v980 = vadd.f32 %v928, %v965
          %v981 = vadd.f32 %v929, %v965
          %v982 = vadd.f32 %v930, %v965
          %v983 = vadd.f32 %v931, %v965
          %v984 = vadd.f32 %v932, %v965
          %v985 = vadd.f32 %v933, %v965
          %v986 = vadd.f32 %v934, %v965
          %v987 = vadd.f32 %v935, %v965
          %v988 = vadd.f32 %v936, %v965
          %v989 = vadd.f32 %v937, %v965
          %v990 = vadd.f32 %v938, %v965
          %v991 = vadd.f32 %v939, %v965
          %v992 = vadd.f32 %v940, %v965
          %v993 = vadd.f32 %v941, %v965
          %v994 = vadd.f32 %v942, %v965
          %v995 = vadd.f32 %v943, %v965
          %v996 = vadd.f32 %v944, %v965
          %v997 = vadd.f32 %v945, %v965
          %v998 = vadd.f32 %v946, %v965
          %v999 = vadd.f32 %v947, %v965
          %v1000 = vadd.f32 %v948, %v965
          %v1001 = vadd.f32 %v949, %v965
          %v1002 = vadd.f32 %v950, %v965
          %v1003 = vadd.f32 %v951, %v965
          %v1004 = vadd.f32 %v952, %v965
          %v1005 = vadd.f32 %v953, %v965
          %v1006 = vadd.f32 %v954, %v965
          %v1007 = vadd.f32 %v955, %v965
          %v1008 = vadd.f32 %v956, %v965
          %v1009 = vadd.f32 %v957, %v965
          %v1010 = vadd.f32 %v958, %v965
          %v1011 = vadd.f32 %v959, %v965
          %v1012 = vmax.f32 %v967, 0.0
          %v1013 = vmax.f32 %v968, 0.0
          %v1014 = vmax.f32 %v969, 0.0
          %v1015 = vmax.f32 %v970, 0.0
          %v1016 = vmax.f32 %v971, 0.0
          %v1017 = vmax.f32 %v972, 0.0
          %v1018 = vmax.f32 %v973, 0.0
          %v1019 = vmax.f32 %v974, 0.0
          %v1020 = vmax.f32 %v975, 0.0
          %v1021 = vmax.f32 %v976, 0.0
          %v1022 = vmax.f32 %v977, 0.0
          %v1023 = vmax.f32 %v978, 0.0
          %v1024 = vmax.f32 %v979, 0.0
          %v1025 = vmax.f32 %v980, 0.0
          %v1026 = vmax.f32 %v981, 0.0
          %v1027 = vmax.f32 %v982, 0.0
          %v1028 = vmax.f32 %v983, 0.0
          %v1029 = vmax.f32 %v984, 0.0
          %v1030 = vmax.f32 %v985, 0.0
          %v1031 = vmax.f32 %v986, 0.0
          %v1032 = vmax.f32 %v987, 0.0
          %v1033 = vmax.f32 %v988, 0.0
          %v1034 = vmax.f32 %v989, 0.0
          %v1035 = vmax.f32 %v990, 0.0
          %v1036 = vmax.f32 %v991, 0.0
          %v1037 = vmax.f32 %v992, 0.0
          %v1038 = vmax.f32 %v993, 0.0
          %v1039 = vmax.f32 %v994, 0.0
          %v1040 = vmax.f32 %v995, 0.0
          %v1041 = vmax.f32 %v996, 0.0
          %v1042 = vmax.f32 %v997, 0.0
          %v1043 = vmax.f32 %v998, 0.0
          %v1044 = vmax.f32 %v999, 0.0
          %v1045 = vmax.f32 %v1000, 0.0
          %v1046 = vmax.f32 %v1001, 0.0
          %v1047 = vmax.f32 %v1002, 0.0
          %v1048 = vmax.f32 %v1003, 0.0
          %v1049 = vmax.f32 %v1004, 0.0
          %v1050 = vmax.f32 %v1005, 0.0
          %v1051 = vmax.f32 %v1006, 0.0
          %v1052 = vmax.f32 %v1007, 0.0
          %v1053 = vmax.f32 %v1008, 0.0
          %v1054 = vmax.f32 %v1009, 0.0
          %v1055 = vmax.f32 %v1010, 0.0
          %v1056 = vmax.f32 %v1011, 0.0
          %v1057 = vpack.c.bf16 %v1013, %v1012
          %v1058 = vpack.c.bf16 %v1015, %v1014
          %v1059 = vpack.c.bf16 %v1017, %v1016
          %v1060 = vpack.c.bf16 %v1019, %v1018
          %v1061 = vpack.c.bf16 %v1021, %v1020
          %v1062 = vpack.c.bf16 %v1023, %v1022
          %v1063 = vpack.c.bf16 %v1025, %v1024
          %v1064 = vpack.c.bf16 %v1027, %v1026
          %v1065 = vpack.c.bf16 %v1029, %v1028
          %v1066 = vpack.c.bf16 %v1031, %v1030
          %v1067 = vpack.c.bf16 %v1033, %v1032
          %v1068 = vpack.c.bf16 %v1035, %v1034
          %v1069 = vpack.c.bf16 %v1037, %v1036
          %v1070 = vpack.c.bf16 %v1039, %v1038
          %v1071 = vpack.c.bf16 %v1041, %v1040
          %v1072 = vpack.c.bf16 %v1043, %v1042
          %v1073 = vpack.c.bf16 %v1045, %v1044
          %v1074 = vpack.c.bf16 %v1047, %v1046
          %v1075 = vpack.c.bf16 %v1049, %v1048
          %v1076 = vpack.c.bf16 %v1051, %v1050
          %v1077 = vpack.c.bf16 %v1053, %v1052
          %v1078 = vpack.c.bf16 %v1055, %v1054
          %v1079 = vpack.c.bf16 %v1056, %v1056
          %v1103 = vunpack.c.l.b16 %v1057
          %v1104 = vunpack.c.h.b16 %v1057
          %v1105 = vunpack.c.l.b16 %v1058
          %v1106 = vunpack.c.h.b16 %v1058
          %v1107 = vunpack.c.l.b16 %v1059
          %v1108 = vunpack.c.h.b16 %v1059
          %v1109 = vunpack.c.l.b16 %v1060
          %v1110 = vunpack.c.h.b16 %v1060
          %v1111 = vunpack.c.l.b16 %v1061
          %v1112 = vunpack.c.h.b16 %v1061
          %v1113 = vunpack.c.l.b16 %v1062
          %v1114 = vunpack.c.h.b16 %v1062
          %v1115 = vunpack.c.l.b16 %v1063
          %v1116 = vunpack.c.h.b16 %v1063
          %v1117 = vunpack.c.l.b16 %v1064
          %v1118 = vunpack.c.h.b16 %v1064
          %v1119 = vunpack.c.l.b16 %v1065
          %v1120 = vunpack.c.h.b16 %v1065
          %v1121 = vunpack.c.l.b16 %v1066
          %v1122 = vunpack.c.h.b16 %v1066
          %v1123 = vunpack.c.l.b16 %v1067
          %v1124 = vunpack.c.h.b16 %v1067
          %v1125 = vunpack.c.l.b16 %v1068
          %v1126 = vunpack.c.h.b16 %v1068
          %v1127 = vunpack.c.l.b16 %v1069
          %v1128 = vunpack.c.h.b16 %v1069
          %v1129 = vunpack.c.l.b16 %v1070
          %v1130 = vunpack.c.h.b16 %v1070
          %v1131 = vunpack.c.l.b16 %v1071
          %v1132 = vunpack.c.h.b16 %v1071
          %v1133 = vunpack.c.l.b16 %v1072
          %v1134 = vunpack.c.h.b16 %v1072
          %v1135 = vunpack.c.l.b16 %v1073
          %v1136 = vunpack.c.h.b16 %v1073
          %v1137 = vunpack.c.l.b16 %v1074
          %v1138 = vunpack.c.h.b16 %v1074
          %v1139 = vunpack.c.l.b16 %v1075
          %v1140 = vunpack.c.h.b16 %v1075
          %v1141 = vunpack.c.l.b16 %v1076
          %v1142 = vunpack.c.h.b16 %v1076
          %v1143 = vunpack.c.l.b16 %v1077
          %v1144 = vunpack.c.h.b16 %v1077
          %v1145 = vunpack.c.l.b16 %v1078
          %v1146 = vunpack.c.h.b16 %v1078
          %v1147 = vunpack.c.l.b16 %v1079
          %v1148 = vpack.c.b16 %v1103, %v1103
          %v1149 = vpack.c.b16 %v1104, %v1104
          %v1150 = vpack.c.b16 %v1105, %v1105
          %v1151 = vpack.c.b16 %v1106, %v1106
          %v1152 = vpack.c.b16 %v1107, %v1107
          %v1153 = vpack.c.b16 %v1108, %v1108
          %v1154 = vpack.c.b16 %v1109, %v1109
          %v1155 = vpack.c.b16 %v1110, %v1110
          %v1156 = vpack.c.b16 %v1111, %v1111
          %v1157 = vpack.c.b16 %v1112, %v1112
          %v1158 = vpack.c.b16 %v1113, %v1113
          %v1159 = vpack.c.b16 %v1114, %v1114
          %v1160 = vpack.c.b16 %v1115, %v1115
          %v1161 = vpack.c.b16 %v1116, %v1116
          %v1162 = vpack.c.b16 %v1117, %v1117
          %v1163 = vpack.c.b16 %v1118, %v1118
          %v1164 = vpack.c.b16 %v1119, %v1119
          %v1165 = vpack.c.b16 %v1120, %v1120
          %v1166 = vpack.c.b16 %v1121, %v1121
          %v1167 = vpack.c.b16 %v1122, %v1122
          %v1168 = vpack.c.b16 %v1123, %v1123
          %v1169 = vpack.c.b16 %v1124, %v1124
          %v1170 = vpack.c.b16 %v1125, %v1125
          %v1171 = vpack.c.b16 %v1126, %v1126
          %v1172 = vpack.c.b16 %v1127, %v1127
          %v1173 = vpack.c.b16 %v1128, %v1128
          %v1174 = vpack.c.b16 %v1129, %v1129
          %v1175 = vpack.c.b16 %v1130, %v1130
          %v1176 = vpack.c.b16 %v1131, %v1131
          %v1177 = vpack.c.b16 %v1132, %v1132
          %v1178 = vpack.c.b16 %v1133, %v1133
          %v1179 = vpack.c.b16 %v1134, %v1134
          %v1180 = vpack.c.b16 %v1135, %v1135
          %v1181 = vpack.c.b16 %v1136, %v1136
          %v1182 = vpack.c.b16 %v1137, %v1137
          %v1183 = vpack.c.b16 %v1138, %v1138
          %v1184 = vpack.c.b16 %v1139, %v1139
          %v1185 = vpack.c.b16 %v1140, %v1140
          %v1186 = vpack.c.b16 %v1141, %v1141
          %v1187 = vpack.c.b16 %v1142, %v1142
          %v1188 = vpack.c.b16 %v1143, %v1143
          %v1189 = vpack.c.b16 %v1144, %v1144
          %v1190 = vpack.c.b16 %v1145, %v1145
          %v1191 = vpack.c.b16 %v1146, %v1146
          %v1192 = vpack.c.b16 %v1147, %v1147
          %1238 = vst [vmem:[%s257] sm:$0xf] %v1148
          %1239 = vst [vmem:[%s257 + $0x4] sm:$0xf] %v1149
          %1240 = vst [vmem:[%s257 + $0x8] sm:$0xf] %v1150
          %1241 = vst [vmem:[%s257 + $0xc] sm:$0xf] %v1151
          %1242 = vst [vmem:[%s257 + $0x10] sm:$0xf] %v1152
          %1243 = vst [vmem:[%s257 + $0x14] sm:$0xf] %v1153
          %1244 = vst [vmem:[%s257 + $0x18] sm:$0xf] %v1154
          %1245 = vst [vmem:[%s257 + $0x1c] sm:$0xf] %v1155
          %1246 = vst [vmem:[%s257 + $0x20] sm:$0xf] %v1156
          %1247 = vst [vmem:[%s257 + $0x24] sm:$0xf] %v1157
          %1248 = vst [vmem:[%s257 + $0x28] sm:$0xf] %v1158
          %1249 = vst [vmem:[%s257 + $0x2c] sm:$0xf] %v1159
          %1250 = vst [vmem:[%s257 + $0x30] sm:$0xf] %v1160
          %1251 = vst [vmem:[%s257 + $0x34] sm:$0xf] %v1161
          %1252 = vst [vmem:[%s257 + $0x38] sm:$0xf] %v1162
          %1253 = vst [vmem:[%s257 + $0x3c] sm:$0xf] %v1163
          %1254 = vst [vmem:[%s257 + $0x40] sm:$0xf] %v1164
          %1255 = vst [vmem:[%s257 + $0x44] sm:$0xf] %v1165
          %1256 = vst [vmem:[%s257 + $0x48] sm:$0xf] %v1166
          %1257 = vst [vmem:[%s257 + $0x4c] sm:$0xf] %v1167
          %1258 = vst [vmem:[%s257 + $0x50] sm:$0xf] %v1168
          %1259 = vst [vmem:[%s257 + $0x54] sm:$0xf] %v1169
          %1260 = vst [vmem:[%s257 + $0x58] sm:$0xf] %v1170
          %1261 = vst [vmem:[%s257 + $0x5c] sm:$0xf] %v1171
          %1262 = vst [vmem:[%s257 + $0x60] sm:$0xf] %v1172
          %1263 = vst [vmem:[%s257 + $0x64] sm:$0xf] %v1173
          %1264 = vst [vmem:[%s257 + $0x68] sm:$0xf] %v1174
          %1265 = vst [vmem:[%s257 + $0x6c] sm:$0xf] %v1175
          %1266 = vst [vmem:[%s257 + $0x70] sm:$0xf] %v1176
          %1267 = vst [vmem:[%s257 + $0x74] sm:$0xf] %v1177
          %1268 = vst [vmem:[%s257 + $0x78] sm:$0xf] %v1178
          %1269 = vst [vmem:[%s257 + $0x7c] sm:$0xf] %v1179
          %1270 = vst [vmem:[%s257 + $0x80] sm:$0xf] %v1180
          %1271 = vst [vmem:[%s257 + $0x84] sm:$0xf] %v1181
          %1272 = vst [vmem:[%s257 + $0x88] sm:$0xf] %v1182
          %1273 = vst [vmem:[%s257 + $0x8c] sm:$0xf] %v1183
          %1274 = vst [vmem:[%s257 + $0x90] sm:$0xf] %v1184
          %1275 = vst [vmem:[%s257 + $0x94] sm:$0xf] %v1185
          %1276 = vst [vmem:[%s257 + $0x98] sm:$0xf] %v1186
          %1277 = vst [vmem:[%s257 + $0x9c] sm:$0xf] %v1187
          %1278 = vst [vmem:[%s257 + $0xa0] sm:$0xf] %v1188
          %1279 = vst [vmem:[%s257 + $0xa4] sm:$0xf] %v1189
          %1280 = vst [vmem:[%s257 + $0xa8] sm:$0xf] %v1190
          %1281 = vst [vmem:[%s257 + $0xac] sm:$0xf] %v1191
          %1282 = vst [vmem:[%s257 + $0xb0] sm:$0xf] %v1192
        $region48: #{lenet5_forward.7} parent=31 // pred_fallthru
          _
        %s1283 = smul.u32 45, %s21
        %p1284 = scmp.lt.s32.totalorder %s1283, 224
        %s1285 = scalar_select %p1284, %s1283, 224
        %p1286 = scmp.lt.s32.totalorder %s22, 0
        %s1287 = scalar_select %p1286, %s22, 0
        %s1288 = sadd.s32 %s1287, %s1285
        %s1289 = smul.addr %s1288, 4
        %s1290 = scalar_lea.vmem %s3, %s1289
        // Predicated region
        $region49: #{lenet5_forward.7} parent=31 // pred_check
          %p1291 = pneg %p137
        $region50: #{lenet5_forward.7} parent=31 // pred_check_branch
          %1293 = sbr.rel (%p1291) target = $region52
        $region51: #{lenet5_forward.7} parent=31 // pred_region
          %s1294 = smul.u32 45, %s21
        $region52: #{lenet5_forward.7} parent=31 // pred_fallthru
          _
      $region32: #{lenet5_forward.7} parent=5 // pred_fallthru
        _
      %p1295 = scmp.le.s32.totalorder 2, %s11
      // Predicated region
      $region53: #{lenet5_forward.7} parent=5 // pred_check
        %p1296 = pneg %p1295
      $region54: #{lenet5_forward.7} parent=5 // pred_check_branch
        %1298 = sbr.rel (%p1296) target = $region56
      $region55: #{lenet5_forward.7} parent=5 // pred_region
        %s1299 = ssub.s32 %s11, 2
        // Predicated region
        $region57: #{lenet5_forward.7} parent=55 // pred_check
          %p1300 = pneg %p143
        $region58: #{lenet5_forward.7} parent=55 // pred_check_branch
          %1302 = sbr.rel (%p1300) target = $region60
        $region59: #{lenet5_forward.7} parent=55 // pred_region
          %s1303 = smul.u32 45, %s24
          %p1304 = scmp.lt.s32.totalorder %s1303, 224
          %s1305 = scalar_select %p1304, %s1303, 224
          %p1306 = scmp.lt.s32.totalorder %s25, 0
          %s1307 = scalar_select %p1306, %s25, 0
          %s1308 = sadd.s32 %s1307, %s1305
          %s1309 = smul.addr %s1308, 4
          %s1310 = scalar_lea.vmem %s3, %s1309
        $region60: #{lenet5_forward.7} parent=55 // pred_fallthru
          _
      $region56: #{lenet5_forward.7} parent=5 // pred_fallthru
        _
    $region6: #{lenet5_forward.7} parent=1 // loop_footer
      %s15 = sadd.s32 1, %s11
    $region7: #{lenet5_forward.7} parent=1 // loop_footer_branch
      %10 = sbr.rel target = $region3
    $region8: #{lenet5_forward.7} parent=1 // loop_exit
      _
    %1311 = vsyncpa [#allocation4], 1
    %s1312 = scalar_lea.sflag [#allocation4], 1
    %1313 = vsyncpa %s1312, 1
    %1314 = vsyncpa [#allocation6], 1

// kernel: lenet5_forward.8
$region0: #{lenet5_forward.8}
  #allocation0 [shape = 'u32[]', space=smem, size = 0x4, offset = 0x4, fixed_abs, tag = 'smem constant byte address 0x4 - core index']
  #allocation1 [shape = 'u32[144,128]{1,0:T(1,128)}', space=vmem, size = 0x12000, scoped, tag = 'internal scratch']
  #allocation2 [shape = 'f32[1,15,30,128]{3,2,1,0:T(8,128)}', space=vmem, size = 0x3c000, scoped, tag = 'scratch operand']
  %s0 = inlined_call_operand.vmem [shape: bf16[2,30,30,128], index: 0, kind: input, shape index: {}]
  %s1 = inlined_call_operand.vmem [shape: bf16[2,15,15,16], index: 1, kind: output, shape index: {}]
  %s2 = sld [smem:[#allocation0]]
  $region37: #{lenet5_forward.8} parent=0
    _
  %s4 = ssub.s32 1, %s2
  %s5 = scalar_select 0, %s4, %s2
  loop: start=0, step=1, limit=4
  $region2: #{lenet5_forward.8} parent=0 // loop_pre_header
    _
  $region3: #{lenet5_forward.8} parent=0 // loop_header
    %s7 = sphi 0, %s11
    %p8 = scmp.ge.s32.totalorder %s7, 4
    %s14 = sphi 0, %s26
    %s15 = sphi 0, %s22
    %s16 = sphi 0, %s14
    %s17 = sphi 0, %s15
    %s18 = sphi 0, %s16
    %s19 = sphi 0, %s17
    %s31 = sphi 0, %s33
    %s34 = sphi 0, %s31
    %s35 = sphi 0, %s34
    %s51 = sphi 0, %s35
    %s59 = sphi 0, %s61
    %s62 = sphi 0, %s59
    %s63 = sphi 0, %s62
    %s79 = sphi 0, %s63
  $region4: #{lenet5_forward.8} parent=0 // loop_header_branch
    %10 = sbr.rel (%p8) target = $region8
  $region5: #{lenet5_forward.8} parent=0 // loop_body
    %s12 = ssub.s32 %s7, 1
    %s13 = ssub.s32 %s7, 2
    %s20 = sadd.s32 1, %s15
    %p21 = scmp.ge.s32.totalorder %s20, 1
    %s22 = scalar_select %p21, 0, %s20
    %s23 = sadd.s32 1, %s14
    %s24 = scalar_select %p21, %s23, %s14
    %p25 = scmp.ge.s32.totalorder %s24, 2
    %s26 = scalar_select %p25, 0, %s24
    %s27 = ssub.s32 %s14, %s26
    %s28 = ssub.s32 %s15, %s22
    %s29 = sor.u32 %s27, %s28
    %p30 = scmp.eq.s32.totalorder %s29, 0
    %s32 = sadd.s32 %s31, 1
    %s33 = scalar_select %p30, %s31, %s32
    %p36 = pneg %p30
    %p37 = scmp.eq.s32.totalorder %s7, 1
    %p38 = por %p36, %p37
    %p39 = scmp.ne.s32.totalorder %s31, %s34
    %p40 = scmp.eq.s32.totalorder %s7, 0
    %p41 = por %p39, %p40
    %p42 = scmp.ne.s32.totalorder %s31, %s34
    %p43 = scmp.eq.s32.totalorder %s12, 1
    %p44 = por %p42, %p43
    %p45 = scmp.ne.s32.totalorder %s34, %s35
    %p46 = scmp.eq.s32.totalorder %s12, 0
    %p47 = por %p45, %p46
    %p48 = scmp.ne.s32.totalorder %s34, %s35
    %p49 = scmp.eq.s32.totalorder %s13, 1
    %p50 = por %p48, %p49
    %p52 = scmp.ne.s32.totalorder %s35, %s51
    %p53 = scmp.eq.s32.totalorder %s13, 0
    %p54 = por %p52, %p53
    %s55 = ssub.s32 %s14, %s26
    %s56 = ssub.s32 %s15, %s22
    %s57 = sor.u32 %s55, %s56
    %p58 = scmp.eq.s32.totalorder %s57, 0
    %s60 = sadd.s32 %s59, 1
    %s61 = scalar_select %p58, %s59, %s60
    %p64 = pneg %p58
    %p65 = scmp.eq.s32.totalorder %s7, 1
    %p66 = por %p64, %p65
    %p67 = scmp.ne.s32.totalorder %s59, %s62
    %p68 = scmp.eq.s32.totalorder %s7, 0
    %p69 = por %p67, %p68
    %p70 = scmp.ne.s32.totalorder %s59, %s62
    %p71 = scmp.eq.s32.totalorder %s12, 1
    %p72 = por %p70, %p71
    %p73 = scmp.ne.s32.totalorder %s62, %s63
    %p74 = scmp.eq.s32.totalorder %s12, 0
    %p75 = por %p73, %p74
    %p76 = scmp.ne.s32.totalorder %s62, %s63
    %p77 = scmp.eq.s32.totalorder %s13, 1
    %p78 = por %p76, %p77
    %p80 = scmp.ne.s32.totalorder %s63, %s79
    %p81 = scmp.eq.s32.totalorder %s13, 0
    %p82 = por %p80, %p81
    %p83 = scmp.le.s32.totalorder 1, %s7
    %p84 = scmp.lt.s32.totalorder %s7, 3
    %p85 = pnand %p83, %p84
    %p86 = pneg %p85
    // Predicated region
    $region9: #{lenet5_forward.8} parent=5 // pred_check
      _
    $region10: #{lenet5_forward.8} parent=5 // pred_check_branch
      %88 = sbr.rel (%p85) target = $region12
    $region11: #{lenet5_forward.8} parent=5 // pred_region
      %s89 = ssub.s32 %s7, 1
    $region12: #{lenet5_forward.8} parent=5 // pred_fallthru
      _
    %p90 = scmp.lt.s32.totalorder %s7, 2
    // Predicated region
    $region13: #{lenet5_forward.8} parent=5 // pred_check
      %p91 = pneg %p90
    $region14: #{lenet5_forward.8} parent=5 // pred_check_branch
      %93 = sbr.rel (%p91) target = $region16
    $region15: #{lenet5_forward.8} parent=5 // pred_region
      // Predicated region
      $region17: #{lenet5_forward.8} parent=15 // pred_check
        %p94 = pneg %p41
      $region18: #{lenet5_forward.8} parent=15 // pred_check_branch
        %96 = sbr.rel (%p94) target = $region20
      $region19: #{lenet5_forward.8} parent=15 // pred_region
        %s97 = smul.u32 30, %s15
        %p98 = scmp.lt.s32.totalorder %s14, 1
        %s99 = scalar_select %p98, %s14, 1
        %p100 = scmp.lt.s32.totalorder %s97, 29
        %s101 = scalar_select %p100, %s97, 29
        %s102 = smul.addr %s101, 4
        %s103 = smul.addr %s99, 120
        %s104 = sadd.s32 %s102, %s103
        %s105 = smul.addr %s104, 4
        %s106 = scalar_lea.vmem %s0, %s105
        %s107 = smul.u32 30, %s15
      $region20: #{lenet5_forward.8} parent=15 // pred_fallthru
        _
    $region16: #{lenet5_forward.8} parent=5 // pred_fallthru
      _
    %p108 = scmp.le.s32.totalorder 1, %s7
    %p109 = scmp.lt.s32.totalorder %s7, 3
    %p110 = pnand %p108, %p109
    %p111 = pneg %p110
    // Predicated region
    $region21: #{lenet5_forward.8} parent=5 // pred_check
      _
    $region22: #{lenet5_forward.8} parent=5 // pred_check_branch
      %113 = sbr.rel (%p110) target = $region24
    $region23: #{lenet5_forward.8} parent=5 // pred_region
      %s114 = ssub.s32 %s7, 1
      %s115 = smul.u32 30, %s17
      %p116 = scmp.lt.s32.totalorder %s16, 1
      %s117 = scalar_select %p116, %s16, 1
      %p118 = scmp.lt.s32.totalorder %s115, 29
      %s119 = scalar_select %p118, %s115, 29
      %s120 = smul.addr %s119, 4
      %s121 = smul.addr %s117, 120
      %s122 = sadd.s32 %s120, %s121
      %s123 = smul.addr %s122, 4
      %s124 = scalar_lea.vmem %s0, %s123
      %p125 = pneg %p47
      %p126 = pneg %p44
      %p127 = pneg %p75
      %p128 = pneg %p72
      %s129 = smul.u32 15, %s17
      %p130 = scmp.lt.s32.totalorder %s16, 1
      %s131 = scalar_select %p130, %s16, 1
      %p132 = scmp.lt.s32.totalorder %s129, 14
      %s133 = scalar_select %p132, %s129, 14
      %s134 = smul.addr %s133, 2
      %s135 = smul.addr %s131, 30
      %s136 = sadd.s32 %s134, %s135
      %s137 = smul.addr %s136, 4
      %s138 = scalar_lea.vmem %s1, %s137
      %s139 = smul.u32 30, %s17
      %p140 = scmp.lt.s32.totalorder %s16, 1
      %s141 = scalar_select %p140, %s16, 1
      %p142 = scmp.lt.s32.totalorder %s139, 29
      %s143 = scalar_select %p142, %s139, 29
      %s144 = smul.addr %s143, 4
      %s145 = smul.addr %s141, 120
      %s146 = sadd.s32 %s144, %s145
      %s147 = smul.addr %s146, 4
      %s148 = scalar_lea.vmem %s0, %s147
      %s149 = smul.u32 30, %s17
      %s150 = smul.u32 15, %s17
      %p151 = scmp.lt.s32.totalorder %s16, 1
      %s152 = scalar_select %p151, %s16, 1
      %p153 = scmp.lt.s32.totalorder %s150, 14
      %s154 = scalar_select %p153, %s150, 14
      %s155 = smul.addr %s154, 2
      %s156 = smul.addr %s152, 30
      %s157 = sadd.s32 %s155, %s156
      %s158 = smul.addr %s157, 4
      %s159 = scalar_lea.vmem %s1, %s158
      %s160 = smul.u32 15, %s17
      %v161 = vld [vmem:[%s148] sm:$0xf]
      %v162 = vld [vmem:[%s148 + $0x4] sm:$0xf]
      %v163 = vld [vmem:[%s148 + $0x8] sm:$0xf]
      %v164 = vld [vmem:[%s148 + $0xc] sm:$0x7]
      %v165 = vld [vmem:[%s148 + $0x10] sm:$0xf]
      %v166 = vld [vmem:[%s148 + $0x14] sm:$0xf]
      %v167 = vld [vmem:[%s148 + $0x18] sm:$0xf]
      %v168 = vld [vmem:[%s148 + $0x1c] sm:$0x7]
      %v169 = vld [vmem:[%s148 + $0x20] sm:$0xf]
      %v170 = vld [vmem:[%s148 + $0x24] sm:$0xf]
      %v171 = vld [vmem:[%s148 + $0x28] sm:$0xf]
      %v172 = vld [vmem:[%s148 + $0x2c] sm:$0x7]
      %v173 = vld [vmem:[%s148 + $0x30] sm:$0xf]
      %v174 = vld [vmem:[%s148 + $0x34] sm:$0xf]
      %v175 = vld [vmem:[%s148 + $0x38] sm:$0xf]
      %v176 = vld [vmem:[%s148 + $0x3c] sm:$0x7]
      %v177 = vld [vmem:[%s148 + $0x40] sm:$0xf]
      %v178 = vld [vmem:[%s148 + $0x44] sm:$0xf]
      %v179 = vld [vmem:[%s148 + $0x48] sm:$0xf]
      %v180 = vld [vmem:[%s148 + $0x4c] sm:$0x7]
      %v181 = vld [vmem:[%s148 + $0x50] sm:$0xf]
      %v182 = vld [vmem:[%s148 + $0x54] sm:$0xf]
      %v183 = vld [vmem:[%s148 + $0x58] sm:$0xf]
      %v184 = vld [vmem:[%s148 + $0x5c] sm:$0x7]
      %v185 = vld [vmem:[%s148 + $0x60] sm:$0xf]
      %v186 = vld [vmem:[%s148 + $0x64] sm:$0xf]
      %v187 = vld [vmem:[%s148 + $0x68] sm:$0xf]
      %v188 = vld [vmem:[%s148 + $0x6c] sm:$0x7]
      %v189 = vld [vmem:[%s148 + $0x70] sm:$0xf]
      %v190 = vld [vmem:[%s148 + $0x74] sm:$0xf]
      %v191 = vld [vmem:[%s148 + $0x78] sm:$0xf]
      %v192 = vld [vmem:[%s148 + $0x7c] sm:$0x7]
      %v193 = vld [vmem:[%s148 + $0x80] sm:$0xf]
      %v194 = vld [vmem:[%s148 + $0x84] sm:$0xf]
      %v195 = vld [vmem:[%s148 + $0x88] sm:$0xf]
      %v196 = vld [vmem:[%s148 + $0x8c] sm:$0x7]
      %v197 = vld [vmem:[%s148 + $0x90] sm:$0xf]
      %v198 = vld [vmem:[%s148 + $0x94] sm:$0xf]
      %v199 = vld [vmem:[%s148 + $0x98] sm:$0xf]
      %v200 = vld [vmem:[%s148 + $0x9c] sm:$0x7]
      %v201 = vld [vmem:[%s148 + $0xa0] sm:$0xf]
      %v202 = vld [vmem:[%s148 + $0xa4] sm:$0xf]
      %v203 = vld [vmem:[%s148 + $0xa8] sm:$0xf]
      %v204 = vld [vmem:[%s148 + $0xac] sm:$0x7]
      %v205 = vld [vmem:[%s148 + $0xb0] sm:$0xf]
      %v206 = vld [vmem:[%s148 + $0xb4] sm:$0xf]
      %v207 = vld [vmem:[%s148 + $0xb8] sm:$0xf]
      %v208 = vld [vmem:[%s148 + $0xbc] sm:$0x7]
      %v209 = vld [vmem:[%s148 + $0xc0] sm:$0xf]
      %v210 = vld [vmem:[%s148 + $0xc4] sm:$0xf]
      %v211 = vld [vmem:[%s148 + $0xc8] sm:$0xf]
      %v212 = vld [vmem:[%s148 + $0xcc] sm:$0x7]
      %v213 = vld [vmem:[%s148 + $0xd0] sm:$0xf]
      %v214 = vld [vmem:[%s148 + $0xd4] sm:$0xf]
      %v215 = vld [vmem:[%s148 + $0xd8] sm:$0xf]
      %v216 = vld [vmem:[%s148 + $0xdc] sm:$0x7]
      %v217 = vld [vmem:[%s148 + $0xe0] sm:$0xf]
      %v218 = vld [vmem:[%s148 + $0xe4] sm:$0xf]
      %v219 = vld [vmem:[%s148 + $0xe8] sm:$0xf]
      %v220 = vld [vmem:[%s148 + $0xec] sm:$0x7]
      %v221 = vld [vmem:[%s148 + $0xf0] sm:$0xf]
      %v222 = vld [vmem:[%s148 + $0xf4] sm:$0xf]
      %v223 = vld [vmem:[%s148 + $0xf8] sm:$0xf]
      %v224 = vld [vmem:[%s148 + $0xfc] sm:$0x7]
      %v225 = vld [vmem:[%s148 + $0x100] sm:$0xf]
      %v226 = vld [vmem:[%s148 + $0x104] sm:$0xf]
      %v227 = vld [vmem:[%s148 + $0x108] sm:$0xf]
      %v228 = vld [vmem:[%s148 + $0x10c] sm:$0x7]
      %v229 = vld [vmem:[%s148 + $0x110] sm:$0xf]
      %v230 = vld [vmem:[%s148 + $0x114] sm:$0xf]
      %v231 = vld [vmem:[%s148 + $0x118] sm:$0xf]
      %v232 = vld [vmem:[%s148 + $0x11c] sm:$0x7]
      %v233 = vld [vmem:[%s148 + $0x120] sm:$0xf]
      %v234 = vld [vmem:[%s148 + $0x124] sm:$0xf]
      %v235 = vld [vmem:[%s148 + $0x128] sm:$0xf]
      %v236 = vld [vmem:[%s148 + $0x12c] sm:$0x7]
      %v237 = vld [vmem:[%s148 + $0x130] sm:$0xf]
      %v238 = vld [vmem:[%s148 + $0x134] sm:$0xf]
      %v239 = vld [vmem:[%s148 + $0x138] sm:$0xf]
      %v240 = vld [vmem:[%s148 + $0x13c] sm:$0x7]
      %v241 = vld [vmem:[%s148 + $0x140] sm:$0xf]
      %v242 = vld [vmem:[%s148 + $0x144] sm:$0xf]
      %v243 = vld [vmem:[%s148 + $0x148] sm:$0xf]
      %v244 = vld [vmem:[%s148 + $0x14c] sm:$0x7]
      %v245 = vld [vmem:[%s148 + $0x150] sm:$0xf]
      %v246 = vld [vmem:[%s148 + $0x154] sm:$0xf]
      %v247 = vld [vmem:[%s148 + $0x158] sm:$0xf]
      %v248 = vld [vmem:[%s148 + $0x15c] sm:$0x7]
      %v249 = vld [vmem:[%s148 + $0x160] sm:$0xf]
      %v250 = vld [vmem:[%s148 + $0x164] sm:$0xf]
      %v251 = vld [vmem:[%s148 + $0x168] sm:$0xf]
      %v252 = vld [vmem:[%s148 + $0x16c] sm:$0x7]
      %v253 = vld [vmem:[%s148 + $0x170] sm:$0xf]
      %v254 = vld [vmem:[%s148 + $0x174] sm:$0xf]
      %v255 = vld [vmem:[%s148 + $0x178] sm:$0xf]
      %v256 = vld [vmem:[%s148 + $0x17c] sm:$0x7]
      %v257 = vld [vmem:[%s148 + $0x180] sm:$0xf]
      %v258 = vld [vmem:[%s148 + $0x184] sm:$0xf]
      %v259 = vld [vmem:[%s148 + $0x188] sm:$0xf]
      %v260 = vld [vmem:[%s148 + $0x18c] sm:$0x7]
      %v261 = vld [vmem:[%s148 + $0x190] sm:$0xf]
      %v262 = vld [vmem:[%s148 + $0x194] sm:$0xf]
      %v263 = vld [vmem:[%s148 + $0x198] sm:$0xf]
      %v264 = vld [vmem:[%s148 + $0x19c] sm:$0x7]
      %v265 = vld [vmem:[%s148 + $0x1a0] sm:$0xf]
      %v266 = vld [vmem:[%s148 + $0x1a4] sm:$0xf]
      %v267 = vld [vmem:[%s148 + $0x1a8] sm:$0xf]
      %v268 = vld [vmem:[%s148 + $0x1ac] sm:$0x7]
      %v269 = vld [vmem:[%s148 + $0x1b0] sm:$0xf]
      %v270 = vld [vmem:[%s148 + $0x1b4] sm:$0xf]
      %v271 = vld [vmem:[%s148 + $0x1b8] sm:$0xf]
      %v272 = vld [vmem:[%s148 + $0x1bc] sm:$0x7]
      %v273 = vld [vmem:[%s148 + $0x1c0] sm:$0xf]
      %v274 = vld [vmem:[%s148 + $0x1c4] sm:$0xf]
      %v275 = vld [vmem:[%s148 + $0x1c8] sm:$0xf]
      %v276 = vld [vmem:[%s148 + $0x1cc] sm:$0x7]
      %v277 = vld [vmem:[%s148 + $0x1d0] sm:$0xf]
      %v278 = vld [vmem:[%s148 + $0x1d4] sm:$0xf]
      %v279 = vld [vmem:[%s148 + $0x1d8] sm:$0xf]
      %v280 = vld [vmem:[%s148 + $0x1dc] sm:$0x7]
      %v281 = vunpack.c.l.bf16 %v161
      %v282 = vunpack.c.l.bf16 %v162
      %v283 = vunpack.c.l.bf16 %v163
      %v284 = vunpack.c.l.bf16 %v164
      %v285 = vunpack.c.l.bf16 %v165
      %v286 = vunpack.c.l.bf16 %v166
      %v287 = vunpack.c.l.bf16 %v167
      %v288 = vunpack.c.l.bf16 %v168
      %v289 = vunpack.c.l.bf16 %v169
      %v290 = vunpack.c.l.bf16 %v170
      %v291 = vunpack.c.l.bf16 %v171
      %v292 = vunpack.c.l.bf16 %v172
      %v293 = vunpack.c.l.bf16 %v173
      %v294 = vunpack.c.l.bf16 %v174
      %v295 = vunpack.c.l.bf16 %v175
      %v296 = vunpack.c.l.bf16 %v176
      %v297 = vunpack.c.l.bf16 %v177
      %v298 = vunpack.c.l.bf16 %v178
      %v299 = vunpack.c.l.bf16 %v179
      %v300 = vunpack.c.l.bf16 %v180
      %v301 = vunpack.c.l.bf16 %v181
      %v302 = vunpack.c.l.bf16 %v182
      %v303 = vunpack.c.l.bf16 %v183
      %v304 = vunpack.c.l.bf16 %v184
      %v305 = vunpack.c.l.bf16 %v185
      %v306 = vunpack.c.l.bf16 %v186
      %v307 = vunpack.c.l.bf16 %v187
      %v308 = vunpack.c.l.bf16 %v188
      %v309 = vunpack.c.l.bf16 %v189
      %v310 = vunpack.c.l.bf16 %v190
      %v311 = vunpack.c.l.bf16 %v191
      %v312 = vunpack.c.l.bf16 %v192
      %v313 = vunpack.c.l.bf16 %v193
      %v314 = vunpack.c.l.bf16 %v194
      %v315 = vunpack.c.l.bf16 %v195
      %v316 = vunpack.c.l.bf16 %v196
      %v317 = vunpack.c.l.bf16 %v197
      %v318 = vunpack.c.l.bf16 %v198
      %v319 = vunpack.c.l.bf16 %v199
      %v320 = vunpack.c.l.bf16 %v200
      %v321 = vunpack.c.l.bf16 %v201
      %v322 = vunpack.c.l.bf16 %v202
      %v323 = vunpack.c.l.bf16 %v203
      %v324 = vunpack.c.l.bf16 %v204
      %v325 = vunpack.c.l.bf16 %v205
      %v326 = vunpack.c.l.bf16 %v206
      %v327 = vunpack.c.l.bf16 %v207
      %v328 = vunpack.c.l.bf16 %v208
      %v329 = vunpack.c.l.bf16 %v209
      %v330 = vunpack.c.l.bf16 %v210
      %v331 = vunpack.c.l.bf16 %v211
      %v332 = vunpack.c.l.bf16 %v212
      %v333 = vunpack.c.l.bf16 %v213
      %v334 = vunpack.c.l.bf16 %v214
      %v335 = vunpack.c.l.bf16 %v215
      %v336 = vunpack.c.l.bf16 %v216
      %v337 = vunpack.c.l.bf16 %v217
      %v338 = vunpack.c.l.bf16 %v218
      %v339 = vunpack.c.l.bf16 %v219
      %v340 = vunpack.c.l.bf16 %v220
      %v341 = vunpack.c.l.bf16 %v221
      %v342 = vunpack.c.l.bf16 %v222
      %v343 = vunpack.c.l.bf16 %v223
      %v344 = vunpack.c.l.bf16 %v224
      %v345 = vunpack.c.l.bf16 %v225
      %v346 = vunpack.c.l.bf16 %v226
      %v347 = vunpack.c.l.bf16 %v227
      %v348 = vunpack.c.l.bf16 %v228
      %v349 = vunpack.c.l.bf16 %v229
      %v350 = vunpack.c.l.bf16 %v230
      %v351 = vunpack.c.l.bf16 %v231
      %v352 = vunpack.c.l.bf16 %v232
      %v353 = vunpack.c.l.bf16 %v233
      %v354 = vunpack.c.l.bf16 %v234
      %v355 = vunpack.c.l.bf16 %v235
      %v356 = vunpack.c.l.bf16 %v236
      %v357 = vunpack.c.l.bf16 %v237
      %v358 = vunpack.c.l.bf16 %v238
      %v359 = vunpack.c.l.bf16 %v239
      %v360 = vunpack.c.l.bf16 %v240
      %v361 = vunpack.c.l.bf16 %v241
      %v362 = vunpack.c.l.bf16 %v242
      %v363 = vunpack.c.l.bf16 %v243
      %v364 = vunpack.c.l.bf16 %v244
      %v365 = vunpack.c.l.bf16 %v245
      %v366 = vunpack.c.l.bf16 %v246
      %v367 = vunpack.c.l.bf16 %v247
      %v368 = vunpack.c.l.bf16 %v248
      %v369 = vunpack.c.l.bf16 %v249
      %v370 = vunpack.c.l.bf16 %v250
      %v371 = vunpack.c.l.bf16 %v251
      %v372 = vunpack.c.l.bf16 %v252
      %v373 = vunpack.c.l.bf16 %v253
      %v374 = vunpack.c.l.bf16 %v254
      %v375 = vunpack.c.l.bf16 %v255
      %v376 = vunpack.c.l.bf16 %v256
      %v377 = vunpack.c.l.bf16 %v257
      %v378 = vunpack.c.l.bf16 %v258
      %v379 = vunpack.c.l.bf16 %v259
      %v380 = vunpack.c.l.bf16 %v260
      %v381 = vunpack.c.l.bf16 %v261
      %v382 = vunpack.c.l.bf16 %v262
      %v383 = vunpack.c.l.bf16 %v263
      %v384 = vunpack.c.l.bf16 %v264
      %v385 = vunpack.c.l.bf16 %v265
      %v386 = vunpack.c.l.bf16 %v266
      %v387 = vunpack.c.l.bf16 %v267
      %v388 = vunpack.c.l.bf16 %v268
      %v389 = vunpack.c.l.bf16 %v269
      %v390 = vunpack.c.l.bf16 %v270
      %v391 = vunpack.c.l.bf16 %v271
      %v392 = vunpack.c.l.bf16 %v272
      %v393 = vunpack.c.l.bf16 %v273
      %v394 = vunpack.c.l.bf16 %v274
      %v395 = vunpack.c.l.bf16 %v275
      %v396 = vunpack.c.l.bf16 %v276
      %v397 = vunpack.c.l.bf16 %v277
      %v398 = vunpack.c.l.bf16 %v278
      %v399 = vunpack.c.l.bf16 %v279
      %v400 = vunpack.c.l.bf16 %v280
      %v401 = vadd.f32 %v281, %v285
      %v402 = vadd.f32 %v282, %v286
      %v403 = vadd.f32 %v283, %v287
      %v404 = vadd.f32 %v284, %v288
      %v405 = vadd.f32 %v289, %v293
      %v406 = vadd.f32 %v290, %v294
      %v407 = vadd.f32 %v291, %v295
      %v408 = vadd.f32 %v292, %v296
      %v409 = vadd.f32 %v297, %v301
      %v410 = vadd.f32 %v298, %v302
      %v411 = vadd.f32 %v299, %v303
      %v412 = vadd.f32 %v300, %v304
      %v413 = vadd.f32 %v305, %v309
      %v414 = vadd.f32 %v306, %v310
      %v415 = vadd.f32 %v307, %v311
      %v416 = vadd.f32 %v308, %v312
      %v417 = vadd.f32 %v313, %v317
      %v418 = vadd.f32 %v314, %v318
      %v419 = vadd.f32 %v315, %v319
      %v420 = vadd.f32 %v316, %v320
      %v421 = vadd.f32 %v321, %v325
      %v422 = vadd.f32 %v322, %v326
      %v423 = vadd.f32 %v323, %v327
      %v424 = vadd.f32 %v324, %v328
      %v425 = vadd.f32 %v329, %v333
      %v426 = vadd.f32 %v330, %v334
      %v427 = vadd.f32 %v331, %v335
      %v428 = vadd.f32 %v332, %v336
      %v429 = vadd.f32 %v337, %v341
      %v430 = vadd.f32 %v338, %v342
      %v431 = vadd.f32 %v339, %v343
      %v432 = vadd.f32 %v340, %v344
      %v433 = vadd.f32 %v345, %v349
      %v434 = vadd.f32 %v346, %v350
      %v435 = vadd.f32 %v347, %v351
      %v436 = vadd.f32 %v348, %v352
      %v437 = vadd.f32 %v353, %v357
      %v438 = vadd.f32 %v354, %v358
      %v439 = vadd.f32 %v355, %v359
      %v440 = vadd.f32 %v356, %v360
      %v441 = vadd.f32 %v361, %v365
      %v442 = vadd.f32 %v362, %v366
      %v443 = vadd.f32 %v363, %v367
      %v444 = vadd.f32 %v364, %v368
      %v445 = vadd.f32 %v369, %v373
      %v446 = vadd.f32 %v370, %v374
      %v447 = vadd.f32 %v371, %v375
      %v448 = vadd.f32 %v372, %v376
      %v449 = vadd.f32 %v377, %v381
      %v450 = vadd.f32 %v378, %v382
      %v451 = vadd.f32 %v379, %v383
      %v452 = vadd.f32 %v380, %v384
      %v453 = vadd.f32 %v385, %v389
      %v454 = vadd.f32 %v386, %v390
      %v455 = vadd.f32 %v387, %v391
      %v456 = vadd.f32 %v388, %v392
      %v457 = vadd.f32 %v393, %v397
      %v458 = vadd.f32 %v394, %v398
      %v459 = vadd.f32 %v395, %v399
      %v460 = vadd.f32 %v396, %v400
      %461 = vst [vmem:[#allocation2] sm:$0xff] %v401
      %462 = vst [vmem:[#allocation2 + $0x8] sm:$0xff] %v402
      %463 = vst [vmem:[#allocation2 + $0x10] sm:$0xff] %v403
      %464 = vst [vmem:[#allocation2 + $0x18] sm:$0x3f] %v404
      %465 = vst [vmem:[#allocation2 + $0x20] sm:$0xff] %v405
      %466 = vst [vmem:[#allocation2 + $0x28] sm:$0xff] %v406
      %467 = vst [vmem:[#allocation2 + $0x30] sm:$0xff] %v407
      %468 = vst [vmem:[#allocation2 + $0x38] sm:$0x3f] %v408
      %469 = vst [vmem:[#allocation2 + $0x40] sm:$0xff] %v409
      %470 = vst [vmem:[#allocation2 + $0x48] sm:$0xff] %v410
      %471 = vst [vmem:[#allocation2 + $0x50] sm:$0xff] %v411
      %472 = vst [vmem:[#allocation2 + $0x58] sm:$0x3f] %v412
      %473 = vst [vmem:[#allocation2 + $0x60] sm:$0xff] %v413
      %474 = vst [vmem:[#allocation2 + $0x68] sm:$0xff] %v414
      %475 = vst [vmem:[#allocation2 + $0x70] sm:$0xff] %v415
      %476 = vst [vmem:[#allocation2 + $0x78] sm:$0x3f] %v416
      %477 = vst [vmem:[#allocation2 + $0x80] sm:$0xff] %v417
      %478 = vst [vmem:[#allocation2 + $0x88] sm:$0xff] %v418
      %479 = vst [vmem:[#allocation2 + $0x90] sm:$0xff] %v419
      %480 = vst [vmem:[#allocation2 + $0x98] sm:$0x3f] %v420
      %481 = vst [vmem:[#allocation2 + $0xa0] sm:$0xff] %v421
      %482 = vst [vmem:[#allocation2 + $0xa8] sm:$0xff] %v422
      %483 = vst [vmem:[#allocation2 + $0xb0] sm:$0xff] %v423
      %484 = vst [vmem:[#allocation2 + $0xb8] sm:$0x3f] %v424
      %485 = vst [vmem:[#allocation2 + $0xc0] sm:$0xff] %v425
      %486 = vst [vmem:[#allocation2 + $0xc8] sm:$0xff] %v426
      %487 = vst [vmem:[#allocation2 + $0xd0] sm:$0xff] %v427
      %488 = vst [vmem:[#allocation2 + $0xd8] sm:$0x3f] %v428
      %489 = vst [vmem:[#allocation2 + $0xe0] sm:$0xff] %v429
      %490 = vst [vmem:[#allocation2 + $0xe8] sm:$0xff] %v430
      %491 = vst [vmem:[#allocation2 + $0xf0] sm:$0xff] %v431
      %492 = vst [vmem:[#allocation2 + $0xf8] sm:$0x3f] %v432
      %493 = vst [vmem:[#allocation2 + $0x100] sm:$0xff] %v433
      %494 = vst [vmem:[#allocation2 + $0x108] sm:$0xff] %v434
      %495 = vst [vmem:[#allocation2 + $0x110] sm:$0xff] %v435
      %496 = vst [vmem:[#allocation2 + $0x118] sm:$0x3f] %v436
      %497 = vst [vmem:[#allocation2 + $0x120] sm:$0xff] %v437
      %498 = vst [vmem:[#allocation2 + $0x128] sm:$0xff] %v438
      %499 = vst [vmem:[#allocation2 + $0x130] sm:$0xff] %v439
      %500 = vst [vmem:[#allocation2 + $0x138] sm:$0x3f] %v440
      %501 = vst [vmem:[#allocation2 + $0x140] sm:$0xff] %v441
      %502 = vst [vmem:[#allocation2 + $0x148] sm:$0xff] %v442
      %503 = vst [vmem:[#allocation2 + $0x150] sm:$0xff] %v443
      %504 = vst [vmem:[#allocation2 + $0x158] sm:$0x3f] %v444
      %505 = vst [vmem:[#allocation2 + $0x160] sm:$0xff] %v445
      %506 = vst [vmem:[#allocation2 + $0x168] sm:$0xff] %v446
      %507 = vst [vmem:[#allocation2 + $0x170] sm:$0xff] %v447
      %508 = vst [vmem:[#allocation2 + $0x178] sm:$0x3f] %v448
      %509 = vst [vmem:[#allocation2 + $0x180] sm:$0xff] %v449
      %510 = vst [vmem:[#allocation2 + $0x188] sm:$0xff] %v450
      %511 = vst [vmem:[#allocation2 + $0x190] sm:$0xff] %v451
      %512 = vst [vmem:[#allocation2 + $0x198] sm:$0x3f] %v452
      %513 = vst [vmem:[#allocation2 + $0x1a0] sm:$0xff] %v453
      %514 = vst [vmem:[#allocation2 + $0x1a8] sm:$0xff] %v454
      %515 = vst [vmem:[#allocation2 + $0x1b0] sm:$0xff] %v455
      %516 = vst [vmem:[#allocation2 + $0x1b8] sm:$0x3f] %v456
      %517 = vst [vmem:[#allocation2 + $0x1c0] sm:$0xff] %v457
      %518 = vst [vmem:[#allocation2 + $0x1c8] sm:$0xff] %v458
      %519 = vst [vmem:[#allocation2 + $0x1d0] sm:$0xff] %v459
      %520 = vst [vmem:[#allocation2 + $0x1d8] sm:$0x3f] %v460
      %v521 = vld [vmem:[#allocation2] ss:$2 sm:$0xff]
      %s522 = scalar_lea.vmem [#allocation2], 16
      %v523 = vld [vmem:[%s522] ss:$2 sm:$0x7f]
      %s524 = scalar_lea.vmem [#allocation2], 32
      %v525 = vld [vmem:[%s524] ss:$2 sm:$0xff]
      %s526 = scalar_lea.vmem [#allocation2], 48
      %v527 = vld [vmem:[%s526] ss:$2 sm:$0x7f]
      %s528 = scalar_lea.vmem [#allocation2], 64
      %v529 = vld [vmem:[%s528] ss:$2 sm:$0xff]
      %s530 = scalar_lea.vmem [#allocation2], 80
      %v531 = vld [vmem:[%s530] ss:$2 sm:$0x7f]
      %s532 = scalar_lea.vmem [#allocation2], 96
      %v533 = vld [vmem:[%s532] ss:$2 sm:$0xff]
      %s534 = scalar_lea.vmem [#allocation2], 112
      %v535 = vld [vmem:[%s534] ss:$2 sm:$0x7f]
      %s536 = scalar_lea.vmem [#allocation2], 128
      %v537 = vld [vmem:[%s536] ss:$2 sm:$0xff]
      %s538 = scalar_lea.vmem [#allocation2], 144
      %v539 = vld [vmem:[%s538] ss:$2 sm:$0x7f]
      %s540 = scalar_lea.vmem [#allocation2], 160
      %v541 = vld [vmem:[%s540] ss:$2 sm:$0xff]
      %s542 = scalar_lea.vmem [#allocation2], 176
      %v543 = vld [vmem:[%s542] ss:$2 sm:$0x7f]
      %s544 = scalar_lea.vmem [#allocation2], 192
      %v545 = vld [vmem:[%s544] ss:$2 sm:$0xff]
      %s546 = scalar_lea.vmem [#allocation2], 208
      %v547 = vld [vmem:[%s546] ss:$2 sm:$0x7f]
      %s548 = scalar_lea.vmem [#allocation2], 224
      %v549 = vld [vmem:[%s548] ss:$2 sm:$0xff]
      %s550 = scalar_lea.vmem [#allocation2], 240
      %v551 = vld [vmem:[%s550] ss:$2 sm:$0x7f]
      %s552 = scalar_lea.vmem [#allocation2], 256
      %v553 = vld [vmem:[%s552] ss:$2 sm:$0xff]
      %s554 = scalar_lea.vmem [#allocation2], 272
      %v555 = vld [vmem:[%s554] ss:$2 sm:$0x7f]
      %s556 = scalar_lea.vmem [#allocation2], 288
      %v557 = vld [vmem:[%s556] ss:$2 sm:$0xff]
      %s558 = scalar_lea.vmem [#allocation2], 304
      %v559 = vld [vmem:[%s558] ss:$2 sm:$0x7f]
      %s560 = scalar_lea.vmem [#allocation2], 320
      %v561 = vld [vmem:[%s560] ss:$2 sm:$0xff]
      %s562 = scalar_lea.vmem [#allocation2], 336
      %v563 = vld [vmem:[%s562] ss:$2 sm:$0x7f]
      %s564 = scalar_lea.vmem [#allocation2], 352
      %v565 = vld [vmem:[%s564] ss:$2 sm:$0xff]
      %s566 = scalar_lea.vmem [#allocation2], 368
      %v567 = vld [vmem:[%s566] ss:$2 sm:$0x7f]
      %s568 = scalar_lea.vmem [#allocation2], 384
      %v569 = vld [vmem:[%s568] ss:$2 sm:$0xff]
      %s570 = scalar_lea.vmem [#allocation2], 400
      %v571 = vld [vmem:[%s570] ss:$2 sm:$0x7f]
      %s572 = scalar_lea.vmem [#allocation2], 416
      %v573 = vld [vmem:[%s572] ss:$2 sm:$0xff]
      %s574 = scalar_lea.vmem [#allocation2], 432
      %v575 = vld [vmem:[%s574] ss:$2 sm:$0x7f]
      %s576 = scalar_lea.vmem [#allocation2], 448
      %v577 = vld [vmem:[%s576] ss:$2 sm:$0xff]
      %s578 = scalar_lea.vmem [#allocation2], 464
      %v579 = vld [vmem:[%s578] ss:$2 sm:$0x7f]
      %s580 = scalar_lea.vmem [#allocation2], 1
      %v581 = vld [vmem:[%s580] ss:$2 sm:$0xff]
      %s582 = scalar_lea.vmem [#allocation2], 17
      %v583 = vld [vmem:[%s582] ss:$2 sm:$0x7f]
      %s584 = scalar_lea.vmem [#allocation2], 33
      %v585 = vld [vmem:[%s584] ss:$2 sm:$0xff]
      %s586 = scalar_lea.vmem [#allocation2], 49
      %v587 = vld [vmem:[%s586] ss:$2 sm:$0x7f]
      %s588 = scalar_lea.vmem [#allocation2], 65
      %v589 = vld [vmem:[%s588] ss:$2 sm:$0xff]
      %s590 = scalar_lea.vmem [#allocation2], 81
      %v591 = vld [vmem:[%s590] ss:$2 sm:$0x7f]
      %s592 = scalar_lea.vmem [#allocation2], 97
      %v593 = vld [vmem:[%s592] ss:$2 sm:$0xff]
      %s594 = scalar_lea.vmem [#allocation2], 113
      %v595 = vld [vmem:[%s594] ss:$2 sm:$0x7f]
      %s596 = scalar_lea.vmem [#allocation2], 129
      %v597 = vld [vmem:[%s596] ss:$2 sm:$0xff]
      %s598 = scalar_lea.vmem [#allocation2], 145
      %v599 = vld [vmem:[%s598] ss:$2 sm:$0x7f]
      %s600 = scalar_lea.vmem [#allocation2], 161
      %v601 = vld [vmem:[%s600] ss:$2 sm:$0xff]
      %s602 = scalar_lea.vmem [#allocation2], 177
      %v603 = vld [vmem:[%s602] ss:$2 sm:$0x7f]
      %s604 = scalar_lea.vmem [#allocation2], 193
      %v605 = vld [vmem:[%s604] ss:$2 sm:$0xff]
      %s606 = scalar_lea.vmem [#allocation2], 209
      %v607 = vld [vmem:[%s606] ss:$2 sm:$0x7f]
      %s608 = scalar_lea.vmem [#allocation2], 225
      %v609 = vld [vmem:[%s608] ss:$2 sm:$0xff]
      %s610 = scalar_lea.vmem [#allocation2], 241
      %v611 = vld [vmem:[%s610] ss:$2 sm:$0x7f]
      %s612 = scalar_lea.vmem [#allocation2], 257
      %v613 = vld [vmem:[%s612] ss:$2 sm:$0xff]
      %s614 = scalar_lea.vmem [#allocation2], 273
      %v615 = vld [vmem:[%s614] ss:$2 sm:$0x7f]
      %s616 = scalar_lea.vmem [#allocation2], 289
      %v617 = vld [vmem:[%s616] ss:$2 sm:$0xff]
      %s618 = scalar_lea.vmem [#allocation2], 305
      %v619 = vld [vmem:[%s618] ss:$2 sm:$0x7f]
      %s620 = scalar_lea.vmem [#allocation2], 321
      %v621 = vld [vmem:[%s620] ss:$2 sm:$0xff]
      %s622 = scalar_lea.vmem [#allocation2], 337
      %v623 = vld [vmem:[%s622] ss:$2 sm:$0x7f]
      %s624 = scalar_lea.vmem [#allocation2], 353
      %v625 = vld [vmem:[%s624] ss:$2 sm:$0xff]
      %s626 = scalar_lea.vmem [#allocation2], 369
      %v627 = vld [vmem:[%s626] ss:$2 sm:$0x7f]
      %s628 = scalar_lea.vmem [#allocation2], 385
      %v629 = vld [vmem:[%s628] ss:$2 sm:$0xff]
      %s630 = scalar_lea.vmem [#allocation2], 401
      %v631 = vld [vmem:[%s630] ss:$2 sm:$0x7f]
      %s632 = scalar_lea.vmem [#allocation2], 417
      %v633 = vld [vmem:[%s632] ss:$2 sm:$0xff]
      %s634 = scalar_lea.vmem [#allocation2], 433
      %v635 = vld [vmem:[%s634] ss:$2 sm:$0x7f]
      %s636 = scalar_lea.vmem [#allocation2], 449
      %v637 = vld [vmem:[%s636] ss:$2 sm:$0xff]
      %s638 = scalar_lea.vmem [#allocation2], 465
      %v639 = vld [vmem:[%s638] ss:$2 sm:$0x7f]
      %v640 = vadd.f32 %v521, %v581
      %v641 = vadd.f32 %v523, %v583
      %v642 = vadd.f32 %v525, %v585
      %v643 = vadd.f32 %v527, %v587
      %v644 = vadd.f32 %v529, %v589
      %v645 = vadd.f32 %v531, %v591
      %v646 = vadd.f32 %v533, %v593
      %v647 = vadd.f32 %v535, %v595
      %v648 = vadd.f32 %v537, %v597
      %v649 = vadd.f32 %v539, %v599
      %v650 = vadd.f32 %v541, %v601
      %v651 = vadd.f32 %v543, %v603
      %v652 = vadd.f32 %v545, %v605
      %v653 = vadd.f32 %v547, %v607
      %v654 = vadd.f32 %v549, %v609
      %v655 = vadd.f32 %v551, %v611
      %v656 = vadd.f32 %v553, %v613
      %v657 = vadd.f32 %v555, %v615
      %v658 = vadd.f32 %v557, %v617
      %v659 = vadd.f32 %v559, %v619
      %v660 = vadd.f32 %v561, %v621
      %v661 = vadd.f32 %v563, %v623
      %v662 = vadd.f32 %v565, %v625
      %v663 = vadd.f32 %v567, %v627
      %v664 = vadd.f32 %v569, %v629
      %v665 = vadd.f32 %v571, %v631
      %v666 = vadd.f32 %v573, %v633
      %v667 = vadd.f32 %v575, %v635
      %v668 = vadd.f32 %v577, %v637
      %v669 = vadd.f32 %v579, %v639
      %v670 = vmul.f32 %v640, 0.25
      %v671 = vmul.f32 %v641, 0.25
      %v672 = vmul.f32 %v642, 0.25
      %v673 = vmul.f32 %v643, 0.25
      %v674 = vmul.f32 %v644, 0.25
      %v675 = vmul.f32 %v645, 0.25
      %v676 = vmul.f32 %v646, 0.25
      %v677 = vmul.f32 %v647, 0.25
      %v678 = vmul.f32 %v648, 0.25
      %v679 = vmul.f32 %v649, 0.25
      %v680 = vmul.f32 %v650, 0.25
      %v681 = vmul.f32 %v651, 0.25
      %v682 = vmul.f32 %v652, 0.25
      %v683 = vmul.f32 %v653, 0.25
      %v684 = vmul.f32 %v654, 0.25
      %v685 = vmul.f32 %v655, 0.25
      %v686 = vmul.f32 %v656, 0.25
      %v687 = vmul.f32 %v657, 0.25
      %v688 = vmul.f32 %v658, 0.25
      %v689 = vmul.f32 %v659, 0.25
      %v690 = vmul.f32 %v660, 0.25
      %v691 = vmul.f32 %v661, 0.25
      %v692 = vmul.f32 %v662, 0.25
      %v693 = vmul.f32 %v663, 0.25
      %v694 = vmul.f32 %v664, 0.25
      %v695 = vmul.f32 %v665, 0.25
      %v696 = vmul.f32 %v666, 0.25
      %v697 = vmul.f32 %v667, 0.25
      %v698 = vmul.f32 %v668, 0.25
      %v699 = vmul.f32 %v669, 0.25
      %v700 = vpack.c.bf16 %v671, %v670
      %v701 = vpack.c.bf16 %v673, %v672
      %v702 = vpack.c.bf16 %v675, %v674
      %v703 = vpack.c.bf16 %v677, %v676
      %v704 = vpack.c.bf16 %v679, %v678
      %v705 = vpack.c.bf16 %v681, %v680
      %v706 = vpack.c.bf16 %v683, %v682
      %v707 = vpack.c.bf16 %v685, %v684
      %v708 = vpack.c.bf16 %v687, %v686
      %v709 = vpack.c.bf16 %v689, %v688
      %v710 = vpack.c.bf16 %v691, %v690
      %v711 = vpack.c.bf16 %v693, %v692
      %v712 = vpack.c.bf16 %v695, %v694
      %v713 = vpack.c.bf16 %v697, %v696
      %v714 = vpack.c.bf16 %v699, %v698
      %v730 = vunpack.c.l.b16 %v700
      %v731 = vunpack.c.h.b16 %v700
      %v732 = vunpack.c.l.b16 %v701
      %v733 = vunpack.c.h.b16 %v701
      %v734 = vunpack.c.l.b16 %v702
      %v735 = vunpack.c.h.b16 %v702
      %v736 = vunpack.c.l.b16 %v703
      %v737 = vunpack.c.h.b16 %v703
      %v738 = vunpack.c.l.b16 %v704
      %v739 = vunpack.c.h.b16 %v704
      %v740 = vunpack.c.l.b16 %v705
      %v741 = vunpack.c.h.b16 %v705
      %v742 = vunpack.c.l.b16 %v706
      %v743 = vunpack.c.h.b16 %v706
      %v744 = vunpack.c.l.b16 %v707
      %v745 = vunpack.c.h.b16 %v707
      %v746 = vunpack.c.l.b16 %v708
      %v747 = vunpack.c.h.b16 %v708
      %v748 = vunpack.c.l.b16 %v709
      %v749 = vunpack.c.h.b16 %v709
      %v750 = vunpack.c.l.b16 %v710
      %v751 = vunpack.c.h.b16 %v710
      %v752 = vunpack.c.l.b16 %v711
      %v753 = vunpack.c.h.b16 %v711
      %v754 = vunpack.c.l.b16 %v712
      %v755 = vunpack.c.h.b16 %v712
      %v756 = vunpack.c.l.b16 %v713
      %v757 = vunpack.c.h.b16 %v713
      %v758 = vunpack.c.l.b16 %v714
      %v759 = vunpack.c.h.b16 %v714
      %v760 = vpack.c.b16 %v730, %v730
      %v761 = vpack.c.b16 %v731, %v731
      %v762 = vpack.c.b16 %v732, %v732
      %v763 = vpack.c.b16 %v733, %v733
      %v764 = vpack.c.b16 %v734, %v734
      %v765 = vpack.c.b16 %v735, %v735
      %v766 = vpack.c.b16 %v736, %v736
      %v767 = vpack.c.b16 %v737, %v737
      %v768 = vpack.c.b16 %v738, %v738
      %v769 = vpack.c.b16 %v739, %v739
      %v770 = vpack.c.b16 %v740, %v740
      %v771 = vpack.c.b16 %v741, %v741
      %v772 = vpack.c.b16 %v742, %v742
      %v773 = vpack.c.b16 %v743, %v743
      %v774 = vpack.c.b16 %v744, %v744
      %v775 = vpack.c.b16 %v745, %v745
      %v776 = vpack.c.b16 %v746, %v746
      %v777 = vpack.c.b16 %v747, %v747
      %v778 = vpack.c.b16 %v748, %v748
      %v779 = vpack.c.b16 %v749, %v749
      %v780 = vpack.c.b16 %v750, %v750
      %v781 = vpack.c.b16 %v751, %v751
      %v782 = vpack.c.b16 %v752, %v752
      %v783 = vpack.c.b16 %v753, %v753
      %v784 = vpack.c.b16 %v754, %v754
      %v785 = vpack.c.b16 %v755, %v755
      %v786 = vpack.c.b16 %v756, %v756
      %v787 = vpack.c.b16 %v757, %v757
      %v788 = vpack.c.b16 %v758, %v758
      %v789 = vpack.c.b16 %v759, %v759
      %vm820 = vcmask 125952
      %821 = vst.msk [vmem:[%s159] sm:$0xf] %vm820, %v760
      %vm822 = vcmask 125952
      %vm823 = vsmask.f32 3328
      %vm824 = vmand %vm822, %vm823
      %v825 = vld [vmem:[%s159 + $0x4] sm:$0xf]
      %v826 = vsel %vm824, %v761, %v825
      %827 = vst [vmem:[%s159 + $0x4] sm:$0xf] %v826
      %828 = vst.msk [vmem:[%s159 + $0x8] sm:$0xf] %vm820, %v762
      %v829 = vld [vmem:[%s159 + $0xc] sm:$0xf]
      %v830 = vsel %vm824, %v763, %v829
      %831 = vst [vmem:[%s159 + $0xc] sm:$0xf] %v830
      %832 = vst.msk [vmem:[%s159 + $0x10] sm:$0xf] %vm820, %v764
      %v833 = vld [vmem:[%s159 + $0x14] sm:$0xf]
      %v834 = vsel %vm824, %v765, %v833
      %835 = vst [vmem:[%s159 + $0x14] sm:$0xf] %v834
      %836 = vst.msk [vmem:[%s159 + $0x18] sm:$0xf] %vm820, %v766
      %v837 = vld [vmem:[%s159 + $0x1c] sm:$0xf]
      %v838 = vsel %vm824, %v767, %v837
      %839 = vst [vmem:[%s159 + $0x1c] sm:$0xf] %v838
      %840 = vst.msk [vmem:[%s159 + $0x20] sm:$0xf] %vm820, %v768
      %v841 = vld [vmem:[%s159 + $0x24] sm:$0xf]
      %v842 = vsel %vm824, %v769, %v841
      %843 = vst [vmem:[%s159 + $0x24] sm:$0xf] %v842
      %844 = vst.msk [vmem:[%s159 + $0x28] sm:$0xf] %vm820, %v770
      %v845 = vld [vmem:[%s159 + $0x2c] sm:$0xf]
      %v846 = vsel %vm824, %v771, %v845
      %847 = vst [vmem:[%s159 + $0x2c] sm:$0xf] %v846
      %848 = vst.msk [vmem:[%s159 + $0x30] sm:$0xf] %vm820, %v772
      %v849 = vld [vmem:[%s159 + $0x34] sm:$0xf]
      %v850 = vsel %vm824, %v773, %v849
      %851 = vst [vmem:[%s159 + $0x34] sm:$0xf] %v850
      %852 = vst.msk [vmem:[%s159 + $0x38] sm:$0xf] %vm820, %v774
      %v853 = vld [vmem:[%s159 + $0x3c] sm:$0xf]
      %v854 = vsel %vm824, %v775, %v853
      %855 = vst [vmem:[%s159 + $0x3c] sm:$0xf] %v854
      %856 = vst.msk [vmem:[%s159 + $0x40] sm:$0xf] %vm820, %v776
      %v857 = vld [vmem:[%s159 + $0x44] sm:$0xf]
      %v858 = vsel %vm824, %v777, %v857
      %859 = vst [vmem:[%s159 + $0x44] sm:$0xf] %v858
      %860 = vst.msk [vmem:[%s159 + $0x48] sm:$0xf] %vm820, %v778
      %v861 = vld [vmem:[%s159 + $0x4c] sm:$0xf]
      %v862 = vsel %vm824, %v779, %v861
      %863 = vst [vmem:[%s159 + $0x4c] sm:$0xf] %v862
      %864 = vst.msk [vmem:[%s159 + $0x50] sm:$0xf] %vm820, %v780
      %v865 = vld [vmem:[%s159 + $0x54] sm:$0xf]
      %v866 = vsel %vm824, %v781, %v865
      %867 = vst [vmem:[%s159 + $0x54] sm:$0xf] %v866
      %868 = vst.msk [vmem:[%s159 + $0x58] sm:$0xf] %vm820, %v782
      %v869 = vld [vmem:[%s159 + $0x5c] sm:$0xf]
      %v870 = vsel %vm824, %v783, %v869
      %871 = vst [vmem:[%s159 + $0x5c] sm:$0xf] %v870
      %872 = vst.msk [vmem:[%s159 + $0x60] sm:$0xf] %vm820, %v784
      %v873 = vld [vmem:[%s159 + $0x64] sm:$0xf]
      %v874 = vsel %vm824, %v785, %v873
      %875 = vst [vmem:[%s159 + $0x64] sm:$0xf] %v874
      %876 = vst.msk [vmem:[%s159 + $0x68] sm:$0xf] %vm820, %v786
      %v877 = vld [vmem:[%s159 + $0x6c] sm:$0xf]
      %v878 = vsel %vm824, %v787, %v877
      %879 = vst [vmem:[%s159 + $0x6c] sm:$0xf] %v878
      %880 = vst.msk [vmem:[%s159 + $0x70] sm:$0xf] %vm820, %v788
      %v881 = vld [vmem:[%s159 + $0x74] sm:$0xf]
      %v882 = vsel %vm824, %v789, %v881
      %883 = vst [vmem:[%s159 + $0x74] sm:$0xf] %v882
      %s884 = smul.u32 15, %s17
      %p885 = scmp.lt.s32.totalorder %s16, 1
      %s886 = scalar_select %p885, %s16, 1
      %p887 = scmp.lt.s32.totalorder %s884, 14
      %s888 = scalar_select %p887, %s884, 14
      %s889 = smul.addr %s888, 2
      %s890 = smul.addr %s886, 30
      %s891 = sadd.s32 %s889, %s890
      %s892 = smul.addr %s891, 4
      %s893 = scalar_lea.vmem %s1, %s892
      // Predicated region
      $region25: #{lenet5_forward.8} parent=23 // pred_check
        %p894 = pneg %p72
      $region26: #{lenet5_forward.8} parent=23 // pred_check_branch
        %896 = sbr.rel (%p894) target = $region28
      $region27: #{lenet5_forward.8} parent=23 // pred_region
        %s897 = smul.u32 15, %s17
      $region28: #{lenet5_forward.8} parent=23 // pred_fallthru
        _
    $region24: #{lenet5_forward.8} parent=5 // pred_fallthru
      _
    %p898 = scmp.le.s32.totalorder 2, %s7
    // Predicated region
    $region29: #{lenet5_forward.8} parent=5 // pred_check
      %p899 = pneg %p898
    $region30: #{lenet5_forward.8} parent=5 // pred_check_branch
      %901 = sbr.rel (%p899) target = $region32
    $region31: #{lenet5_forward.8} parent=5 // pred_region
      %s902 = ssub.s32 %s7, 2
      // Predicated region
      $region33: #{lenet5_forward.8} parent=31 // pred_check
        %p903 = pneg %p78
      $region34: #{lenet5_forward.8} parent=31 // pred_check_branch
        %905 = sbr.rel (%p903) target = $region36
      $region35: #{lenet5_forward.8} parent=31 // pred_region
        %s906 = smul.u32 15, %s19
        %p907 = scmp.lt.s32.totalorder %s18, 1
        %s908 = scalar_select %p907, %s18, 1
        %p909 = scmp.lt.s32.totalorder %s906, 14
        %s910 = scalar_select %p909, %s906, 14
        %s911 = smul.addr %s910, 2
        %s912 = smul.addr %s908, 30
        %s913 = sadd.s32 %s911, %s912
        %s914 = smul.addr %s913, 4
        %s915 = scalar_lea.vmem %s1, %s914
      $region36: #{lenet5_forward.8} parent=31 // pred_fallthru
        _
    $region32: #{lenet5_forward.8} parent=5 // pred_fallthru
      _
  $region6: #{lenet5_forward.8} parent=0 // loop_footer
    %s11 = sadd.s32 1, %s7
  $region7: #{lenet5_forward.8} parent=0 // loop_footer_branch
    %6 = sbr.rel target = $region3
  $region8: #{lenet5_forward.8} parent=0 // loop_exit
    _

// kernel: lenet5_forward.9
$region0: #{lenet5_forward.9}
  #allocation0 [shape = 'u32[]', space=smem, size = 0x4, offset = 0x4, fixed_abs, tag = 'smem constant byte address 0x4 - core index']
  #allocation1 [shape = 'u32[144,128]{1,0:T(1,128)}', space=vmem, size = 0x12000, scoped, tag = 'internal scratch']
  #allocation2 [shape = 'f32[338,128]{1,0:T(8,128)}', space=vmem, size = 0x2b000, scoped, tag = 'scratch operand']
  %s0 = inlined_call_operand.vmem [shape: bf16[338,144], index: 0, kind: input, shape index: {}]
  %s1 = inlined_call_operand.vmem [shape: bf16[144,128], index: 1, kind: input, shape index: {}]
  %s2 = inlined_call_operand.vmem [shape: f32[1,128], index: 2, kind: input, shape index: {}]
  %s3 = inlined_call_operand.vmem [shape: bf16[338,128], index: 3, kind: output, shape index: {}]
  %s4 = sld [smem:[#allocation0]]
  $region30: #{lenet5_forward.9} parent=0
    _
  %s6 = ssub.s32 1, %s4
  %s7 = scalar_select 0, %s6, %s4
  // Predicated region
  $region2: #{lenet5_forward.9} parent=0 // pred_check
    _
  $region3: #{lenet5_forward.9} parent=0 // pred_check_branch
    %9 = sbr.rel (0) target = $region5
  $region4: #{lenet5_forward.9} parent=0 // pred_region
    _
  $region5: #{lenet5_forward.9} parent=0 // pred_fallthru
    _
  // Predicated region
  $region6: #{lenet5_forward.9} parent=0 // pred_check
    _
  $region7: #{lenet5_forward.9} parent=0 // pred_check_branch
    %11 = sbr.rel (0) target = $region9
  $region8: #{lenet5_forward.9} parent=0 // pred_region
    _
  $region9: #{lenet5_forward.9} parent=0 // pred_fallthru
    _
  // Predicated region
  $region10: #{lenet5_forward.9} parent=0 // pred_check
    _
  $region11: #{lenet5_forward.9} parent=0 // pred_check_branch
    %13 = sbr.rel (0) target = $region13
  $region12: #{lenet5_forward.9} parent=0 // pred_region
    _
  $region13: #{lenet5_forward.9} parent=0 // pred_fallthru
    _
  %p15 = scmp.eq.s32.totalorder 0, 0
  // Predicated region
  $region14: #{lenet5_forward.9} parent=0 // pred_check
    %p16 = pneg %p15
  $region15: #{lenet5_forward.9} parent=0 // pred_check_branch
    %18 = sbr.rel (%p16) target = $region17
  $region16: #{lenet5_forward.9} parent=0 // pred_region
    %19 = vst [vmem:[#allocation2] sm:$0xff] 0.0
    %20 = vst [vmem:[#allocation2 + $0x8] sm:$0xff] 0.0
    %21 = vst [vmem:[#allocation2 + $0x10] sm:$0xff] 0.0
    %22 = vst [vmem:[#allocation2 + $0x18] sm:$0xff] 0.0
    %23 = vst [vmem:[#allocation2 + $0x20] sm:$0xff] 0.0
    %24 = vst [vmem:[#allocation2 + $0x28] sm:$0xff] 0.0
    %25 = vst [vmem:[#allocation2 + $0x30] sm:$0xff] 0.0
    %26 = vst [vmem:[#allocation2 + $0x38] sm:$0xff] 0.0
    %27 = vst [vmem:[#allocation2 + $0x40] sm:$0xff] 0.0
    %28 = vst [vmem:[#allocation2 + $0x48] sm:$0xff] 0.0
    %29 = vst [vmem:[#allocation2 + $0x50] sm:$0xff] 0.0
    %30 = vst [vmem:[#allocation2 + $0x58] sm:$0xff] 0.0
    %31 = vst [vmem:[#allocation2 + $0x60] sm:$0xff] 0.0
    %32 = vst [vmem:[#allocation2 + $0x68] sm:$0xff] 0.0
    %33 = vst [vmem:[#allocation2 + $0x70] sm:$0xff] 0.0
    %34 = vst [vmem:[#allocation2 + $0x78] sm:$0xff] 0.0
    %35 = vst [vmem:[#allocation2 + $0x80] sm:$0xff] 0.0
    %36 = vst [vmem:[#allocation2 + $0x88] sm:$0xff] 0.0
    %37 = vst [vmem:[#allocation2 + $0x90] sm:$0xff] 0.0
    %38 = vst [vmem:[#allocation2 + $0x98] sm:$0xff] 0.0
    %39 = vst [vmem:[#allocation2 + $0xa0] sm:$0xff] 0.0
    %40 = vst [vmem:[#allocation2 + $0xa8] sm:$0xff] 0.0
    %41 = vst [vmem:[#allocation2 + $0xb0] sm:$0xff] 0.0
    %42 = vst [vmem:[#allocation2 + $0xb8] sm:$0xff] 0.0
    %43 = vst [vmem:[#allocation2 + $0xc0] sm:$0xff] 0.0
    %44 = vst [vmem:[#allocation2 + $0xc8] sm:$0xff] 0.0
    %45 = vst [vmem:[#allocation2 + $0xd0] sm:$0xff] 0.0
    %46 = vst [vmem:[#allocation2 + $0xd8] sm:$0xff] 0.0
    %47 = vst [vmem:[#allocation2 + $0xe0] sm:$0xff] 0.0
    %48 = vst [vmem:[#allocation2 + $0xe8] sm:$0xff] 0.0
    %49 = vst [vmem:[#allocation2 + $0xf0] sm:$0xff] 0.0
    %50 = vst [vmem:[#allocation2 + $0xf8] sm:$0xff] 0.0
    %51 = vst [vmem:[#allocation2 + $0x100] sm:$0xff] 0.0
    %52 = vst [vmem:[#allocation2 + $0x108] sm:$0xff] 0.0
    %53 = vst [vmem:[#allocation2 + $0x110] sm:$0xff] 0.0
    %54 = vst [vmem:[#allocation2 + $0x118] sm:$0xff] 0.0
    %55 = vst [vmem:[#allocation2 + $0x120] sm:$0xff] 0.0
    %56 = vst [vmem:[#allocation2 + $0x128] sm:$0xff] 0.0
    %57 = vst [vmem:[#allocation2 + $0x130] sm:$0xff] 0.0
    %58 = vst [vmem:[#allocation2 + $0x138] sm:$0xff] 0.0
    %59 = vst [vmem:[#allocation2 + $0x140] sm:$0xff] 0.0
    %60 = vst [vmem:[#allocation2 + $0x148] sm:$0xff] 0.0
    %61 = vst [vmem:[#allocation2 + $0x150] sm:$0x3] 0.0
  $region17: #{lenet5_forward.9} parent=0 // pred_fallthru
    _
  %v62 = vld [vmem:[#allocation2] sm:$0xff]
  %v63 = vld [vmem:[#allocation2 + $0x8] sm:$0xff]
  %v64 = vld [vmem:[#allocation2 + $0x10] sm:$0xff]
  %v65 = vld [vmem:[#allocation2 + $0x18] sm:$0xff]
  %v66 = vld [vmem:[#allocation2 + $0x20] sm:$0xff]
  %v67 = vld [vmem:[#allocation2 + $0x28] sm:$0xff]
  %v68 = vld [vmem:[#allocation2 + $0x30] sm:$0xff]
  %v69 = vld [vmem:[#allocation2 + $0x38] sm:$0xff]
  %v70 = vld [vmem:[#allocation2 + $0x40] sm:$0xff]
  %v71 = vld [vmem:[#allocation2 + $0x48] sm:$0xff]
  %v72 = vld [vmem:[#allocation2 + $0x50] sm:$0xff]
  %v73 = vld [vmem:[#allocation2 + $0x58] sm:$0xff]
  %v74 = vld [vmem:[#allocation2 + $0x60] sm:$0xff]
  %v75 = vld [vmem:[#allocation2 + $0x68] sm:$0xff]
  %v76 = vld [vmem:[#allocation2 + $0x70] sm:$0xff]
  %v77 = vld [vmem:[#allocation2 + $0x78] sm:$0xff]
  %v78 = vld [vmem:[#allocation2 + $0x80] sm:$0xff]
  %v79 = vld [vmem:[#allocation2 + $0x88] sm:$0xff]
  %v80 = vld [vmem:[#allocation2 + $0x90] sm:$0xff]
  %v81 = vld [vmem:[#allocation2 + $0x98] sm:$0xff]
  %v82 = vld [vmem:[#allocation2 + $0xa0] sm:$0xff]
  %v83 = vld [vmem:[#allocation2 + $0xa8] sm:$0xff]
  %v84 = vld [vmem:[#allocation2 + $0xb0] sm:$0xff]
  %v85 = vld [vmem:[#allocation2 + $0xb8] sm:$0xff]
  %v86 = vld [vmem:[#allocation2 + $0xc0] sm:$0xff]
  %v87 = vld [vmem:[#allocation2 + $0xc8] sm:$0xff]
  %v88 = vld [vmem:[#allocation2 + $0xd0] sm:$0xff]
  %v89 = vld [vmem:[#allocation2 + $0xd8] sm:$0xff]
  %v90 = vld [vmem:[#allocation2 + $0xe0] sm:$0xff]
  %v91 = vld [vmem:[#allocation2 + $0xe8] sm:$0xff]
  %v92 = vld [vmem:[#allocation2 + $0xf0] sm:$0xff]
  %v93 = vld [vmem:[#allocation2 + $0xf8] sm:$0xff]
  %v94 = vld [vmem:[#allocation2 + $0x100] sm:$0xff]
  %v95 = vld [vmem:[#allocation2 + $0x108] sm:$0xff]
  %v96 = vld [vmem:[#allocation2 + $0x110] sm:$0xff]
  %v97 = vld [vmem:[#allocation2 + $0x118] sm:$0xff]
  %v98 = vld [vmem:[#allocation2 + $0x120] sm:$0xff]
  %v99 = vld [vmem:[#allocation2 + $0x128] sm:$0xff]
  %v100 = vld [vmem:[#allocation2 + $0x130] sm:$0xff]
  %v101 = vld [vmem:[#allocation2 + $0x138] sm:$0xff]
  %v102 = vld [vmem:[#allocation2 + $0x140] sm:$0xff]
  %v103 = vld [vmem:[#allocation2 + $0x148] sm:$0xff]
  %v104 = vld [vmem:[#allocation2 + $0x150] sm:$0x3]
  %v105 = vld [vmem:[%s0] sm:$0xff]
  %v106 = vld [vmem:[%s0 + $0x8] sm:$0xff]
  %v107 = vld [vmem:[%s0 + $0x10] sm:$0xff]
  %v108 = vld [vmem:[%s0 + $0x18] sm:$0xff]
  %v109 = vld [vmem:[%s0 + $0x20] sm:$0xff]
  %v110 = vld [vmem:[%s0 + $0x28] sm:$0xff]
  %v111 = vld [vmem:[%s0 + $0x30] sm:$0xff]
  %v112 = vld [vmem:[%s0 + $0x38] sm:$0xff]
  %v113 = vld [vmem:[%s0 + $0x40] sm:$0xff]
  %v114 = vld [vmem:[%s0 + $0x48] sm:$0xff]
  %v115 = vld [vmem:[%s0 + $0x50] sm:$0xff]
  %v116 = vld [vmem:[%s0 + $0x58] sm:$0xff]
  %v117 = vld [vmem:[%s0 + $0x60] sm:$0xff]
  %v118 = vld [vmem:[%s0 + $0x68] sm:$0xff]
  %v119 = vld [vmem:[%s0 + $0x70] sm:$0xff]
  %v120 = vld [vmem:[%s0 + $0x78] sm:$0xff]
  %v121 = vld [vmem:[%s0 + $0x80] sm:$0xff]
  %v122 = vld [vmem:[%s0 + $0x88] sm:$0xff]
  %v123 = vld [vmem:[%s0 + $0x90] sm:$0xff]
  %v124 = vld [vmem:[%s0 + $0x98] sm:$0xff]
  %v125 = vld [vmem:[%s0 + $0xa0] sm:$0xff]
  %v126 = vld [vmem:[%s0 + $0xa8] sm:$0xff]
  %v127 = vld [vmem:[%s0 + $0xb0] sm:$0xff]
  %v128 = vld [vmem:[%s0 + $0xb8] sm:$0xff]
  %v129 = vld [vmem:[%s0 + $0xc0] sm:$0xff]
  %v130 = vld [vmem:[%s0 + $0xc8] sm:$0xff]
  %v131 = vld [vmem:[%s0 + $0xd0] sm:$0xff]
  %v132 = vld [vmem:[%s0 + $0xd8] sm:$0xff]
  %v133 = vld [vmem:[%s0 + $0xe0] sm:$0xff]
  %v134 = vld [vmem:[%s0 + $0xe8] sm:$0xff]
  %v135 = vld [vmem:[%s0 + $0xf0] sm:$0xff]
  %v136 = vld [vmem:[%s0 + $0xf8] sm:$0xff]
  %v137 = vld [vmem:[%s0 + $0x100] sm:$0xff]
  %v138 = vld [vmem:[%s0 + $0x108] sm:$0xff]
  %v139 = vld [vmem:[%s0 + $0x110] sm:$0xff]
  %v140 = vld [vmem:[%s0 + $0x118] sm:$0xff]
  %v141 = vld [vmem:[%s0 + $0x120] sm:$0xff]
  %v142 = vld [vmem:[%s0 + $0x128] sm:$0xff]
  %v143 = vld [vmem:[%s0 + $0x130] sm:$0xff]
  %v144 = vld [vmem:[%s0 + $0x138] sm:$0xff]
  %v145 = vld [vmem:[%s0 + $0x140] sm:$0xff]
  %v146 = vld [vmem:[%s0 + $0x148] sm:$0xff]
  %v147 = vld [vmem:[%s0 + $0x150] sm:$0x11]
  %v148 = vld [vmem:[%s1] sm:$0xf]
  %v149 = vld [vmem:[%s1 + $0x4] sm:$0xf]
  %v150 = vld [vmem:[%s1 + $0x8] sm:$0xf]
  %v151 = vld [vmem:[%s1 + $0xc] sm:$0xf]
  %v152 = vld [vmem:[%s1 + $0x10] sm:$0xf]
  %v153 = vld [vmem:[%s1 + $0x14] sm:$0xf]
  %v154 = vld [vmem:[%s1 + $0x18] sm:$0xf]
  %v155 = vld [vmem:[%s1 + $0x1c] sm:$0xf]
  %v156 = vld [vmem:[%s1 + $0x20] sm:$0xf]
  %v157 = vld [vmem:[%s1 + $0x24] sm:$0xf]
  %v158 = vld [vmem:[%s1 + $0x28] sm:$0xf]
  %v159 = vld [vmem:[%s1 + $0x2c] sm:$0xf]
  %v160 = vld [vmem:[%s1 + $0x30] sm:$0xf]
  %v161 = vld [vmem:[%s1 + $0x34] sm:$0xf]
  %v162 = vld [vmem:[%s1 + $0x38] sm:$0xf]
  %v163 = vld [vmem:[%s1 + $0x3c] sm:$0xf]
  %v164 = vld [vmem:[%s1 + $0x40] sm:$0xf]
  %v165 = vld [vmem:[%s1 + $0x44] sm:$0xf]
  %v209 = vunpack.c.l.b16 %v105
  %v210 = vunpack.c.h.b16 %v105
  %v211 = vunpack.c.l.b16 %v106
  %v212 = vunpack.c.h.b16 %v106
  %v213 = vunpack.c.l.b16 %v107
  %v214 = vunpack.c.h.b16 %v107
  %v215 = vunpack.c.l.b16 %v108
  %v216 = vunpack.c.h.b16 %v108
  %v217 = vunpack.c.l.b16 %v109
  %v218 = vunpack.c.h.b16 %v109
  %v219 = vunpack.c.l.b16 %v110
  %v220 = vunpack.c.h.b16 %v110
  %v221 = vunpack.c.l.b16 %v111
  %v222 = vunpack.c.h.b16 %v111
  %v223 = vunpack.c.l.b16 %v112
  %v224 = vunpack.c.h.b16 %v112
  %v225 = vunpack.c.l.b16 %v113
  %v226 = vunpack.c.h.b16 %v113
  %v227 = vunpack.c.l.b16 %v114
  %v228 = vunpack.c.h.b16 %v114
  %v229 = vunpack.c.l.b16 %v115
  %v230 = vunpack.c.h.b16 %v115
  %v231 = vunpack.c.l.b16 %v116
  %v232 = vunpack.c.h.b16 %v116
  %v233 = vunpack.c.l.b16 %v117
  %v234 = vunpack.c.h.b16 %v117
  %v235 = vunpack.c.l.b16 %v118
  %v236 = vunpack.c.h.b16 %v118
  %v237 = vunpack.c.l.b16 %v119
  %v238 = vunpack.c.h.b16 %v119
  %v239 = vunpack.c.l.b16 %v120
  %v240 = vunpack.c.h.b16 %v120
  %v241 = vunpack.c.l.b16 %v121
  %v242 = vunpack.c.h.b16 %v121
  %v243 = vunpack.c.l.b16 %v122
  %v244 = vunpack.c.h.b16 %v122
  %v245 = vunpack.c.l.b16 %v123
  %v246 = vunpack.c.h.b16 %v123
  %v247 = vunpack.c.l.b16 %v124
  %v248 = vunpack.c.h.b16 %v124
  %v249 = vunpack.c.l.b16 %v125
  %v250 = vunpack.c.h.b16 %v125
  %v251 = vunpack.c.l.b16 %v126
  %v252 = vunpack.c.h.b16 %v126
  %v253 = vunpack.c.l.b16 %v127
  %v254 = vunpack.c.h.b16 %v127
  %v255 = vunpack.c.l.b16 %v128
  %v256 = vunpack.c.h.b16 %v128
  %v257 = vunpack.c.l.b16 %v129
  %v258 = vunpack.c.h.b16 %v129
  %v259 = vunpack.c.l.b16 %v130
  %v260 = vunpack.c.h.b16 %v130
  %v261 = vunpack.c.l.b16 %v131
  %v262 = vunpack.c.h.b16 %v131
  %v263 = vunpack.c.l.b16 %v132
  %v264 = vunpack.c.h.b16 %v132
  %v265 = vunpack.c.l.b16 %v133
  %v266 = vunpack.c.h.b16 %v133
  %v267 = vunpack.c.l.b16 %v134
  %v268 = vunpack.c.h.b16 %v134
  %v269 = vunpack.c.l.b16 %v135
  %v270 = vunpack.c.h.b16 %v135
  %v271 = vunpack.c.l.b16 %v136
  %v272 = vunpack.c.h.b16 %v136
  %v273 = vunpack.c.l.b16 %v137
  %v274 = vunpack.c.h.b16 %v137
  %v275 = vunpack.c.l.b16 %v138
  %v276 = vunpack.c.h.b16 %v138
  %v277 = vunpack.c.l.b16 %v139
  %v278 = vunpack.c.h.b16 %v139
  %v279 = vunpack.c.l.b16 %v140
  %v280 = vunpack.c.h.b16 %v140
  %v281 = vunpack.c.l.b16 %v141
  %v282 = vunpack.c.h.b16 %v141
  %v283 = vunpack.c.l.b16 %v142
  %v284 = vunpack.c.h.b16 %v142
  %v285 = vunpack.c.l.b16 %v143
  %v286 = vunpack.c.h.b16 %v143
  %v287 = vunpack.c.l.b16 %v144
  %v288 = vunpack.c.h.b16 %v144
  %v289 = vunpack.c.l.b16 %v145
  %v290 = vunpack.c.h.b16 %v145
  %v291 = vunpack.c.l.b16 %v146
  %v292 = vunpack.c.h.b16 %v146
  %v293 = vunpack.c.l.b16 %v147
  %v294 = vunpack.c.h.b16 %v147
  %v295 = vpack.c.b16 %v211, %v209
  %v296 = vpack.c.b16 %v212, %v210
  %v297 = vpack.c.b16 %v215, %v213
  %v298 = vpack.c.b16 %v216, %v214
  %v299 = vpack.c.b16 %v219, %v217
  %v300 = vpack.c.b16 %v220, %v218
  %v301 = vpack.c.b16 %v223, %v221
  %v302 = vpack.c.b16 %v224, %v222
  %v303 = vpack.c.b16 %v227, %v225
  %v304 = vpack.c.b16 %v228, %v226
  %v305 = vpack.c.b16 %v231, %v229
  %v306 = vpack.c.b16 %v232, %v230
  %v307 = vpack.c.b16 %v235, %v233
  %v308 = vpack.c.b16 %v236, %v234
  %v309 = vpack.c.b16 %v239, %v237
  %v310 = vpack.c.b16 %v240, %v238
  %v311 = vpack.c.b16 %v243, %v241
  %v312 = vpack.c.b16 %v244, %v242
  %v313 = vpack.c.b16 %v247, %v245
  %v314 = vpack.c.b16 %v248, %v246
  %v315 = vpack.c.b16 %v251, %v249
  %v316 = vpack.c.b16 %v252, %v250
  %v317 = vpack.c.b16 %v255, %v253
  %v318 = vpack.c.b16 %v256, %v254
  %v319 = vpack.c.b16 %v259, %v257
  %v320 = vpack.c.b16 %v260, %v258
  %v321 = vpack.c.b16 %v263, %v261
  %v322 = vpack.c.b16 %v264, %v262
  %v323 = vpack.c.b16 %v267, %v265
  %v324 = vpack.c.b16 %v268, %v266
  %v325 = vpack.c.b16 %v271, %v269
  %v326 = vpack.c.b16 %v272, %v270
  %v327 = vpack.c.b16 %v275, %v273
  %v328 = vpack.c.b16 %v276, %v274
  %v329 = vpack.c.b16 %v279, %v277
  %v330 = vpack.c.b16 %v280, %v278
  %v331 = vpack.c.b16 %v283, %v281
  %v332 = vpack.c.b16 %v284, %v282
  %v333 = vpack.c.b16 %v287, %v285
  %v334 = vpack.c.b16 %v288, %v286
  %v335 = vpack.c.b16 %v291, %v289
  %v336 = vpack.c.b16 %v292, %v290
  %v337 = vpack.c.b16 %v293, %v293
  %v338 = vpack.c.b16 %v294, %v294
  %v379 = vunpack.c.l.b16 %v148
  %v380 = vunpack.c.l.b16 %v149
  %v381 = vunpack.c.l.b16 %v150
  %v382 = vunpack.c.l.b16 %v151
  %v383 = vunpack.c.l.b16 %v152
  %v384 = vunpack.c.l.b16 %v153
  %v385 = vunpack.c.l.b16 %v154
  %v386 = vunpack.c.l.b16 %v155
  %v387 = vunpack.c.l.b16 %v156
  %v388 = vunpack.c.l.b16 %v157
  %v389 = vunpack.c.l.b16 %v158
  %v390 = vunpack.c.l.b16 %v159
  %v391 = vunpack.c.l.b16 %v160
  %v392 = vunpack.c.l.b16 %v161
  %v393 = vunpack.c.l.b16 %v162
  %v394 = vunpack.c.l.b16 %v163
  %v395 = vunpack.c.l.b16 %v164
  %v396 = vunpack.c.l.b16 %v165
  %v397 = vpack.c.b16 %v380, %v379
  %v398 = vpack.c.b16 %v382, %v381
  %v399 = vpack.c.b16 %v384, %v383
  %v400 = vpack.c.b16 %v386, %v385
  %v401 = vpack.c.b16 %v388, %v387
  %v402 = vpack.c.b16 %v390, %v389
  %v403 = vpack.c.b16 %v392, %v391
  %v404 = vpack.c.b16 %v394, %v393
  %v405 = vpack.c.b16 %v396, %v395
  %vm415 = vcmask 130048
  %v417 = vsel %vm415, %v296, 0
  %v420 = vsel %vm415, %v298, 0
  %v423 = vsel %vm415, %v300, 0
  %v426 = vsel %vm415, %v302, 0
  %v429 = vsel %vm415, %v304, 0
  %v432 = vsel %vm415, %v306, 0
  %v435 = vsel %vm415, %v308, 0
  %v438 = vsel %vm415, %v310, 0
  %v441 = vsel %vm415, %v312, 0
  %v444 = vsel %vm415, %v314, 0
  %v447 = vsel %vm415, %v316, 0
  %v450 = vsel %vm415, %v318, 0
  %v453 = vsel %vm415, %v320, 0
  %v456 = vsel %vm415, %v322, 0
  %v459 = vsel %vm415, %v324, 0
  %v462 = vsel %vm415, %v326, 0
  %v465 = vsel %vm415, %v328, 0
  %v468 = vsel %vm415, %v330, 0
  %v471 = vsel %vm415, %v332, 0
  %v474 = vsel %vm415, %v334, 0
  %v477 = vsel %vm415, %v336, 0
  %v480 = vsel %vm415, %v338, 0
  %482 = vmatprep.subr.bf16.mxu0 0
  %483 = vmatpush1.bf16.msra.mxu0 %v397
  %484 = vmatprep.subr.bf16.mxu0 0
  %485 = vmatpush1.bf16.msra.mxu0 %v398
  %486 = vmatprep.subr.bf16.mxu0 0
  %487 = vmatpush1.bf16.msra.mxu0 %v399
  %488 = vmatprep.subr.bf16.mxu0 0
  %489 = vmatpush1.bf16.msra.mxu0 %v400
  %490 = vmatprep.subr.bf16.mxu0 0
  %491 = vmatpush1.bf16.msra.mxu0 %v401
  %492 = vmatprep.subr.bf16.mxu0 0
  %493 = vmatpush1.bf16.msra.mxu0 %v402
  %494 = vmatprep.subr.bf16.mxu0 0
  %495 = vmatpush1.bf16.msra.mxu0 %v403
  %496 = vmatprep.subr.bf16.mxu0 0
  %497 = vmatpush1.bf16.msra.mxu0 %v404
  %498 = vmatprep.subr.bf16.mxu0 0
  %499 = vmatpush1.bf16.msra.mxu0 %v405
  %500 = vmatprep.subr.bf16.mxu0 0
  %501 = vmatpush1.bf16.msra.mxu0 0
  %502 = vmatprep.subr.bf16.mxu0 0
  %503 = vmatpush1.bf16.msra.mxu0 0
  %504 = vmatprep.subr.bf16.mxu0 0
  %505 = vmatpush1.bf16.msra.mxu0 0
  %506 = vmatprep.subr.bf16.mxu0 0
  %507 = vmatpush1.bf16.msra.mxu0 0
  %508 = vmatprep.subr.bf16.mxu0 0
  %509 = vmatpush1.bf16.msra.mxu0 0
  %510 = vmatprep.subr.bf16.mxu0 0
  %511 = vmatpush1.bf16.msra.mxu0 0
  %512 = vmatprep.subr.bf16.mxu0 0
  %513 = vmatpush1.bf16.msra.mxu0 0
  %514 = vmatprep.mubr.bf16.mxu0 %v417
  %515 = vmatmul.mubr.bf16.gmra.mrb[0].mxu0 %v295
  %v516 = vpop.f32.mrb[0].mxu0
  %v517 = vadd.f32 0.0, %v516
  %v518 = vpop.f32.mrb[0].mxu0
  %v519 = vpop.f32.mrb[0].mxu0
  %v520 = vadd.f32 0.0, %v519
  %v521 = vpop.f32.mrb[0].mxu0
  %522 = vmatprep.mubr.bf16.mxu0 %v420
  %523 = vmatmul.mubr.bf16.gmra.mrb[0].mxu0 %v297
  %v524 = vpop.f32.mrb[0].mxu0
  %v525 = vadd.f32 0.0, %v524
  %v526 = vpop.f32.mrb[0].mxu0
  %v527 = vpop.f32.mrb[0].mxu0
  %v528 = vadd.f32 0.0, %v527
  %v529 = vpop.f32.mrb[0].mxu0
  %530 = vmatprep.mubr.bf16.mxu0 %v423
  %531 = vmatmul.mubr.bf16.gmra.mrb[0].mxu0 %v299
  %v532 = vpop.f32.mrb[0].mxu0
  %v533 = vadd.f32 0.0, %v532
  %v534 = vpop.f32.mrb[0].mxu0
  %v535 = vpop.f32.mrb[0].mxu0
  %v536 = vadd.f32 0.0, %v535
  %v537 = vpop.f32.mrb[0].mxu0
  %538 = vmatprep.mubr.bf16.mxu0 %v426
  %539 = vmatmul.mubr.bf16.gmra.mrb[0].mxu0 %v301
  %v540 = vpop.f32.mrb[0].mxu0
  %v541 = vadd.f32 0.0, %v540
  %v542 = vpop.f32.mrb[0].mxu0
  %v543 = vpop.f32.mrb[0].mxu0
  %v544 = vadd.f32 0.0, %v543
  %v545 = vpop.f32.mrb[0].mxu0
  %546 = vmatprep.mubr.bf16.mxu0 %v429
  %547 = vmatmul.mubr.bf16.gmra.mrb[0].mxu0 %v303
  %v548 = vpop.f32.mrb[0].mxu0
  %v549 = vadd.f32 0.0, %v548
  %v550 = vpop.f32.mrb[0].mxu0
  %v551 = vpop.f32.mrb[0].mxu0
  %v552 = vadd.f32 0.0, %v551
  %v553 = vpop.f32.mrb[0].mxu0
  %554 = vmatprep.mubr.bf16.mxu0 %v432
  %555 = vmatmul.mubr.bf16.gmra.mrb[0].mxu0 %v305
  %v556 = vpop.f32.mrb[0].mxu0
  %v557 = vadd.f32 0.0, %v556
  %v558 = vpop.f32.mrb[0].mxu0
  %v559 = vpop.f32.mrb[0].mxu0
  %v560 = vadd.f32 0.0, %v559
  %v561 = vpop.f32.mrb[0].mxu0
  %562 = vmatprep.mubr.bf16.mxu0 %v435
  %563 = vmatmul.mubr.bf16.gmra.mrb[0].mxu0 %v307
  %v564 = vpop.f32.mrb[0].mxu0
  %v565 = vadd.f32 0.0, %v564
  %v566 = vpop.f32.mrb[0].mxu0
  %v567 = vpop.f32.mrb[0].mxu0
  %v568 = vadd.f32 0.0, %v567
  %v569 = vpop.f32.mrb[0].mxu0
  %570 = vmatprep.mubr.bf16.mxu0 %v438
  %571 = vmatmul.mubr.bf16.gmra.mrb[0].mxu0 %v309
  %v572 = vpop.f32.mrb[0].mxu0
  %v573 = vadd.f32 0.0, %v572
  %v574 = vpop.f32.mrb[0].mxu0
  %v575 = vpop.f32.mrb[0].mxu0
  %v576 = vadd.f32 0.0, %v575
  %v577 = vpop.f32.mrb[0].mxu0
  %578 = vmatprep.mubr.bf16.mxu0 %v441
  %579 = vmatmul.mubr.bf16.gmra.mrb[0].mxu0 %v311
  %v580 = vpop.f32.mrb[0].mxu0
  %v581 = vadd.f32 0.0, %v580
  %v582 = vpop.f32.mrb[0].mxu0
  %v583 = vpop.f32.mrb[0].mxu0
  %v584 = vadd.f32 0.0, %v583
  %v585 = vpop.f32.mrb[0].mxu0
  %586 = vmatprep.mubr.bf16.mxu0 %v444
  %587 = vmatmul.mubr.bf16.gmra.mrb[0].mxu0 %v313
  %v588 = vpop.f32.mrb[0].mxu0
  %v589 = vadd.f32 0.0, %v588
  %v590 = vpop.f32.mrb[0].mxu0
  %v591 = vpop.f32.mrb[0].mxu0
  %v592 = vadd.f32 0.0, %v591
  %v593 = vpop.f32.mrb[0].mxu0
  %594 = vmatprep.mubr.bf16.mxu0 %v447
  %595 = vmatmul.mubr.bf16.gmra.mrb[0].mxu0 %v315
  %v596 = vpop.f32.mrb[0].mxu0
  %v597 = vadd.f32 0.0, %v596
  %v598 = vpop.f32.mrb[0].mxu0
  %v599 = vpop.f32.mrb[0].mxu0
  %v600 = vadd.f32 0.0, %v599
  %v601 = vpop.f32.mrb[0].mxu0
  %602 = vmatprep.mubr.bf16.mxu0 %v450
  %603 = vmatmul.mubr.bf16.gmra.mrb[0].mxu0 %v317
  %v604 = vpop.f32.mrb[0].mxu0
  %v605 = vadd.f32 0.0, %v604
  %v606 = vpop.f32.mrb[0].mxu0
  %v607 = vpop.f32.mrb[0].mxu0
  %v608 = vadd.f32 0.0, %v607
  %v609 = vpop.f32.mrb[0].mxu0
  %610 = vmatprep.mubr.bf16.mxu0 %v453
  %611 = vmatmul.mubr.bf16.gmra.mrb[0].mxu0 %v319
  %v612 = vpop.f32.mrb[0].mxu0
  %v613 = vadd.f32 0.0, %v612
  %v614 = vpop.f32.mrb[0].mxu0
  %v615 = vpop.f32.mrb[0].mxu0
  %v616 = vadd.f32 0.0, %v615
  %v617 = vpop.f32.mrb[0].mxu0
  %618 = vmatprep.mubr.bf16.mxu0 %v456
  %619 = vmatmul.mubr.bf16.gmra.mrb[0].mxu0 %v321
  %v620 = vpop.f32.mrb[0].mxu0
  %v621 = vadd.f32 0.0, %v620
  %v622 = vpop.f32.mrb[0].mxu0
  %v623 = vpop.f32.mrb[0].mxu0
  %v624 = vadd.f32 0.0, %v623
  %v625 = vpop.f32.mrb[0].mxu0
  %626 = vmatprep.mubr.bf16.mxu0 %v459
  %627 = vmatmul.mubr.bf16.gmra.mrb[0].mxu0 %v323
  %v628 = vpop.f32.mrb[0].mxu0
  %v629 = vadd.f32 0.0, %v628
  %v630 = vpop.f32.mrb[0].mxu0
  %v631 = vpop.f32.mrb[0].mxu0
  %v632 = vadd.f32 0.0, %v631
  %v633 = vpop.f32.mrb[0].mxu0
  %634 = vmatprep.mubr.bf16.mxu0 %v462
  %635 = vmatmul.mubr.bf16.gmra.mrb[0].mxu0 %v325
  %v636 = vpop.f32.mrb[0].mxu0
  %v637 = vadd.f32 0.0, %v636
  %v638 = vpop.f32.mrb[0].mxu0
  %v639 = vpop.f32.mrb[0].mxu0
  %v640 = vadd.f32 0.0, %v639
  %v641 = vpop.f32.mrb[0].mxu0
  %642 = vmatprep.mubr.bf16.mxu0 %v465
  %643 = vmatmul.mubr.bf16.gmra.mrb[0].mxu0 %v327
  %v644 = vpop.f32.mrb[0].mxu0
  %v645 = vadd.f32 0.0, %v644
  %v646 = vpop.f32.mrb[0].mxu0
  %v647 = vpop.f32.mrb[0].mxu0
  %v648 = vadd.f32 0.0, %v647
  %v649 = vpop.f32.mrb[0].mxu0
  %650 = vmatprep.mubr.bf16.mxu0 %v468
  %651 = vmatmul.mubr.bf16.gmra.mrb[0].mxu0 %v329
  %v652 = vpop.f32.mrb[0].mxu0
  %v653 = vadd.f32 0.0, %v652
  %v654 = vpop.f32.mrb[0].mxu0
  %v655 = vpop.f32.mrb[0].mxu0
  %v656 = vadd.f32 0.0, %v655
  %v657 = vpop.f32.mrb[0].mxu0
  %658 = vmatprep.mubr.bf16.mxu0 %v471
  %659 = vmatmul.mubr.bf16.gmra.mrb[0].mxu0 %v331
  %v660 = vpop.f32.mrb[0].mxu0
  %v661 = vadd.f32 0.0, %v660
  %v662 = vpop.f32.mrb[0].mxu0
  %v663 = vpop.f32.mrb[0].mxu0
  %v664 = vadd.f32 0.0, %v663
  %v665 = vpop.f32.mrb[0].mxu0
  %666 = vmatprep.mubr.bf16.mxu0 %v474
  %667 = vmatmul.mubr.bf16.gmra.mrb[0].mxu0 %v333
  %v668 = vpop.f32.mrb[0].mxu0
  %v669 = vadd.f32 0.0, %v668
  %v670 = vpop.f32.mrb[0].mxu0
  %v671 = vpop.f32.mrb[0].mxu0
  %v672 = vadd.f32 0.0, %v671
  %v673 = vpop.f32.mrb[0].mxu0
  %674 = vmatprep.mubr.bf16.mxu0 %v477
  %675 = vmatmul.mubr.bf16.gmra.mrb[0].mxu0 %v335
  %v676 = vpop.f32.mrb[0].mxu0
  %v677 = vadd.f32 0.0, %v676
  %v678 = vpop.f32.mrb[0].mxu0
  %v679 = vpop.f32.mrb[0].mxu0
  %v680 = vadd.f32 0.0, %v679
  %v681 = vpop.f32.mrb[0].mxu0
  %682 = vmatprep.mubr.bf16.mxu0 %v480
  %683 = vmatmul.mubr.bf16.gmra.mrb[0].mxu0 %v337
  %v684 = vpop.f32.mrb[0].mxu0
  %v685 = vadd.f32 0.0, %v684
  %v686 = vpop.f32.mrb[0].mxu0
  %v687 = vpop.f32.mrb[0].mxu0
  %v688 = vpop.f32.mrb[0].mxu0
  %689 = vdwg.mxu0
  %v690 = vadd.f32 %v62, %v517
  %v691 = vadd.f32 %v63, %v520
  %v692 = vadd.f32 %v64, %v525
  %v693 = vadd.f32 %v65, %v528
  %v694 = vadd.f32 %v66, %v533
  %v695 = vadd.f32 %v67, %v536
  %v696 = vadd.f32 %v68, %v541
  %v697 = vadd.f32 %v69, %v544
  %v698 = vadd.f32 %v70, %v549
  %v699 = vadd.f32 %v71, %v552
  %v700 = vadd.f32 %v72, %v557
  %v701 = vadd.f32 %v73, %v560
  %v702 = vadd.f32 %v74, %v565
  %v703 = vadd.f32 %v75, %v568
  %v704 = vadd.f32 %v76, %v573
  %v705 = vadd.f32 %v77, %v576
  %v706 = vadd.f32 %v78, %v581
  %v707 = vadd.f32 %v79, %v584
  %v708 = vadd.f32 %v80, %v589
  %v709 = vadd.f32 %v81, %v592
  %v710 = vadd.f32 %v82, %v597
  %v711 = vadd.f32 %v83, %v600
  %v712 = vadd.f32 %v84, %v605
  %v713 = vadd.f32 %v85, %v608
  %v714 = vadd.f32 %v86, %v613
  %v715 = vadd.f32 %v87, %v616
  %v716 = vadd.f32 %v88, %v621
  %v717 = vadd.f32 %v89, %v624
  %v718 = vadd.f32 %v90, %v629
  %v719 = vadd.f32 %v91, %v632
  %v720 = vadd.f32 %v92, %v637
  %v721 = vadd.f32 %v93, %v640
  %v722 = vadd.f32 %v94, %v645
  %v723 = vadd.f32 %v95, %v648
  %v724 = vadd.f32 %v96, %v653
  %v725 = vadd.f32 %v97, %v656
  %v726 = vadd.f32 %v98, %v661
  %v727 = vadd.f32 %v99, %v664
  %v728 = vadd.f32 %v100, %v669
  %v729 = vadd.f32 %v101, %v672
  %v730 = vadd.f32 %v102, %v677
  %v731 = vadd.f32 %v103, %v680
  %v732 = vadd.f32 %v104, %v685
  %733 = vst [vmem:[#allocation2] sm:$0xff] %v690
  %734 = vst [vmem:[#allocation2 + $0x8] sm:$0xff] %v691
  %735 = vst [vmem:[#allocation2 + $0x10] sm:$0xff] %v692
  %736 = vst [vmem:[#allocation2 + $0x18] sm:$0xff] %v693
  %737 = vst [vmem:[#allocation2 + $0x20] sm:$0xff] %v694
  %738 = vst [vmem:[#allocation2 + $0x28] sm:$0xff] %v695
  %739 = vst [vmem:[#allocation2 + $0x30] sm:$0xff] %v696
  %740 = vst [vmem:[#allocation2 + $0x38] sm:$0xff] %v697
  %741 = vst [vmem:[#allocation2 + $0x40] sm:$0xff] %v698
  %742 = vst [vmem:[#allocation2 + $0x48] sm:$0xff] %v699
  %743 = vst [vmem:[#allocation2 + $0x50] sm:$0xff] %v700
  %744 = vst [vmem:[#allocation2 + $0x58] sm:$0xff] %v701
  %745 = vst [vmem:[#allocation2 + $0x60] sm:$0xff] %v702
  %746 = vst [vmem:[#allocation2 + $0x68] sm:$0xff] %v703
  %747 = vst [vmem:[#allocation2 + $0x70] sm:$0xff] %v704
  %748 = vst [vmem:[#allocation2 + $0x78] sm:$0xff] %v705
  %749 = vst [vmem:[#allocation2 + $0x80] sm:$0xff] %v706
  %750 = vst [vmem:[#allocation2 + $0x88] sm:$0xff] %v707
  %751 = vst [vmem:[#allocation2 + $0x90] sm:$0xff] %v708
  %752 = vst [vmem:[#allocation2 + $0x98] sm:$0xff] %v709
  %753 = vst [vmem:[#allocation2 + $0xa0] sm:$0xff] %v710
  %754 = vst [vmem:[#allocation2 + $0xa8] sm:$0xff] %v711
  %755 = vst [vmem:[#allocation2 + $0xb0] sm:$0xff] %v712
  %756 = vst [vmem:[#allocation2 + $0xb8] sm:$0xff] %v713
  %757 = vst [vmem:[#allocation2 + $0xc0] sm:$0xff] %v714
  %758 = vst [vmem:[#allocation2 + $0xc8] sm:$0xff] %v715
  %759 = vst [vmem:[#allocation2 + $0xd0] sm:$0xff] %v716
  %760 = vst [vmem:[#allocation2 + $0xd8] sm:$0xff] %v717
  %761 = vst [vmem:[#allocation2 + $0xe0] sm:$0xff] %v718
  %762 = vst [vmem:[#allocation2 + $0xe8] sm:$0xff] %v719
  %763 = vst [vmem:[#allocation2 + $0xf0] sm:$0xff] %v720
  %764 = vst [vmem:[#allocation2 + $0xf8] sm:$0xff] %v721
  %765 = vst [vmem:[#allocation2 + $0x100] sm:$0xff] %v722
  %766 = vst [vmem:[#allocation2 + $0x108] sm:$0xff] %v723
  %767 = vst [vmem:[#allocation2 + $0x110] sm:$0xff] %v724
  %768 = vst [vmem:[#allocation2 + $0x118] sm:$0xff] %v725
  %769 = vst [vmem:[#allocation2 + $0x120] sm:$0xff] %v726
  %770 = vst [vmem:[#allocation2 + $0x128] sm:$0xff] %v727
  %771 = vst [vmem:[#allocation2 + $0x130] sm:$0xff] %v728
  %772 = vst [vmem:[#allocation2 + $0x138] sm:$0xff] %v729
  %773 = vst [vmem:[#allocation2 + $0x140] sm:$0xff] %v730
  %774 = vst [vmem:[#allocation2 + $0x148] sm:$0xff] %v731
  %775 = vst [vmem:[#allocation2 + $0x150] sm:$0x3] %v732
  // Predicated region
  $region18: #{lenet5_forward.9} parent=0 // pred_check
    %p776 = pneg %p15
  $region19: #{lenet5_forward.9} parent=0 // pred_check_branch
    %778 = sbr.rel (%p776) target = $region21
  $region20: #{lenet5_forward.9} parent=0 // pred_region
    %v779 = vld [vmem:[#allocation2] sm:$0xff]
    %v780 = vld [vmem:[#allocation2 + $0x8] sm:$0xff]
    %v781 = vld [vmem:[#allocation2 + $0x10] sm:$0xff]
    %v782 = vld [vmem:[#allocation2 + $0x18] sm:$0xff]
    %v783 = vld [vmem:[#allocation2 + $0x20] sm:$0xff]
    %v784 = vld [vmem:[#allocation2 + $0x28] sm:$0xff]
    %v785 = vld [vmem:[#allocation2 + $0x30] sm:$0xff]
    %v786 = vld [vmem:[#allocation2 + $0x38] sm:$0xff]
    %v787 = vld [vmem:[#allocation2 + $0x40] sm:$0xff]
    %v788 = vld [vmem:[#allocation2 + $0x48] sm:$0xff]
    %v789 = vld [vmem:[#allocation2 + $0x50] sm:$0xff]
    %v790 = vld [vmem:[#allocation2 + $0x58] sm:$0xff]
    %v791 = vld [vmem:[#allocation2 + $0x60] sm:$0xff]
    %v792 = vld [vmem:[#allocation2 + $0x68] sm:$0xff]
    %v793 = vld [vmem:[#allocation2 + $0x70] sm:$0xff]
    %v794 = vld [vmem:[#allocation2 + $0x78] sm:$0xff]
    %v795 = vld [vmem:[#allocation2 + $0x80] sm:$0xff]
    %v796 = vld [vmem:[#allocation2 + $0x88] sm:$0xff]
    %v797 = vld [vmem:[#allocation2 + $0x90] sm:$0xff]
    %v798 = vld [vmem:[#allocation2 + $0x98] sm:$0xff]
    %v799 = vld [vmem:[#allocation2 + $0xa0] sm:$0xff]
    %v800 = vld [vmem:[#allocation2 + $0xa8] sm:$0xff]
    %v801 = vld [vmem:[#allocation2 + $0xb0] sm:$0xff]
    %v802 = vld [vmem:[#allocation2 + $0xb8] sm:$0xff]
    %v803 = vld [vmem:[#allocation2 + $0xc0] sm:$0xff]
    %v804 = vld [vmem:[#allocation2 + $0xc8] sm:$0xff]
    %v805 = vld [vmem:[#allocation2 + $0xd0] sm:$0xff]
    %v806 = vld [vmem:[#allocation2 + $0xd8] sm:$0xff]
    %v807 = vld [vmem:[#allocation2 + $0xe0] sm:$0xff]
    %v808 = vld [vmem:[#allocation2 + $0xe8] sm:$0xff]
    %v809 = vld [vmem:[#allocation2 + $0xf0] sm:$0xff]
    %v810 = vld [vmem:[#allocation2 + $0xf8] sm:$0xff]
    %v811 = vld [vmem:[#allocation2 + $0x100] sm:$0xff]
    %v812 = vld [vmem:[#allocation2 + $0x108] sm:$0xff]
    %v813 = vld [vmem:[#allocation2 + $0x110] sm:$0xff]
    %v814 = vld [vmem:[#allocation2 + $0x118] sm:$0xff]
    %v815 = vld [vmem:[#allocation2 + $0x120] sm:$0xff]
    %v816 = vld [vmem:[#allocation2 + $0x128] sm:$0xff]
    %v817 = vld [vmem:[#allocation2 + $0x130] sm:$0xff]
    %v818 = vld [vmem:[#allocation2 + $0x138] sm:$0xff]
    %v819 = vld [vmem:[#allocation2 + $0x140] sm:$0xff]
    %v820 = vld [vmem:[#allocation2 + $0x148] sm:$0xff]
    %v821 = vld [vmem:[#allocation2 + $0x150] sm:$0x3]
    %v822 = vld [vmem:[%s2] sm:$0x1]
    %v824 = vlaneseq
    %v825 = vshrl.u32 %v824, 7
    %v826 = vsub.s32 0, %v825
    %v827 = vrot.slane %v822, %v826
    %v829 = vadd.f32 %v779, %v827
    %v830 = vadd.f32 %v780, %v827
    %v831 = vadd.f32 %v781, %v827
    %v832 = vadd.f32 %v782, %v827
    %v833 = vadd.f32 %v783, %v827
    %v834 = vadd.f32 %v784, %v827
    %v835 = vadd.f32 %v785, %v827
    %v836 = vadd.f32 %v786, %v827
    %v837 = vadd.f32 %v787, %v827
    %v838 = vadd.f32 %v788, %v827
    %v839 = vadd.f32 %v789, %v827
    %v840 = vadd.f32 %v790, %v827
    %v841 = vadd.f32 %v791, %v827
    %v842 = vadd.f32 %v792, %v827
    %v843 = vadd.f32 %v793, %v827
    %v844 = vadd.f32 %v794, %v827
    %v845 = vadd.f32 %v795, %v827
    %v846 = vadd.f32 %v796, %v827
    %v847 = vadd.f32 %v797, %v827
    %v848 = vadd.f32 %v798, %v827
    %v849 = vadd.f32 %v799, %v827
    %v850 = vadd.f32 %v800, %v827
    %v851 = vadd.f32 %v801, %v827
    %v852 = vadd.f32 %v802, %v827
    %v853 = vadd.f32 %v803, %v827
    %v854 = vadd.f32 %v804, %v827
    %v855 = vadd.f32 %v805, %v827
    %v856 = vadd.f32 %v806, %v827
    %v857 = vadd.f32 %v807, %v827
    %v858 = vadd.f32 %v808, %v827
    %v859 = vadd.f32 %v809, %v827
    %v860 = vadd.f32 %v810, %v827
    %v861 = vadd.f32 %v811, %v827
    %v862 = vadd.f32 %v812, %v827
    %v863 = vadd.f32 %v813, %v827
    %v864 = vadd.f32 %v814, %v827
    %v865 = vadd.f32 %v815, %v827
    %v866 = vadd.f32 %v816, %v827
    %v867 = vadd.f32 %v817, %v827
    %v868 = vadd.f32 %v818, %v827
    %v869 = vadd.f32 %v819, %v827
    %v870 = vadd.f32 %v820, %v827
    %v871 = vadd.f32 %v821, %v827
    %v872 = vmax.f32 %v829, 0.0
    %v873 = vmax.f32 %v830, 0.0
    %v874 = vmax.f32 %v831, 0.0
    %v875 = vmax.f32 %v832, 0.0
    %v876 = vmax.f32 %v833, 0.0
    %v877 = vmax.f32 %v834, 0.0
    %v878 = vmax.f32 %v835, 0.0
    %v879 = vmax.f32 %v836, 0.0
    %v880 = vmax.f32 %v837, 0.0
    %v881 = vmax.f32 %v838, 0.0
    %v882 = vmax.f32 %v839, 0.0
    %v883 = vmax.f32 %v840, 0.0
    %v884 = vmax.f32 %v841, 0.0
    %v885 = vmax.f32 %v842, 0.0
    %v886 = vmax.f32 %v843, 0.0
    %v887 = vmax.f32 %v844, 0.0
    %v888 = vmax.f32 %v845, 0.0
    %v889 = vmax.f32 %v846, 0.0
    %v890 = vmax.f32 %v847, 0.0
    %v891 = vmax.f32 %v848, 0.0
    %v892 = vmax.f32 %v849, 0.0
    %v893 = vmax.f32 %v850, 0.0
    %v894 = vmax.f32 %v851, 0.0
    %v895 = vmax.f32 %v852, 0.0
    %v896 = vmax.f32 %v853, 0.0
    %v897 = vmax.f32 %v854, 0.0
    %v898 = vmax.f32 %v855, 0.0
    %v899 = vmax.f32 %v856, 0.0
    %v900 = vmax.f32 %v857, 0.0
    %v901 = vmax.f32 %v858, 0.0
    %v902 = vmax.f32 %v859, 0.0
    %v903 = vmax.f32 %v860, 0.0
    %v904 = vmax.f32 %v861, 0.0
    %v905 = vmax.f32 %v862, 0.0
    %v906 = vmax.f32 %v863, 0.0
    %v907 = vmax.f32 %v864, 0.0
    %v908 = vmax.f32 %v865, 0.0
    %v909 = vmax.f32 %v866, 0.0
    %v910 = vmax.f32 %v867, 0.0
    %v911 = vmax.f32 %v868, 0.0
    %v912 = vmax.f32 %v869, 0.0
    %v913 = vmax.f32 %v870, 0.0
    %v914 = vmax.f32 %v871, 0.0
    %v915 = vpack.c.bf16 %v873, %v872
    %v916 = vpack.c.bf16 %v875, %v874
    %v917 = vpack.c.bf16 %v877, %v876
    %v918 = vpack.c.bf16 %v879, %v878
    %v919 = vpack.c.bf16 %v881, %v880
    %v920 = vpack.c.bf16 %v883, %v882
    %v921 = vpack.c.bf16 %v885, %v884
    %v922 = vpack.c.bf16 %v887, %v886
    %v923 = vpack.c.bf16 %v889, %v888
    %v924 = vpack.c.bf16 %v891, %v890
    %v925 = vpack.c.bf16 %v893, %v892
    %v926 = vpack.c.bf16 %v895, %v894
    %v927 = vpack.c.bf16 %v897, %v896
    %v928 = vpack.c.bf16 %v899, %v898
    %v929 = vpack.c.bf16 %v901, %v900
    %v930 = vpack.c.bf16 %v903, %v902
    %v931 = vpack.c.bf16 %v905, %v904
    %v932 = vpack.c.bf16 %v907, %v906
    %v933 = vpack.c.bf16 %v909, %v908
    %v934 = vpack.c.bf16 %v911, %v910
    %v935 = vpack.c.bf16 %v913, %v912
    %v936 = vpack.c.bf16 %v914, %v914
    %v959 = vunpack.c.l.b16 %v915
    %v960 = vunpack.c.h.b16 %v915
    %v961 = vunpack.c.l.b16 %v916
    %v962 = vunpack.c.h.b16 %v916
    %v963 = vunpack.c.l.b16 %v917
    %v964 = vunpack.c.h.b16 %v917
    %v965 = vunpack.c.l.b16 %v918
    %v966 = vunpack.c.h.b16 %v918
    %v967 = vunpack.c.l.b16 %v919
    %v968 = vunpack.c.h.b16 %v919
    %v969 = vunpack.c.l.b16 %v920
    %v970 = vunpack.c.h.b16 %v920
    %v971 = vunpack.c.l.b16 %v921
    %v972 = vunpack.c.h.b16 %v921
    %v973 = vunpack.c.l.b16 %v922
    %v974 = vunpack.c.h.b16 %v922
    %v975 = vunpack.c.l.b16 %v923
    %v976 = vunpack.c.h.b16 %v923
    %v977 = vunpack.c.l.b16 %v924
    %v978 = vunpack.c.h.b16 %v924
    %v979 = vunpack.c.l.b16 %v925
    %v980 = vunpack.c.h.b16 %v925
    %v981 = vunpack.c.l.b16 %v926
    %v982 = vunpack.c.h.b16 %v926
    %v983 = vunpack.c.l.b16 %v927
    %v984 = vunpack.c.h.b16 %v927
    %v985 = vunpack.c.l.b16 %v928
    %v986 = vunpack.c.h.b16 %v928
    %v987 = vunpack.c.l.b16 %v929
    %v988 = vunpack.c.h.b16 %v929
    %v989 = vunpack.c.l.b16 %v930
    %v990 = vunpack.c.h.b16 %v930
    %v991 = vunpack.c.l.b16 %v931
    %v992 = vunpack.c.h.b16 %v931
    %v993 = vunpack.c.l.b16 %v932
    %v994 = vunpack.c.h.b16 %v932
    %v995 = vunpack.c.l.b16 %v933
    %v996 = vunpack.c.h.b16 %v933
    %v997 = vunpack.c.l.b16 %v934
    %v998 = vunpack.c.h.b16 %v934
    %v999 = vunpack.c.l.b16 %v935
    %v1000 = vunpack.c.h.b16 %v935
    %v1001 = vunpack.c.l.b16 %v936
    %v1002 = vpack.c.b16 %v959, %v959
    %v1003 = vpack.c.b16 %v960, %v960
    %v1004 = vpack.c.b16 %v961, %v961
    %v1005 = vpack.c.b16 %v962, %v962
    %v1006 = vpack.c.b16 %v963, %v963
    %v1007 = vpack.c.b16 %v964, %v964
    %v1008 = vpack.c.b16 %v965, %v965
    %v1009 = vpack.c.b16 %v966, %v966
    %v1010 = vpack.c.b16 %v967, %v967
    %v1011 = vpack.c.b16 %v968, %v968
    %v1012 = vpack.c.b16 %v969, %v969
    %v1013 = vpack.c.b16 %v970, %v970
    %v1014 = vpack.c.b16 %v971, %v971
    %v1015 = vpack.c.b16 %v972, %v972
    %v1016 = vpack.c.b16 %v973, %v973
    %v1017 = vpack.c.b16 %v974, %v974
    %v1018 = vpack.c.b16 %v975, %v975
    %v1019 = vpack.c.b16 %v976, %v976
    %v1020 = vpack.c.b16 %v977, %v977
    %v1021 = vpack.c.b16 %v978, %v978
    %v1022 = vpack.c.b16 %v979, %v979
    %v1023 = vpack.c.b16 %v980, %v980
    %v1024 = vpack.c.b16 %v981, %v981
    %v1025 = vpack.c.b16 %v982, %v982
    %v1026 = vpack.c.b16 %v983, %v983
    %v1027 = vpack.c.b16 %v984, %v984
    %v1028 = vpack.c.b16 %v985, %v985
    %v1029 = vpack.c.b16 %v986, %v986
    %v1030 = vpack.c.b16 %v987, %v987
    %v1031 = vpack.c.b16 %v988, %v988
    %v1032 = vpack.c.b16 %v989, %v989
    %v1033 = vpack.c.b16 %v990, %v990
    %v1034 = vpack.c.b16 %v991, %v991
    %v1035 = vpack.c.b16 %v992, %v992
    %v1036 = vpack.c.b16 %v993, %v993
    %v1037 = vpack.c.b16 %v994, %v994
    %v1038 = vpack.c.b16 %v995, %v995
    %v1039 = vpack.c.b16 %v996, %v996
    %v1040 = vpack.c.b16 %v997, %v997
    %v1041 = vpack.c.b16 %v998, %v998
    %v1042 = vpack.c.b16 %v999, %v999
    %v1043 = vpack.c.b16 %v1000, %v1000
    %v1044 = vpack.c.b16 %v1001, %v1001
    %1088 = vst [vmem:[%s3] sm:$0xf] %v1002
    %1089 = vst [vmem:[%s3 + $0x4] sm:$0xf] %v1003
    %1090 = vst [vmem:[%s3 + $0x8] sm:$0xf] %v1004
    %1091 = vst [vmem:[%s3 + $0xc] sm:$0xf] %v1005
    %1092 = vst [vmem:[%s3 + $0x10] sm:$0xf] %v1006
    %1093 = vst [vmem:[%s3 + $0x14] sm:$0xf] %v1007
    %1094 = vst [vmem:[%s3 + $0x18] sm:$0xf] %v1008
    %1095 = vst [vmem:[%s3 + $0x1c] sm:$0xf] %v1009
    %1096 = vst [vmem:[%s3 + $0x20] sm:$0xf] %v1010
    %1097 = vst [vmem:[%s3 + $0x24] sm:$0xf] %v1011
    %1098 = vst [vmem:[%s3 + $0x28] sm:$0xf] %v1012
    %1099 = vst [vmem:[%s3 + $0x2c] sm:$0xf] %v1013
    %1100 = vst [vmem:[%s3 + $0x30] sm:$0xf] %v1014
    %1101 = vst [vmem:[%s3 + $0x34] sm:$0xf] %v1015
    %1102 = vst [vmem:[%s3 + $0x38] sm:$0xf] %v1016
    %1103 = vst [vmem:[%s3 + $0x3c] sm:$0xf] %v1017
    %1104 = vst [vmem:[%s3 + $0x40] sm:$0xf] %v1018
    %1105 = vst [vmem:[%s3 + $0x44] sm:$0xf] %v1019
    %1106 = vst [vmem:[%s3 + $0x48] sm:$0xf] %v1020
    %1107 = vst [vmem:[%s3 + $0x4c] sm:$0xf] %v1021
    %1108 = vst [vmem:[%s3 + $0x50] sm:$0xf] %v1022
    %1109 = vst [vmem:[%s3 + $0x54] sm:$0xf] %v1023
    %1110 = vst [vmem:[%s3 + $0x58] sm:$0xf] %v1024
    %1111 = vst [vmem:[%s3 + $0x5c] sm:$0xf] %v1025
    %1112 = vst [vmem:[%s3 + $0x60] sm:$0xf] %v1026
    %1113 = vst [vmem:[%s3 + $0x64] sm:$0xf] %v1027
    %1114 = vst [vmem:[%s3 + $0x68] sm:$0xf] %v1028
    %1115 = vst [vmem:[%s3 + $0x6c] sm:$0xf] %v1029
    %1116 = vst [vmem:[%s3 + $0x70] sm:$0xf] %v1030
    %1117 = vst [vmem:[%s3 + $0x74] sm:$0xf] %v1031
    %1118 = vst [vmem:[%s3 + $0x78] sm:$0xf] %v1032
    %1119 = vst [vmem:[%s3 + $0x7c] sm:$0xf] %v1033
    %1120 = vst [vmem:[%s3 + $0x80] sm:$0xf] %v1034
    %1121 = vst [vmem:[%s3 + $0x84] sm:$0xf] %v1035
    %1122 = vst [vmem:[%s3 + $0x88] sm:$0xf] %v1036
    %1123 = vst [vmem:[%s3 + $0x8c] sm:$0xf] %v1037
    %1124 = vst [vmem:[%s3 + $0x90] sm:$0xf] %v1038
    %1125 = vst [vmem:[%s3 + $0x94] sm:$0xf] %v1039
    %1126 = vst [vmem:[%s3 + $0x98] sm:$0xf] %v1040
    %1127 = vst [vmem:[%s3 + $0x9c] sm:$0xf] %v1041
    %1128 = vst [vmem:[%s3 + $0xa0] sm:$0xf] %v1042
    %1129 = vst [vmem:[%s3 + $0xa4] sm:$0xf] %v1043
    %1130 = vst [vmem:[%s3 + $0xa8] sm:$0x1] %v1044
  $region21: #{lenet5_forward.9} parent=0 // pred_fallthru
    _
  // Predicated region
  $region22: #{lenet5_forward.9} parent=0 // pred_check
    _
  $region23: #{lenet5_forward.9} parent=0 // pred_check_branch
    %1132 = sbr.rel (0) target = $region25
  $region24: #{lenet5_forward.9} parent=0 // pred_region
    _
  $region25: #{lenet5_forward.9} parent=0 // pred_fallthru
    _
  // Predicated region
  $region26: #{lenet5_forward.9} parent=0 // pred_check
    _
  $region27: #{lenet5_forward.9} parent=0 // pred_check_branch
    %1134 = sbr.rel (0) target = $region29
  $region28: #{lenet5_forward.9} parent=0 // pred_region
    _
  $region29: #{lenet5_forward.9} parent=0 // pred_fallthru
    _

// kernel: lenet5_forward.10
$region0: #{lenet5_forward.10}
  #allocation0 [shape = 'u32[]', space=smem, size = 0x4, offset = 0x4, fixed_abs, tag = 'smem constant byte address 0x4 - core index']
  #allocation1 [shape = 'u32[144,128]{1,0:T(1,128)}', space=vmem, size = 0x12000, scoped, tag = 'internal scratch']
  #allocation2 [shape = 'f32[1,6,13,128]{3,2,1,0:T(8,128)}', space=vmem, size = 0xc000, scoped, tag = 'scratch operand']
  %s0 = inlined_call_operand.vmem [shape: bf16[2,13,13,128], index: 0, kind: input, shape index: {}]
  %s1 = inlined_call_operand.vmem [shape: bf16[2,6,6,32], index: 1, kind: output, shape index: {}]
  %s2 = sld [smem:[#allocation0]]
  $region37: #{lenet5_forward.10} parent=0
    _
  %s4 = ssub.s32 1, %s2
  %s5 = scalar_select 0, %s4, %s2
  loop: start=0, step=1, limit=4
  $region2: #{lenet5_forward.10} parent=0 // loop_pre_header
    _
  $region3: #{lenet5_forward.10} parent=0 // loop_header
    %s7 = sphi 0, %s11
    %p8 = scmp.ge.s32.totalorder %s7, 4
    %s14 = sphi 0, %s26
    %s15 = sphi 0, %s22
    %s16 = sphi 0, %s14
    %s17 = sphi 0, %s15
    %s18 = sphi 0, %s16
    %s19 = sphi 0, %s17
    %s31 = sphi 0, %s33
    %s34 = sphi 0, %s31
    %s35 = sphi 0, %s34
    %s51 = sphi 0, %s35
    %s59 = sphi 0, %s61
    %s62 = sphi 0, %s59
    %s63 = sphi 0, %s62
    %s79 = sphi 0, %s63
  $region4: #{lenet5_forward.10} parent=0 // loop_header_branch
    %10 = sbr.rel (%p8) target = $region8
  $region5: #{lenet5_forward.10} parent=0 // loop_body
    %s12 = ssub.s32 %s7, 1
    %s13 = ssub.s32 %s7, 2
    %s20 = sadd.s32 1, %s15
    %p21 = scmp.ge.s32.totalorder %s20, 1
    %s22 = scalar_select %p21, 0, %s20
    %s23 = sadd.s32 1, %s14
    %s24 = scalar_select %p21, %s23, %s14
    %p25 = scmp.ge.s32.totalorder %s24, 2
    %s26 = scalar_select %p25, 0, %s24
    %s27 = ssub.s32 %s14, %s26
    %s28 = ssub.s32 %s15, %s22
    %s29 = sor.u32 %s27, %s28
    %p30 = scmp.eq.s32.totalorder %s29, 0
    %s32 = sadd.s32 %s31, 1
    %s33 = scalar_select %p30, %s31, %s32
    %p36 = pneg %p30
    %p37 = scmp.eq.s32.totalorder %s7, 1
    %p38 = por %p36, %p37
    %p39 = scmp.ne.s32.totalorder %s31, %s34
    %p40 = scmp.eq.s32.totalorder %s7, 0
    %p41 = por %p39, %p40
    %p42 = scmp.ne.s32.totalorder %s31, %s34
    %p43 = scmp.eq.s32.totalorder %s12, 1
    %p44 = por %p42, %p43
    %p45 = scmp.ne.s32.totalorder %s34, %s35
    %p46 = scmp.eq.s32.totalorder %s12, 0
    %p47 = por %p45, %p46
    %p48 = scmp.ne.s32.totalorder %s34, %s35
    %p49 = scmp.eq.s32.totalorder %s13, 1
    %p50 = por %p48, %p49
    %p52 = scmp.ne.s32.totalorder %s35, %s51
    %p53 = scmp.eq.s32.totalorder %s13, 0
    %p54 = por %p52, %p53
    %s55 = ssub.s32 %s14, %s26
    %s56 = ssub.s32 %s15, %s22
    %s57 = sor.u32 %s55, %s56
    %p58 = scmp.eq.s32.totalorder %s57, 0
    %s60 = sadd.s32 %s59, 1
    %s61 = scalar_select %p58, %s59, %s60
    %p64 = pneg %p58
    %p65 = scmp.eq.s32.totalorder %s7, 1
    %p66 = por %p64, %p65
    %p67 = scmp.ne.s32.totalorder %s59, %s62
    %p68 = scmp.eq.s32.totalorder %s7, 0
    %p69 = por %p67, %p68
    %p70 = scmp.ne.s32.totalorder %s59, %s62
    %p71 = scmp.eq.s32.totalorder %s12, 1
    %p72 = por %p70, %p71
    %p73 = scmp.ne.s32.totalorder %s62, %s63
    %p74 = scmp.eq.s32.totalorder %s12, 0
    %p75 = por %p73, %p74
    %p76 = scmp.ne.s32.totalorder %s62, %s63
    %p77 = scmp.eq.s32.totalorder %s13, 1
    %p78 = por %p76, %p77
    %p80 = scmp.ne.s32.totalorder %s63, %s79
    %p81 = scmp.eq.s32.totalorder %s13, 0
    %p82 = por %p80, %p81
    %p83 = scmp.le.s32.totalorder 1, %s7
    %p84 = scmp.lt.s32.totalorder %s7, 3
    %p85 = pnand %p83, %p84
    %p86 = pneg %p85
    // Predicated region
    $region9: #{lenet5_forward.10} parent=5 // pred_check
      _
    $region10: #{lenet5_forward.10} parent=5 // pred_check_branch
      %88 = sbr.rel (%p85) target = $region12
    $region11: #{lenet5_forward.10} parent=5 // pred_region
      %s89 = ssub.s32 %s7, 1
    $region12: #{lenet5_forward.10} parent=5 // pred_fallthru
      _
    %p90 = scmp.lt.s32.totalorder %s7, 2
    // Predicated region
    $region13: #{lenet5_forward.10} parent=5 // pred_check
      %p91 = pneg %p90
    $region14: #{lenet5_forward.10} parent=5 // pred_check_branch
      %93 = sbr.rel (%p91) target = $region16
    $region15: #{lenet5_forward.10} parent=5 // pred_region
      // Predicated region
      $region17: #{lenet5_forward.10} parent=15 // pred_check
        %p94 = pneg %p41
      $region18: #{lenet5_forward.10} parent=15 // pred_check_branch
        %96 = sbr.rel (%p94) target = $region20
      $region19: #{lenet5_forward.10} parent=15 // pred_region
        %s97 = smul.u32 12, %s15
        %s98 = ssub.s32 13, %s97
        %p99 = scmp.lt.s32.totalorder %s98, 12
        %s100 = scalar_select %p99, %s98, 12
        %s101 = smul.u32 64, %s100
        %s102 = smul.u32 %s101, 2
        %p103 = scmp.lt.s32.totalorder %s14, 1
        %s104 = scalar_select %p103, %s14, 1
        %p105 = scmp.lt.s32.totalorder %s97, 12
        %s106 = scalar_select %p105, %s97, 12
        %s107 = smul.addr %s106, 2
        %s108 = smul.addr %s104, 26
        %s109 = sadd.s32 %s107, %s108
        %s110 = smul.addr %s109, 4
        %s111 = scalar_lea.vmem %s0, %s110
        %s112 = smul.u32 12, %s15
        %s113 = ssub.s32 13, %s112
        %p114 = scmp.lt.s32.totalorder %s113, 12
        %s115 = scalar_select %p114, %s113, 12
        %s116 = smul.u32 64, %s115
        %s117 = smul.u32 %s116, 2
      $region20: #{lenet5_forward.10} parent=15 // pred_fallthru
        _
    $region16: #{lenet5_forward.10} parent=5 // pred_fallthru
      _
    %p118 = scmp.le.s32.totalorder 1, %s7
    %p119 = scmp.lt.s32.totalorder %s7, 3
    %p120 = pnand %p118, %p119
    %p121 = pneg %p120
    // Predicated region
    $region21: #{lenet5_forward.10} parent=5 // pred_check
      _
    $region22: #{lenet5_forward.10} parent=5 // pred_check_branch
      %123 = sbr.rel (%p120) target = $region24
    $region23: #{lenet5_forward.10} parent=5 // pred_region
      %s124 = ssub.s32 %s7, 1
      %s125 = smul.u32 12, %s17
      %s126 = ssub.s32 13, %s125
      %p127 = scmp.lt.s32.totalorder %s126, 12
      %s128 = scalar_select %p127, %s126, 12
      %s129 = smul.u32 64, %s128
      %s130 = smul.u32 %s129, 2
      %p131 = scmp.lt.s32.totalorder %s16, 1
      %s132 = scalar_select %p131, %s16, 1
      %p133 = scmp.lt.s32.totalorder %s125, 12
      %s134 = scalar_select %p133, %s125, 12
      %s135 = smul.addr %s134, 2
      %s136 = smul.addr %s132, 26
      %s137 = sadd.s32 %s135, %s136
      %s138 = smul.addr %s137, 4
      %s139 = scalar_lea.vmem %s0, %s138
      %p140 = pneg %p47
      %p141 = pneg %p44
      %p142 = pneg %p75
      %p143 = pneg %p72
      %s144 = smul.u32 6, %s17
      %p145 = scmp.lt.s32.totalorder %s16, 1
      %s146 = scalar_select %p145, %s16, 1
      %p147 = scmp.lt.s32.totalorder %s144, 5
      %s148 = scalar_select %p147, %s144, 5
      %s149 = smul.addr %s146, 6
      %s150 = sadd.s32 %s148, %s149
      %s151 = smul.addr %s150, 4
      %s152 = scalar_lea.vmem %s1, %s151
      %s153 = smul.u32 12, %s17
      %s154 = ssub.s32 13, %s153
      %p155 = scmp.lt.s32.totalorder %s154, 12
      %s156 = scalar_select %p155, %s154, 12
      %s157 = smul.u32 64, %s156
      %s158 = smul.u32 %s157, 2
      %p159 = scmp.lt.s32.totalorder %s16, 1
      %s160 = scalar_select %p159, %s16, 1
      %p161 = scmp.lt.s32.totalorder %s153, 12
      %s162 = scalar_select %p161, %s153, 12
      %s163 = smul.addr %s162, 2
      %s164 = smul.addr %s160, 26
      %s165 = sadd.s32 %s163, %s164
      %s166 = smul.addr %s165, 4
      %s167 = scalar_lea.vmem %s0, %s166
      %s168 = smul.u32 12, %s17
      %s169 = ssub.s32 13, %s168
      %p170 = scmp.lt.s32.totalorder %s169, 12
      %s171 = scalar_select %p170, %s169, 12
      %s172 = smul.u32 64, %s171
      %s173 = smul.u32 %s172, 2
      %s174 = smul.u32 6, %s17
      %p175 = scmp.lt.s32.totalorder %s16, 1
      %s176 = scalar_select %p175, %s16, 1
      %p177 = scmp.lt.s32.totalorder %s174, 5
      %s178 = scalar_select %p177, %s174, 5
      %s179 = smul.addr %s176, 6
      %s180 = sadd.s32 %s178, %s179
      %s181 = smul.addr %s180, 4
      %s182 = scalar_lea.vmem %s1, %s181
      %s183 = smul.u32 6, %s17
      %v184 = vld [vmem:[%s167] sm:$0xf]
      %v185 = vld [vmem:[%s167 + $0x4] sm:$0x7]
      %v186 = vld [vmem:[%s167 + $0x8] sm:$0xf]
      %v187 = vld [vmem:[%s167 + $0xc] sm:$0x7]
      %v188 = vld [vmem:[%s167 + $0x10] sm:$0xf]
      %v189 = vld [vmem:[%s167 + $0x14] sm:$0x7]
      %v190 = vld [vmem:[%s167 + $0x18] sm:$0xf]
      %v191 = vld [vmem:[%s167 + $0x1c] sm:$0x7]
      %v192 = vld [vmem:[%s167 + $0x20] sm:$0xf]
      %v193 = vld [vmem:[%s167 + $0x24] sm:$0x7]
      %v194 = vld [vmem:[%s167 + $0x28] sm:$0xf]
      %v195 = vld [vmem:[%s167 + $0x2c] sm:$0x7]
      %v196 = vld [vmem:[%s167 + $0x30] sm:$0xf]
      %v197 = vld [vmem:[%s167 + $0x34] sm:$0x7]
      %v198 = vld [vmem:[%s167 + $0x38] sm:$0xf]
      %v199 = vld [vmem:[%s167 + $0x3c] sm:$0x7]
      %v200 = vld [vmem:[%s167 + $0x40] sm:$0xf]
      %v201 = vld [vmem:[%s167 + $0x44] sm:$0x7]
      %v202 = vld [vmem:[%s167 + $0x48] sm:$0xf]
      %v203 = vld [vmem:[%s167 + $0x4c] sm:$0x7]
      %v204 = vld [vmem:[%s167 + $0x50] sm:$0xf]
      %v205 = vld [vmem:[%s167 + $0x54] sm:$0x7]
      %v206 = vld [vmem:[%s167 + $0x58] sm:$0xf]
      %v207 = vld [vmem:[%s167 + $0x5c] sm:$0x7]
      %v208 = vunpack.c.l.bf16 %v184
      %v209 = vunpack.c.l.bf16 %v185
      %v210 = vunpack.c.l.bf16 %v186
      %v211 = vunpack.c.l.bf16 %v187
      %v212 = vunpack.c.l.bf16 %v188
      %v213 = vunpack.c.l.bf16 %v189
      %v214 = vunpack.c.l.bf16 %v190
      %v215 = vunpack.c.l.bf16 %v191
      %v216 = vunpack.c.l.bf16 %v192
      %v217 = vunpack.c.l.bf16 %v193
      %v218 = vunpack.c.l.bf16 %v194
      %v219 = vunpack.c.l.bf16 %v195
      %v220 = vunpack.c.l.bf16 %v196
      %v221 = vunpack.c.l.bf16 %v197
      %v222 = vunpack.c.l.bf16 %v198
      %v223 = vunpack.c.l.bf16 %v199
      %v224 = vunpack.c.l.bf16 %v200
      %v225 = vunpack.c.l.bf16 %v201
      %v226 = vunpack.c.l.bf16 %v202
      %v227 = vunpack.c.l.bf16 %v203
      %v228 = vunpack.c.l.bf16 %v204
      %v229 = vunpack.c.l.bf16 %v205
      %v230 = vunpack.c.l.bf16 %v206
      %v231 = vunpack.c.l.bf16 %v207
      %v232 = vadd.f32 %v208, %v210
      %v233 = vadd.f32 %v209, %v211
      %v234 = vadd.f32 %v212, %v214
      %v235 = vadd.f32 %v213, %v215
      %v236 = vadd.f32 %v216, %v218
      %v237 = vadd.f32 %v217, %v219
      %v238 = vadd.f32 %v220, %v222
      %v239 = vadd.f32 %v221, %v223
      %v240 = vadd.f32 %v224, %v226
      %v241 = vadd.f32 %v225, %v227
      %v242 = vadd.f32 %v228, %v230
      %v243 = vadd.f32 %v229, %v231
      %244 = vst [vmem:[#allocation2] sm:$0xff] %v232
      %245 = vst [vmem:[#allocation2 + $0x8] sm:$0x1f] %v233
      %246 = vst [vmem:[#allocation2 + $0x10] sm:$0xff] %v234
      %247 = vst [vmem:[#allocation2 + $0x18] sm:$0x1f] %v235
      %248 = vst [vmem:[#allocation2 + $0x20] sm:$0xff] %v236
      %249 = vst [vmem:[#allocation2 + $0x28] sm:$0x1f] %v237
      %250 = vst [vmem:[#allocation2 + $0x30] sm:$0xff] %v238
      %251 = vst [vmem:[#allocation2 + $0x38] sm:$0x1f] %v239
      %252 = vst [vmem:[#allocation2 + $0x40] sm:$0xff] %v240
      %253 = vst [vmem:[#allocation2 + $0x48] sm:$0x1f] %v241
      %254 = vst [vmem:[#allocation2 + $0x50] sm:$0xff] %v242
      %255 = vst [vmem:[#allocation2 + $0x58] sm:$0x1f] %v243
      %v256 = vld [vmem:[#allocation2] ss:$2 sm:$0x3f]
      %s257 = scalar_lea.vmem [#allocation2], 16
      %v258 = vld [vmem:[%s257] ss:$2 sm:$0x3f]
      %s259 = scalar_lea.vmem [#allocation2], 32
      %v260 = vld [vmem:[%s259] ss:$2 sm:$0x3f]
      %s261 = scalar_lea.vmem [#allocation2], 48
      %v262 = vld [vmem:[%s261] ss:$2 sm:$0x3f]
      %s263 = scalar_lea.vmem [#allocation2], 64
      %v264 = vld [vmem:[%s263] ss:$2 sm:$0x3f]
      %s265 = scalar_lea.vmem [#allocation2], 80
      %v266 = vld [vmem:[%s265] ss:$2 sm:$0x3f]
      %s267 = scalar_lea.vmem [#allocation2], 1
      %v268 = vld [vmem:[%s267] ss:$2 sm:$0x3f]
      %s269 = scalar_lea.vmem [#allocation2], 17
      %v270 = vld [vmem:[%s269] ss:$2 sm:$0x3f]
      %s271 = scalar_lea.vmem [#allocation2], 33
      %v272 = vld [vmem:[%s271] ss:$2 sm:$0x3f]
      %s273 = scalar_lea.vmem [#allocation2], 49
      %v274 = vld [vmem:[%s273] ss:$2 sm:$0x3f]
      %s275 = scalar_lea.vmem [#allocation2], 65
      %v276 = vld [vmem:[%s275] ss:$2 sm:$0x3f]
      %s277 = scalar_lea.vmem [#allocation2], 81
      %v278 = vld [vmem:[%s277] ss:$2 sm:$0x3f]
      %v279 = vadd.f32 %v256, %v268
      %v280 = vadd.f32 %v258, %v270
      %v281 = vadd.f32 %v260, %v272
      %v282 = vadd.f32 %v262, %v274
      %v283 = vadd.f32 %v264, %v276
      %v284 = vadd.f32 %v266, %v278
      %v285 = vmul.f32 %v279, 0.25
      %v286 = vmul.f32 %v280, 0.25
      %v287 = vmul.f32 %v281, 0.25
      %v288 = vmul.f32 %v282, 0.25
      %v289 = vmul.f32 %v283, 0.25
      %v290 = vmul.f32 %v284, 0.25
      %v291 = vpack.c.bf16 %v285, %v285
      %v292 = vpack.c.bf16 %v286, %v286
      %v293 = vpack.c.bf16 %v287, %v287
      %v294 = vpack.c.bf16 %v288, %v288
      %v295 = vpack.c.bf16 %v289, %v289
      %v296 = vpack.c.bf16 %v290, %v290
      %vm297 = vcmask 256000
      %298 = vst.msk [vmem:[%s182] sm:$0x7] %vm297, %v291
      %299 = vst.msk [vmem:[%s182 + $0x4] sm:$0x7] %vm297, %v292
      %300 = vst.msk [vmem:[%s182 + $0x8] sm:$0x7] %vm297, %v293
      %301 = vst.msk [vmem:[%s182 + $0xc] sm:$0x7] %vm297, %v294
      %302 = vst.msk [vmem:[%s182 + $0x10] sm:$0x7] %vm297, %v295
      %303 = vst.msk [vmem:[%s182 + $0x14] sm:$0x7] %vm297, %v296
      %s304 = smul.u32 6, %s17
      %p305 = scmp.lt.s32.totalorder %s16, 1
      %s306 = scalar_select %p305, %s16, 1
      %p307 = scmp.lt.s32.totalorder %s304, 5
      %s308 = scalar_select %p307, %s304, 5
      %s309 = smul.addr %s306, 6
      %s310 = sadd.s32 %s308, %s309
      %s311 = smul.addr %s310, 4
      %s312 = scalar_lea.vmem %s1, %s311
      // Predicated region
      $region25: #{lenet5_forward.10} parent=23 // pred_check
        %p313 = pneg %p72
      $region26: #{lenet5_forward.10} parent=23 // pred_check_branch
        %315 = sbr.rel (%p313) target = $region28
      $region27: #{lenet5_forward.10} parent=23 // pred_region
        %s316 = smul.u32 6, %s17
      $region28: #{lenet5_forward.10} parent=23 // pred_fallthru
        _
    $region24: #{lenet5_forward.10} parent=5 // pred_fallthru
      _
    %p317 = scmp.le.s32.totalorder 2, %s7
    // Predicated region
    $region29: #{lenet5_forward.10} parent=5 // pred_check
      %p318 = pneg %p317
    $region30: #{lenet5_forward.10} parent=5 // pred_check_branch
      %320 = sbr.rel (%p318) target = $region32
    $region31: #{lenet5_forward.10} parent=5 // pred_region
      %s321 = ssub.s32 %s7, 2
      // Predicated region
      $region33: #{lenet5_forward.10} parent=31 // pred_check
        %p322 = pneg %p78
      $region34: #{lenet5_forward.10} parent=31 // pred_check_branch
        %324 = sbr.rel (%p322) target = $region36
      $region35: #{lenet5_forward.10} parent=31 // pred_region
        %s325 = smul.u32 6, %s19
        %p326 = scmp.lt.s32.totalorder %s18, 1
        %s327 = scalar_select %p326, %s18, 1
        %p328 = scmp.lt.s32.totalorder %s325, 5
        %s329 = scalar_select %p328, %s325, 5
        %s330 = smul.addr %s327, 6
        %s331 = sadd.s32 %s329, %s330
        %s332 = smul.addr %s331, 4
        %s333 = scalar_lea.vmem %s1, %s332
      $region36: #{lenet5_forward.10} parent=31 // pred_fallthru
        _
    $region32: #{lenet5_forward.10} parent=5 // pred_fallthru
      _
  $region6: #{lenet5_forward.10} parent=0 // loop_footer
    %s11 = sadd.s32 1, %s7
  $region7: #{lenet5_forward.10} parent=0 // loop_footer_branch
    %6 = sbr.rel target = $region3
  $region8: #{lenet5_forward.10} parent=0 // loop_exit
    _

// kernel: lenet5_forward.11
$region0: #{lenet5_forward.11}
  #allocation0 [shape = 'u32[]', space=smem, size = 0x4, offset = 0x4, fixed_abs, tag = 'smem constant byte address 0x4 - core index']
  #allocation1 [shape = 'u32[144,128]{1,0:T(1,128)}', space=vmem, size = 0x12000, scoped, tag = 'internal scratch']
  #allocation2 [shape = 'f32[32,128]{1,0:T(8,128)}', space=vmem, size = 0x4000, scoped, tag = 'scratch operand']
  %s0 = inlined_call_operand.vmem [shape: bf16[32,288], index: 0, kind: input, shape index: {}]
  %s1 = inlined_call_operand.vmem [shape: bf16[288,128], index: 1, kind: input, shape index: {}]
  %s2 = inlined_call_operand.vmem [shape: f32[1,128], index: 2, kind: input, shape index: {}]
  %s3 = inlined_call_operand.vmem [shape: bf16[32,128], index: 3, kind: output, shape index: {}]
  %s4 = sld [smem:[#allocation0]]
  $region30: #{lenet5_forward.11} parent=0
    _
  %s6 = ssub.s32 1, %s4
  %s7 = scalar_select 0, %s6, %s4
  // Predicated region
  $region2: #{lenet5_forward.11} parent=0 // pred_check
    _
  $region3: #{lenet5_forward.11} parent=0 // pred_check_branch
    %9 = sbr.rel (0) target = $region5
  $region4: #{lenet5_forward.11} parent=0 // pred_region
    _
  $region5: #{lenet5_forward.11} parent=0 // pred_fallthru
    _
  // Predicated region
  $region6: #{lenet5_forward.11} parent=0 // pred_check
    _
  $region7: #{lenet5_forward.11} parent=0 // pred_check_branch
    %11 = sbr.rel (0) target = $region9
  $region8: #{lenet5_forward.11} parent=0 // pred_region
    _
  $region9: #{lenet5_forward.11} parent=0 // pred_fallthru
    _
  // Predicated region
  $region10: #{lenet5_forward.11} parent=0 // pred_check
    _
  $region11: #{lenet5_forward.11} parent=0 // pred_check_branch
    %13 = sbr.rel (0) target = $region13
  $region12: #{lenet5_forward.11} parent=0 // pred_region
    _
  $region13: #{lenet5_forward.11} parent=0 // pred_fallthru
    _
  %p15 = scmp.eq.s32.totalorder 0, 0
  // Predicated region
  $region14: #{lenet5_forward.11} parent=0 // pred_check
    %p16 = pneg %p15
  $region15: #{lenet5_forward.11} parent=0 // pred_check_branch
    %18 = sbr.rel (%p16) target = $region17
  $region16: #{lenet5_forward.11} parent=0 // pred_region
    %19 = vst [vmem:[#allocation2] sm:$0xff] 0.0
    %20 = vst [vmem:[#allocation2 + $0x8] sm:$0xff] 0.0
    %21 = vst [vmem:[#allocation2 + $0x10] sm:$0xff] 0.0
    %22 = vst [vmem:[#allocation2 + $0x18] sm:$0xff] 0.0
  $region17: #{lenet5_forward.11} parent=0 // pred_fallthru
    _
  %v23 = vld [vmem:[#allocation2] sm:$0xff]
  %v24 = vld [vmem:[#allocation2 + $0x8] sm:$0xff]
  %v25 = vld [vmem:[#allocation2 + $0x10] sm:$0xff]
  %v26 = vld [vmem:[#allocation2 + $0x18] sm:$0xff]
  %v27 = vld [vmem:[%s0] sm:$0xff]
  %v28 = vld [vmem:[%s0 + $0x8] sm:$0xf]
  %v29 = vld [vmem:[%s0 + $0xc] sm:$0xff]
  %v30 = vld [vmem:[%s0 + $0x14] sm:$0xf]
  %v31 = vld [vmem:[%s0 + $0x18] sm:$0xff]
  %v32 = vld [vmem:[%s0 + $0x20] sm:$0xf]
  %v33 = vld [vmem:[%s0 + $0x24] sm:$0xff]
  %v34 = vld [vmem:[%s0 + $0x2c] sm:$0xf]
  %v35 = vld [vmem:[%s1] sm:$0xf]
  %v36 = vld [vmem:[%s1 + $0x4] sm:$0xf]
  %v37 = vld [vmem:[%s1 + $0x8] sm:$0xf]
  %v38 = vld [vmem:[%s1 + $0xc] sm:$0xf]
  %v39 = vld [vmem:[%s1 + $0x10] sm:$0xf]
  %v40 = vld [vmem:[%s1 + $0x14] sm:$0xf]
  %v41 = vld [vmem:[%s1 + $0x18] sm:$0xf]
  %v42 = vld [vmem:[%s1 + $0x1c] sm:$0xf]
  %v43 = vld [vmem:[%s1 + $0x20] sm:$0xf]
  %v44 = vld [vmem:[%s1 + $0x24] sm:$0xf]
  %v45 = vld [vmem:[%s1 + $0x28] sm:$0xf]
  %v46 = vld [vmem:[%s1 + $0x2c] sm:$0xf]
  %v47 = vld [vmem:[%s1 + $0x30] sm:$0xf]
  %v48 = vld [vmem:[%s1 + $0x34] sm:$0xf]
  %v49 = vld [vmem:[%s1 + $0x38] sm:$0xf]
  %v50 = vld [vmem:[%s1 + $0x3c] sm:$0xf]
  %v51 = vld [vmem:[%s1 + $0x40] sm:$0xf]
  %v52 = vld [vmem:[%s1 + $0x44] sm:$0xf]
  %v53 = vld [vmem:[%s1 + $0x48] sm:$0xf]
  %v54 = vld [vmem:[%s1 + $0x4c] sm:$0xf]
  %v55 = vld [vmem:[%s1 + $0x50] sm:$0xf]
  %v56 = vld [vmem:[%s1 + $0x54] sm:$0xf]
  %v57 = vld [vmem:[%s1 + $0x58] sm:$0xf]
  %v58 = vld [vmem:[%s1 + $0x5c] sm:$0xf]
  %v59 = vld [vmem:[%s1 + $0x60] sm:$0xf]
  %v60 = vld [vmem:[%s1 + $0x64] sm:$0xf]
  %v61 = vld [vmem:[%s1 + $0x68] sm:$0xf]
  %v62 = vld [vmem:[%s1 + $0x6c] sm:$0xf]
  %v63 = vld [vmem:[%s1 + $0x70] sm:$0xf]
  %v64 = vld [vmem:[%s1 + $0x74] sm:$0xf]
  %v65 = vld [vmem:[%s1 + $0x78] sm:$0xf]
  %v66 = vld [vmem:[%s1 + $0x7c] sm:$0xf]
  %v67 = vld [vmem:[%s1 + $0x80] sm:$0xf]
  %v68 = vld [vmem:[%s1 + $0x84] sm:$0xf]
  %v69 = vld [vmem:[%s1 + $0x88] sm:$0xf]
  %v70 = vld [vmem:[%s1 + $0x8c] sm:$0xf]
  %v79 = vunpack.c.l.b16 %v27
  %v80 = vunpack.c.h.b16 %v27
  %v81 = vunpack.c.l.b16 %v28
  %v82 = vunpack.c.l.b16 %v29
  %v83 = vunpack.c.h.b16 %v29
  %v84 = vunpack.c.l.b16 %v30
  %v85 = vunpack.c.l.b16 %v31
  %v86 = vunpack.c.h.b16 %v31
  %v87 = vunpack.c.l.b16 %v32
  %v88 = vunpack.c.l.b16 %v33
  %v89 = vunpack.c.h.b16 %v33
  %v90 = vunpack.c.l.b16 %v34
  %v91 = vpack.c.b16 %v82, %v79
  %v92 = vpack.c.b16 %v83, %v80
  %v93 = vpack.c.b16 %v84, %v81
  %v94 = vpack.c.b16 %v88, %v85
  %v95 = vpack.c.b16 %v89, %v86
  %v96 = vpack.c.b16 %v90, %v87
  %v137 = vunpack.c.l.b16 %v35
  %v138 = vunpack.c.l.b16 %v36
  %v139 = vunpack.c.l.b16 %v37
  %v140 = vunpack.c.l.b16 %v38
  %v141 = vunpack.c.l.b16 %v39
  %v142 = vunpack.c.l.b16 %v40
  %v143 = vunpack.c.l.b16 %v41
  %v144 = vunpack.c.l.b16 %v42
  %v145 = vunpack.c.l.b16 %v43
  %v146 = vunpack.c.l.b16 %v44
  %v147 = vunpack.c.l.b16 %v45
  %v148 = vunpack.c.l.b16 %v46
  %v149 = vunpack.c.l.b16 %v47
  %v150 = vunpack.c.l.b16 %v48
  %v151 = vunpack.c.l.b16 %v49
  %v152 = vunpack.c.l.b16 %v50
  %v153 = vunpack.c.l.b16 %v51
  %v154 = vunpack.c.l.b16 %v52
  %v155 = vunpack.c.l.b16 %v53
  %v156 = vunpack.c.l.b16 %v54
  %v157 = vunpack.c.l.b16 %v55
  %v158 = vunpack.c.l.b16 %v56
  %v159 = vunpack.c.l.b16 %v57
  %v160 = vunpack.c.l.b16 %v58
  %v161 = vunpack.c.l.b16 %v59
  %v162 = vunpack.c.l.b16 %v60
  %v163 = vunpack.c.l.b16 %v61
  %v164 = vunpack.c.l.b16 %v62
  %v165 = vunpack.c.l.b16 %v63
  %v166 = vunpack.c.l.b16 %v64
  %v167 = vunpack.c.l.b16 %v65
  %v168 = vunpack.c.l.b16 %v66
  %v169 = vunpack.c.l.b16 %v67
  %v170 = vunpack.c.l.b16 %v68
  %v171 = vunpack.c.l.b16 %v69
  %v172 = vunpack.c.l.b16 %v70
  %v173 = vpack.c.b16 %v138, %v137
  %v174 = vpack.c.b16 %v140, %v139
  %v175 = vpack.c.b16 %v142, %v141
  %v176 = vpack.c.b16 %v144, %v143
  %v177 = vpack.c.b16 %v146, %v145
  %v178 = vpack.c.b16 %v148, %v147
  %v179 = vpack.c.b16 %v150, %v149
  %v180 = vpack.c.b16 %v152, %v151
  %v181 = vpack.c.b16 %v154, %v153
  %v182 = vpack.c.b16 %v156, %v155
  %v183 = vpack.c.b16 %v158, %v157
  %v184 = vpack.c.b16 %v160, %v159
  %v185 = vpack.c.b16 %v162, %v161
  %v186 = vpack.c.b16 %v164, %v163
  %v187 = vpack.c.b16 %v166, %v165
  %v188 = vpack.c.b16 %v168, %v167
  %v189 = vpack.c.b16 %v170, %v169
  %v190 = vpack.c.b16 %v172, %v171
  %vm209 = vcmask 261120
  %v211 = vsel %vm209, %v93, 0
  %v214 = vsel %vm209, %v96, 0
  %216 = vmatprep.subr.bf16.mxu0 0
  %217 = vmatpush1.bf16.msra.mxu0 %v173
  %218 = vmatprep.subr.bf16.mxu0 0
  %219 = vmatpush1.bf16.msra.mxu0 %v174
  %220 = vmatprep.subr.bf16.mxu0 0
  %221 = vmatpush1.bf16.msra.mxu0 %v175
  %222 = vmatprep.subr.bf16.mxu0 0
  %223 = vmatpush1.bf16.msra.mxu0 %v176
  %224 = vmatprep.subr.bf16.mxu0 0
  %225 = vmatpush1.bf16.msra.mxu0 %v177
  %226 = vmatprep.subr.bf16.mxu0 0
  %227 = vmatpush1.bf16.msra.mxu0 %v178
  %228 = vmatprep.subr.bf16.mxu0 0
  %229 = vmatpush1.bf16.msra.mxu0 %v179
  %230 = vmatprep.subr.bf16.mxu0 0
  %231 = vmatpush1.bf16.msra.mxu0 %v180
  %232 = vmatprep.subr.bf16.mxu0 0
  %233 = vmatpush1.bf16.msra.mxu0 %v181
  %234 = vmatprep.subr.bf16.mxu0 0
  %235 = vmatpush1.bf16.msra.mxu0 %v182
  %236 = vmatprep.subr.bf16.mxu0 0
  %237 = vmatpush1.bf16.msra.mxu0 %v183
  %238 = vmatprep.subr.bf16.mxu0 0
  %239 = vmatpush1.bf16.msra.mxu0 %v184
  %240 = vmatprep.subr.bf16.mxu0 0
  %241 = vmatpush1.bf16.msra.mxu0 %v185
  %242 = vmatprep.subr.bf16.mxu0 0
  %243 = vmatpush1.bf16.msra.mxu0 %v186
  %244 = vmatprep.subr.bf16.mxu0 0
  %245 = vmatpush1.bf16.msra.mxu0 %v187
  %246 = vmatprep.subr.bf16.mxu0 0
  %247 = vmatpush1.bf16.msra.mxu0 %v188
  %248 = vmatprep.mubr.bf16.mxu0 %v92
  %249 = vmatmul.mubr.bf16.gmra.mrb[0].mxu0 %v91
  %v250 = vpop.f32.mrb[0].mxu0
  %v251 = vadd.f32 0.0, %v250
  %v252 = vpop.f32.mrb[0].mxu0
  %v253 = vpop.f32.mrb[0].mxu0
  %v254 = vadd.f32 0.0, %v253
  %v255 = vpop.f32.mrb[0].mxu0
  %256 = vmatprep.mubr.bf16.mxu0 %v95
  %257 = vmatmul.mubr.bf16.gmra.mrb[0].mxu0 %v94
  %v258 = vpop.f32.mrb[0].mxu0
  %v259 = vadd.f32 0.0, %v258
  %v260 = vpop.f32.mrb[0].mxu0
  %v261 = vpop.f32.mrb[0].mxu0
  %v262 = vadd.f32 0.0, %v261
  %v263 = vpop.f32.mrb[0].mxu0
  %264 = vdwg.mxu0
  %265 = vmatprep.subr.bf16.mxu0 0
  %266 = vmatpush1.bf16.msra.mxu0 %v189
  %267 = vmatprep.subr.bf16.mxu0 0
  %268 = vmatpush1.bf16.msra.mxu0 %v190
  %269 = vmatprep.subr.bf16.mxu0 0
  %270 = vmatpush1.bf16.msra.mxu0 0
  %271 = vmatprep.subr.bf16.mxu0 0
  %272 = vmatpush1.bf16.msra.mxu0 0
  %273 = vmatprep.subr.bf16.mxu0 0
  %274 = vmatpush1.bf16.msra.mxu0 0
  %275 = vmatprep.subr.bf16.mxu0 0
  %276 = vmatpush1.bf16.msra.mxu0 0
  %277 = vmatprep.subr.bf16.mxu0 0
  %278 = vmatpush1.bf16.msra.mxu0 0
  %279 = vmatprep.subr.bf16.mxu0 0
  %280 = vmatpush1.bf16.msra.mxu0 0
  %281 = vmatprep.subr.bf16.mxu0 0
  %282 = vmatpush1.bf16.msra.mxu0 0
  %283 = vmatprep.subr.bf16.mxu0 0
  %284 = vmatpush1.bf16.msra.mxu0 0
  %285 = vmatprep.subr.bf16.mxu0 0
  %286 = vmatpush1.bf16.msra.mxu0 0
  %287 = vmatprep.subr.bf16.mxu0 0
  %288 = vmatpush1.bf16.msra.mxu0 0
  %289 = vmatprep.subr.bf16.mxu0 0
  %290 = vmatpush1.bf16.msra.mxu0 0
  %291 = vmatprep.subr.bf16.mxu0 0
  %292 = vmatpush1.bf16.msra.mxu0 0
  %293 = vmatprep.subr.bf16.mxu0 0
  %294 = vmatpush1.bf16.msra.mxu0 0
  %295 = vmatprep.subr.bf16.mxu0 0
  %296 = vmatpush1.bf16.msra.mxu0 0
  %297 = vmatprep.mubr.bf16.mxu0 0
  %298 = vmatmul.mubr.bf16.gmra.mrb[0].mxu0 %v211
  %v299 = vpop.f32.mrb[0].mxu0
  %v300 = vadd.f32 %v251, %v299
  %v301 = vpop.f32.mrb[0].mxu0
  %v302 = vpop.f32.mrb[0].mxu0
  %v303 = vadd.f32 %v254, %v302
  %v304 = vpop.f32.mrb[0].mxu0
  %305 = vmatprep.mubr.bf16.mxu0 0
  %306 = vmatmul.mubr.bf16.gmra.mrb[0].mxu0 %v214
  %v307 = vpop.f32.mrb[0].mxu0
  %v308 = vadd.f32 %v259, %v307
  %v309 = vpop.f32.mrb[0].mxu0
  %v310 = vpop.f32.mrb[0].mxu0
  %v311 = vadd.f32 %v262, %v310
  %v312 = vpop.f32.mrb[0].mxu0
  %313 = vdwg.mxu0
  %v314 = vadd.f32 %v23, %v300
  %v315 = vadd.f32 %v24, %v303
  %v316 = vadd.f32 %v25, %v308
  %v317 = vadd.f32 %v26, %v311
  %318 = vst [vmem:[#allocation2] sm:$0xff] %v314
  %319 = vst [vmem:[#allocation2 + $0x8] sm:$0xff] %v315
  %320 = vst [vmem:[#allocation2 + $0x10] sm:$0xff] %v316
  %321 = vst [vmem:[#allocation2 + $0x18] sm:$0xff] %v317
  // Predicated region
  $region18: #{lenet5_forward.11} parent=0 // pred_check
    %p322 = pneg %p15
  $region19: #{lenet5_forward.11} parent=0 // pred_check_branch
    %324 = sbr.rel (%p322) target = $region21
  $region20: #{lenet5_forward.11} parent=0 // pred_region
    %v325 = vld [vmem:[#allocation2] sm:$0xff]
    %v326 = vld [vmem:[#allocation2 + $0x8] sm:$0xff]
    %v327 = vld [vmem:[#allocation2 + $0x10] sm:$0xff]
    %v328 = vld [vmem:[#allocation2 + $0x18] sm:$0xff]
    %v329 = vld [vmem:[%s2] sm:$0x1]
    %v331 = vlaneseq
    %v332 = vshrl.u32 %v331, 7
    %v333 = vsub.s32 0, %v332
    %v334 = vrot.slane %v329, %v333
    %v336 = vadd.f32 %v325, %v334
    %v337 = vadd.f32 %v326, %v334
    %v338 = vadd.f32 %v327, %v334
    %v339 = vadd.f32 %v328, %v334
    %v340 = vmax.f32 %v336, 0.0
    %v341 = vmax.f32 %v337, 0.0
    %v342 = vmax.f32 %v338, 0.0
    %v343 = vmax.f32 %v339, 0.0
    %v344 = vpack.c.bf16 %v341, %v340
    %v345 = vpack.c.bf16 %v343, %v342
    %v348 = vunpack.c.l.b16 %v344
    %v349 = vunpack.c.h.b16 %v344
    %v350 = vunpack.c.l.b16 %v345
    %v351 = vunpack.c.h.b16 %v345
    %v352 = vpack.c.b16 %v348, %v348
    %v353 = vpack.c.b16 %v349, %v349
    %v354 = vpack.c.b16 %v350, %v350
    %v355 = vpack.c.b16 %v351, %v351
    %360 = vst [vmem:[%s3] sm:$0xf] %v352
    %361 = vst [vmem:[%s3 + $0x4] sm:$0xf] %v353
    %362 = vst [vmem:[%s3 + $0x8] sm:$0xf] %v354
    %363 = vst [vmem:[%s3 + $0xc] sm:$0xf] %v355
  $region21: #{lenet5_forward.11} parent=0 // pred_fallthru
    _
  // Predicated region
  $region22: #{lenet5_forward.11} parent=0 // pred_check
    _
  $region23: #{lenet5_forward.11} parent=0 // pred_check_branch
    %365 = sbr.rel (0) target = $region25
  $region24: #{lenet5_forward.11} parent=0 // pred_region
    _
  $region25: #{lenet5_forward.11} parent=0 // pred_fallthru
    _
  // Predicated region
  $region26: #{lenet5_forward.11} parent=0 // pred_check
    _
  $region27: #{lenet5_forward.11} parent=0 // pred_check_branch
    %367 = sbr.rel (0) target = $region29
  $region28: #{lenet5_forward.11} parent=0 // pred_region
    _
  $region29: #{lenet5_forward.11} parent=0 // pred_fallthru
    _

// kernel: lenet5_forward.13
$region0: #{lenet5_forward.13}
  #allocation0 [shape = 'u32[]', space=smem, size = 0x4, offset = 0x4, fixed_abs, tag = 'smem constant byte address 0x4 - core index']
  #allocation1 [shape = 'u32[144,128]{1,0:T(1,128)}', space=vmem, size = 0x12000, scoped, tag = 'internal scratch']
  %s0 = inlined_call_operand.vmem [shape: bf16[2,3200], index: 0, kind: input, shape index: {}]
  %s1 = inlined_call_operand.vmem [shape: bf16[3200,128], index: 1, kind: input, shape index: {}]
  %s2 = inlined_call_operand.vmem [shape: f32[1,128], index: 2, kind: input, shape index: {}]
  %s3 = inlined_call_operand.vmem [shape: bf16[128,128], index: 3, kind: input, shape index: {}]
  %s4 = inlined_call_operand.vmem [shape: f32[1,128], index: 4, kind: input, shape index: {}]
  %s5 = inlined_call_operand.hbm [shape: f32[2,128], index: 5, kind: output, shape index: {0}]
  %s6 = inlined_call_operand.hbm [shape: f32[2,128], index: 6, kind: output, shape index: {1}]
  %7 = xla_tuple %s5, %s6
  %s8 = sld [smem:[#allocation0]]
  $region38: #{lenet5_forward.13} parent=0
    _
  %s10 = ssub.s32 1, %s8
  %s11 = scalar_select 0, %s10, %s8
  $region1: #{lenet5_forward.13} parent=0
    #allocation2 [shape = 'u8[1024]{0}', space=vmem, size = 0x400, scoped, tag = 'output window, operand 0, single buffered']
    #allocation3 [shape = 's32[1]{0}', space=sflag, size = 0x4, scoped, tag = 'scoped memory for lenet5_forward.13']
    #allocation4 [shape = 'u8[1024]{0}', space=vmem, size = 0x400, scoped, tag = 'output window, operand 1, single buffered']
    #allocation5 [shape = 's32[1]{0}', space=sflag, size = 0x4, scoped, tag = 'scoped memory for lenet5_forward.13']
    %12 = vsyncpa [#allocation3], 0
    %13 = vsyncpa [#allocation5], 0
    // Predicated region
    $region2: #{lenet5_forward.13} parent=1 // pred_check
      _
    $region3: #{lenet5_forward.13} parent=1 // pred_check_branch
      %15 = sbr.rel (0) target = $region5
    $region4: #{lenet5_forward.13} parent=1 // pred_region
      _
    $region5: #{lenet5_forward.13} parent=1 // pred_fallthru
      _
    // Predicated region
    $region6: #{lenet5_forward.13} parent=1 // pred_check
      _
    $region7: #{lenet5_forward.13} parent=1 // pred_check_branch
      %17 = sbr.rel (0) target = $region9
    $region8: #{lenet5_forward.13} parent=1 // pred_region
      _
    $region9: #{lenet5_forward.13} parent=1 // pred_fallthru
      _
    // Predicated region
    $region10: #{lenet5_forward.13} parent=1 // pred_check
      _
    $region11: #{lenet5_forward.13} parent=1 // pred_check_branch
      %19 = sbr.rel (0) target = $region13
    $region12: #{lenet5_forward.13} parent=1 // pred_region
      _
    $region13: #{lenet5_forward.13} parent=1 // pred_fallthru
      _
    // Predicated region
    $region14: #{lenet5_forward.13} parent=1 // pred_check
      _
    $region15: #{lenet5_forward.13} parent=1 // pred_check_branch
      %21 = sbr.rel (0) target = $region17
    $region16: #{lenet5_forward.13} parent=1 // pred_region
      _
    $region17: #{lenet5_forward.13} parent=1 // pred_fallthru
      _
    // Predicated region
    $region18: #{lenet5_forward.13} parent=1 // pred_check
      _
    $region19: #{lenet5_forward.13} parent=1 // pred_check_branch
      %23 = sbr.rel (0) target = $region21
    $region20: #{lenet5_forward.13} parent=1 // pred_region
      _
    $region21: #{lenet5_forward.13} parent=1 // pred_fallthru
      _
    %v25 = vld [vmem:[%s0] sm:$0xff]
    %v26 = vld [vmem:[%s0 + $0x8] sm:$0xff]
    %v27 = vld [vmem:[%s0 + $0x10] sm:$0xff]
    %v28 = vld [vmem:[%s0 + $0x18] sm:$0x1]
    %v29 = vld [vmem:[%s1] sm:$0xf]
    %v30 = vld [vmem:[%s1 + $0x4] sm:$0xf]
    %v31 = vld [vmem:[%s1 + $0x8] sm:$0xf]
    %v32 = vld [vmem:[%s1 + $0xc] sm:$0xf]
    %v33 = vld [vmem:[%s1 + $0x10] sm:$0xf]
    %v34 = vld [vmem:[%s1 + $0x14] sm:$0xf]
    %v35 = vld [vmem:[%s1 + $0x18] sm:$0xf]
    %v36 = vld [vmem:[%s1 + $0x1c] sm:$0xf]
    %v37 = vld [vmem:[%s1 + $0x20] sm:$0xf]
    %v38 = vld [vmem:[%s1 + $0x24] sm:$0xf]
    %v39 = vld [vmem:[%s1 + $0x28] sm:$0xf]
    %v40 = vld [vmem:[%s1 + $0x2c] sm:$0xf]
    %v41 = vld [vmem:[%s1 + $0x30] sm:$0xf]
    %v42 = vld [vmem:[%s1 + $0x34] sm:$0xf]
    %v43 = vld [vmem:[%s1 + $0x38] sm:$0xf]
    %v44 = vld [vmem:[%s1 + $0x3c] sm:$0xf]
    %v45 = vld [vmem:[%s1 + $0x40] sm:$0xf]
    %v46 = vld [vmem:[%s1 + $0x44] sm:$0xf]
    %v47 = vld [vmem:[%s1 + $0x48] sm:$0xf]
    %v48 = vld [vmem:[%s1 + $0x4c] sm:$0xf]
    %v49 = vld [vmem:[%s1 + $0x50] sm:$0xf]
    %v50 = vld [vmem:[%s1 + $0x54] sm:$0xf]
    %v51 = vld [vmem:[%s1 + $0x58] sm:$0xf]
    %v52 = vld [vmem:[%s1 + $0x5c] sm:$0xf]
    %v53 = vld [vmem:[%s1 + $0x60] sm:$0xf]
    %v54 = vld [vmem:[%s1 + $0x64] sm:$0xf]
    %v55 = vld [vmem:[%s1 + $0x68] sm:$0xf]
    %v56 = vld [vmem:[%s1 + $0x6c] sm:$0xf]
    %v57 = vld [vmem:[%s1 + $0x70] sm:$0xf]
    %v58 = vld [vmem:[%s1 + $0x74] sm:$0xf]
    %v59 = vld [vmem:[%s1 + $0x78] sm:$0xf]
    %v60 = vld [vmem:[%s1 + $0x7c] sm:$0xf]
    %v61 = vld [vmem:[%s1 + $0x80] sm:$0xf]
    %v62 = vld [vmem:[%s1 + $0x84] sm:$0xf]
    %v63 = vld [vmem:[%s1 + $0x88] sm:$0xf]
    %v64 = vld [vmem:[%s1 + $0x8c] sm:$0xf]
    %v65 = vld [vmem:[%s1 + $0x90] sm:$0xf]
    %v66 = vld [vmem:[%s1 + $0x94] sm:$0xf]
    %v67 = vld [vmem:[%s1 + $0x98] sm:$0xf]
    %v68 = vld [vmem:[%s1 + $0x9c] sm:$0xf]
    %v69 = vld [vmem:[%s1 + $0xa0] sm:$0xf]
    %v70 = vld [vmem:[%s1 + $0xa4] sm:$0xf]
    %v71 = vld [vmem:[%s1 + $0xa8] sm:$0xf]
    %v72 = vld [vmem:[%s1 + $0xac] sm:$0xf]
    %v73 = vld [vmem:[%s1 + $0xb0] sm:$0xf]
    %v74 = vld [vmem:[%s1 + $0xb4] sm:$0xf]
    %v75 = vld [vmem:[%s1 + $0xb8] sm:$0xf]
    %v76 = vld [vmem:[%s1 + $0xbc] sm:$0xf]
    %v77 = vld [vmem:[%s1 + $0xc0] sm:$0xf]
    %v78 = vld [vmem:[%s1 + $0xc4] sm:$0xf]
    %v79 = vld [vmem:[%s1 + $0xc8] sm:$0xf]
    %v80 = vld [vmem:[%s1 + $0xcc] sm:$0xf]
    %v81 = vld [vmem:[%s1 + $0xd0] sm:$0xf]
    %v82 = vld [vmem:[%s1 + $0xd4] sm:$0xf]
    %v83 = vld [vmem:[%s1 + $0xd8] sm:$0xf]
    %v84 = vld [vmem:[%s1 + $0xdc] sm:$0xf]
    %v85 = vld [vmem:[%s1 + $0xe0] sm:$0xf]
    %v86 = vld [vmem:[%s1 + $0xe4] sm:$0xf]
    %v87 = vld [vmem:[%s1 + $0xe8] sm:$0xf]
    %v88 = vld [vmem:[%s1 + $0xec] sm:$0xf]
    %v89 = vld [vmem:[%s1 + $0xf0] sm:$0xf]
    %v90 = vld [vmem:[%s1 + $0xf4] sm:$0xf]
    %v91 = vld [vmem:[%s1 + $0xf8] sm:$0xf]
    %v92 = vld [vmem:[%s1 + $0xfc] sm:$0xf]
    %v93 = vld [vmem:[%s1 + $0x100] sm:$0xf]
    %v94 = vld [vmem:[%s1 + $0x104] sm:$0xf]
    %v95 = vld [vmem:[%s1 + $0x108] sm:$0xf]
    %v96 = vld [vmem:[%s1 + $0x10c] sm:$0xf]
    %v97 = vld [vmem:[%s1 + $0x110] sm:$0xf]
    %v98 = vld [vmem:[%s1 + $0x114] sm:$0xf]
    %v99 = vld [vmem:[%s1 + $0x118] sm:$0xf]
    %v100 = vld [vmem:[%s1 + $0x11c] sm:$0xf]
    %v101 = vld [vmem:[%s1 + $0x120] sm:$0xf]
    %v102 = vld [vmem:[%s1 + $0x124] sm:$0xf]
    %v103 = vld [vmem:[%s1 + $0x128] sm:$0xf]
    %v104 = vld [vmem:[%s1 + $0x12c] sm:$0xf]
    %v105 = vld [vmem:[%s1 + $0x130] sm:$0xf]
    %v106 = vld [vmem:[%s1 + $0x134] sm:$0xf]
    %v107 = vld [vmem:[%s1 + $0x138] sm:$0xf]
    %v108 = vld [vmem:[%s1 + $0x13c] sm:$0xf]
    %v109 = vld [vmem:[%s1 + $0x140] sm:$0xf]
    %v110 = vld [vmem:[%s1 + $0x144] sm:$0xf]
    %v111 = vld [vmem:[%s1 + $0x148] sm:$0xf]
    %v112 = vld [vmem:[%s1 + $0x14c] sm:$0xf]
    %v113 = vld [vmem:[%s1 + $0x150] sm:$0xf]
    %v114 = vld [vmem:[%s1 + $0x154] sm:$0xf]
    %v115 = vld [vmem:[%s1 + $0x158] sm:$0xf]
    %v116 = vld [vmem:[%s1 + $0x15c] sm:$0xf]
    %v117 = vld [vmem:[%s1 + $0x160] sm:$0xf]
    %v118 = vld [vmem:[%s1 + $0x164] sm:$0xf]
    %v119 = vld [vmem:[%s1 + $0x168] sm:$0xf]
    %v120 = vld [vmem:[%s1 + $0x16c] sm:$0xf]
    %v121 = vld [vmem:[%s1 + $0x170] sm:$0xf]
    %v122 = vld [vmem:[%s1 + $0x174] sm:$0xf]
    %v123 = vld [vmem:[%s1 + $0x178] sm:$0xf]
    %v124 = vld [vmem:[%s1 + $0x17c] sm:$0xf]
    %v125 = vld [vmem:[%s1 + $0x180] sm:$0xf]
    %v126 = vld [vmem:[%s1 + $0x184] sm:$0xf]
    %v127 = vld [vmem:[%s1 + $0x188] sm:$0xf]
    %v128 = vld [vmem:[%s1 + $0x18c] sm:$0xf]
    %v129 = vld [vmem:[%s1 + $0x190] sm:$0xf]
    %v130 = vld [vmem:[%s1 + $0x194] sm:$0xf]
    %v131 = vld [vmem:[%s1 + $0x198] sm:$0xf]
    %v132 = vld [vmem:[%s1 + $0x19c] sm:$0xf]
    %v133 = vld [vmem:[%s1 + $0x1a0] sm:$0xf]
    %v134 = vld [vmem:[%s1 + $0x1a4] sm:$0xf]
    %v135 = vld [vmem:[%s1 + $0x1a8] sm:$0xf]
    %v136 = vld [vmem:[%s1 + $0x1ac] sm:$0xf]
    %v137 = vld [vmem:[%s1 + $0x1b0] sm:$0xf]
    %v138 = vld [vmem:[%s1 + $0x1b4] sm:$0xf]
    %v139 = vld [vmem:[%s1 + $0x1b8] sm:$0xf]
    %v140 = vld [vmem:[%s1 + $0x1bc] sm:$0xf]
    %v141 = vld [vmem:[%s1 + $0x1c0] sm:$0xf]
    %v142 = vld [vmem:[%s1 + $0x1c4] sm:$0xf]
    %v143 = vld [vmem:[%s1 + $0x1c8] sm:$0xf]
    %v144 = vld [vmem:[%s1 + $0x1cc] sm:$0xf]
    %v145 = vld [vmem:[%s1 + $0x1d0] sm:$0xf]
    %v146 = vld [vmem:[%s1 + $0x1d4] sm:$0xf]
    %v147 = vld [vmem:[%s1 + $0x1d8] sm:$0xf]
    %v148 = vld [vmem:[%s1 + $0x1dc] sm:$0xf]
    %v149 = vld [vmem:[%s1 + $0x1e0] sm:$0xf]
    %v150 = vld [vmem:[%s1 + $0x1e4] sm:$0xf]
    %v151 = vld [vmem:[%s1 + $0x1e8] sm:$0xf]
    %v152 = vld [vmem:[%s1 + $0x1ec] sm:$0xf]
    %v153 = vld [vmem:[%s1 + $0x1f0] sm:$0xf]
    %v154 = vld [vmem:[%s1 + $0x1f4] sm:$0xf]
    %v155 = vld [vmem:[%s1 + $0x1f8] sm:$0xf]
    %v156 = vld [vmem:[%s1 + $0x1fc] sm:$0xf]
    %v157 = vld [vmem:[%s1 + $0x200] sm:$0xf]
    %v158 = vld [vmem:[%s1 + $0x204] sm:$0xf]
    %v159 = vld [vmem:[%s1 + $0x208] sm:$0xf]
    %v160 = vld [vmem:[%s1 + $0x20c] sm:$0xf]
    %v161 = vld [vmem:[%s1 + $0x210] sm:$0xf]
    %v162 = vld [vmem:[%s1 + $0x214] sm:$0xf]
    %v163 = vld [vmem:[%s1 + $0x218] sm:$0xf]
    %v164 = vld [vmem:[%s1 + $0x21c] sm:$0xf]
    %v165 = vld [vmem:[%s1 + $0x220] sm:$0xf]
    %v166 = vld [vmem:[%s1 + $0x224] sm:$0xf]
    %v167 = vld [vmem:[%s1 + $0x228] sm:$0xf]
    %v168 = vld [vmem:[%s1 + $0x22c] sm:$0xf]
    %v169 = vld [vmem:[%s1 + $0x230] sm:$0xf]
    %v170 = vld [vmem:[%s1 + $0x234] sm:$0xf]
    %v171 = vld [vmem:[%s1 + $0x238] sm:$0xf]
    %v172 = vld [vmem:[%s1 + $0x23c] sm:$0xf]
    %v173 = vld [vmem:[%s1 + $0x240] sm:$0xf]
    %v174 = vld [vmem:[%s1 + $0x244] sm:$0xf]
    %v175 = vld [vmem:[%s1 + $0x248] sm:$0xf]
    %v176 = vld [vmem:[%s1 + $0x24c] sm:$0xf]
    %v177 = vld [vmem:[%s1 + $0x250] sm:$0xf]
    %v178 = vld [vmem:[%s1 + $0x254] sm:$0xf]
    %v179 = vld [vmem:[%s1 + $0x258] sm:$0xf]
    %v180 = vld [vmem:[%s1 + $0x25c] sm:$0xf]
    %v181 = vld [vmem:[%s1 + $0x260] sm:$0xf]
    %v182 = vld [vmem:[%s1 + $0x264] sm:$0xf]
    %v183 = vld [vmem:[%s1 + $0x268] sm:$0xf]
    %v184 = vld [vmem:[%s1 + $0x26c] sm:$0xf]
    %v185 = vld [vmem:[%s1 + $0x270] sm:$0xf]
    %v186 = vld [vmem:[%s1 + $0x274] sm:$0xf]
    %v187 = vld [vmem:[%s1 + $0x278] sm:$0xf]
    %v188 = vld [vmem:[%s1 + $0x27c] sm:$0xf]
    %v189 = vld [vmem:[%s1 + $0x280] sm:$0xf]
    %v190 = vld [vmem:[%s1 + $0x284] sm:$0xf]
    %v191 = vld [vmem:[%s1 + $0x288] sm:$0xf]
    %v192 = vld [vmem:[%s1 + $0x28c] sm:$0xf]
    %v193 = vld [vmem:[%s1 + $0x290] sm:$0xf]
    %v194 = vld [vmem:[%s1 + $0x294] sm:$0xf]
    %v195 = vld [vmem:[%s1 + $0x298] sm:$0xf]
    %v196 = vld [vmem:[%s1 + $0x29c] sm:$0xf]
    %v197 = vld [vmem:[%s1 + $0x2a0] sm:$0xf]
    %v198 = vld [vmem:[%s1 + $0x2a4] sm:$0xf]
    %v199 = vld [vmem:[%s1 + $0x2a8] sm:$0xf]
    %v200 = vld [vmem:[%s1 + $0x2ac] sm:$0xf]
    %v201 = vld [vmem:[%s1 + $0x2b0] sm:$0xf]
    %v202 = vld [vmem:[%s1 + $0x2b4] sm:$0xf]
    %v203 = vld [vmem:[%s1 + $0x2b8] sm:$0xf]
    %v204 = vld [vmem:[%s1 + $0x2bc] sm:$0xf]
    %v205 = vld [vmem:[%s1 + $0x2c0] sm:$0xf]
    %v206 = vld [vmem:[%s1 + $0x2c4] sm:$0xf]
    %v207 = vld [vmem:[%s1 + $0x2c8] sm:$0xf]
    %v208 = vld [vmem:[%s1 + $0x2cc] sm:$0xf]
    %v209 = vld [vmem:[%s1 + $0x2d0] sm:$0xf]
    %v210 = vld [vmem:[%s1 + $0x2d4] sm:$0xf]
    %v211 = vld [vmem:[%s1 + $0x2d8] sm:$0xf]
    %v212 = vld [vmem:[%s1 + $0x2dc] sm:$0xf]
    %v213 = vld [vmem:[%s1 + $0x2e0] sm:$0xf]
    %v214 = vld [vmem:[%s1 + $0x2e4] sm:$0xf]
    %v215 = vld [vmem:[%s1 + $0x2e8] sm:$0xf]
    %v216 = vld [vmem:[%s1 + $0x2ec] sm:$0xf]
    %v217 = vld [vmem:[%s1 + $0x2f0] sm:$0xf]
    %v218 = vld [vmem:[%s1 + $0x2f4] sm:$0xf]
    %v219 = vld [vmem:[%s1 + $0x2f8] sm:$0xf]
    %v220 = vld [vmem:[%s1 + $0x2fc] sm:$0xf]
    %v221 = vld [vmem:[%s1 + $0x300] sm:$0xf]
    %v222 = vld [vmem:[%s1 + $0x304] sm:$0xf]
    %v223 = vld [vmem:[%s1 + $0x308] sm:$0xf]
    %v224 = vld [vmem:[%s1 + $0x30c] sm:$0xf]
    %v225 = vld [vmem:[%s1 + $0x310] sm:$0xf]
    %v226 = vld [vmem:[%s1 + $0x314] sm:$0xf]
    %v227 = vld [vmem:[%s1 + $0x318] sm:$0xf]
    %v228 = vld [vmem:[%s1 + $0x31c] sm:$0xf]
    %v229 = vld [vmem:[%s1 + $0x320] sm:$0xf]
    %v230 = vld [vmem:[%s1 + $0x324] sm:$0xf]
    %v231 = vld [vmem:[%s1 + $0x328] sm:$0xf]
    %v232 = vld [vmem:[%s1 + $0x32c] sm:$0xf]
    %v233 = vld [vmem:[%s1 + $0x330] sm:$0xf]
    %v234 = vld [vmem:[%s1 + $0x334] sm:$0xf]
    %v235 = vld [vmem:[%s1 + $0x338] sm:$0xf]
    %v236 = vld [vmem:[%s1 + $0x33c] sm:$0xf]
    %v237 = vld [vmem:[%s1 + $0x340] sm:$0xf]
    %v238 = vld [vmem:[%s1 + $0x344] sm:$0xf]
    %v239 = vld [vmem:[%s1 + $0x348] sm:$0xf]
    %v240 = vld [vmem:[%s1 + $0x34c] sm:$0xf]
    %v241 = vld [vmem:[%s1 + $0x350] sm:$0xf]
    %v242 = vld [vmem:[%s1 + $0x354] sm:$0xf]
    %v243 = vld [vmem:[%s1 + $0x358] sm:$0xf]
    %v244 = vld [vmem:[%s1 + $0x35c] sm:$0xf]
    %v245 = vld [vmem:[%s1 + $0x360] sm:$0xf]
    %v246 = vld [vmem:[%s1 + $0x364] sm:$0xf]
    %v247 = vld [vmem:[%s1 + $0x368] sm:$0xf]
    %v248 = vld [vmem:[%s1 + $0x36c] sm:$0xf]
    %v249 = vld [vmem:[%s1 + $0x370] sm:$0xf]
    %v250 = vld [vmem:[%s1 + $0x374] sm:$0xf]
    %v251 = vld [vmem:[%s1 + $0x378] sm:$0xf]
    %v252 = vld [vmem:[%s1 + $0x37c] sm:$0xf]
    %v253 = vld [vmem:[%s1 + $0x380] sm:$0xf]
    %v254 = vld [vmem:[%s1 + $0x384] sm:$0xf]
    %v255 = vld [vmem:[%s1 + $0x388] sm:$0xf]
    %v256 = vld [vmem:[%s1 + $0x38c] sm:$0xf]
    %v257 = vld [vmem:[%s1 + $0x390] sm:$0xf]
    %v258 = vld [vmem:[%s1 + $0x394] sm:$0xf]
    %v259 = vld [vmem:[%s1 + $0x398] sm:$0xf]
    %v260 = vld [vmem:[%s1 + $0x39c] sm:$0xf]
    %v261 = vld [vmem:[%s1 + $0x3a0] sm:$0xf]
    %v262 = vld [vmem:[%s1 + $0x3a4] sm:$0xf]
    %v263 = vld [vmem:[%s1 + $0x3a8] sm:$0xf]
    %v264 = vld [vmem:[%s1 + $0x3ac] sm:$0xf]
    %v265 = vld [vmem:[%s1 + $0x3b0] sm:$0xf]
    %v266 = vld [vmem:[%s1 + $0x3b4] sm:$0xf]
    %v267 = vld [vmem:[%s1 + $0x3b8] sm:$0xf]
    %v268 = vld [vmem:[%s1 + $0x3bc] sm:$0xf]
    %v269 = vld [vmem:[%s1 + $0x3c0] sm:$0xf]
    %v270 = vld [vmem:[%s1 + $0x3c4] sm:$0xf]
    %v271 = vld [vmem:[%s1 + $0x3c8] sm:$0xf]
    %v272 = vld [vmem:[%s1 + $0x3cc] sm:$0xf]
    %v273 = vld [vmem:[%s1 + $0x3d0] sm:$0xf]
    %v274 = vld [vmem:[%s1 + $0x3d4] sm:$0xf]
    %v275 = vld [vmem:[%s1 + $0x3d8] sm:$0xf]
    %v276 = vld [vmem:[%s1 + $0x3dc] sm:$0xf]
    %v277 = vld [vmem:[%s1 + $0x3e0] sm:$0xf]
    %v278 = vld [vmem:[%s1 + $0x3e4] sm:$0xf]
    %v279 = vld [vmem:[%s1 + $0x3e8] sm:$0xf]
    %v280 = vld [vmem:[%s1 + $0x3ec] sm:$0xf]
    %v281 = vld [vmem:[%s1 + $0x3f0] sm:$0xf]
    %v282 = vld [vmem:[%s1 + $0x3f4] sm:$0xf]
    %v283 = vld [vmem:[%s1 + $0x3f8] sm:$0xf]
    %v284 = vld [vmem:[%s1 + $0x3fc] sm:$0xf]
    %v285 = vld [vmem:[%s1 + $0x400] sm:$0xf]
    %v286 = vld [vmem:[%s1 + $0x404] sm:$0xf]
    %v287 = vld [vmem:[%s1 + $0x408] sm:$0xf]
    %v288 = vld [vmem:[%s1 + $0x40c] sm:$0xf]
    %v289 = vld [vmem:[%s1 + $0x410] sm:$0xf]
    %v290 = vld [vmem:[%s1 + $0x414] sm:$0xf]
    %v291 = vld [vmem:[%s1 + $0x418] sm:$0xf]
    %v292 = vld [vmem:[%s1 + $0x41c] sm:$0xf]
    %v293 = vld [vmem:[%s1 + $0x420] sm:$0xf]
    %v294 = vld [vmem:[%s1 + $0x424] sm:$0xf]
    %v295 = vld [vmem:[%s1 + $0x428] sm:$0xf]
    %v296 = vld [vmem:[%s1 + $0x42c] sm:$0xf]
    %v297 = vld [vmem:[%s1 + $0x430] sm:$0xf]
    %v298 = vld [vmem:[%s1 + $0x434] sm:$0xf]
    %v299 = vld [vmem:[%s1 + $0x438] sm:$0xf]
    %v300 = vld [vmem:[%s1 + $0x43c] sm:$0xf]
    %v301 = vld [vmem:[%s1 + $0x440] sm:$0xf]
    %v302 = vld [vmem:[%s1 + $0x444] sm:$0xf]
    %v303 = vld [vmem:[%s1 + $0x448] sm:$0xf]
    %v304 = vld [vmem:[%s1 + $0x44c] sm:$0xf]
    %v305 = vld [vmem:[%s1 + $0x450] sm:$0xf]
    %v306 = vld [vmem:[%s1 + $0x454] sm:$0xf]
    %v307 = vld [vmem:[%s1 + $0x458] sm:$0xf]
    %v308 = vld [vmem:[%s1 + $0x45c] sm:$0xf]
    %v309 = vld [vmem:[%s1 + $0x460] sm:$0xf]
    %v310 = vld [vmem:[%s1 + $0x464] sm:$0xf]
    %v311 = vld [vmem:[%s1 + $0x468] sm:$0xf]
    %v312 = vld [vmem:[%s1 + $0x46c] sm:$0xf]
    %v313 = vld [vmem:[%s1 + $0x470] sm:$0xf]
    %v314 = vld [vmem:[%s1 + $0x474] sm:$0xf]
    %v315 = vld [vmem:[%s1 + $0x478] sm:$0xf]
    %v316 = vld [vmem:[%s1 + $0x47c] sm:$0xf]
    %v317 = vld [vmem:[%s1 + $0x480] sm:$0xf]
    %v318 = vld [vmem:[%s1 + $0x484] sm:$0xf]
    %v319 = vld [vmem:[%s1 + $0x488] sm:$0xf]
    %v320 = vld [vmem:[%s1 + $0x48c] sm:$0xf]
    %v321 = vld [vmem:[%s1 + $0x490] sm:$0xf]
    %v322 = vld [vmem:[%s1 + $0x494] sm:$0xf]
    %v323 = vld [vmem:[%s1 + $0x498] sm:$0xf]
    %v324 = vld [vmem:[%s1 + $0x49c] sm:$0xf]
    %v325 = vld [vmem:[%s1 + $0x4a0] sm:$0xf]
    %v326 = vld [vmem:[%s1 + $0x4a4] sm:$0xf]
    %v327 = vld [vmem:[%s1 + $0x4a8] sm:$0xf]
    %v328 = vld [vmem:[%s1 + $0x4ac] sm:$0xf]
    %v329 = vld [vmem:[%s1 + $0x4b0] sm:$0xf]
    %v330 = vld [vmem:[%s1 + $0x4b4] sm:$0xf]
    %v331 = vld [vmem:[%s1 + $0x4b8] sm:$0xf]
    %v332 = vld [vmem:[%s1 + $0x4bc] sm:$0xf]
    %v333 = vld [vmem:[%s1 + $0x4c0] sm:$0xf]
    %v334 = vld [vmem:[%s1 + $0x4c4] sm:$0xf]
    %v335 = vld [vmem:[%s1 + $0x4c8] sm:$0xf]
    %v336 = vld [vmem:[%s1 + $0x4cc] sm:$0xf]
    %v337 = vld [vmem:[%s1 + $0x4d0] sm:$0xf]
    %v338 = vld [vmem:[%s1 + $0x4d4] sm:$0xf]
    %v339 = vld [vmem:[%s1 + $0x4d8] sm:$0xf]
    %v340 = vld [vmem:[%s1 + $0x4dc] sm:$0xf]
    %v341 = vld [vmem:[%s1 + $0x4e0] sm:$0xf]
    %v342 = vld [vmem:[%s1 + $0x4e4] sm:$0xf]
    %v343 = vld [vmem:[%s1 + $0x4e8] sm:$0xf]
    %v344 = vld [vmem:[%s1 + $0x4ec] sm:$0xf]
    %v345 = vld [vmem:[%s1 + $0x4f0] sm:$0xf]
    %v346 = vld [vmem:[%s1 + $0x4f4] sm:$0xf]
    %v347 = vld [vmem:[%s1 + $0x4f8] sm:$0xf]
    %v348 = vld [vmem:[%s1 + $0x4fc] sm:$0xf]
    %v349 = vld [vmem:[%s1 + $0x500] sm:$0xf]
    %v350 = vld [vmem:[%s1 + $0x504] sm:$0xf]
    %v351 = vld [vmem:[%s1 + $0x508] sm:$0xf]
    %v352 = vld [vmem:[%s1 + $0x50c] sm:$0xf]
    %v353 = vld [vmem:[%s1 + $0x510] sm:$0xf]
    %v354 = vld [vmem:[%s1 + $0x514] sm:$0xf]
    %v355 = vld [vmem:[%s1 + $0x518] sm:$0xf]
    %v356 = vld [vmem:[%s1 + $0x51c] sm:$0xf]
    %v357 = vld [vmem:[%s1 + $0x520] sm:$0xf]
    %v358 = vld [vmem:[%s1 + $0x524] sm:$0xf]
    %v359 = vld [vmem:[%s1 + $0x528] sm:$0xf]
    %v360 = vld [vmem:[%s1 + $0x52c] sm:$0xf]
    %v361 = vld [vmem:[%s1 + $0x530] sm:$0xf]
    %v362 = vld [vmem:[%s1 + $0x534] sm:$0xf]
    %v363 = vld [vmem:[%s1 + $0x538] sm:$0xf]
    %v364 = vld [vmem:[%s1 + $0x53c] sm:$0xf]
    %v365 = vld [vmem:[%s1 + $0x540] sm:$0xf]
    %v366 = vld [vmem:[%s1 + $0x544] sm:$0xf]
    %v367 = vld [vmem:[%s1 + $0x548] sm:$0xf]
    %v368 = vld [vmem:[%s1 + $0x54c] sm:$0xf]
    %v369 = vld [vmem:[%s1 + $0x550] sm:$0xf]
    %v370 = vld [vmem:[%s1 + $0x554] sm:$0xf]
    %v371 = vld [vmem:[%s1 + $0x558] sm:$0xf]
    %v372 = vld [vmem:[%s1 + $0x55c] sm:$0xf]
    %v373 = vld [vmem:[%s1 + $0x560] sm:$0xf]
    %v374 = vld [vmem:[%s1 + $0x564] sm:$0xf]
    %v375 = vld [vmem:[%s1 + $0x568] sm:$0xf]
    %v376 = vld [vmem:[%s1 + $0x56c] sm:$0xf]
    %v377 = vld [vmem:[%s1 + $0x570] sm:$0xf]
    %v378 = vld [vmem:[%s1 + $0x574] sm:$0xf]
    %v379 = vld [vmem:[%s1 + $0x578] sm:$0xf]
    %v380 = vld [vmem:[%s1 + $0x57c] sm:$0xf]
    %v381 = vld [vmem:[%s1 + $0x580] sm:$0xf]
    %v382 = vld [vmem:[%s1 + $0x584] sm:$0xf]
    %v383 = vld [vmem:[%s1 + $0x588] sm:$0xf]
    %v384 = vld [vmem:[%s1 + $0x58c] sm:$0xf]
    %v385 = vld [vmem:[%s1 + $0x590] sm:$0xf]
    %v386 = vld [vmem:[%s1 + $0x594] sm:$0xf]
    %v387 = vld [vmem:[%s1 + $0x598] sm:$0xf]
    %v388 = vld [vmem:[%s1 + $0x59c] sm:$0xf]
    %v389 = vld [vmem:[%s1 + $0x5a0] sm:$0xf]
    %v390 = vld [vmem:[%s1 + $0x5a4] sm:$0xf]
    %v391 = vld [vmem:[%s1 + $0x5a8] sm:$0xf]
    %v392 = vld [vmem:[%s1 + $0x5ac] sm:$0xf]
    %v393 = vld [vmem:[%s1 + $0x5b0] sm:$0xf]
    %v394 = vld [vmem:[%s1 + $0x5b4] sm:$0xf]
    %v395 = vld [vmem:[%s1 + $0x5b8] sm:$0xf]
    %v396 = vld [vmem:[%s1 + $0x5bc] sm:$0xf]
    %v397 = vld [vmem:[%s1 + $0x5c0] sm:$0xf]
    %v398 = vld [vmem:[%s1 + $0x5c4] sm:$0xf]
    %v399 = vld [vmem:[%s1 + $0x5c8] sm:$0xf]
    %v400 = vld [vmem:[%s1 + $0x5cc] sm:$0xf]
    %v401 = vld [vmem:[%s1 + $0x5d0] sm:$0xf]
    %v402 = vld [vmem:[%s1 + $0x5d4] sm:$0xf]
    %v403 = vld [vmem:[%s1 + $0x5d8] sm:$0xf]
    %v404 = vld [vmem:[%s1 + $0x5dc] sm:$0xf]
    %v405 = vld [vmem:[%s1 + $0x5e0] sm:$0xf]
    %v406 = vld [vmem:[%s1 + $0x5e4] sm:$0xf]
    %v407 = vld [vmem:[%s1 + $0x5e8] sm:$0xf]
    %v408 = vld [vmem:[%s1 + $0x5ec] sm:$0xf]
    %v409 = vld [vmem:[%s1 + $0x5f0] sm:$0xf]
    %v410 = vld [vmem:[%s1 + $0x5f4] sm:$0xf]
    %v411 = vld [vmem:[%s1 + $0x5f8] sm:$0xf]
    %v412 = vld [vmem:[%s1 + $0x5fc] sm:$0xf]
    %v413 = vld [vmem:[%s1 + $0x600] sm:$0xf]
    %v414 = vld [vmem:[%s1 + $0x604] sm:$0xf]
    %v415 = vld [vmem:[%s1 + $0x608] sm:$0xf]
    %v416 = vld [vmem:[%s1 + $0x60c] sm:$0xf]
    %v417 = vld [vmem:[%s1 + $0x610] sm:$0xf]
    %v418 = vld [vmem:[%s1 + $0x614] sm:$0xf]
    %v419 = vld [vmem:[%s1 + $0x618] sm:$0xf]
    %v420 = vld [vmem:[%s1 + $0x61c] sm:$0xf]
    %v421 = vld [vmem:[%s1 + $0x620] sm:$0xf]
    %v422 = vld [vmem:[%s1 + $0x624] sm:$0xf]
    %v423 = vld [vmem:[%s1 + $0x628] sm:$0xf]
    %v424 = vld [vmem:[%s1 + $0x62c] sm:$0xf]
    %v425 = vld [vmem:[%s1 + $0x630] sm:$0xf]
    %v426 = vld [vmem:[%s1 + $0x634] sm:$0xf]
    %v427 = vld [vmem:[%s1 + $0x638] sm:$0xf]
    %v428 = vld [vmem:[%s1 + $0x63c] sm:$0xf]
    %v429 = vld [vmem:[%s2] sm:$0x1]
    %v431 = vlaneseq
    %v432 = vshrl.u32 %v431, 7
    %v433 = vsub.s32 0, %v432
    %v434 = vrot.slane %v429, %v433
    %v440 = vcombine.high %v25, %v25
    %v442 = vunpack.c.l.s4 1966171168
    %v443 = vunpack.c.0.s8 %v442
    %v444 = vlaneseq
    %v445 = vshrl.u32 %v444, 7
    %v446 = vsub.s32 %v443, %v445
    %v447 = vrot.slane %v25, %v446
    %v449 = vunpack.c.l.s4 1966171168
    %v450 = vunpack.c.0.s8 %v449
    %v451 = vlaneseq
    %v452 = vshrl.u32 %v451, 7
    %v453 = vsub.s32 %v450, %v452
    %v454 = vrot.slane %v440, %v453
    %v455 = vcombine.high %v447, %v447
    %v456 = vcombine.high %v454, %v454
    %v458 = vunpack.c.l.s4 1966171168
    %v459 = vunpack.c.0.s8 %v458
    %v460 = vlaneseq
    %v461 = vshrl.u32 %v460, 7
    %v462 = vsub.s32 %v459, %v461
    %v463 = vrot.slane %v447, %v462
    %v465 = vunpack.c.l.s4 1966171168
    %v466 = vunpack.c.0.s8 %v465
    %v467 = vlaneseq
    %v468 = vshrl.u32 %v467, 7
    %v469 = vsub.s32 %v466, %v468
    %v470 = vrot.slane %v454, %v469
    %v472 = vunpack.c.l.s4 1966171168
    %v473 = vunpack.c.0.s8 %v472
    %v474 = vlaneseq
    %v475 = vshrl.u32 %v474, 7
    %v476 = vsub.s32 %v473, %v475
    %v477 = vrot.slane %v455, %v476
    %v479 = vunpack.c.l.s4 1966171168
    %v480 = vunpack.c.0.s8 %v479
    %v481 = vlaneseq
    %v482 = vshrl.u32 %v481, 7
    %v483 = vsub.s32 %v480, %v482
    %v484 = vrot.slane %v456, %v483
    %v485 = vcombine.high %v463, %v463
    %v486 = vcombine.high %v470, %v470
    %v487 = vcombine.high %v477, %v477
    %v488 = vcombine.high %v484, %v484
    %v489 = vcombine.high %v26, %v26
    %v491 = vunpack.c.l.s4 1966171168
    %v492 = vunpack.c.0.s8 %v491
    %v493 = vlaneseq
    %v494 = vshrl.u32 %v493, 7
    %v495 = vsub.s32 %v492, %v494
    %v496 = vrot.slane %v26, %v495
    %v498 = vunpack.c.l.s4 1966171168
    %v499 = vunpack.c.0.s8 %v498
    %v500 = vlaneseq
    %v501 = vshrl.u32 %v500, 7
    %v502 = vsub.s32 %v499, %v501
    %v503 = vrot.slane %v489, %v502
    %v504 = vcombine.high %v496, %v496
    %v505 = vcombine.high %v503, %v503
    %v507 = vunpack.c.l.s4 1966171168
    %v508 = vunpack.c.0.s8 %v507
    %v509 = vlaneseq
    %v510 = vshrl.u32 %v509, 7
    %v511 = vsub.s32 %v508, %v510
    %v512 = vrot.slane %v496, %v511
    %v514 = vunpack.c.l.s4 1966171168
    %v515 = vunpack.c.0.s8 %v514
    %v516 = vlaneseq
    %v517 = vshrl.u32 %v516, 7
    %v518 = vsub.s32 %v515, %v517
    %v519 = vrot.slane %v503, %v518
    %v521 = vunpack.c.l.s4 1966171168
    %v522 = vunpack.c.0.s8 %v521
    %v523 = vlaneseq
    %v524 = vshrl.u32 %v523, 7
    %v525 = vsub.s32 %v522, %v524
    %v526 = vrot.slane %v504, %v525
    %v528 = vunpack.c.l.s4 1966171168
    %v529 = vunpack.c.0.s8 %v528
    %v530 = vlaneseq
    %v531 = vshrl.u32 %v530, 7
    %v532 = vsub.s32 %v529, %v531
    %v533 = vrot.slane %v505, %v532
    %v534 = vcombine.high %v512, %v512
    %v535 = vcombine.high %v519, %v519
    %v536 = vcombine.high %v526, %v526
    %v537 = vcombine.high %v533, %v533
    %v538 = vcombine.high %v27, %v27
    %v540 = vunpack.c.l.s4 1966171168
    %v541 = vunpack.c.0.s8 %v540
    %v542 = vlaneseq
    %v543 = vshrl.u32 %v542, 7
    %v544 = vsub.s32 %v541, %v543
    %v545 = vrot.slane %v27, %v544
    %v547 = vunpack.c.l.s4 1966171168
    %v548 = vunpack.c.0.s8 %v547
    %v549 = vlaneseq
    %v550 = vshrl.u32 %v549, 7
    %v551 = vsub.s32 %v548, %v550
    %v552 = vrot.slane %v538, %v551
    %v553 = vcombine.high %v545, %v545
    %v554 = vcombine.high %v552, %v552
    %v556 = vunpack.c.l.s4 1966171168
    %v557 = vunpack.c.0.s8 %v556
    %v558 = vlaneseq
    %v559 = vshrl.u32 %v558, 7
    %v560 = vsub.s32 %v557, %v559
    %v561 = vrot.slane %v545, %v560
    %v563 = vunpack.c.l.s4 1966171168
    %v564 = vunpack.c.0.s8 %v563
    %v565 = vlaneseq
    %v566 = vshrl.u32 %v565, 7
    %v567 = vsub.s32 %v564, %v566
    %v568 = vrot.slane %v552, %v567
    %v570 = vunpack.c.l.s4 1966171168
    %v571 = vunpack.c.0.s8 %v570
    %v572 = vlaneseq
    %v573 = vshrl.u32 %v572, 7
    %v574 = vsub.s32 %v571, %v573
    %v575 = vrot.slane %v553, %v574
    %v577 = vunpack.c.l.s4 1966171168
    %v578 = vunpack.c.0.s8 %v577
    %v579 = vlaneseq
    %v580 = vshrl.u32 %v579, 7
    %v581 = vsub.s32 %v578, %v580
    %v582 = vrot.slane %v554, %v581
    %v583 = vcombine.high %v561, %v561
    %v584 = vcombine.high %v568, %v568
    %v585 = vcombine.high %v575, %v575
    %v586 = vcombine.high %v582, %v582
    %v588 = vunpack.c.l.s4 1966171168
    %v589 = vunpack.c.0.s8 %v588
    %v590 = vlaneseq
    %v591 = vshrl.u32 %v590, 7
    %v592 = vsub.s32 %v589, %v591
    %v593 = vrot.slane %v28, %v592
    %v595 = vunpack.c.l.s4 1966171168
    %v596 = vunpack.c.0.s8 %v595
    %v597 = vlaneseq
    %v598 = vshrl.u32 %v597, 7
    %v599 = vsub.s32 %v596, %v598
    %v600 = vrot.slane %v593, %v599
    %v1026 = vunpack.c.l.b16 %v29
    %v1027 = vunpack.c.l.b16 %v30
    %v1028 = vunpack.c.l.b16 %v31
    %v1029 = vunpack.c.l.b16 %v32
    %v1030 = vunpack.c.l.b16 %v33
    %v1031 = vunpack.c.l.b16 %v34
    %v1032 = vunpack.c.l.b16 %v35
    %v1033 = vunpack.c.l.b16 %v36
    %v1034 = vunpack.c.l.b16 %v37
    %v1035 = vunpack.c.l.b16 %v38
    %v1036 = vunpack.c.l.b16 %v39
    %v1037 = vunpack.c.l.b16 %v40
    %v1038 = vunpack.c.l.b16 %v41
    %v1039 = vunpack.c.l.b16 %v42
    %v1040 = vunpack.c.l.b16 %v43
    %v1041 = vunpack.c.l.b16 %v44
    %v1042 = vunpack.c.l.b16 %v45
    %v1043 = vunpack.c.l.b16 %v46
    %v1044 = vunpack.c.l.b16 %v47
    %v1045 = vunpack.c.l.b16 %v48
    %v1046 = vunpack.c.l.b16 %v49
    %v1047 = vunpack.c.l.b16 %v50
    %v1048 = vunpack.c.l.b16 %v51
    %v1049 = vunpack.c.l.b16 %v52
    %v1050 = vunpack.c.l.b16 %v53
    %v1051 = vunpack.c.l.b16 %v54
    %v1052 = vunpack.c.l.b16 %v55
    %v1053 = vunpack.c.l.b16 %v56
    %v1054 = vunpack.c.l.b16 %v57
    %v1055 = vunpack.c.l.b16 %v58
    %v1056 = vunpack.c.l.b16 %v59
    %v1057 = vunpack.c.l.b16 %v60
    %v1058 = vunpack.c.l.b16 %v61
    %v1059 = vunpack.c.l.b16 %v62
    %v1060 = vunpack.c.l.b16 %v63
    %v1061 = vunpack.c.l.b16 %v64
    %v1062 = vunpack.c.l.b16 %v65
    %v1063 = vunpack.c.l.b16 %v66
    %v1064 = vunpack.c.l.b16 %v67
    %v1065 = vunpack.c.l.b16 %v68
    %v1066 = vunpack.c.l.b16 %v69
    %v1067 = vunpack.c.l.b16 %v70
    %v1068 = vunpack.c.l.b16 %v71
    %v1069 = vunpack.c.l.b16 %v72
    %v1070 = vunpack.c.l.b16 %v73
    %v1071 = vunpack.c.l.b16 %v74
    %v1072 = vunpack.c.l.b16 %v75
    %v1073 = vunpack.c.l.b16 %v76
    %v1074 = vunpack.c.l.b16 %v77
    %v1075 = vunpack.c.l.b16 %v78
    %v1076 = vunpack.c.l.b16 %v79
    %v1077 = vunpack.c.l.b16 %v80
    %v1078 = vunpack.c.l.b16 %v81
    %v1079 = vunpack.c.l.b16 %v82
    %v1080 = vunpack.c.l.b16 %v83
    %v1081 = vunpack.c.l.b16 %v84
    %v1082 = vunpack.c.l.b16 %v85
    %v1083 = vunpack.c.l.b16 %v86
    %v1084 = vunpack.c.l.b16 %v87
    %v1085 = vunpack.c.l.b16 %v88
    %v1086 = vunpack.c.l.b16 %v89
    %v1087 = vunpack.c.l.b16 %v90
    %v1088 = vunpack.c.l.b16 %v91
    %v1089 = vunpack.c.l.b16 %v92
    %v1090 = vunpack.c.l.b16 %v93
    %v1091 = vunpack.c.l.b16 %v94
    %v1092 = vunpack.c.l.b16 %v95
    %v1093 = vunpack.c.l.b16 %v96
    %v1094 = vunpack.c.l.b16 %v97
    %v1095 = vunpack.c.l.b16 %v98
    %v1096 = vunpack.c.l.b16 %v99
    %v1097 = vunpack.c.l.b16 %v100
    %v1098 = vunpack.c.l.b16 %v101
    %v1099 = vunpack.c.l.b16 %v102
    %v1100 = vunpack.c.l.b16 %v103
    %v1101 = vunpack.c.l.b16 %v104
    %v1102 = vunpack.c.l.b16 %v105
    %v1103 = vunpack.c.l.b16 %v106
    %v1104 = vunpack.c.l.b16 %v107
    %v1105 = vunpack.c.l.b16 %v108
    %v1106 = vunpack.c.l.b16 %v109
    %v1107 = vunpack.c.l.b16 %v110
    %v1108 = vunpack.c.l.b16 %v111
    %v1109 = vunpack.c.l.b16 %v112
    %v1110 = vunpack.c.l.b16 %v113
    %v1111 = vunpack.c.l.b16 %v114
    %v1112 = vunpack.c.l.b16 %v115
    %v1113 = vunpack.c.l.b16 %v116
    %v1114 = vunpack.c.l.b16 %v117
    %v1115 = vunpack.c.l.b16 %v118
    %v1116 = vunpack.c.l.b16 %v119
    %v1117 = vunpack.c.l.b16 %v120
    %v1118 = vunpack.c.l.b16 %v121
    %v1119 = vunpack.c.l.b16 %v122
    %v1120 = vunpack.c.l.b16 %v123
    %v1121 = vunpack.c.l.b16 %v124
    %v1122 = vunpack.c.l.b16 %v125
    %v1123 = vunpack.c.l.b16 %v126
    %v1124 = vunpack.c.l.b16 %v127
    %v1125 = vunpack.c.l.b16 %v128
    %v1126 = vunpack.c.l.b16 %v129
    %v1127 = vunpack.c.l.b16 %v130
    %v1128 = vunpack.c.l.b16 %v131
    %v1129 = vunpack.c.l.b16 %v132
    %v1130 = vunpack.c.l.b16 %v133
    %v1131 = vunpack.c.l.b16 %v134
    %v1132 = vunpack.c.l.b16 %v135
    %v1133 = vunpack.c.l.b16 %v136
    %v1134 = vunpack.c.l.b16 %v137
    %v1135 = vunpack.c.l.b16 %v138
    %v1136 = vunpack.c.l.b16 %v139
    %v1137 = vunpack.c.l.b16 %v140
    %v1138 = vunpack.c.l.b16 %v141
    %v1139 = vunpack.c.l.b16 %v142
    %v1140 = vunpack.c.l.b16 %v143
    %v1141 = vunpack.c.l.b16 %v144
    %v1142 = vunpack.c.l.b16 %v145
    %v1143 = vunpack.c.l.b16 %v146
    %v1144 = vunpack.c.l.b16 %v147
    %v1145 = vunpack.c.l.b16 %v148
    %v1146 = vunpack.c.l.b16 %v149
    %v1147 = vunpack.c.l.b16 %v150
    %v1148 = vunpack.c.l.b16 %v151
    %v1149 = vunpack.c.l.b16 %v152
    %v1150 = vunpack.c.l.b16 %v153
    %v1151 = vunpack.c.l.b16 %v154
    %v1152 = vunpack.c.l.b16 %v155
    %v1153 = vunpack.c.l.b16 %v156
    %v1154 = vunpack.c.l.b16 %v157
    %v1155 = vunpack.c.l.b16 %v158
    %v1156 = vunpack.c.l.b16 %v159
    %v1157 = vunpack.c.l.b16 %v160
    %v1158 = vunpack.c.l.b16 %v161
    %v1159 = vunpack.c.l.b16 %v162
    %v1160 = vunpack.c.l.b16 %v163
    %v1161 = vunpack.c.l.b16 %v164
    %v1162 = vunpack.c.l.b16 %v165
    %v1163 = vunpack.c.l.b16 %v166
    %v1164 = vunpack.c.l.b16 %v167
    %v1165 = vunpack.c.l.b16 %v168
    %v1166 = vunpack.c.l.b16 %v169
    %v1167 = vunpack.c.l.b16 %v170
    %v1168 = vunpack.c.l.b16 %v171
    %v1169 = vunpack.c.l.b16 %v172
    %v1170 = vunpack.c.l.b16 %v173
    %v1171 = vunpack.c.l.b16 %v174
    %v1172 = vunpack.c.l.b16 %v175
    %v1173 = vunpack.c.l.b16 %v176
    %v1174 = vunpack.c.l.b16 %v177
    %v1175 = vunpack.c.l.b16 %v178
    %v1176 = vunpack.c.l.b16 %v179
    %v1177 = vunpack.c.l.b16 %v180
    %v1178 = vunpack.c.l.b16 %v181
    %v1179 = vunpack.c.l.b16 %v182
    %v1180 = vunpack.c.l.b16 %v183
    %v1181 = vunpack.c.l.b16 %v184
    %v1182 = vunpack.c.l.b16 %v185
    %v1183 = vunpack.c.l.b16 %v186
    %v1184 = vunpack.c.l.b16 %v187
    %v1185 = vunpack.c.l.b16 %v188
    %v1186 = vunpack.c.l.b16 %v189
    %v1187 = vunpack.c.l.b16 %v190
    %v1188 = vunpack.c.l.b16 %v191
    %v1189 = vunpack.c.l.b16 %v192
    %v1190 = vunpack.c.l.b16 %v193
    %v1191 = vunpack.c.l.b16 %v194
    %v1192 = vunpack.c.l.b16 %v195
    %v1193 = vunpack.c.l.b16 %v196
    %v1194 = vunpack.c.l.b16 %v197
    %v1195 = vunpack.c.l.b16 %v198
    %v1196 = vunpack.c.l.b16 %v199
    %v1197 = vunpack.c.l.b16 %v200
    %v1198 = vunpack.c.l.b16 %v201
    %v1199 = vunpack.c.l.b16 %v202
    %v1200 = vunpack.c.l.b16 %v203
    %v1201 = vunpack.c.l.b16 %v204
    %v1202 = vunpack.c.l.b16 %v205
    %v1203 = vunpack.c.l.b16 %v206
    %v1204 = vunpack.c.l.b16 %v207
    %v1205 = vunpack.c.l.b16 %v208
    %v1206 = vunpack.c.l.b16 %v209
    %v1207 = vunpack.c.l.b16 %v210
    %v1208 = vunpack.c.l.b16 %v211
    %v1209 = vunpack.c.l.b16 %v212
    %v1210 = vunpack.c.l.b16 %v213
    %v1211 = vunpack.c.l.b16 %v214
    %v1212 = vunpack.c.l.b16 %v215
    %v1213 = vunpack.c.l.b16 %v216
    %v1214 = vunpack.c.l.b16 %v217
    %v1215 = vunpack.c.l.b16 %v218
    %v1216 = vunpack.c.l.b16 %v219
    %v1217 = vunpack.c.l.b16 %v220
    %v1218 = vunpack.c.l.b16 %v221
    %v1219 = vunpack.c.l.b16 %v222
    %v1220 = vunpack.c.l.b16 %v223
    %v1221 = vunpack.c.l.b16 %v224
    %v1222 = vunpack.c.l.b16 %v225
    %v1223 = vunpack.c.l.b16 %v226
    %v1224 = vunpack.c.l.b16 %v227
    %v1225 = vunpack.c.l.b16 %v228
    %v1226 = vunpack.c.l.b16 %v229
    %v1227 = vunpack.c.l.b16 %v230
    %v1228 = vunpack.c.l.b16 %v231
    %v1229 = vunpack.c.l.b16 %v232
    %v1230 = vunpack.c.l.b16 %v233
    %v1231 = vunpack.c.l.b16 %v234
    %v1232 = vunpack.c.l.b16 %v235
    %v1233 = vunpack.c.l.b16 %v236
    %v1234 = vunpack.c.l.b16 %v237
    %v1235 = vunpack.c.l.b16 %v238
    %v1236 = vunpack.c.l.b16 %v239
    %v1237 = vunpack.c.l.b16 %v240
    %v1238 = vunpack.c.l.b16 %v241
    %v1239 = vunpack.c.l.b16 %v242
    %v1240 = vunpack.c.l.b16 %v243
    %v1241 = vunpack.c.l.b16 %v244
    %v1242 = vunpack.c.l.b16 %v245
    %v1243 = vunpack.c.l.b16 %v246
    %v1244 = vunpack.c.l.b16 %v247
    %v1245 = vunpack.c.l.b16 %v248
    %v1246 = vunpack.c.l.b16 %v249
    %v1247 = vunpack.c.l.b16 %v250
    %v1248 = vunpack.c.l.b16 %v251
    %v1249 = vunpack.c.l.b16 %v252
    %v1250 = vunpack.c.l.b16 %v253
    %v1251 = vunpack.c.l.b16 %v254
    %v1252 = vunpack.c.l.b16 %v255
    %v1253 = vunpack.c.l.b16 %v256
    %v1254 = vunpack.c.l.b16 %v257
    %v1255 = vunpack.c.l.b16 %v258
    %v1256 = vunpack.c.l.b16 %v259
    %v1257 = vunpack.c.l.b16 %v260
    %v1258 = vunpack.c.l.b16 %v261
    %v1259 = vunpack.c.l.b16 %v262
    %v1260 = vunpack.c.l.b16 %v263
    %v1261 = vunpack.c.l.b16 %v264
    %v1262 = vunpack.c.l.b16 %v265
    %v1263 = vunpack.c.l.b16 %v266
    %v1264 = vunpack.c.l.b16 %v267
    %v1265 = vunpack.c.l.b16 %v268
    %v1266 = vunpack.c.l.b16 %v269
    %v1267 = vunpack.c.l.b16 %v270
    %v1268 = vunpack.c.l.b16 %v271
    %v1269 = vunpack.c.l.b16 %v272
    %v1270 = vunpack.c.l.b16 %v273
    %v1271 = vunpack.c.l.b16 %v274
    %v1272 = vunpack.c.l.b16 %v275
    %v1273 = vunpack.c.l.b16 %v276
    %v1274 = vunpack.c.l.b16 %v277
    %v1275 = vunpack.c.l.b16 %v278
    %v1276 = vunpack.c.l.b16 %v279
    %v1277 = vunpack.c.l.b16 %v280
    %v1278 = vunpack.c.l.b16 %v281
    %v1279 = vunpack.c.l.b16 %v282
    %v1280 = vunpack.c.l.b16 %v283
    %v1281 = vunpack.c.l.b16 %v284
    %v1282 = vunpack.c.l.b16 %v285
    %v1283 = vunpack.c.l.b16 %v286
    %v1284 = vunpack.c.l.b16 %v287
    %v1285 = vunpack.c.l.b16 %v288
    %v1286 = vunpack.c.l.b16 %v289
    %v1287 = vunpack.c.l.b16 %v290
    %v1288 = vunpack.c.l.b16 %v291
    %v1289 = vunpack.c.l.b16 %v292
    %v1290 = vunpack.c.l.b16 %v293
    %v1291 = vunpack.c.l.b16 %v294
    %v1292 = vunpack.c.l.b16 %v295
    %v1293 = vunpack.c.l.b16 %v296
    %v1294 = vunpack.c.l.b16 %v297
    %v1295 = vunpack.c.l.b16 %v298
    %v1296 = vunpack.c.l.b16 %v299
    %v1297 = vunpack.c.l.b16 %v300
    %v1298 = vunpack.c.l.b16 %v301
    %v1299 = vunpack.c.l.b16 %v302
    %v1300 = vunpack.c.l.b16 %v303
    %v1301 = vunpack.c.l.b16 %v304
    %v1302 = vunpack.c.l.b16 %v305
    %v1303 = vunpack.c.l.b16 %v306
    %v1304 = vunpack.c.l.b16 %v307
    %v1305 = vunpack.c.l.b16 %v308
    %v1306 = vunpack.c.l.b16 %v309
    %v1307 = vunpack.c.l.b16 %v310
    %v1308 = vunpack.c.l.b16 %v311
    %v1309 = vunpack.c.l.b16 %v312
    %v1310 = vunpack.c.l.b16 %v313
    %v1311 = vunpack.c.l.b16 %v314
    %v1312 = vunpack.c.l.b16 %v315
    %v1313 = vunpack.c.l.b16 %v316
    %v1314 = vunpack.c.l.b16 %v317
    %v1315 = vunpack.c.l.b16 %v318
    %v1316 = vunpack.c.l.b16 %v319
    %v1317 = vunpack.c.l.b16 %v320
    %v1318 = vunpack.c.l.b16 %v321
    %v1319 = vunpack.c.l.b16 %v322
    %v1320 = vunpack.c.l.b16 %v323
    %v1321 = vunpack.c.l.b16 %v324
    %v1322 = vunpack.c.l.b16 %v325
    %v1323 = vunpack.c.l.b16 %v326
    %v1324 = vunpack.c.l.b16 %v327
    %v1325 = vunpack.c.l.b16 %v328
    %v1326 = vunpack.c.l.b16 %v329
    %v1327 = vunpack.c.l.b16 %v330
    %v1328 = vunpack.c.l.b16 %v331
    %v1329 = vunpack.c.l.b16 %v332
    %v1330 = vunpack.c.l.b16 %v333
    %v1331 = vunpack.c.l.b16 %v334
    %v1332 = vunpack.c.l.b16 %v335
    %v1333 = vunpack.c.l.b16 %v336
    %v1334 = vunpack.c.l.b16 %v337
    %v1335 = vunpack.c.l.b16 %v338
    %v1336 = vunpack.c.l.b16 %v339
    %v1337 = vunpack.c.l.b16 %v340
    %v1338 = vunpack.c.l.b16 %v341
    %v1339 = vunpack.c.l.b16 %v342
    %v1340 = vunpack.c.l.b16 %v343
    %v1341 = vunpack.c.l.b16 %v344
    %v1342 = vunpack.c.l.b16 %v345
    %v1343 = vunpack.c.l.b16 %v346
    %v1344 = vunpack.c.l.b16 %v347
    %v1345 = vunpack.c.l.b16 %v348
    %v1346 = vunpack.c.l.b16 %v349
    %v1347 = vunpack.c.l.b16 %v350
    %v1348 = vunpack.c.l.b16 %v351
    %v1349 = vunpack.c.l.b16 %v352
    %v1350 = vunpack.c.l.b16 %v353
    %v1351 = vunpack.c.l.b16 %v354
    %v1352 = vunpack.c.l.b16 %v355
    %v1353 = vunpack.c.l.b16 %v356
    %v1354 = vunpack.c.l.b16 %v357
    %v1355 = vunpack.c.l.b16 %v358
    %v1356 = vunpack.c.l.b16 %v359
    %v1357 = vunpack.c.l.b16 %v360
    %v1358 = vunpack.c.l.b16 %v361
    %v1359 = vunpack.c.l.b16 %v362
    %v1360 = vunpack.c.l.b16 %v363
    %v1361 = vunpack.c.l.b16 %v364
    %v1362 = vunpack.c.l.b16 %v365
    %v1363 = vunpack.c.l.b16 %v366
    %v1364 = vunpack.c.l.b16 %v367
    %v1365 = vunpack.c.l.b16 %v368
    %v1366 = vunpack.c.l.b16 %v369
    %v1367 = vunpack.c.l.b16 %v370
    %v1368 = vunpack.c.l.b16 %v371
    %v1369 = vunpack.c.l.b16 %v372
    %v1370 = vunpack.c.l.b16 %v373
    %v1371 = vunpack.c.l.b16 %v374
    %v1372 = vunpack.c.l.b16 %v375
    %v1373 = vunpack.c.l.b16 %v376
    %v1374 = vunpack.c.l.b16 %v377
    %v1375 = vunpack.c.l.b16 %v378
    %v1376 = vunpack.c.l.b16 %v379
    %v1377 = vunpack.c.l.b16 %v380
    %v1378 = vunpack.c.l.b16 %v381
    %v1379 = vunpack.c.l.b16 %v382
    %v1380 = vunpack.c.l.b16 %v383
    %v1381 = vunpack.c.l.b16 %v384
    %v1382 = vunpack.c.l.b16 %v385
    %v1383 = vunpack.c.l.b16 %v386
    %v1384 = vunpack.c.l.b16 %v387
    %v1385 = vunpack.c.l.b16 %v388
    %v1386 = vunpack.c.l.b16 %v389
    %v1387 = vunpack.c.l.b16 %v390
    %v1388 = vunpack.c.l.b16 %v391
    %v1389 = vunpack.c.l.b16 %v392
    %v1390 = vunpack.c.l.b16 %v393
    %v1391 = vunpack.c.l.b16 %v394
    %v1392 = vunpack.c.l.b16 %v395
    %v1393 = vunpack.c.l.b16 %v396
    %v1394 = vunpack.c.l.b16 %v397
    %v1395 = vunpack.c.l.b16 %v398
    %v1396 = vunpack.c.l.b16 %v399
    %v1397 = vunpack.c.l.b16 %v400
    %v1398 = vunpack.c.l.b16 %v401
    %v1399 = vunpack.c.l.b16 %v402
    %v1400 = vunpack.c.l.b16 %v403
    %v1401 = vunpack.c.l.b16 %v404
    %v1402 = vunpack.c.l.b16 %v405
    %v1403 = vunpack.c.l.b16 %v406
    %v1404 = vunpack.c.l.b16 %v407
    %v1405 = vunpack.c.l.b16 %v408
    %v1406 = vunpack.c.l.b16 %v409
    %v1407 = vunpack.c.l.b16 %v410
    %v1408 = vunpack.c.l.b16 %v411
    %v1409 = vunpack.c.l.b16 %v412
    %v1410 = vunpack.c.l.b16 %v413
    %v1411 = vunpack.c.l.b16 %v414
    %v1412 = vunpack.c.l.b16 %v415
    %v1413 = vunpack.c.l.b16 %v416
    %v1414 = vunpack.c.l.b16 %v417
    %v1415 = vunpack.c.l.b16 %v418
    %v1416 = vunpack.c.l.b16 %v419
    %v1417 = vunpack.c.l.b16 %v420
    %v1418 = vunpack.c.l.b16 %v421
    %v1419 = vunpack.c.l.b16 %v422
    %v1420 = vunpack.c.l.b16 %v423
    %v1421 = vunpack.c.l.b16 %v424
    %v1422 = vunpack.c.l.b16 %v425
    %v1423 = vunpack.c.l.b16 %v426
    %v1424 = vunpack.c.l.b16 %v427
    %v1425 = vunpack.c.l.b16 %v428
    %v1426 = vpack.c.b16 %v1027, %v1026
    %v1427 = vpack.c.b16 %v1029, %v1028
    %v1428 = vpack.c.b16 %v1031, %v1030
    %v1429 = vpack.c.b16 %v1033, %v1032
    %v1430 = vpack.c.b16 %v1035, %v1034
    %v1431 = vpack.c.b16 %v1037, %v1036
    %v1432 = vpack.c.b16 %v1039, %v1038
    %v1433 = vpack.c.b16 %v1041, %v1040
    %v1434 = vpack.c.b16 %v1043, %v1042
    %v1435 = vpack.c.b16 %v1045, %v1044
    %v1436 = vpack.c.b16 %v1047, %v1046
    %v1437 = vpack.c.b16 %v1049, %v1048
    %v1438 = vpack.c.b16 %v1051, %v1050
    %v1439 = vpack.c.b16 %v1053, %v1052
    %v1440 = vpack.c.b16 %v1055, %v1054
    %v1441 = vpack.c.b16 %v1057, %v1056
    %v1442 = vpack.c.b16 %v1059, %v1058
    %v1443 = vpack.c.b16 %v1061, %v1060
    %v1444 = vpack.c.b16 %v1063, %v1062
    %v1445 = vpack.c.b16 %v1065, %v1064
    %v1446 = vpack.c.b16 %v1067, %v1066
    %v1447 = vpack.c.b16 %v1069, %v1068
    %v1448 = vpack.c.b16 %v1071, %v1070
    %v1449 = vpack.c.b16 %v1073, %v1072
    %v1450 = vpack.c.b16 %v1075, %v1074
    %v1451 = vpack.c.b16 %v1077, %v1076
    %v1452 = vpack.c.b16 %v1079, %v1078
    %v1453 = vpack.c.b16 %v1081, %v1080
    %v1454 = vpack.c.b16 %v1083, %v1082
    %v1455 = vpack.c.b16 %v1085, %v1084
    %v1456 = vpack.c.b16 %v1087, %v1086
    %v1457 = vpack.c.b16 %v1089, %v1088
    %v1458 = vpack.c.b16 %v1091, %v1090
    %v1459 = vpack.c.b16 %v1093, %v1092
    %v1460 = vpack.c.b16 %v1095, %v1094
    %v1461 = vpack.c.b16 %v1097, %v1096
    %v1462 = vpack.c.b16 %v1099, %v1098
    %v1463 = vpack.c.b16 %v1101, %v1100
    %v1464 = vpack.c.b16 %v1103, %v1102
    %v1465 = vpack.c.b16 %v1105, %v1104
    %v1466 = vpack.c.b16 %v1107, %v1106
    %v1467 = vpack.c.b16 %v1109, %v1108
    %v1468 = vpack.c.b16 %v1111, %v1110
    %v1469 = vpack.c.b16 %v1113, %v1112
    %v1470 = vpack.c.b16 %v1115, %v1114
    %v1471 = vpack.c.b16 %v1117, %v1116
    %v1472 = vpack.c.b16 %v1119, %v1118
    %v1473 = vpack.c.b16 %v1121, %v1120
    %v1474 = vpack.c.b16 %v1123, %v1122
    %v1475 = vpack.c.b16 %v1125, %v1124
    %v1476 = vpack.c.b16 %v1127, %v1126
    %v1477 = vpack.c.b16 %v1129, %v1128
    %v1478 = vpack.c.b16 %v1131, %v1130
    %v1479 = vpack.c.b16 %v1133, %v1132
    %v1480 = vpack.c.b16 %v1135, %v1134
    %v1481 = vpack.c.b16 %v1137, %v1136
    %v1482 = vpack.c.b16 %v1139, %v1138
    %v1483 = vpack.c.b16 %v1141, %v1140
    %v1484 = vpack.c.b16 %v1143, %v1142
    %v1485 = vpack.c.b16 %v1145, %v1144
    %v1486 = vpack.c.b16 %v1147, %v1146
    %v1487 = vpack.c.b16 %v1149, %v1148
    %v1488 = vpack.c.b16 %v1151, %v1150
    %v1489 = vpack.c.b16 %v1153, %v1152
    %v1490 = vpack.c.b16 %v1155, %v1154
    %v1491 = vpack.c.b16 %v1157, %v1156
    %v1492 = vpack.c.b16 %v1159, %v1158
    %v1493 = vpack.c.b16 %v1161, %v1160
    %v1494 = vpack.c.b16 %v1163, %v1162
    %v1495 = vpack.c.b16 %v1165, %v1164
    %v1496 = vpack.c.b16 %v1167, %v1166
    %v1497 = vpack.c.b16 %v1169, %v1168
    %v1498 = vpack.c.b16 %v1171, %v1170
    %v1499 = vpack.c.b16 %v1173, %v1172
    %v1500 = vpack.c.b16 %v1175, %v1174
    %v1501 = vpack.c.b16 %v1177, %v1176
    %v1502 = vpack.c.b16 %v1179, %v1178
    %v1503 = vpack.c.b16 %v1181, %v1180
    %v1504 = vpack.c.b16 %v1183, %v1182
    %v1505 = vpack.c.b16 %v1185, %v1184
    %v1506 = vpack.c.b16 %v1187, %v1186
    %v1507 = vpack.c.b16 %v1189, %v1188
    %v1508 = vpack.c.b16 %v1191, %v1190
    %v1509 = vpack.c.b16 %v1193, %v1192
    %v1510 = vpack.c.b16 %v1195, %v1194
    %v1511 = vpack.c.b16 %v1197, %v1196
    %v1512 = vpack.c.b16 %v1199, %v1198
    %v1513 = vpack.c.b16 %v1201, %v1200
    %v1514 = vpack.c.b16 %v1203, %v1202
    %v1515 = vpack.c.b16 %v1205, %v1204
    %v1516 = vpack.c.b16 %v1207, %v1206
    %v1517 = vpack.c.b16 %v1209, %v1208
    %v1518 = vpack.c.b16 %v1211, %v1210
    %v1519 = vpack.c.b16 %v1213, %v1212
    %v1520 = vpack.c.b16 %v1215, %v1214
    %v1521 = vpack.c.b16 %v1217, %v1216
    %v1522 = vpack.c.b16 %v1219, %v1218
    %v1523 = vpack.c.b16 %v1221, %v1220
    %v1524 = vpack.c.b16 %v1223, %v1222
    %v1525 = vpack.c.b16 %v1225, %v1224
    %v1526 = vpack.c.b16 %v1227, %v1226
    %v1527 = vpack.c.b16 %v1229, %v1228
    %v1528 = vpack.c.b16 %v1231, %v1230
    %v1529 = vpack.c.b16 %v1233, %v1232
    %v1530 = vpack.c.b16 %v1235, %v1234
    %v1531 = vpack.c.b16 %v1237, %v1236
    %v1532 = vpack.c.b16 %v1239, %v1238
    %v1533 = vpack.c.b16 %v1241, %v1240
    %v1534 = vpack.c.b16 %v1243, %v1242
    %v1535 = vpack.c.b16 %v1245, %v1244
    %v1536 = vpack.c.b16 %v1247, %v1246
    %v1537 = vpack.c.b16 %v1249, %v1248
    %v1538 = vpack.c.b16 %v1251, %v1250
    %v1539 = vpack.c.b16 %v1253, %v1252
    %v1540 = vpack.c.b16 %v1255, %v1254
    %v1541 = vpack.c.b16 %v1257, %v1256
    %v1542 = vpack.c.b16 %v1259, %v1258
    %v1543 = vpack.c.b16 %v1261, %v1260
    %v1544 = vpack.c.b16 %v1263, %v1262
    %v1545 = vpack.c.b16 %v1265, %v1264
    %v1546 = vpack.c.b16 %v1267, %v1266
    %v1547 = vpack.c.b16 %v1269, %v1268
    %v1548 = vpack.c.b16 %v1271, %v1270
    %v1549 = vpack.c.b16 %v1273, %v1272
    %v1550 = vpack.c.b16 %v1275, %v1274
    %v1551 = vpack.c.b16 %v1277, %v1276
    %v1552 = vpack.c.b16 %v1279, %v1278
    %v1553 = vpack.c.b16 %v1281, %v1280
    %v1554 = vpack.c.b16 %v1283, %v1282
    %v1555 = vpack.c.b16 %v1285, %v1284
    %v1556 = vpack.c.b16 %v1287, %v1286
    %v1557 = vpack.c.b16 %v1289, %v1288
    %v1558 = vpack.c.b16 %v1291, %v1290
    %v1559 = vpack.c.b16 %v1293, %v1292
    %v1560 = vpack.c.b16 %v1295, %v1294
    %v1561 = vpack.c.b16 %v1297, %v1296
    %v1562 = vpack.c.b16 %v1299, %v1298
    %v1563 = vpack.c.b16 %v1301, %v1300
    %v1564 = vpack.c.b16 %v1303, %v1302
    %v1565 = vpack.c.b16 %v1305, %v1304
    %v1566 = vpack.c.b16 %v1307, %v1306
    %v1567 = vpack.c.b16 %v1309, %v1308
    %v1568 = vpack.c.b16 %v1311, %v1310
    %v1569 = vpack.c.b16 %v1313, %v1312
    %v1570 = vpack.c.b16 %v1315, %v1314
    %v1571 = vpack.c.b16 %v1317, %v1316
    %v1572 = vpack.c.b16 %v1319, %v1318
    %v1573 = vpack.c.b16 %v1321, %v1320
    %v1574 = vpack.c.b16 %v1323, %v1322
    %v1575 = vpack.c.b16 %v1325, %v1324
    %v1576 = vpack.c.b16 %v1327, %v1326
    %v1577 = vpack.c.b16 %v1329, %v1328
    %v1578 = vpack.c.b16 %v1331, %v1330
    %v1579 = vpack.c.b16 %v1333, %v1332
    %v1580 = vpack.c.b16 %v1335, %v1334
    %v1581 = vpack.c.b16 %v1337, %v1336
    %v1582 = vpack.c.b16 %v1339, %v1338
    %v1583 = vpack.c.b16 %v1341, %v1340
    %v1584 = vpack.c.b16 %v1343, %v1342
    %v1585 = vpack.c.b16 %v1345, %v1344
    %v1586 = vpack.c.b16 %v1347, %v1346
    %v1587 = vpack.c.b16 %v1349, %v1348
    %v1588 = vpack.c.b16 %v1351, %v1350
    %v1589 = vpack.c.b16 %v1353, %v1352
    %v1590 = vpack.c.b16 %v1355, %v1354
    %v1591 = vpack.c.b16 %v1357, %v1356
    %v1592 = vpack.c.b16 %v1359, %v1358
    %v1593 = vpack.c.b16 %v1361, %v1360
    %v1594 = vpack.c.b16 %v1363, %v1362
    %v1595 = vpack.c.b16 %v1365, %v1364
    %v1596 = vpack.c.b16 %v1367, %v1366
    %v1597 = vpack.c.b16 %v1369, %v1368
    %v1598 = vpack.c.b16 %v1371, %v1370
    %v1599 = vpack.c.b16 %v1373, %v1372
    %v1600 = vpack.c.b16 %v1375, %v1374
    %v1601 = vpack.c.b16 %v1377, %v1376
    %v1602 = vpack.c.b16 %v1379, %v1378
    %v1603 = vpack.c.b16 %v1381, %v1380
    %v1604 = vpack.c.b16 %v1383, %v1382
    %v1605 = vpack.c.b16 %v1385, %v1384
    %v1606 = vpack.c.b16 %v1387, %v1386
    %v1607 = vpack.c.b16 %v1389, %v1388
    %v1608 = vpack.c.b16 %v1391, %v1390
    %v1609 = vpack.c.b16 %v1393, %v1392
    %v1610 = vpack.c.b16 %v1395, %v1394
    %v1611 = vpack.c.b16 %v1397, %v1396
    %v1612 = vpack.c.b16 %v1399, %v1398
    %v1613 = vpack.c.b16 %v1401, %v1400
    %v1614 = vpack.c.b16 %v1403, %v1402
    %v1615 = vpack.c.b16 %v1405, %v1404
    %v1616 = vpack.c.b16 %v1407, %v1406
    %v1617 = vpack.c.b16 %v1409, %v1408
    %v1618 = vpack.c.b16 %v1411, %v1410
    %v1619 = vpack.c.b16 %v1413, %v1412
    %v1620 = vpack.c.b16 %v1415, %v1414
    %v1621 = vpack.c.b16 %v1417, %v1416
    %v1622 = vpack.c.b16 %v1419, %v1418
    %v1623 = vpack.c.b16 %v1421, %v1420
    %v1624 = vpack.c.b16 %v1423, %v1422
    %v1625 = vpack.c.b16 %v1425, %v1424
    %1826 = vmatprep.subr.bf16.mxu0 0
    %1827 = vmatpush1.bf16.msra.mxu0 %v1426
    %1828 = vmatprep.subr.bf16.mxu0 0
    %1829 = vmatpush1.bf16.msra.mxu0 %v1427
    %1830 = vmatprep.subr.bf16.mxu0 0
    %1831 = vmatpush1.bf16.msra.mxu0 %v1428
    %1832 = vmatprep.subr.bf16.mxu0 0
    %1833 = vmatpush1.bf16.msra.mxu0 %v1429
    %1834 = vmatprep.subr.bf16.mxu0 0
    %1835 = vmatpush1.bf16.msra.mxu0 %v1430
    %1836 = vmatprep.subr.bf16.mxu0 0
    %1837 = vmatpush1.bf16.msra.mxu0 %v1431
    %1838 = vmatprep.subr.bf16.mxu0 0
    %1839 = vmatpush1.bf16.msra.mxu0 %v1432
    %1840 = vmatprep.subr.bf16.mxu0 0
    %1841 = vmatpush1.bf16.msra.mxu0 %v1433
    %1842 = vmatprep.subr.bf16.mxu0 0
    %1843 = vmatpush1.bf16.msra.mxu0 %v1434
    %1844 = vmatprep.subr.bf16.mxu0 0
    %1845 = vmatpush1.bf16.msra.mxu0 %v1435
    %1846 = vmatprep.subr.bf16.mxu0 0
    %1847 = vmatpush1.bf16.msra.mxu0 %v1436
    %1848 = vmatprep.subr.bf16.mxu0 0
    %1849 = vmatpush1.bf16.msra.mxu0 %v1437
    %1850 = vmatprep.subr.bf16.mxu0 0
    %1851 = vmatpush1.bf16.msra.mxu0 %v1438
    %1852 = vmatprep.subr.bf16.mxu0 0
    %1853 = vmatpush1.bf16.msra.mxu0 %v1439
    %1854 = vmatprep.subr.bf16.mxu0 0
    %1855 = vmatpush1.bf16.msra.mxu0 %v1440
    %1856 = vmatprep.subr.bf16.mxu0 0
    %1857 = vmatpush1.bf16.msra.mxu0 %v1441
    %1858 = vmatprep.mubr.bf16.mxu0 %v477
    %1859 = vmatmul.mubr.bf16.gmra.mrb[0].mxu0 %v463
    %v1860 = vpop.f32.mrb[0].mxu0
    %v1861 = vadd.f32 %v434, %v1860
    %v1862 = vpop.f32.mrb[0].mxu0
    %v1863 = vpop.f32.mrb[0].mxu0
    %v1864 = vpop.f32.mrb[0].mxu0
    %1865 = vdwg.mxu0
    %1866 = vmatprep.subr.bf16.mxu0 0
    %1867 = vmatpush1.bf16.msra.mxu0 %v1442
    %1868 = vmatprep.subr.bf16.mxu0 0
    %1869 = vmatpush1.bf16.msra.mxu0 %v1443
    %1870 = vmatprep.subr.bf16.mxu0 0
    %1871 = vmatpush1.bf16.msra.mxu0 %v1444
    %1872 = vmatprep.subr.bf16.mxu0 0
    %1873 = vmatpush1.bf16.msra.mxu0 %v1445
    %1874 = vmatprep.subr.bf16.mxu0 0
    %1875 = vmatpush1.bf16.msra.mxu0 %v1446
    %1876 = vmatprep.subr.bf16.mxu0 0
    %1877 = vmatpush1.bf16.msra.mxu0 %v1447
    %1878 = vmatprep.subr.bf16.mxu0 0
    %1879 = vmatpush1.bf16.msra.mxu0 %v1448
    %1880 = vmatprep.subr.bf16.mxu0 0
    %1881 = vmatpush1.bf16.msra.mxu0 %v1449
    %1882 = vmatprep.subr.bf16.mxu0 0
    %1883 = vmatpush1.bf16.msra.mxu0 %v1450
    %1884 = vmatprep.subr.bf16.mxu0 0
    %1885 = vmatpush1.bf16.msra.mxu0 %v1451
    %1886 = vmatprep.subr.bf16.mxu0 0
    %1887 = vmatpush1.bf16.msra.mxu0 %v1452
    %1888 = vmatprep.subr.bf16.mxu0 0
    %1889 = vmatpush1.bf16.msra.mxu0 %v1453
    %1890 = vmatprep.subr.bf16.mxu0 0
    %1891 = vmatpush1.bf16.msra.mxu0 %v1454
    %1892 = vmatprep.subr.bf16.mxu0 0
    %1893 = vmatpush1.bf16.msra.mxu0 %v1455
    %1894 = vmatprep.subr.bf16.mxu0 0
    %1895 = vmatpush1.bf16.msra.mxu0 %v1456
    %1896 = vmatprep.subr.bf16.mxu0 0
    %1897 = vmatpush1.bf16.msra.mxu0 %v1457
    %1898 = vmatprep.mubr.bf16.mxu0 %v487
    %1899 = vmatmul.mubr.bf16.gmra.mrb[0].mxu0 %v485
    %v1900 = vpop.f32.mrb[0].mxu0
    %v1901 = vadd.f32 %v1861, %v1900
    %v1902 = vpop.f32.mrb[0].mxu0
    %v1903 = vpop.f32.mrb[0].mxu0
    %v1904 = vpop.f32.mrb[0].mxu0
    %1905 = vdwg.mxu0
    %1906 = vmatprep.subr.bf16.mxu0 0
    %1907 = vmatpush1.bf16.msra.mxu0 %v1458
    %1908 = vmatprep.subr.bf16.mxu0 0
    %1909 = vmatpush1.bf16.msra.mxu0 %v1459
    %1910 = vmatprep.subr.bf16.mxu0 0
    %1911 = vmatpush1.bf16.msra.mxu0 %v1460
    %1912 = vmatprep.subr.bf16.mxu0 0
    %1913 = vmatpush1.bf16.msra.mxu0 %v1461
    %1914 = vmatprep.subr.bf16.mxu0 0
    %1915 = vmatpush1.bf16.msra.mxu0 %v1462
    %1916 = vmatprep.subr.bf16.mxu0 0
    %1917 = vmatpush1.bf16.msra.mxu0 %v1463
    %1918 = vmatprep.subr.bf16.mxu0 0
    %1919 = vmatpush1.bf16.msra.mxu0 %v1464
    %1920 = vmatprep.subr.bf16.mxu0 0
    %1921 = vmatpush1.bf16.msra.mxu0 %v1465
    %1922 = vmatprep.subr.bf16.mxu0 0
    %1923 = vmatpush1.bf16.msra.mxu0 %v1466
    %1924 = vmatprep.subr.bf16.mxu0 0
    %1925 = vmatpush1.bf16.msra.mxu0 %v1467
    %1926 = vmatprep.subr.bf16.mxu0 0
    %1927 = vmatpush1.bf16.msra.mxu0 %v1468
    %1928 = vmatprep.subr.bf16.mxu0 0
    %1929 = vmatpush1.bf16.msra.mxu0 %v1469
    %1930 = vmatprep.subr.bf16.mxu0 0
    %1931 = vmatpush1.bf16.msra.mxu0 %v1470
    %1932 = vmatprep.subr.bf16.mxu0 0
    %1933 = vmatpush1.bf16.msra.mxu0 %v1471
    %1934 = vmatprep.subr.bf16.mxu0 0
    %1935 = vmatpush1.bf16.msra.mxu0 %v1472
    %1936 = vmatprep.subr.bf16.mxu0 0
    %1937 = vmatpush1.bf16.msra.mxu0 %v1473
    %1938 = vmatprep.mubr.bf16.mxu0 %v484
    %1939 = vmatmul.mubr.bf16.gmra.mrb[0].mxu0 %v470
    %v1940 = vpop.f32.mrb[0].mxu0
    %v1941 = vadd.f32 %v1901, %v1940
    %v1942 = vpop.f32.mrb[0].mxu0
    %v1943 = vpop.f32.mrb[0].mxu0
    %v1944 = vpop.f32.mrb[0].mxu0
    %1945 = vdwg.mxu0
    %1946 = vmatprep.subr.bf16.mxu0 0
    %1947 = vmatpush1.bf16.msra.mxu0 %v1474
    %1948 = vmatprep.subr.bf16.mxu0 0
    %1949 = vmatpush1.bf16.msra.mxu0 %v1475
    %1950 = vmatprep.subr.bf16.mxu0 0
    %1951 = vmatpush1.bf16.msra.mxu0 %v1476
    %1952 = vmatprep.subr.bf16.mxu0 0
    %1953 = vmatpush1.bf16.msra.mxu0 %v1477
    %1954 = vmatprep.subr.bf16.mxu0 0
    %1955 = vmatpush1.bf16.msra.mxu0 %v1478
    %1956 = vmatprep.subr.bf16.mxu0 0
    %1957 = vmatpush1.bf16.msra.mxu0 %v1479
    %1958 = vmatprep.subr.bf16.mxu0 0
    %1959 = vmatpush1.bf16.msra.mxu0 %v1480
    %1960 = vmatprep.subr.bf16.mxu0 0
    %1961 = vmatpush1.bf16.msra.mxu0 %v1481
    %1962 = vmatprep.subr.bf16.mxu0 0
    %1963 = vmatpush1.bf16.msra.mxu0 %v1482
    %1964 = vmatprep.subr.bf16.mxu0 0
    %1965 = vmatpush1.bf16.msra.mxu0 %v1483
    %1966 = vmatprep.subr.bf16.mxu0 0
    %1967 = vmatpush1.bf16.msra.mxu0 %v1484
    %1968 = vmatprep.subr.bf16.mxu0 0
    %1969 = vmatpush1.bf16.msra.mxu0 %v1485
    %1970 = vmatprep.subr.bf16.mxu0 0
    %1971 = vmatpush1.bf16.msra.mxu0 %v1486
    %1972 = vmatprep.subr.bf16.mxu0 0
    %1973 = vmatpush1.bf16.msra.mxu0 %v1487
    %1974 = vmatprep.subr.bf16.mxu0 0
    %1975 = vmatpush1.bf16.msra.mxu0 %v1488
    %1976 = vmatprep.subr.bf16.mxu0 0
    %1977 = vmatpush1.bf16.msra.mxu0 %v1489
    %1978 = vmatprep.mubr.bf16.mxu0 %v488
    %1979 = vmatmul.mubr.bf16.gmra.mrb[0].mxu0 %v486
    %v1980 = vpop.f32.mrb[0].mxu0
    %v1981 = vadd.f32 %v1941, %v1980
    %v1982 = vpop.f32.mrb[0].mxu0
    %v1983 = vpop.f32.mrb[0].mxu0
    %v1984 = vpop.f32.mrb[0].mxu0
    %1985 = vdwg.mxu0
    %1986 = vmatprep.subr.bf16.mxu0 0
    %1987 = vmatpush1.bf16.msra.mxu0 %v1490
    %1988 = vmatprep.subr.bf16.mxu0 0
    %1989 = vmatpush1.bf16.msra.mxu0 %v1491
    %1990 = vmatprep.subr.bf16.mxu0 0
    %1991 = vmatpush1.bf16.msra.mxu0 %v1492
    %1992 = vmatprep.subr.bf16.mxu0 0
    %1993 = vmatpush1.bf16.msra.mxu0 %v1493
    %1994 = vmatprep.subr.bf16.mxu0 0
    %1995 = vmatpush1.bf16.msra.mxu0 %v1494
    %1996 = vmatprep.subr.bf16.mxu0 0
    %1997 = vmatpush1.bf16.msra.mxu0 %v1495
    %1998 = vmatprep.subr.bf16.mxu0 0
    %1999 = vmatpush1.bf16.msra.mxu0 %v1496
    %2000 = vmatprep.subr.bf16.mxu0 0
    %2001 = vmatpush1.bf16.msra.mxu0 %v1497
    %2002 = vmatprep.subr.bf16.mxu0 0
    %2003 = vmatpush1.bf16.msra.mxu0 %v1498
    %2004 = vmatprep.subr.bf16.mxu0 0
    %2005 = vmatpush1.bf16.msra.mxu0 %v1499
    %2006 = vmatprep.subr.bf16.mxu0 0
    %2007 = vmatpush1.bf16.msra.mxu0 %v1500
    %2008 = vmatprep.subr.bf16.mxu0 0
    %2009 = vmatpush1.bf16.msra.mxu0 %v1501
    %2010 = vmatprep.subr.bf16.mxu0 0
    %2011 = vmatpush1.bf16.msra.mxu0 %v1502
    %2012 = vmatprep.subr.bf16.mxu0 0
    %2013 = vmatpush1.bf16.msra.mxu0 %v1503
    %2014 = vmatprep.subr.bf16.mxu0 0
    %2015 = vmatpush1.bf16.msra.mxu0 %v1504
    %2016 = vmatprep.subr.bf16.mxu0 0
    %2017 = vmatpush1.bf16.msra.mxu0 %v1505
    %2018 = vmatprep.mubr.bf16.mxu0 %v526
    %2019 = vmatmul.mubr.bf16.gmra.mrb[0].mxu0 %v512
    %v2020 = vpop.f32.mrb[0].mxu0
    %v2021 = vadd.f32 %v1981, %v2020
    %v2022 = vpop.f32.mrb[0].mxu0
    %v2023 = vpop.f32.mrb[0].mxu0
    %v2024 = vpop.f32.mrb[0].mxu0
    %2025 = vdwg.mxu0
    %2026 = vmatprep.subr.bf16.mxu0 0
    %2027 = vmatpush1.bf16.msra.mxu0 %v1506
    %2028 = vmatprep.subr.bf16.mxu0 0
    %2029 = vmatpush1.bf16.msra.mxu0 %v1507
    %2030 = vmatprep.subr.bf16.mxu0 0
    %2031 = vmatpush1.bf16.msra.mxu0 %v1508
    %2032 = vmatprep.subr.bf16.mxu0 0
    %2033 = vmatpush1.bf16.msra.mxu0 %v1509
    %2034 = vmatprep.subr.bf16.mxu0 0
    %2035 = vmatpush1.bf16.msra.mxu0 %v1510
    %2036 = vmatprep.subr.bf16.mxu0 0
    %2037 = vmatpush1.bf16.msra.mxu0 %v1511
    %2038 = vmatprep.subr.bf16.mxu0 0
    %2039 = vmatpush1.bf16.msra.mxu0 %v1512
    %2040 = vmatprep.subr.bf16.mxu0 0
    %2041 = vmatpush1.bf16.msra.mxu0 %v1513
    %2042 = vmatprep.subr.bf16.mxu0 0
    %2043 = vmatpush1.bf16.msra.mxu0 %v1514
    %2044 = vmatprep.subr.bf16.mxu0 0
    %2045 = vmatpush1.bf16.msra.mxu0 %v1515
    %2046 = vmatprep.subr.bf16.mxu0 0
    %2047 = vmatpush1.bf16.msra.mxu0 %v1516
    %2048 = vmatprep.subr.bf16.mxu0 0
    %2049 = vmatpush1.bf16.msra.mxu0 %v1517
    %2050 = vmatprep.subr.bf16.mxu0 0
    %2051 = vmatpush1.bf16.msra.mxu0 %v1518
    %2052 = vmatprep.subr.bf16.mxu0 0
    %2053 = vmatpush1.bf16.msra.mxu0 %v1519
    %2054 = vmatprep.subr.bf16.mxu0 0
    %2055 = vmatpush1.bf16.msra.mxu0 %v1520
    %2056 = vmatprep.subr.bf16.mxu0 0
    %2057 = vmatpush1.bf16.msra.mxu0 %v1521
    %2058 = vmatprep.mubr.bf16.mxu0 %v536
    %2059 = vmatmul.mubr.bf16.gmra.mrb[0].mxu0 %v534
    %v2060 = vpop.f32.mrb[0].mxu0
    %v2061 = vadd.f32 %v2021, %v2060
    %v2062 = vpop.f32.mrb[0].mxu0
    %v2063 = vpop.f32.mrb[0].mxu0
    %v2064 = vpop.f32.mrb[0].mxu0
    %2065 = vdwg.mxu0
    %2066 = vmatprep.subr.bf16.mxu0 0
    %2067 = vmatpush1.bf16.msra.mxu0 %v1522
    %2068 = vmatprep.subr.bf16.mxu0 0
    %2069 = vmatpush1.bf16.msra.mxu0 %v1523
    %2070 = vmatprep.subr.bf16.mxu0 0
    %2071 = vmatpush1.bf16.msra.mxu0 %v1524
    %2072 = vmatprep.subr.bf16.mxu0 0
    %2073 = vmatpush1.bf16.msra.mxu0 %v1525
    %2074 = vmatprep.subr.bf16.mxu0 0
    %2075 = vmatpush1.bf16.msra.mxu0 %v1526
    %2076 = vmatprep.subr.bf16.mxu0 0
    %2077 = vmatpush1.bf16.msra.mxu0 %v1527
    %2078 = vmatprep.subr.bf16.mxu0 0
    %2079 = vmatpush1.bf16.msra.mxu0 %v1528
    %2080 = vmatprep.subr.bf16.mxu0 0
    %2081 = vmatpush1.bf16.msra.mxu0 %v1529
    %2082 = vmatprep.subr.bf16.mxu0 0
    %2083 = vmatpush1.bf16.msra.mxu0 %v1530
    %2084 = vmatprep.subr.bf16.mxu0 0
    %2085 = vmatpush1.bf16.msra.mxu0 %v1531
    %2086 = vmatprep.subr.bf16.mxu0 0
    %2087 = vmatpush1.bf16.msra.mxu0 %v1532
    %2088 = vmatprep.subr.bf16.mxu0 0
    %2089 = vmatpush1.bf16.msra.mxu0 %v1533
    %2090 = vmatprep.subr.bf16.mxu0 0
    %2091 = vmatpush1.bf16.msra.mxu0 %v1534
    %2092 = vmatprep.subr.bf16.mxu0 0
    %2093 = vmatpush1.bf16.msra.mxu0 %v1535
    %2094 = vmatprep.subr.bf16.mxu0 0
    %2095 = vmatpush1.bf16.msra.mxu0 %v1536
    %2096 = vmatprep.subr.bf16.mxu0 0
    %2097 = vmatpush1.bf16.msra.mxu0 %v1537
    %2098 = vmatprep.mubr.bf16.mxu0 %v533
    %2099 = vmatmul.mubr.bf16.gmra.mrb[0].mxu0 %v519
    %v2100 = vpop.f32.mrb[0].mxu0
    %v2101 = vadd.f32 %v2061, %v2100
    %v2102 = vpop.f32.mrb[0].mxu0
    %v2103 = vpop.f32.mrb[0].mxu0
    %v2104 = vpop.f32.mrb[0].mxu0
    %2105 = vdwg.mxu0
    %2106 = vmatprep.subr.bf16.mxu0 0
    %2107 = vmatpush1.bf16.msra.mxu0 %v1538
    %2108 = vmatprep.subr.bf16.mxu0 0
    %2109 = vmatpush1.bf16.msra.mxu0 %v1539
    %2110 = vmatprep.subr.bf16.mxu0 0
    %2111 = vmatpush1.bf16.msra.mxu0 %v1540
    %2112 = vmatprep.subr.bf16.mxu0 0
    %2113 = vmatpush1.bf16.msra.mxu0 %v1541
    %2114 = vmatprep.subr.bf16.mxu0 0
    %2115 = vmatpush1.bf16.msra.mxu0 %v1542
    %2116 = vmatprep.subr.bf16.mxu0 0
    %2117 = vmatpush1.bf16.msra.mxu0 %v1543
    %2118 = vmatprep.subr.bf16.mxu0 0
    %2119 = vmatpush1.bf16.msra.mxu0 %v1544
    %2120 = vmatprep.subr.bf16.mxu0 0
    %2121 = vmatpush1.bf16.msra.mxu0 %v1545
    %2122 = vmatprep.subr.bf16.mxu0 0
    %2123 = vmatpush1.bf16.msra.mxu0 %v1546
    %2124 = vmatprep.subr.bf16.mxu0 0
    %2125 = vmatpush1.bf16.msra.mxu0 %v1547
    %2126 = vmatprep.subr.bf16.mxu0 0
    %2127 = vmatpush1.bf16.msra.mxu0 %v1548
    %2128 = vmatprep.subr.bf16.mxu0 0
    %2129 = vmatpush1.bf16.msra.mxu0 %v1549
    %2130 = vmatprep.subr.bf16.mxu0 0
    %2131 = vmatpush1.bf16.msra.mxu0 %v1550
    %2132 = vmatprep.subr.bf16.mxu0 0
    %2133 = vmatpush1.bf16.msra.mxu0 %v1551
    %2134 = vmatprep.subr.bf16.mxu0 0
    %2135 = vmatpush1.bf16.msra.mxu0 %v1552
    %2136 = vmatprep.subr.bf16.mxu0 0
    %2137 = vmatpush1.bf16.msra.mxu0 %v1553
    %2138 = vmatprep.mubr.bf16.mxu0 %v537
    %2139 = vmatmul.mubr.bf16.gmra.mrb[0].mxu0 %v535
    %v2140 = vpop.f32.mrb[0].mxu0
    %v2141 = vadd.f32 %v2101, %v2140
    %v2142 = vpop.f32.mrb[0].mxu0
    %v2143 = vpop.f32.mrb[0].mxu0
    %v2144 = vpop.f32.mrb[0].mxu0
    %2145 = vdwg.mxu0
    %2146 = vmatprep.subr.bf16.mxu0 0
    %2147 = vmatpush1.bf16.msra.mxu0 %v1554
    %2148 = vmatprep.subr.bf16.mxu0 0
    %2149 = vmatpush1.bf16.msra.mxu0 %v1555
    %2150 = vmatprep.subr.bf16.mxu0 0
    %2151 = vmatpush1.bf16.msra.mxu0 %v1556
    %2152 = vmatprep.subr.bf16.mxu0 0
    %2153 = vmatpush1.bf16.msra.mxu0 %v1557
    %2154 = vmatprep.subr.bf16.mxu0 0
    %2155 = vmatpush1.bf16.msra.mxu0 %v1558
    %2156 = vmatprep.subr.bf16.mxu0 0
    %2157 = vmatpush1.bf16.msra.mxu0 %v1559
    %2158 = vmatprep.subr.bf16.mxu0 0
    %2159 = vmatpush1.bf16.msra.mxu0 %v1560
    %2160 = vmatprep.subr.bf16.mxu0 0
    %2161 = vmatpush1.bf16.msra.mxu0 %v1561
    %2162 = vmatprep.subr.bf16.mxu0 0
    %2163 = vmatpush1.bf16.msra.mxu0 %v1562
    %2164 = vmatprep.subr.bf16.mxu0 0
    %2165 = vmatpush1.bf16.msra.mxu0 %v1563
    %2166 = vmatprep.subr.bf16.mxu0 0
    %2167 = vmatpush1.bf16.msra.mxu0 %v1564
    %2168 = vmatprep.subr.bf16.mxu0 0
    %2169 = vmatpush1.bf16.msra.mxu0 %v1565
    %2170 = vmatprep.subr.bf16.mxu0 0
    %2171 = vmatpush1.bf16.msra.mxu0 %v1566
    %2172 = vmatprep.subr.bf16.mxu0 0
    %2173 = vmatpush1.bf16.msra.mxu0 %v1567
    %2174 = vmatprep.subr.bf16.mxu0 0
    %2175 = vmatpush1.bf16.msra.mxu0 %v1568
    %2176 = vmatprep.subr.bf16.mxu0 0
    %2177 = vmatpush1.bf16.msra.mxu0 %v1569
    %2178 = vmatprep.mubr.bf16.mxu0 %v575
    %2179 = vmatmul.mubr.bf16.gmra.mrb[0].mxu0 %v561
    %v2180 = vpop.f32.mrb[0].mxu0
    %v2181 = vadd.f32 %v2141, %v2180
    %v2182 = vpop.f32.mrb[0].mxu0
    %v2183 = vpop.f32.mrb[0].mxu0
    %v2184 = vpop.f32.mrb[0].mxu0
    %2185 = vdwg.mxu0
    %2186 = vmatprep.subr.bf16.mxu0 0
    %2187 = vmatpush1.bf16.msra.mxu0 %v1570
    %2188 = vmatprep.subr.bf16.mxu0 0
    %2189 = vmatpush1.bf16.msra.mxu0 %v1571
    %2190 = vmatprep.subr.bf16.mxu0 0
    %2191 = vmatpush1.bf16.msra.mxu0 %v1572
    %2192 = vmatprep.subr.bf16.mxu0 0
    %2193 = vmatpush1.bf16.msra.mxu0 %v1573
    %2194 = vmatprep.subr.bf16.mxu0 0
    %2195 = vmatpush1.bf16.msra.mxu0 %v1574
    %2196 = vmatprep.subr.bf16.mxu0 0
    %2197 = vmatpush1.bf16.msra.mxu0 %v1575
    %2198 = vmatprep.subr.bf16.mxu0 0
    %2199 = vmatpush1.bf16.msra.mxu0 %v1576
    %2200 = vmatprep.subr.bf16.mxu0 0
    %2201 = vmatpush1.bf16.msra.mxu0 %v1577
    %2202 = vmatprep.subr.bf16.mxu0 0
    %2203 = vmatpush1.bf16.msra.mxu0 %v1578
    %2204 = vmatprep.subr.bf16.mxu0 0
    %2205 = vmatpush1.bf16.msra.mxu0 %v1579
    %2206 = vmatprep.subr.bf16.mxu0 0
    %2207 = vmatpush1.bf16.msra.mxu0 %v1580
    %2208 = vmatprep.subr.bf16.mxu0 0
    %2209 = vmatpush1.bf16.msra.mxu0 %v1581
    %2210 = vmatprep.subr.bf16.mxu0 0
    %2211 = vmatpush1.bf16.msra.mxu0 %v1582
    %2212 = vmatprep.subr.bf16.mxu0 0
    %2213 = vmatpush1.bf16.msra.mxu0 %v1583
    %2214 = vmatprep.subr.bf16.mxu0 0
    %2215 = vmatpush1.bf16.msra.mxu0 %v1584
    %2216 = vmatprep.subr.bf16.mxu0 0
    %2217 = vmatpush1.bf16.msra.mxu0 %v1585
    %2218 = vmatprep.mubr.bf16.mxu0 %v585
    %2219 = vmatmul.mubr.bf16.gmra.mrb[0].mxu0 %v583
    %v2220 = vpop.f32.mrb[0].mxu0
    %v2221 = vadd.f32 %v2181, %v2220
    %v2222 = vpop.f32.mrb[0].mxu0
    %v2223 = vpop.f32.mrb[0].mxu0
    %v2224 = vpop.f32.mrb[0].mxu0
    %2225 = vdwg.mxu0
    %2226 = vmatprep.subr.bf16.mxu0 0
    %2227 = vmatpush1.bf16.msra.mxu0 %v1586
    %2228 = vmatprep.subr.bf16.mxu0 0
    %2229 = vmatpush1.bf16.msra.mxu0 %v1587
    %2230 = vmatprep.subr.bf16.mxu0 0
    %2231 = vmatpush1.bf16.msra.mxu0 %v1588
    %2232 = vmatprep.subr.bf16.mxu0 0
    %2233 = vmatpush1.bf16.msra.mxu0 %v1589
    %2234 = vmatprep.subr.bf16.mxu0 0
    %2235 = vmatpush1.bf16.msra.mxu0 %v1590
    %2236 = vmatprep.subr.bf16.mxu0 0
    %2237 = vmatpush1.bf16.msra.mxu0 %v1591
    %2238 = vmatprep.subr.bf16.mxu0 0
    %2239 = vmatpush1.bf16.msra.mxu0 %v1592
    %2240 = vmatprep.subr.bf16.mxu0 0
    %2241 = vmatpush1.bf16.msra.mxu0 %v1593
    %2242 = vmatprep.subr.bf16.mxu0 0
    %2243 = vmatpush1.bf16.msra.mxu0 %v1594
    %2244 = vmatprep.subr.bf16.mxu0 0
    %2245 = vmatpush1.bf16.msra.mxu0 %v1595
    %2246 = vmatprep.subr.bf16.mxu0 0
    %2247 = vmatpush1.bf16.msra.mxu0 %v1596
    %2248 = vmatprep.subr.bf16.mxu0 0
    %2249 = vmatpush1.bf16.msra.mxu0 %v1597
    %2250 = vmatprep.subr.bf16.mxu0 0
    %2251 = vmatpush1.bf16.msra.mxu0 %v1598
    %2252 = vmatprep.subr.bf16.mxu0 0
    %2253 = vmatpush1.bf16.msra.mxu0 %v1599
    %2254 = vmatprep.subr.bf16.mxu0 0
    %2255 = vmatpush1.bf16.msra.mxu0 %v1600
    %2256 = vmatprep.subr.bf16.mxu0 0
    %2257 = vmatpush1.bf16.msra.mxu0 %v1601
    %2258 = vmatprep.mubr.bf16.mxu0 %v582
    %2259 = vmatmul.mubr.bf16.gmra.mrb[0].mxu0 %v568
    %v2260 = vpop.f32.mrb[0].mxu0
    %v2261 = vadd.f32 %v2221, %v2260
    %v2262 = vpop.f32.mrb[0].mxu0
    %v2263 = vpop.f32.mrb[0].mxu0
    %v2264 = vpop.f32.mrb[0].mxu0
    %2265 = vdwg.mxu0
    %2266 = vmatprep.subr.bf16.mxu0 0
    %2267 = vmatpush1.bf16.msra.mxu0 %v1602
    %2268 = vmatprep.subr.bf16.mxu0 0
    %2269 = vmatpush1.bf16.msra.mxu0 %v1603
    %2270 = vmatprep.subr.bf16.mxu0 0
    %2271 = vmatpush1.bf16.msra.mxu0 %v1604
    %2272 = vmatprep.subr.bf16.mxu0 0
    %2273 = vmatpush1.bf16.msra.mxu0 %v1605
    %2274 = vmatprep.subr.bf16.mxu0 0
    %2275 = vmatpush1.bf16.msra.mxu0 %v1606
    %2276 = vmatprep.subr.bf16.mxu0 0
    %2277 = vmatpush1.bf16.msra.mxu0 %v1607
    %2278 = vmatprep.subr.bf16.mxu0 0
    %2279 = vmatpush1.bf16.msra.mxu0 %v1608
    %2280 = vmatprep.subr.bf16.mxu0 0
    %2281 = vmatpush1.bf16.msra.mxu0 %v1609
    %2282 = vmatprep.subr.bf16.mxu0 0
    %2283 = vmatpush1.bf16.msra.mxu0 %v1610
    %2284 = vmatprep.subr.bf16.mxu0 0
    %2285 = vmatpush1.bf16.msra.mxu0 %v1611
    %2286 = vmatprep.subr.bf16.mxu0 0
    %2287 = vmatpush1.bf16.msra.mxu0 %v1612
    %2288 = vmatprep.subr.bf16.mxu0 0
    %2289 = vmatpush1.bf16.msra.mxu0 %v1613
    %2290 = vmatprep.subr.bf16.mxu0 0
    %2291 = vmatpush1.bf16.msra.mxu0 %v1614
    %2292 = vmatprep.subr.bf16.mxu0 0
    %2293 = vmatpush1.bf16.msra.mxu0 %v1615
    %2294 = vmatprep.subr.bf16.mxu0 0
    %2295 = vmatpush1.bf16.msra.mxu0 %v1616
    %2296 = vmatprep.subr.bf16.mxu0 0
    %2297 = vmatpush1.bf16.msra.mxu0 %v1617
    %2298 = vmatprep.mubr.bf16.mxu0 %v586
    %2299 = vmatmul.mubr.bf16.gmra.mrb[0].mxu0 %v584
    %v2300 = vpop.f32.mrb[0].mxu0
    %v2301 = vadd.f32 %v2261, %v2300
    %v2302 = vpop.f32.mrb[0].mxu0
    %v2303 = vpop.f32.mrb[0].mxu0
    %v2304 = vpop.f32.mrb[0].mxu0
    %2305 = vdwg.mxu0
    %2306 = vmatprep.subr.bf16.mxu0 0
    %2307 = vmatpush1.bf16.msra.mxu0 %v1618
    %2308 = vmatprep.subr.bf16.mxu0 0
    %2309 = vmatpush1.bf16.msra.mxu0 %v1619
    %2310 = vmatprep.subr.bf16.mxu0 0
    %2311 = vmatpush1.bf16.msra.mxu0 %v1620
    %2312 = vmatprep.subr.bf16.mxu0 0
    %2313 = vmatpush1.bf16.msra.mxu0 %v1621
    %2314 = vmatprep.subr.bf16.mxu0 0
    %2315 = vmatpush1.bf16.msra.mxu0 %v1622
    %2316 = vmatprep.subr.bf16.mxu0 0
    %2317 = vmatpush1.bf16.msra.mxu0 %v1623
    %2318 = vmatprep.subr.bf16.mxu0 0
    %2319 = vmatpush1.bf16.msra.mxu0 %v1624
    %2320 = vmatprep.subr.bf16.mxu0 0
    %2321 = vmatpush1.bf16.msra.mxu0 %v1625
    %2322 = vmatprep.subr.bf16.mxu0 0
    %2323 = vmatpush1.bf16.msra.mxu0 0
    %2324 = vmatprep.subr.bf16.mxu0 0
    %2325 = vmatpush1.bf16.msra.mxu0 0
    %2326 = vmatprep.subr.bf16.mxu0 0
    %2327 = vmatpush1.bf16.msra.mxu0 0
    %2328 = vmatprep.subr.bf16.mxu0 0
    %2329 = vmatpush1.bf16.msra.mxu0 0
    %2330 = vmatprep.subr.bf16.mxu0 0
    %2331 = vmatpush1.bf16.msra.mxu0 0
    %2332 = vmatprep.subr.bf16.mxu0 0
    %2333 = vmatpush1.bf16.msra.mxu0 0
    %2334 = vmatprep.subr.bf16.mxu0 0
    %2335 = vmatpush1.bf16.msra.mxu0 0
    %2336 = vmatprep.subr.bf16.mxu0 0
    %2337 = vmatpush1.bf16.msra.mxu0 0
    %2338 = vmatprep.mubr.bf16.mxu0 0
    %2339 = vmatmul.mubr.bf16.gmra.mrb[0].mxu0 %v600
    %v2340 = vpop.f32.mrb[0].mxu0
    %v2341 = vadd.f32 %v2301, %v2340
    %v2342 = vpop.f32.mrb[0].mxu0
    %v2343 = vpop.f32.mrb[0].mxu0
    %v2344 = vpop.f32.mrb[0].mxu0
    %2345 = vdwg.mxu0
    %v2346 = vmax.f32 %v2341, 0.0
    %v2347 = vpack.c.bf16 %v2346, %v2346
    %v2348 = vld [vmem:[%s3] sm:$0xf]
    %v2349 = vld [vmem:[%s3 + $0x4] sm:$0xf]
    %v2350 = vld [vmem:[%s3 + $0x8] sm:$0xf]
    %v2351 = vld [vmem:[%s3 + $0xc] sm:$0xf]
    %v2352 = vld [vmem:[%s3 + $0x10] sm:$0xf]
    %v2353 = vld [vmem:[%s3 + $0x14] sm:$0xf]
    %v2354 = vld [vmem:[%s3 + $0x18] sm:$0xf]
    %v2355 = vld [vmem:[%s3 + $0x1c] sm:$0xf]
    %v2356 = vld [vmem:[%s3 + $0x20] sm:$0xf]
    %v2357 = vld [vmem:[%s3 + $0x24] sm:$0xf]
    %v2358 = vld [vmem:[%s3 + $0x28] sm:$0xf]
    %v2359 = vld [vmem:[%s3 + $0x2c] sm:$0xf]
    %v2360 = vld [vmem:[%s3 + $0x30] sm:$0xf]
    %v2361 = vld [vmem:[%s3 + $0x34] sm:$0xf]
    %v2362 = vld [vmem:[%s3 + $0x38] sm:$0xf]
    %v2363 = vld [vmem:[%s3 + $0x3c] sm:$0xf]
    %v2364 = vld [vmem:[%s4] sm:$0x1]
    %v2366 = vlaneseq
    %v2367 = vshrl.u32 %v2366, 7
    %v2368 = vsub.s32 0, %v2367
    %v2369 = vrot.slane %v2364, %v2368
    %v2387 = vunpack.c.l.b16 %v2348
    %v2388 = vunpack.c.l.b16 %v2349
    %v2389 = vunpack.c.l.b16 %v2350
    %v2390 = vunpack.c.l.b16 %v2351
    %v2391 = vunpack.c.l.b16 %v2352
    %v2392 = vunpack.c.l.b16 %v2353
    %v2393 = vunpack.c.l.b16 %v2354
    %v2394 = vunpack.c.l.b16 %v2355
    %v2395 = vunpack.c.l.b16 %v2356
    %v2396 = vunpack.c.l.b16 %v2357
    %v2397 = vunpack.c.l.b16 %v2358
    %v2398 = vunpack.c.l.b16 %v2359
    %v2399 = vunpack.c.l.b16 %v2360
    %v2400 = vunpack.c.l.b16 %v2361
    %v2401 = vunpack.c.l.b16 %v2362
    %v2402 = vunpack.c.l.b16 %v2363
    %v2403 = vpack.c.b16 %v2388, %v2387
    %v2404 = vpack.c.b16 %v2390, %v2389
    %v2405 = vpack.c.b16 %v2392, %v2391
    %v2406 = vpack.c.b16 %v2394, %v2393
    %v2407 = vpack.c.b16 %v2396, %v2395
    %v2408 = vpack.c.b16 %v2398, %v2397
    %v2409 = vpack.c.b16 %v2400, %v2399
    %v2410 = vpack.c.b16 %v2402, %v2401
    %2419 = vmatprep.subr.bf16.mxu0 0
    %2420 = vmatpush1.bf16.msra.mxu0 %v2403
    %2421 = vmatprep.subr.bf16.mxu0 0
    %2422 = vmatpush1.bf16.msra.mxu0 %v2404
    %2423 = vmatprep.subr.bf16.mxu0 0
    %2424 = vmatpush1.bf16.msra.mxu0 %v2405
    %2425 = vmatprep.subr.bf16.mxu0 0
    %2426 = vmatpush1.bf16.msra.mxu0 %v2406
    %2427 = vmatprep.subr.bf16.mxu0 0
    %2428 = vmatpush1.bf16.msra.mxu0 %v2407
    %2429 = vmatprep.subr.bf16.mxu0 0
    %2430 = vmatpush1.bf16.msra.mxu0 %v2408
    %2431 = vmatprep.subr.bf16.mxu0 0
    %2432 = vmatpush1.bf16.msra.mxu0 %v2409
    %2433 = vmatprep.subr.bf16.mxu0 0
    %2434 = vmatpush1.bf16.msra.mxu0 %v2410
    %2435 = vmatprep.subr.bf16.mxu0 0
    %2436 = vmatpush1.bf16.msra.mxu0 0
    %2437 = vmatprep.subr.bf16.mxu0 0
    %2438 = vmatpush1.bf16.msra.mxu0 0
    %2439 = vmatprep.subr.bf16.mxu0 0
    %2440 = vmatpush1.bf16.msra.mxu0 0
    %2441 = vmatprep.subr.bf16.mxu0 0
    %2442 = vmatpush1.bf16.msra.mxu0 0
    %2443 = vmatprep.subr.bf16.mxu0 0
    %2444 = vmatpush1.bf16.msra.mxu0 0
    %2445 = vmatprep.subr.bf16.mxu0 0
    %2446 = vmatpush1.bf16.msra.mxu0 0
    %2447 = vmatprep.subr.bf16.mxu0 0
    %2448 = vmatpush1.bf16.msra.mxu0 0
    %2449 = vmatprep.subr.bf16.mxu0 0
    %2450 = vmatpush1.bf16.msra.mxu0 0
    %2451 = vmatprep.mubr.bf16.mxu0 0
    %2452 = vmatmul.mubr.bf16.gmra.mrb[0].mxu0 %v2347
    %v2453 = vpop.f32.mrb[0].mxu0
    %v2454 = vadd.f32 %v2369, %v2453
    %v2455 = vpop.f32.mrb[0].mxu0
    %v2456 = vpop.f32.mrb[0].mxu0
    %v2457 = vpop.f32.mrb[0].mxu0
    %2458 = vdwg.mxu0
    %2459 = vst [vmem:[#allocation2] sm:$0x3] %v2454
    %v2460 = vlaneseq
    %v2461 = vand.u32 %v2460, 127
    %vm2462 = vcmp.lt.s32.totalorder %v2461, 3
    %v2463 = vsel %vm2462, %v2454, -inf
    %vm2464 = vcmask 1041408
    %v2465 = vsel %vm2464, %v2463, -inf
    %2466 = vmax.xlane.f32.xlu0 %v2465
    %v2467 = vpop.xlane.xlu0 %2466
    %v2468 = vsub.f32 %v2463, %v2467
    %v2469 = vmul.f32 %v2468, 1.442695
    %v2470 = vpow.pop %v2469
    %v2471 = vsel %vm2464, %v2470, 0.0
    %2472 = vadd.xlane.f32.xlu0 %v2471
    %v2473 = vpop.xlane.xlu0 %2472
    %v2474 = vrcp.pop %v2473
    %v2475 = vmul.f32 %v2470, %v2474
    %2476 = vst [vmem:[#allocation4] sm:$0x3] %v2475
    // Predicated region
    $region22: #{lenet5_forward.13} parent=1 // pred_check
      _
    $region23: #{lenet5_forward.13} parent=1 // pred_check_branch
      %2478 = sbr.rel (0) target = $region25
    $region24: #{lenet5_forward.13} parent=1 // pred_region
      %s2480 = ssub.s32 32, 32
      %2481 = vsyncadd [#allocation3], %s2480
      %s2483 = sshll.u32 [#allocation2], 4
      %s2484 = int_to_ptr.vmem [resolvable:$true] %s2483
      %2486 = dma.vmem_to_hbm [thread:$0]  %s2484, 32, %s5, [#allocation3]
    $region25: #{lenet5_forward.13} parent=1 // pred_fallthru
      _
    // Predicated region
    $region26: #{lenet5_forward.13} parent=1 // pred_check
      _
    $region27: #{lenet5_forward.13} parent=1 // pred_check_branch
      %2488 = sbr.rel (0) target = $region29
    $region28: #{lenet5_forward.13} parent=1 // pred_region
      %s2490 = ssub.s32 32, 32
      %2491 = vsyncadd [#allocation5], %s2490
      %s2493 = sshll.u32 [#allocation4], 4
      %s2494 = int_to_ptr.vmem [resolvable:$true] %s2493
      %2496 = dma.vmem_to_hbm [thread:$0]  %s2494, 32, %s6, [#allocation5]
    $region29: #{lenet5_forward.13} parent=1 // pred_fallthru
      _
    // Predicated region
    $region30: #{lenet5_forward.13} parent=1 // pred_check
      _
    $region31: #{lenet5_forward.13} parent=1 // pred_check_branch
      %2498 = sbr.rel (0) target = $region33
    $region32: #{lenet5_forward.13} parent=1 // pred_region
      %2499 = dma.done [#allocation3], 32
    $region33: #{lenet5_forward.13} parent=1 // pred_fallthru
      _
    // Predicated region
    $region34: #{lenet5_forward.13} parent=1 // pred_check
      _
    $region35: #{lenet5_forward.13} parent=1 // pred_check_branch
      %2501 = sbr.rel (0) target = $region37
    $region36: #{lenet5_forward.13} parent=1 // pred_region
      %2502 = dma.done [#allocation5], 32
    $region37: #{lenet5_forward.13} parent=1 // pred_fallthru
      _
    %2503 = vsyncpa [#allocation3], 1
    %2504 = vsyncpa [#allocation5], 1

// kernel: lenet5_forward.12
$region0: #{lenet5_forward.12}
  #allocation0 [shape = 'u32[]', space=smem, size = 0x4, offset = 0x4, fixed_abs, tag = 'smem constant byte address 0x4 - core index']
  #allocation1 [shape = 'u32[144,128]{1,0:T(1,128)}', space=vmem, size = 0x12000, scoped, tag = 'internal scratch']
  #allocation2 [shape = 'f32[2,640]{1,0:T(2,128)}', space=vmem, size = 0x1400, scoped, tag = 'scratch operand']
  %s0 = inlined_call_operand.vmem [shape: bf16[2,1024], index: 0, kind: input, shape index: {}]
  %s1 = inlined_call_operand.vmem [shape: bf16[1024,3200], index: 1, kind: input, shape index: {}]
  %s2 = inlined_call_operand.vmem [shape: f32[1,3200], index: 2, kind: input, shape index: {}]
  %s3 = inlined_call_operand.vmem [shape: bf16[2,3200], index: 3, kind: output, shape index: {}]
  %s4 = sld [smem:[#allocation0]]
  $region79: #{lenet5_forward.12} parent=0
    _
  %s6 = ssub.s32 1, %s4
  %s7 = scalar_select 0, %s6, %s4
  $region1: #{lenet5_forward.12} parent=0
    #allocation3 [shape = 'u8[2621440]{0}', space=vmem, size = 0x280000, scoped, tag = 'input window, operand 1']
    loop: start=0, step=1, limit=7
    $region2: #{lenet5_forward.12} parent=1 // loop_pre_header
      _
    $region3: #{lenet5_forward.12} parent=1 // loop_header
      %s9 = sphi 0, %s13
      %p10 = scmp.ge.s32.totalorder %s9, 7
      %s16 = sphi 0, %s35
      %s17 = sphi 0, %s31
      %s18 = sphi 0, %s27
      %s19 = sphi 0, %s16
      %s20 = sphi 0, %s17
      %s21 = sphi 0, %s18
      %s22 = sphi 0, %s19
      %s23 = sphi 0, %s20
      %s24 = sphi 0, %s21
      %s40 = sphi 0, %s42
      %s43 = sphi 0, %s40
      %s44 = sphi 0, %s43
      %s60 = sphi 0, %s44
      %s68 = sphi 0, %s70
      %s71 = sphi 0, %s68
      %s72 = sphi 0, %s71
      %s88 = sphi 0, %s72
      %s94 = sphi 0, %s96
      %s97 = sphi 0, %s94
      %s98 = sphi 0, %s97
      %s114 = sphi 0, %s98
      %s122 = sphi 0, %s124
      %s125 = sphi 0, %s122
      %s126 = sphi 0, %s125
      %s142 = sphi 0, %s126
    $region4: #{lenet5_forward.12} parent=1 // loop_header_branch
      %12 = sbr.rel (%p10) target = $region8
    $region5: #{lenet5_forward.12} parent=1 // loop_body
      %s14 = ssub.s32 %s9, 1
      %s15 = ssub.s32 %s9, 2
      %s25 = sadd.s32 1, %s18
      %p26 = scmp.ge.s32.totalorder %s25, 1
      %s27 = scalar_select %p26, 0, %s25
      %s28 = sadd.s32 1, %s17
      %s29 = scalar_select %p26, %s28, %s17
      %p30 = scmp.ge.s32.totalorder %s29, 5
      %s31 = scalar_select %p30, 0, %s29
      %s32 = sadd.s32 1, %s16
      %s33 = scalar_select %p30, %s32, %s16
      %p34 = scmp.ge.s32.totalorder %s33, 1
      %s35 = scalar_select %p34, 0, %s33
      %s36 = ssub.s32 %s16, %s35
      %s37 = ssub.s32 %s18, %s27
      %s38 = sor.u32 %s36, %s37
      %p39 = scmp.eq.s32.totalorder %s38, 0
      %s41 = sadd.s32 %s40, 1
      %s42 = scalar_select %p39, %s40, %s41
      %p45 = pneg %p39
      %p46 = scmp.eq.s32.totalorder %s9, 4
      %p47 = por %p45, %p46
      %p48 = scmp.ne.s32.totalorder %s40, %s43
      %p49 = scmp.eq.s32.totalorder %s9, 0
      %p50 = por %p48, %p49
      %p51 = scmp.ne.s32.totalorder %s40, %s43
      %p52 = scmp.eq.s32.totalorder %s14, 4
      %p53 = por %p51, %p52
      %p54 = scmp.ne.s32.totalorder %s43, %s44
      %p55 = scmp.eq.s32.totalorder %s14, 0
      %p56 = por %p54, %p55
      %p57 = scmp.ne.s32.totalorder %s43, %s44
      %p58 = scmp.eq.s32.totalorder %s15, 4
      %p59 = por %p57, %p58
      %p61 = scmp.ne.s32.totalorder %s44, %s60
      %p62 = scmp.eq.s32.totalorder %s15, 0
      %p63 = por %p61, %p62
      %s64 = ssub.s32 %s18, %s27
      %s65 = ssub.s32 %s17, %s31
      %s66 = sor.u32 %s64, %s65
      %p67 = scmp.eq.s32.totalorder %s66, 0
      %s69 = sadd.s32 %s68, 1
      %s70 = scalar_select %p67, %s68, %s69
      %p73 = pneg %p67
      %p74 = scmp.eq.s32.totalorder %s9, 4
      %p75 = por %p73, %p74
      %p76 = scmp.ne.s32.totalorder %s68, %s71
      %p77 = scmp.eq.s32.totalorder %s9, 0
      %p78 = por %p76, %p77
      %p79 = scmp.ne.s32.totalorder %s68, %s71
      %p80 = scmp.eq.s32.totalorder %s14, 4
      %p81 = por %p79, %p80
      %p82 = scmp.ne.s32.totalorder %s71, %s72
      %p83 = scmp.eq.s32.totalorder %s14, 0
      %p84 = por %p82, %p83
      %p85 = scmp.ne.s32.totalorder %s71, %s72
      %p86 = scmp.eq.s32.totalorder %s15, 4
      %p87 = por %p85, %p86
      %p89 = scmp.ne.s32.totalorder %s72, %s88
      %p90 = scmp.eq.s32.totalorder %s15, 0
      %p91 = por %p89, %p90
      %s92 = ssub.s32 %s17, %s31
      %p93 = scmp.eq.s32.totalorder %s92, 0
      %s95 = sadd.s32 %s94, 1
      %s96 = scalar_select %p93, %s94, %s95
      %p99 = pneg %p93
      %p100 = scmp.eq.s32.totalorder %s9, 4
      %p101 = por %p99, %p100
      %p102 = scmp.ne.s32.totalorder %s94, %s97
      %p103 = scmp.eq.s32.totalorder %s9, 0
      %p104 = por %p102, %p103
      %p105 = scmp.ne.s32.totalorder %s94, %s97
      %p106 = scmp.eq.s32.totalorder %s14, 4
      %p107 = por %p105, %p106
      %p108 = scmp.ne.s32.totalorder %s97, %s98
      %p109 = scmp.eq.s32.totalorder %s14, 0
      %p110 = por %p108, %p109
      %p111 = scmp.ne.s32.totalorder %s97, %s98
      %p112 = scmp.eq.s32.totalorder %s15, 4
      %p113 = por %p111, %p112
      %p115 = scmp.ne.s32.totalorder %s98, %s114
      %p116 = scmp.eq.s32.totalorder %s15, 0
      %p117 = por %p115, %p116
      %s118 = ssub.s32 %s16, %s35
      %s119 = ssub.s32 %s17, %s31
      %s120 = sor.u32 %s118, %s119
      %p121 = scmp.eq.s32.totalorder %s120, 0
      %s123 = sadd.s32 %s122, 1
      %s124 = scalar_select %p121, %s122, %s123
      %p127 = pneg %p121
      %p128 = scmp.eq.s32.totalorder %s9, 4
      %p129 = por %p127, %p128
      %p130 = scmp.ne.s32.totalorder %s122, %s125
      %p131 = scmp.eq.s32.totalorder %s9, 0
      %p132 = por %p130, %p131
      %p133 = scmp.ne.s32.totalorder %s122, %s125
      %p134 = scmp.eq.s32.totalorder %s14, 4
      %p135 = por %p133, %p134
      %p136 = scmp.ne.s32.totalorder %s125, %s126
      %p137 = scmp.eq.s32.totalorder %s14, 0
      %p138 = por %p136, %p137
      %p139 = scmp.ne.s32.totalorder %s125, %s126
      %p140 = scmp.eq.s32.totalorder %s15, 4
      %p141 = por %p139, %p140
      %p143 = scmp.ne.s32.totalorder %s126, %s142
      %p144 = scmp.eq.s32.totalorder %s15, 0
      %p145 = por %p143, %p144
      %p146 = scmp.le.s32.totalorder 1, %s9
      %p147 = scmp.lt.s32.totalorder %s9, 6
      %p148 = pnand %p146, %p147
      %p149 = pneg %p148
      // Predicated region
      $region9: #{lenet5_forward.12} parent=5 // pred_check
        _
      $region10: #{lenet5_forward.12} parent=5 // pred_check_branch
        %151 = sbr.rel (%p148) target = $region12
      $region11: #{lenet5_forward.12} parent=5 // pred_region
        %s152 = ssub.s32 %s9, 1
        // Predicated region
        $region13: #{lenet5_forward.12} parent=11 // pred_check
          %p153 = pneg %p56
        $region14: #{lenet5_forward.12} parent=11 // pred_check_branch
          %155 = sbr.rel (%p153) target = $region16
        $region15: #{lenet5_forward.12} parent=11 // pred_region
          %s156 = smul.u32 8, %s21
          %p157 = scmp.lt.s32.totalorder %s19, 0
          %s158 = scalar_select %p157, %s19, 0
          %p159 = scmp.lt.s32.totalorder %s156, 7
          %s160 = scalar_select %p159, %s156, 7
          %s161 = smul.addr %s158, 8
          %s162 = sadd.s32 %s160, %s161
          %s163 = scalar_lea.vmem %s0, %s162
          %s164 = smul.u32 8, %s21
        $region16: #{lenet5_forward.12} parent=11 // pred_fallthru
          _
      $region12: #{lenet5_forward.12} parent=5 // pred_fallthru
        _
      %p165 = scmp.lt.s32.totalorder %s9, 5
      // Predicated region
      $region17: #{lenet5_forward.12} parent=5 // pred_check
        %p166 = pneg %p165
      $region18: #{lenet5_forward.12} parent=5 // pred_check_branch
        %168 = sbr.rel (%p166) target = $region20
      $region19: #{lenet5_forward.12} parent=5 // pred_region
        // Predicated region
        $region21: #{lenet5_forward.12} parent=19 // pred_check
          %p169 = pneg %p78
        $region22: #{lenet5_forward.12} parent=19 // pred_check_branch
          %171 = sbr.rel (%p169) target = $region24
        $region23: #{lenet5_forward.12} parent=19 // pred_region
          %s172 = sand.u32 %s68, 1
          %s173 = sand.u32 %s68, 1
          %s174 = smul.addr %s173, 2560
          %s175 = scalar_lea.vmem [#allocation3], %s174
          %s176 = smul.u32 128, %s18
          %s177 = smul.u32 5, %s17
          %s178 = smul.addr %s176, 25
          %s179 = sadd.s32 %s177, %s178
          %s180 = smul.addr %s179, 4
          %s181 = scalar_lea.vmem %s1, %s180
          // Predicated region
          $region25: #{lenet5_forward.12} parent=23 // pred_check
            _
          $region26: #{lenet5_forward.12} parent=23 // pred_check_branch
            %183 = sbr.rel (0) target = $region28
          $region27: #{lenet5_forward.12} parent=23 // pred_region
            // Predicated region
            $region29: #{lenet5_forward.12} parent=27 // pred_check
              _
            $region30: #{lenet5_forward.12} parent=27 // pred_check_branch
              %185 = sbr.rel (0) target = $region32
            $region31: #{lenet5_forward.12} parent=27 // pred_region
              %s186 = scalar_lea.vmem %s181, 16
              %s187 = scalar_lea.vmem %s175, 16 [#allocation3]
              loop: start=0, step=1, limit=1
              $region33: #{lenet5_forward.12} parent=31 // loop_pre_header
                _
              $region34: #{lenet5_forward.12} parent=31 // loop_header
                %s189 = sphi 0, %s193
                %p190 = scmp.ge.s32.totalorder %s189, 1
                %s194 = sphi %s181, %s181
                %s195 = sphi %s175, %s175
              $region35: #{lenet5_forward.12} parent=31 // loop_header_branch
                %192 = sbr.rel (%p190) target = $region39
              $region36: #{lenet5_forward.12} parent=31 // loop_body
                %v196 = vld [vmem:[%s194] sm:$0xff]
                %197 = vst [vmem:[%s195] sm:$0xff] %v196
                %v198 = vld [vmem:[%s194 + $0x8] sm:$0xff]
                %199 = vst [vmem:[%s195 + $0x8] sm:$0xff] %v198
                %v200 = vld [vmem:[%s194 + $0x64] sm:$0xff]
                %201 = vst [vmem:[%s195 + $0x14] sm:$0xff] %v200
                %v202 = vld [vmem:[%s194 + $0x6c] sm:$0xff]
                %203 = vst [vmem:[%s195 + $0x1c] sm:$0xff] %v202
                %v204 = vld [vmem:[%s194 + $0xc8] sm:$0xff]
                %205 = vst [vmem:[%s195 + $0x28] sm:$0xff] %v204
                %v206 = vld [vmem:[%s194 + $0xd0] sm:$0xff]
                %207 = vst [vmem:[%s195 + $0x30] sm:$0xff] %v206
                %v208 = vld [vmem:[%s194 + $0x12c] sm:$0xff]
                %209 = vst [vmem:[%s195 + $0x3c] sm:$0xff] %v208
                %v210 = vld [vmem:[%s194 + $0x134] sm:$0xff]
                %211 = vst [vmem:[%s195 + $0x44] sm:$0xff] %v210
                %v212 = vld [vmem:[%s194 + $0x190] sm:$0xff]
                %213 = vst [vmem:[%s195 + $0x50] sm:$0xff] %v212
                %v214 = vld [vmem:[%s194 + $0x198] sm:$0xff]
                %215 = vst [vmem:[%s195 + $0x58] sm:$0xff] %v214
                %v216 = vld [vmem:[%s194 + $0x1f4] sm:$0xff]
                %217 = vst [vmem:[%s195 + $0x64] sm:$0xff] %v216
                %v218 = vld [vmem:[%s194 + $0x1fc] sm:$0xff]
                %219 = vst [vmem:[%s195 + $0x6c] sm:$0xff] %v218
                %v220 = vld [vmem:[%s194 + $0x258] sm:$0xff]
                %221 = vst [vmem:[%s195 + $0x78] sm:$0xff] %v220
                %v222 = vld [vmem:[%s194 + $0x260] sm:$0xff]
                %223 = vst [vmem:[%s195 + $0x80] sm:$0xff] %v222
                %v224 = vld [vmem:[%s194 + $0x2bc] sm:$0xff]
                %225 = vst [vmem:[%s195 + $0x8c] sm:$0xff] %v224
                %v226 = vld [vmem:[%s194 + $0x2c4] sm:$0xff]
                %227 = vst [vmem:[%s195 + $0x94] sm:$0xff] %v226
                %v228 = vld [vmem:[%s194 + $0x320] sm:$0xff]
                %229 = vst [vmem:[%s195 + $0xa0] sm:$0xff] %v228
                %v230 = vld [vmem:[%s194 + $0x328] sm:$0xff]
                %231 = vst [vmem:[%s195 + $0xa8] sm:$0xff] %v230
                %v232 = vld [vmem:[%s194 + $0x384] sm:$0xff]
                %233 = vst [vmem:[%s195 + $0xb4] sm:$0xff] %v232
                %v234 = vld [vmem:[%s194 + $0x38c] sm:$0xff]
                %235 = vst [vmem:[%s195 + $0xbc] sm:$0xff] %v234
                %v236 = vld [vmem:[%s194 + $0x3e8] sm:$0xff]
                %237 = vst [vmem:[%s195 + $0xc8] sm:$0xff] %v236
                %v238 = vld [vmem:[%s194 + $0x3f0] sm:$0xff]
                %239 = vst [vmem:[%s195 + $0xd0] sm:$0xff] %v238
                %v240 = vld [vmem:[%s194 + $0x44c] sm:$0xff]
                %241 = vst [vmem:[%s195 + $0xdc] sm:$0xff] %v240
                %v242 = vld [vmem:[%s194 + $0x454] sm:$0xff]
                %243 = vst [vmem:[%s195 + $0xe4] sm:$0xff] %v242
                %v244 = vld [vmem:[%s194 + $0x4b0] sm:$0xff]
                %245 = vst [vmem:[%s195 + $0xf0] sm:$0xff] %v244
                %v246 = vld [vmem:[%s194 + $0x4b8] sm:$0xff]
                %247 = vst [vmem:[%s195 + $0xf8] sm:$0xff] %v246
                %v248 = vld [vmem:[%s194 + $0x514] sm:$0xff]
                %249 = vst [vmem:[%s195 + $0x104] sm:$0xff] %v248
                %v250 = vld [vmem:[%s194 + $0x51c] sm:$0xff]
                %251 = vst [vmem:[%s195 + $0x10c] sm:$0xff] %v250
                %v252 = vld [vmem:[%s194 + $0x578] sm:$0xff]
                %253 = vst [vmem:[%s195 + $0x118] sm:$0xff] %v252
                %v254 = vld [vmem:[%s194 + $0x580] sm:$0xff]
                %255 = vst [vmem:[%s195 + $0x120] sm:$0xff] %v254
                %v256 = vld [vmem:[%s194 + $0x5dc] sm:$0xff]
                %257 = vst [vmem:[%s195 + $0x12c] sm:$0xff] %v256
                %v258 = vld [vmem:[%s194 + $0x5e4] sm:$0xff]
                %259 = vst [vmem:[%s195 + $0x134] sm:$0xff] %v258
                %v260 = vld [vmem:[%s194 + $0x640] sm:$0xff]
                %261 = vst [vmem:[%s195 + $0x140] sm:$0xff] %v260
                %v262 = vld [vmem:[%s194 + $0x648] sm:$0xff]
                %263 = vst [vmem:[%s195 + $0x148] sm:$0xff] %v262
                %v264 = vld [vmem:[%s194 + $0x6a4] sm:$0xff]
                %265 = vst [vmem:[%s195 + $0x154] sm:$0xff] %v264
                %v266 = vld [vmem:[%s194 + $0x6ac] sm:$0xff]
                %267 = vst [vmem:[%s195 + $0x15c] sm:$0xff] %v266
                %v268 = vld [vmem:[%s194 + $0x708] sm:$0xff]
                %269 = vst [vmem:[%s195 + $0x168] sm:$0xff] %v268
                %v270 = vld [vmem:[%s194 + $0x710] sm:$0xff]
                %271 = vst [vmem:[%s195 + $0x170] sm:$0xff] %v270
                %v272 = vld [vmem:[%s194 + $0x76c] sm:$0xff]
                %273 = vst [vmem:[%s195 + $0x17c] sm:$0xff] %v272
                %v274 = vld [vmem:[%s194 + $0x774] sm:$0xff]
                %275 = vst [vmem:[%s195 + $0x184] sm:$0xff] %v274
                %v276 = vld [vmem:[%s194 + $0x7d0] sm:$0xff]
                %277 = vst [vmem:[%s195 + $0x190] sm:$0xff] %v276
                %v278 = vld [vmem:[%s194 + $0x7d8] sm:$0xff]
                %279 = vst [vmem:[%s195 + $0x198] sm:$0xff] %v278
                %v280 = vld [vmem:[%s194 + $0x834] sm:$0xff]
                %281 = vst [vmem:[%s195 + $0x1a4] sm:$0xff] %v280
                %v282 = vld [vmem:[%s194 + $0x83c] sm:$0xff]
                %283 = vst [vmem:[%s195 + $0x1ac] sm:$0xff] %v282
                %v284 = vld [vmem:[%s194 + $0x898] sm:$0xff]
                %285 = vst [vmem:[%s195 + $0x1b8] sm:$0xff] %v284
                %v286 = vld [vmem:[%s194 + $0x8a0] sm:$0xff]
                %287 = vst [vmem:[%s195 + $0x1c0] sm:$0xff] %v286
                %v288 = vld [vmem:[%s194 + $0x8fc] sm:$0xff]
                %289 = vst [vmem:[%s195 + $0x1cc] sm:$0xff] %v288
                %v290 = vld [vmem:[%s194 + $0x904] sm:$0xff]
                %291 = vst [vmem:[%s195 + $0x1d4] sm:$0xff] %v290
                %v292 = vld [vmem:[%s194 + $0x960] sm:$0xff]
                %293 = vst [vmem:[%s195 + $0x1e0] sm:$0xff] %v292
                %v294 = vld [vmem:[%s194 + $0x968] sm:$0xff]
                %295 = vst [vmem:[%s195 + $0x1e8] sm:$0xff] %v294
                %v296 = vld [vmem:[%s194 + $0x9c4] sm:$0xff]
                %297 = vst [vmem:[%s195 + $0x1f4] sm:$0xff] %v296
                %v298 = vld [vmem:[%s194 + $0x9cc] sm:$0xff]
                %299 = vst [vmem:[%s195 + $0x1fc] sm:$0xff] %v298
                %v300 = vld [vmem:[%s194 + $0xa28] sm:$0xff]
                %301 = vst [vmem:[%s195 + $0x208] sm:$0xff] %v300
                %v302 = vld [vmem:[%s194 + $0xa30] sm:$0xff]
                %303 = vst [vmem:[%s195 + $0x210] sm:$0xff] %v302
                %v304 = vld [vmem:[%s194 + $0xa8c] sm:$0xff]
                %305 = vst [vmem:[%s195 + $0x21c] sm:$0xff] %v304
                %v306 = vld [vmem:[%s194 + $0xa94] sm:$0xff]
                %307 = vst [vmem:[%s195 + $0x224] sm:$0xff] %v306
                %v308 = vld [vmem:[%s194 + $0xaf0] sm:$0xff]
                %309 = vst [vmem:[%s195 + $0x230] sm:$0xff] %v308
                %v310 = vld [vmem:[%s194 + $0xaf8] sm:$0xff]
                %311 = vst [vmem:[%s195 + $0x238] sm:$0xff] %v310
                %v312 = vld [vmem:[%s194 + $0xb54] sm:$0xff]
                %313 = vst [vmem:[%s195 + $0x244] sm:$0xff] %v312
                %v314 = vld [vmem:[%s194 + $0xb5c] sm:$0xff]
                %315 = vst [vmem:[%s195 + $0x24c] sm:$0xff] %v314
                %v316 = vld [vmem:[%s194 + $0xbb8] sm:$0xff]
                %317 = vst [vmem:[%s195 + $0x258] sm:$0xff] %v316
                %v318 = vld [vmem:[%s194 + $0xbc0] sm:$0xff]
                %319 = vst [vmem:[%s195 + $0x260] sm:$0xff] %v318
                %v320 = vld [vmem:[%s194 + $0xc1c] sm:$0xff]
                %321 = vst [vmem:[%s195 + $0x26c] sm:$0xff] %v320
                %v322 = vld [vmem:[%s194 + $0xc24] sm:$0xff]
                %323 = vst [vmem:[%s195 + $0x274] sm:$0xff] %v322
                %v324 = vld [vmem:[%s194 + $0xc80] sm:$0xff]
                %325 = vst [vmem:[%s195 + $0x280] sm:$0xff] %v324
                %v326 = vld [vmem:[%s194 + $0xc88] sm:$0xff]
                %327 = vst [vmem:[%s195 + $0x288] sm:$0xff] %v326
                %v328 = vld [vmem:[%s194 + $0xce4] sm:$0xff]
                %329 = vst [vmem:[%s195 + $0x294] sm:$0xff] %v328
                %v330 = vld [vmem:[%s194 + $0xcec] sm:$0xff]
                %331 = vst [vmem:[%s195 + $0x29c] sm:$0xff] %v330
                %v332 = vld [vmem:[%s194 + $0xd48] sm:$0xff]
                %333 = vst [vmem:[%s195 + $0x2a8] sm:$0xff] %v332
                %v334 = vld [vmem:[%s194 + $0xd50] sm:$0xff]
                %335 = vst [vmem:[%s195 + $0x2b0] sm:$0xff] %v334
                %v336 = vld [vmem:[%s194 + $0xdac] sm:$0xff]
                %337 = vst [vmem:[%s195 + $0x2bc] sm:$0xff] %v336
                %v338 = vld [vmem:[%s194 + $0xdb4] sm:$0xff]
                %339 = vst [vmem:[%s195 + $0x2c4] sm:$0xff] %v338
                %v340 = vld [vmem:[%s194 + $0xe10] sm:$0xff]
                %341 = vst [vmem:[%s195 + $0x2d0] sm:$0xff] %v340
                %v342 = vld [vmem:[%s194 + $0xe18] sm:$0xff]
                %343 = vst [vmem:[%s195 + $0x2d8] sm:$0xff] %v342
                %v344 = vld [vmem:[%s194 + $0xe74] sm:$0xff]
                %345 = vst [vmem:[%s195 + $0x2e4] sm:$0xff] %v344
                %v346 = vld [vmem:[%s194 + $0xe7c] sm:$0xff]
                %347 = vst [vmem:[%s195 + $0x2ec] sm:$0xff] %v346
                %v348 = vld [vmem:[%s194 + $0xed8] sm:$0xff]
                %349 = vst [vmem:[%s195 + $0x2f8] sm:$0xff] %v348
                %v350 = vld [vmem:[%s194 + $0xee0] sm:$0xff]
                %351 = vst [vmem:[%s195 + $0x300] sm:$0xff] %v350
                %v352 = vld [vmem:[%s194 + $0xf3c] sm:$0xff]
                %353 = vst [vmem:[%s195 + $0x30c] sm:$0xff] %v352
                %v354 = vld [vmem:[%s194 + $0xf44] sm:$0xff]
                %355 = vst [vmem:[%s195 + $0x314] sm:$0xff] %v354
                %v356 = vld [vmem:[%s194 + $0xfa0] sm:$0xff]
                %357 = vst [vmem:[%s195 + $0x320] sm:$0xff] %v356
                %v358 = vld [vmem:[%s194 + $0xfa8] sm:$0xff]
                %359 = vst [vmem:[%s195 + $0x328] sm:$0xff] %v358
                %v360 = vld [vmem:[%s194 + $0x1004] sm:$0xff]
                %361 = vst [vmem:[%s195 + $0x334] sm:$0xff] %v360
                %v362 = vld [vmem:[%s194 + $0x100c] sm:$0xff]
                %363 = vst [vmem:[%s195 + $0x33c] sm:$0xff] %v362
                %v364 = vld [vmem:[%s194 + $0x1068] sm:$0xff]
                %365 = vst [vmem:[%s195 + $0x348] sm:$0xff] %v364
                %v366 = vld [vmem:[%s194 + $0x1070] sm:$0xff]
                %367 = vst [vmem:[%s195 + $0x350] sm:$0xff] %v366
                %v368 = vld [vmem:[%s194 + $0x10cc] sm:$0xff]
                %369 = vst [vmem:[%s195 + $0x35c] sm:$0xff] %v368
                %v370 = vld [vmem:[%s194 + $0x10d4] sm:$0xff]
                %371 = vst [vmem:[%s195 + $0x364] sm:$0xff] %v370
                %v372 = vld [vmem:[%s194 + $0x1130] sm:$0xff]
                %373 = vst [vmem:[%s195 + $0x370] sm:$0xff] %v372
                %v374 = vld [vmem:[%s194 + $0x1138] sm:$0xff]
                %375 = vst [vmem:[%s195 + $0x378] sm:$0xff] %v374
                %v376 = vld [vmem:[%s194 + $0x1194] sm:$0xff]
                %377 = vst [vmem:[%s195 + $0x384] sm:$0xff] %v376
                %v378 = vld [vmem:[%s194 + $0x119c] sm:$0xff]
                %379 = vst [vmem:[%s195 + $0x38c] sm:$0xff] %v378
                %v380 = vld [vmem:[%s194 + $0x11f8] sm:$0xff]
                %381 = vst [vmem:[%s195 + $0x398] sm:$0xff] %v380
                %v382 = vld [vmem:[%s194 + $0x1200] sm:$0xff]
                %383 = vst [vmem:[%s195 + $0x3a0] sm:$0xff] %v382
                %v384 = vld [vmem:[%s194 + $0x125c] sm:$0xff]
                %385 = vst [vmem:[%s195 + $0x3ac] sm:$0xff] %v384
                %v386 = vld [vmem:[%s194 + $0x1264] sm:$0xff]
                %387 = vst [vmem:[%s195 + $0x3b4] sm:$0xff] %v386
                %v388 = vld [vmem:[%s194 + $0x12c0] sm:$0xff]
                %389 = vst [vmem:[%s195 + $0x3c0] sm:$0xff] %v388
                %v390 = vld [vmem:[%s194 + $0x12c8] sm:$0xff]
                %391 = vst [vmem:[%s195 + $0x3c8] sm:$0xff] %v390
                %v392 = vld [vmem:[%s194 + $0x1324] sm:$0xff]
                %393 = vst [vmem:[%s195 + $0x3d4] sm:$0xff] %v392
                %v394 = vld [vmem:[%s194 + $0x132c] sm:$0xff]
                %395 = vst [vmem:[%s195 + $0x3dc] sm:$0xff] %v394
                %v396 = vld [vmem:[%s194 + $0x1388] sm:$0xff]
                %397 = vst [vmem:[%s195 + $0x3e8] sm:$0xff] %v396
                %v398 = vld [vmem:[%s194 + $0x1390] sm:$0xff]
                %399 = vst [vmem:[%s195 + $0x3f0] sm:$0xff] %v398
                %v400 = vld [vmem:[%s194 + $0x13ec] sm:$0xff]
                %401 = vst [vmem:[%s195 + $0x3fc] sm:$0xff] %v400
                %v402 = vld [vmem:[%s194 + $0x13f4] sm:$0xff]
                %403 = vst [vmem:[%s195 + $0x404] sm:$0xff] %v402
                %v404 = vld [vmem:[%s194 + $0x1450] sm:$0xff]
                %405 = vst [vmem:[%s195 + $0x410] sm:$0xff] %v404
                %v406 = vld [vmem:[%s194 + $0x1458] sm:$0xff]
                %407 = vst [vmem:[%s195 + $0x418] sm:$0xff] %v406
                %v408 = vld [vmem:[%s194 + $0x14b4] sm:$0xff]
                %409 = vst [vmem:[%s195 + $0x424] sm:$0xff] %v408
                %v410 = vld [vmem:[%s194 + $0x14bc] sm:$0xff]
                %411 = vst [vmem:[%s195 + $0x42c] sm:$0xff] %v410
                %v412 = vld [vmem:[%s194 + $0x1518] sm:$0xff]
                %413 = vst [vmem:[%s195 + $0x438] sm:$0xff] %v412
                %v414 = vld [vmem:[%s194 + $0x1520] sm:$0xff]
                %415 = vst [vmem:[%s195 + $0x440] sm:$0xff] %v414
                %v416 = vld [vmem:[%s194 + $0x157c] sm:$0xff]
                %417 = vst [vmem:[%s195 + $0x44c] sm:$0xff] %v416
                %v418 = vld [vmem:[%s194 + $0x1584] sm:$0xff]
                %419 = vst [vmem:[%s195 + $0x454] sm:$0xff] %v418
                %v420 = vld [vmem:[%s194 + $0x15e0] sm:$0xff]
                %421 = vst [vmem:[%s195 + $0x460] sm:$0xff] %v420
                %v422 = vld [vmem:[%s194 + $0x15e8] sm:$0xff]
                %423 = vst [vmem:[%s195 + $0x468] sm:$0xff] %v422
                %v424 = vld [vmem:[%s194 + $0x1644] sm:$0xff]
                %425 = vst [vmem:[%s195 + $0x474] sm:$0xff] %v424
                %v426 = vld [vmem:[%s194 + $0x164c] sm:$0xff]
                %427 = vst [vmem:[%s195 + $0x47c] sm:$0xff] %v426
                %v428 = vld [vmem:[%s194 + $0x16a8] sm:$0xff]
                %429 = vst [vmem:[%s195 + $0x488] sm:$0xff] %v428
                %v430 = vld [vmem:[%s194 + $0x16b0] sm:$0xff]
                %431 = vst [vmem:[%s195 + $0x490] sm:$0xff] %v430
                %v432 = vld [vmem:[%s194 + $0x170c] sm:$0xff]
                %433 = vst [vmem:[%s195 + $0x49c] sm:$0xff] %v432
                %v434 = vld [vmem:[%s194 + $0x1714] sm:$0xff]
                %435 = vst [vmem:[%s195 + $0x4a4] sm:$0xff] %v434
                %v436 = vld [vmem:[%s194 + $0x1770] sm:$0xff]
                %437 = vst [vmem:[%s195 + $0x4b0] sm:$0xff] %v436
                %v438 = vld [vmem:[%s194 + $0x1778] sm:$0xff]
                %439 = vst [vmem:[%s195 + $0x4b8] sm:$0xff] %v438
                %v440 = vld [vmem:[%s194 + $0x17d4] sm:$0xff]
                %441 = vst [vmem:[%s195 + $0x4c4] sm:$0xff] %v440
                %v442 = vld [vmem:[%s194 + $0x17dc] sm:$0xff]
                %443 = vst [vmem:[%s195 + $0x4cc] sm:$0xff] %v442
                %v444 = vld [vmem:[%s194 + $0x1838] sm:$0xff]
                %445 = vst [vmem:[%s195 + $0x4d8] sm:$0xff] %v444
                %v446 = vld [vmem:[%s194 + $0x1840] sm:$0xff]
                %447 = vst [vmem:[%s195 + $0x4e0] sm:$0xff] %v446
                %v448 = vld [vmem:[%s194 + $0x189c] sm:$0xff]
                %449 = vst [vmem:[%s195 + $0x4ec] sm:$0xff] %v448
                %v450 = vld [vmem:[%s194 + $0x18a4] sm:$0xff]
                %451 = vst [vmem:[%s195 + $0x4f4] sm:$0xff] %v450
                %v452 = vld [vmem:[%s194 + $0x1900] sm:$0xff]
                %453 = vst [vmem:[%s195 + $0x500] sm:$0xff] %v452
                %v454 = vld [vmem:[%s194 + $0x1908] sm:$0xff]
                %455 = vst [vmem:[%s195 + $0x508] sm:$0xff] %v454
                %v456 = vld [vmem:[%s194 + $0x1964] sm:$0xff]
                %457 = vst [vmem:[%s195 + $0x514] sm:$0xff] %v456
                %v458 = vld [vmem:[%s194 + $0x196c] sm:$0xff]
                %459 = vst [vmem:[%s195 + $0x51c] sm:$0xff] %v458
                %v460 = vld [vmem:[%s194 + $0x19c8] sm:$0xff]
                %461 = vst [vmem:[%s195 + $0x528] sm:$0xff] %v460
                %v462 = vld [vmem:[%s194 + $0x19d0] sm:$0xff]
                %463 = vst [vmem:[%s195 + $0x530] sm:$0xff] %v462
                %v464 = vld [vmem:[%s194 + $0x1a2c] sm:$0xff]
                %465 = vst [vmem:[%s195 + $0x53c] sm:$0xff] %v464
                %v466 = vld [vmem:[%s194 + $0x1a34] sm:$0xff]
                %467 = vst [vmem:[%s195 + $0x544] sm:$0xff] %v466
                %v468 = vld [vmem:[%s194 + $0x1a90] sm:$0xff]
                %469 = vst [vmem:[%s195 + $0x550] sm:$0xff] %v468
                %v470 = vld [vmem:[%s194 + $0x1a98] sm:$0xff]
                %471 = vst [vmem:[%s195 + $0x558] sm:$0xff] %v470
                %v472 = vld [vmem:[%s194 + $0x1af4] sm:$0xff]
                %473 = vst [vmem:[%s195 + $0x564] sm:$0xff] %v472
                %v474 = vld [vmem:[%s194 + $0x1afc] sm:$0xff]
                %475 = vst [vmem:[%s195 + $0x56c] sm:$0xff] %v474
                %v476 = vld [vmem:[%s194 + $0x1b58] sm:$0xff]
                %477 = vst [vmem:[%s195 + $0x578] sm:$0xff] %v476
                %v478 = vld [vmem:[%s194 + $0x1b60] sm:$0xff]
                %479 = vst [vmem:[%s195 + $0x580] sm:$0xff] %v478
                %v480 = vld [vmem:[%s194 + $0x1bbc] sm:$0xff]
                %481 = vst [vmem:[%s195 + $0x58c] sm:$0xff] %v480
                %v482 = vld [vmem:[%s194 + $0x1bc4] sm:$0xff]
                %483 = vst [vmem:[%s195 + $0x594] sm:$0xff] %v482
                %v484 = vld [vmem:[%s194 + $0x1c20] sm:$0xff]
                %485 = vst [vmem:[%s195 + $0x5a0] sm:$0xff] %v484
                %v486 = vld [vmem:[%s194 + $0x1c28] sm:$0xff]
                %487 = vst [vmem:[%s195 + $0x5a8] sm:$0xff] %v486
                %v488 = vld [vmem:[%s194 + $0x1c84] sm:$0xff]
                %489 = vst [vmem:[%s195 + $0x5b4] sm:$0xff] %v488
                %v490 = vld [vmem:[%s194 + $0x1c8c] sm:$0xff]
                %491 = vst [vmem:[%s195 + $0x5bc] sm:$0xff] %v490
                %v492 = vld [vmem:[%s194 + $0x1ce8] sm:$0xff]
                %493 = vst [vmem:[%s195 + $0x5c8] sm:$0xff] %v492
                %v494 = vld [vmem:[%s194 + $0x1cf0] sm:$0xff]
                %495 = vst [vmem:[%s195 + $0x5d0] sm:$0xff] %v494
                %v496 = vld [vmem:[%s194 + $0x1d4c] sm:$0xff]
                %497 = vst [vmem:[%s195 + $0x5dc] sm:$0xff] %v496
                %v498 = vld [vmem:[%s194 + $0x1d54] sm:$0xff]
                %499 = vst [vmem:[%s195 + $0x5e4] sm:$0xff] %v498
                %v500 = vld [vmem:[%s194 + $0x1db0] sm:$0xff]
                %501 = vst [vmem:[%s195 + $0x5f0] sm:$0xff] %v500
                %v502 = vld [vmem:[%s194 + $0x1db8] sm:$0xff]
                %503 = vst [vmem:[%s195 + $0x5f8] sm:$0xff] %v502
                %v504 = vld [vmem:[%s194 + $0x1e14] sm:$0xff]
                %505 = vst [vmem:[%s195 + $0x604] sm:$0xff] %v504
                %v506 = vld [vmem:[%s194 + $0x1e1c] sm:$0xff]
                %507 = vst [vmem:[%s195 + $0x60c] sm:$0xff] %v506
                %v508 = vld [vmem:[%s194 + $0x1e78] sm:$0xff]
                %509 = vst [vmem:[%s195 + $0x618] sm:$0xff] %v508
                %v510 = vld [vmem:[%s194 + $0x1e80] sm:$0xff]
                %511 = vst [vmem:[%s195 + $0x620] sm:$0xff] %v510
                %v512 = vld [vmem:[%s194 + $0x1edc] sm:$0xff]
                %513 = vst [vmem:[%s195 + $0x62c] sm:$0xff] %v512
                %v514 = vld [vmem:[%s194 + $0x1ee4] sm:$0xff]
                %515 = vst [vmem:[%s195 + $0x634] sm:$0xff] %v514
                %v516 = vld [vmem:[%s194 + $0x1f40] sm:$0xff]
                %517 = vst [vmem:[%s195 + $0x640] sm:$0xff] %v516
                %v518 = vld [vmem:[%s194 + $0x1f48] sm:$0xff]
                %519 = vst [vmem:[%s195 + $0x648] sm:$0xff] %v518
                %v520 = vld [vmem:[%s194 + $0x1fa4] sm:$0xff]
                %521 = vst [vmem:[%s195 + $0x654] sm:$0xff] %v520
                %v522 = vld [vmem:[%s194 + $0x1fac] sm:$0xff]
                %523 = vst [vmem:[%s195 + $0x65c] sm:$0xff] %v522
                %v524 = vld [vmem:[%s194 + $0x2008] sm:$0xff]
                %525 = vst [vmem:[%s195 + $0x668] sm:$0xff] %v524
                %v526 = vld [vmem:[%s194 + $0x2010] sm:$0xff]
                %527 = vst [vmem:[%s195 + $0x670] sm:$0xff] %v526
                %v528 = vld [vmem:[%s194 + $0x206c] sm:$0xff]
                %529 = vst [vmem:[%s195 + $0x67c] sm:$0xff] %v528
                %v530 = vld [vmem:[%s194 + $0x2074] sm:$0xff]
                %531 = vst [vmem:[%s195 + $0x684] sm:$0xff] %v530
                %v532 = vld [vmem:[%s194 + $0x20d0] sm:$0xff]
                %533 = vst [vmem:[%s195 + $0x690] sm:$0xff] %v532
                %v534 = vld [vmem:[%s194 + $0x20d8] sm:$0xff]
                %535 = vst [vmem:[%s195 + $0x698] sm:$0xff] %v534
                %v536 = vld [vmem:[%s194 + $0x2134] sm:$0xff]
                %537 = vst [vmem:[%s195 + $0x6a4] sm:$0xff] %v536
                %v538 = vld [vmem:[%s194 + $0x213c] sm:$0xff]
                %539 = vst [vmem:[%s195 + $0x6ac] sm:$0xff] %v538
                %v540 = vld [vmem:[%s194 + $0x2198] sm:$0xff]
                %541 = vst [vmem:[%s195 + $0x6b8] sm:$0xff] %v540
                %v542 = vld [vmem:[%s194 + $0x21a0] sm:$0xff]
                %543 = vst [vmem:[%s195 + $0x6c0] sm:$0xff] %v542
                %v544 = vld [vmem:[%s194 + $0x21fc] sm:$0xff]
                %545 = vst [vmem:[%s195 + $0x6cc] sm:$0xff] %v544
                %v546 = vld [vmem:[%s194 + $0x2204] sm:$0xff]
                %547 = vst [vmem:[%s195 + $0x6d4] sm:$0xff] %v546
                %v548 = vld [vmem:[%s194 + $0x2260] sm:$0xff]
                %549 = vst [vmem:[%s195 + $0x6e0] sm:$0xff] %v548
                %v550 = vld [vmem:[%s194 + $0x2268] sm:$0xff]
                %551 = vst [vmem:[%s195 + $0x6e8] sm:$0xff] %v550
                %v552 = vld [vmem:[%s194 + $0x22c4] sm:$0xff]
                %553 = vst [vmem:[%s195 + $0x6f4] sm:$0xff] %v552
                %v554 = vld [vmem:[%s194 + $0x22cc] sm:$0xff]
                %555 = vst [vmem:[%s195 + $0x6fc] sm:$0xff] %v554
                %v556 = vld [vmem:[%s194 + $0x2328] sm:$0xff]
                %557 = vst [vmem:[%s195 + $0x708] sm:$0xff] %v556
                %v558 = vld [vmem:[%s194 + $0x2330] sm:$0xff]
                %559 = vst [vmem:[%s195 + $0x710] sm:$0xff] %v558
                %v560 = vld [vmem:[%s194 + $0x238c] sm:$0xff]
                %561 = vst [vmem:[%s195 + $0x71c] sm:$0xff] %v560
                %v562 = vld [vmem:[%s194 + $0x2394] sm:$0xff]
                %563 = vst [vmem:[%s195 + $0x724] sm:$0xff] %v562
                %v564 = vld [vmem:[%s194 + $0x23f0] sm:$0xff]
                %565 = vst [vmem:[%s195 + $0x730] sm:$0xff] %v564
                %v566 = vld [vmem:[%s194 + $0x23f8] sm:$0xff]
                %567 = vst [vmem:[%s195 + $0x738] sm:$0xff] %v566
                %v568 = vld [vmem:[%s194 + $0x2454] sm:$0xff]
                %569 = vst [vmem:[%s195 + $0x744] sm:$0xff] %v568
                %v570 = vld [vmem:[%s194 + $0x245c] sm:$0xff]
                %571 = vst [vmem:[%s195 + $0x74c] sm:$0xff] %v570
                %v572 = vld [vmem:[%s194 + $0x24b8] sm:$0xff]
                %573 = vst [vmem:[%s195 + $0x758] sm:$0xff] %v572
                %v574 = vld [vmem:[%s194 + $0x24c0] sm:$0xff]
                %575 = vst [vmem:[%s195 + $0x760] sm:$0xff] %v574
                %v576 = vld [vmem:[%s194 + $0x251c] sm:$0xff]
                %577 = vst [vmem:[%s195 + $0x76c] sm:$0xff] %v576
                %v578 = vld [vmem:[%s194 + $0x2524] sm:$0xff]
                %579 = vst [vmem:[%s195 + $0x774] sm:$0xff] %v578
                %v580 = vld [vmem:[%s194 + $0x2580] sm:$0xff]
                %581 = vst [vmem:[%s195 + $0x780] sm:$0xff] %v580
                %v582 = vld [vmem:[%s194 + $0x2588] sm:$0xff]
                %583 = vst [vmem:[%s195 + $0x788] sm:$0xff] %v582
                %v584 = vld [vmem:[%s194 + $0x25e4] sm:$0xff]
                %585 = vst [vmem:[%s195 + $0x794] sm:$0xff] %v584
                %v586 = vld [vmem:[%s194 + $0x25ec] sm:$0xff]
                %587 = vst [vmem:[%s195 + $0x79c] sm:$0xff] %v586
                %v588 = vld [vmem:[%s194 + $0x2648] sm:$0xff]
                %589 = vst [vmem:[%s195 + $0x7a8] sm:$0xff] %v588
                %v590 = vld [vmem:[%s194 + $0x2650] sm:$0xff]
                %591 = vst [vmem:[%s195 + $0x7b0] sm:$0xff] %v590
                %v592 = vld [vmem:[%s194 + $0x26ac] sm:$0xff]
                %593 = vst [vmem:[%s195 + $0x7bc] sm:$0xff] %v592
                %v594 = vld [vmem:[%s194 + $0x26b4] sm:$0xff]
                %595 = vst [vmem:[%s195 + $0x7c4] sm:$0xff] %v594
                %v596 = vld [vmem:[%s194 + $0x2710] sm:$0xff]
                %597 = vst [vmem:[%s195 + $0x7d0] sm:$0xff] %v596
                %v598 = vld [vmem:[%s194 + $0x2718] sm:$0xff]
                %599 = vst [vmem:[%s195 + $0x7d8] sm:$0xff] %v598
                %v600 = vld [vmem:[%s194 + $0x2774] sm:$0xff]
                %601 = vst [vmem:[%s195 + $0x7e4] sm:$0xff] %v600
                %v602 = vld [vmem:[%s194 + $0x277c] sm:$0xff]
                %603 = vst [vmem:[%s195 + $0x7ec] sm:$0xff] %v602
                %v604 = vld [vmem:[%s194 + $0x27d8] sm:$0xff]
                %605 = vst [vmem:[%s195 + $0x7f8] sm:$0xff] %v604
                %v606 = vld [vmem:[%s194 + $0x27e0] sm:$0xff]
                %607 = vst [vmem:[%s195 + $0x800] sm:$0xff] %v606
                %v608 = vld [vmem:[%s194 + $0x283c] sm:$0xff]
                %609 = vst [vmem:[%s195 + $0x80c] sm:$0xff] %v608
                %v610 = vld [vmem:[%s194 + $0x2844] sm:$0xff]
                %611 = vst [vmem:[%s195 + $0x814] sm:$0xff] %v610
                %v612 = vld [vmem:[%s194 + $0x28a0] sm:$0xff]
                %613 = vst [vmem:[%s195 + $0x820] sm:$0xff] %v612
                %v614 = vld [vmem:[%s194 + $0x28a8] sm:$0xff]
                %615 = vst [vmem:[%s195 + $0x828] sm:$0xff] %v614
                %v616 = vld [vmem:[%s194 + $0x2904] sm:$0xff]
                %617 = vst [vmem:[%s195 + $0x834] sm:$0xff] %v616
                %v618 = vld [vmem:[%s194 + $0x290c] sm:$0xff]
                %619 = vst [vmem:[%s195 + $0x83c] sm:$0xff] %v618
                %v620 = vld [vmem:[%s194 + $0x2968] sm:$0xff]
                %621 = vst [vmem:[%s195 + $0x848] sm:$0xff] %v620
                %v622 = vld [vmem:[%s194 + $0x2970] sm:$0xff]
                %623 = vst [vmem:[%s195 + $0x850] sm:$0xff] %v622
                %v624 = vld [vmem:[%s194 + $0x29cc] sm:$0xff]
                %625 = vst [vmem:[%s195 + $0x85c] sm:$0xff] %v624
                %v626 = vld [vmem:[%s194 + $0x29d4] sm:$0xff]
                %627 = vst [vmem:[%s195 + $0x864] sm:$0xff] %v626
                %v628 = vld [vmem:[%s194 + $0x2a30] sm:$0xff]
                %629 = vst [vmem:[%s195 + $0x870] sm:$0xff] %v628
                %v630 = vld [vmem:[%s194 + $0x2a38] sm:$0xff]
                %631 = vst [vmem:[%s195 + $0x878] sm:$0xff] %v630
                %v632 = vld [vmem:[%s194 + $0x2a94] sm:$0xff]
                %633 = vst [vmem:[%s195 + $0x884] sm:$0xff] %v632
                %v634 = vld [vmem:[%s194 + $0x2a9c] sm:$0xff]
                %635 = vst [vmem:[%s195 + $0x88c] sm:$0xff] %v634
                %v636 = vld [vmem:[%s194 + $0x2af8] sm:$0xff]
                %637 = vst [vmem:[%s195 + $0x898] sm:$0xff] %v636
                %v638 = vld [vmem:[%s194 + $0x2b00] sm:$0xff]
                %639 = vst [vmem:[%s195 + $0x8a0] sm:$0xff] %v638
                %v640 = vld [vmem:[%s194 + $0x2b5c] sm:$0xff]
                %641 = vst [vmem:[%s195 + $0x8ac] sm:$0xff] %v640
                %v642 = vld [vmem:[%s194 + $0x2b64] sm:$0xff]
                %643 = vst [vmem:[%s195 + $0x8b4] sm:$0xff] %v642
                %v644 = vld [vmem:[%s194 + $0x2bc0] sm:$0xff]
                %645 = vst [vmem:[%s195 + $0x8c0] sm:$0xff] %v644
                %v646 = vld [vmem:[%s194 + $0x2bc8] sm:$0xff]
                %647 = vst [vmem:[%s195 + $0x8c8] sm:$0xff] %v646
                %v648 = vld [vmem:[%s194 + $0x2c24] sm:$0xff]
                %649 = vst [vmem:[%s195 + $0x8d4] sm:$0xff] %v648
                %v650 = vld [vmem:[%s194 + $0x2c2c] sm:$0xff]
                %651 = vst [vmem:[%s195 + $0x8dc] sm:$0xff] %v650
                %v652 = vld [vmem:[%s194 + $0x2c88] sm:$0xff]
                %653 = vst [vmem:[%s195 + $0x8e8] sm:$0xff] %v652
                %v654 = vld [vmem:[%s194 + $0x2c90] sm:$0xff]
                %655 = vst [vmem:[%s195 + $0x8f0] sm:$0xff] %v654
                %v656 = vld [vmem:[%s194 + $0x2cec] sm:$0xff]
                %657 = vst [vmem:[%s195 + $0x8fc] sm:$0xff] %v656
                %v658 = vld [vmem:[%s194 + $0x2cf4] sm:$0xff]
                %659 = vst [vmem:[%s195 + $0x904] sm:$0xff] %v658
                %v660 = vld [vmem:[%s194 + $0x2d50] sm:$0xff]
                %661 = vst [vmem:[%s195 + $0x910] sm:$0xff] %v660
                %v662 = vld [vmem:[%s194 + $0x2d58] sm:$0xff]
                %663 = vst [vmem:[%s195 + $0x918] sm:$0xff] %v662
                %v664 = vld [vmem:[%s194 + $0x2db4] sm:$0xff]
                %665 = vst [vmem:[%s195 + $0x924] sm:$0xff] %v664
                %v666 = vld [vmem:[%s194 + $0x2dbc] sm:$0xff]
                %667 = vst [vmem:[%s195 + $0x92c] sm:$0xff] %v666
                %v668 = vld [vmem:[%s194 + $0x2e18] sm:$0xff]
                %669 = vst [vmem:[%s195 + $0x938] sm:$0xff] %v668
                %v670 = vld [vmem:[%s194 + $0x2e20] sm:$0xff]
                %671 = vst [vmem:[%s195 + $0x940] sm:$0xff] %v670
                %v672 = vld [vmem:[%s194 + $0x2e7c] sm:$0xff]
                %673 = vst [vmem:[%s195 + $0x94c] sm:$0xff] %v672
                %v674 = vld [vmem:[%s194 + $0x2e84] sm:$0xff]
                %675 = vst [vmem:[%s195 + $0x954] sm:$0xff] %v674
                %v676 = vld [vmem:[%s194 + $0x2ee0] sm:$0xff]
                %677 = vst [vmem:[%s195 + $0x960] sm:$0xff] %v676
                %v678 = vld [vmem:[%s194 + $0x2ee8] sm:$0xff]
                %679 = vst [vmem:[%s195 + $0x968] sm:$0xff] %v678
                %v680 = vld [vmem:[%s194 + $0x2f44] sm:$0xff]
                %681 = vst [vmem:[%s195 + $0x974] sm:$0xff] %v680
                %v682 = vld [vmem:[%s194 + $0x2f4c] sm:$0xff]
                %683 = vst [vmem:[%s195 + $0x97c] sm:$0xff] %v682
                %v684 = vld [vmem:[%s194 + $0x2fa8] sm:$0xff]
                %685 = vst [vmem:[%s195 + $0x988] sm:$0xff] %v684
                %v686 = vld [vmem:[%s194 + $0x2fb0] sm:$0xff]
                %687 = vst [vmem:[%s195 + $0x990] sm:$0xff] %v686
                %v688 = vld [vmem:[%s194 + $0x300c] sm:$0xff]
                %689 = vst [vmem:[%s195 + $0x99c] sm:$0xff] %v688
                %v690 = vld [vmem:[%s194 + $0x3014] sm:$0xff]
                %691 = vst [vmem:[%s195 + $0x9a4] sm:$0xff] %v690
                %v692 = vld [vmem:[%s194 + $0x3070] sm:$0xff]
                %693 = vst [vmem:[%s195 + $0x9b0] sm:$0xff] %v692
                %v694 = vld [vmem:[%s194 + $0x3078] sm:$0xff]
                %695 = vst [vmem:[%s195 + $0x9b8] sm:$0xff] %v694
                %v696 = vld [vmem:[%s194 + $0x30d4] sm:$0xff]
                %697 = vst [vmem:[%s195 + $0x9c4] sm:$0xff] %v696
                %v698 = vld [vmem:[%s194 + $0x30dc] sm:$0xff]
                %699 = vst [vmem:[%s195 + $0x9cc] sm:$0xff] %v698
                %v700 = vld [vmem:[%s194 + $0x3138] sm:$0xff]
                %701 = vst [vmem:[%s195 + $0x9d8] sm:$0xff] %v700
                %v702 = vld [vmem:[%s194 + $0x3140] sm:$0xff]
                %703 = vst [vmem:[%s195 + $0x9e0] sm:$0xff] %v702
                %v704 = vld [vmem:[%s194 + $0x319c] sm:$0xff]
                %705 = vst [vmem:[%s195 + $0x9ec] sm:$0xff] %v704
                %v706 = vld [vmem:[%s194 + $0x31a4] sm:$0xff]
                %707 = vst [vmem:[%s195 + $0x9f4] sm:$0xff] %v706
              $region37: #{lenet5_forward.12} parent=31 // loop_footer
                %s193 = sadd.s32 1, %s189
              $region38: #{lenet5_forward.12} parent=31 // loop_footer_branch
                %188 = sbr.rel target = $region34
              $region39: #{lenet5_forward.12} parent=31 // loop_exit
                _
              loop: start=0, step=1, limit=1
              $region40: #{lenet5_forward.12} parent=31 // loop_pre_header
                _
              $region41: #{lenet5_forward.12} parent=31 // loop_header
                %s710 = sphi 0, %s714
                %p711 = scmp.ge.s32.totalorder %s710, 1
                %s715 = sphi %s186, %s186
                %s716 = sphi %s187, %s187
              $region42: #{lenet5_forward.12} parent=31 // loop_header_branch
                %713 = sbr.rel (%p711) target = $region46
              $region43: #{lenet5_forward.12} parent=31 // loop_body
                %v717 = vld [vmem:[%s715] sm:$0xf]
                %718 = vst [vmem:[%s716] sm:$0xf] %v717
                %v719 = vld [vmem:[%s715 + $0x64] sm:$0xf]
                %720 = vst [vmem:[%s716 + $0x14] sm:$0xf] %v719
                %v721 = vld [vmem:[%s715 + $0xc8] sm:$0xf]
                %722 = vst [vmem:[%s716 + $0x28] sm:$0xf] %v721
                %v723 = vld [vmem:[%s715 + $0x12c] sm:$0xf]
                %724 = vst [vmem:[%s716 + $0x3c] sm:$0xf] %v723
                %v725 = vld [vmem:[%s715 + $0x190] sm:$0xf]
                %726 = vst [vmem:[%s716 + $0x50] sm:$0xf] %v725
                %v727 = vld [vmem:[%s715 + $0x1f4] sm:$0xf]
                %728 = vst [vmem:[%s716 + $0x64] sm:$0xf] %v727
                %v729 = vld [vmem:[%s715 + $0x258] sm:$0xf]
                %730 = vst [vmem:[%s716 + $0x78] sm:$0xf] %v729
                %v731 = vld [vmem:[%s715 + $0x2bc] sm:$0xf]
                %732 = vst [vmem:[%s716 + $0x8c] sm:$0xf] %v731
                %v733 = vld [vmem:[%s715 + $0x320] sm:$0xf]
                %734 = vst [vmem:[%s716 + $0xa0] sm:$0xf] %v733
                %v735 = vld [vmem:[%s715 + $0x384] sm:$0xf]
                %736 = vst [vmem:[%s716 + $0xb4] sm:$0xf] %v735
                %v737 = vld [vmem:[%s715 + $0x3e8] sm:$0xf]
                %738 = vst [vmem:[%s716 + $0xc8] sm:$0xf] %v737
                %v739 = vld [vmem:[%s715 + $0x44c] sm:$0xf]
                %740 = vst [vmem:[%s716 + $0xdc] sm:$0xf] %v739
                %v741 = vld [vmem:[%s715 + $0x4b0] sm:$0xf]
                %742 = vst [vmem:[%s716 + $0xf0] sm:$0xf] %v741
                %v743 = vld [vmem:[%s715 + $0x514] sm:$0xf]
                %744 = vst [vmem:[%s716 + $0x104] sm:$0xf] %v743
                %v745 = vld [vmem:[%s715 + $0x578] sm:$0xf]
                %746 = vst [vmem:[%s716 + $0x118] sm:$0xf] %v745
                %v747 = vld [vmem:[%s715 + $0x5dc] sm:$0xf]
                %748 = vst [vmem:[%s716 + $0x12c] sm:$0xf] %v747
                %v749 = vld [vmem:[%s715 + $0x640] sm:$0xf]
                %750 = vst [vmem:[%s716 + $0x140] sm:$0xf] %v749
                %v751 = vld [vmem:[%s715 + $0x6a4] sm:$0xf]
                %752 = vst [vmem:[%s716 + $0x154] sm:$0xf] %v751
                %v753 = vld [vmem:[%s715 + $0x708] sm:$0xf]
                %754 = vst [vmem:[%s716 + $0x168] sm:$0xf] %v753
                %v755 = vld [vmem:[%s715 + $0x76c] sm:$0xf]
                %756 = vst [vmem:[%s716 + $0x17c] sm:$0xf] %v755
                %v757 = vld [vmem:[%s715 + $0x7d0] sm:$0xf]
                %758 = vst [vmem:[%s716 + $0x190] sm:$0xf] %v757
                %v759 = vld [vmem:[%s715 + $0x834] sm:$0xf]
                %760 = vst [vmem:[%s716 + $0x1a4] sm:$0xf] %v759
                %v761 = vld [vmem:[%s715 + $0x898] sm:$0xf]
                %762 = vst [vmem:[%s716 + $0x1b8] sm:$0xf] %v761
                %v763 = vld [vmem:[%s715 + $0x8fc] sm:$0xf]
                %764 = vst [vmem:[%s716 + $0x1cc] sm:$0xf] %v763
                %v765 = vld [vmem:[%s715 + $0x960] sm:$0xf]
                %766 = vst [vmem:[%s716 + $0x1e0] sm:$0xf] %v765
                %v767 = vld [vmem:[%s715 + $0x9c4] sm:$0xf]
                %768 = vst [vmem:[%s716 + $0x1f4] sm:$0xf] %v767
                %v769 = vld [vmem:[%s715 + $0xa28] sm:$0xf]
                %770 = vst [vmem:[%s716 + $0x208] sm:$0xf] %v769
                %v771 = vld [vmem:[%s715 + $0xa8c] sm:$0xf]
                %772 = vst [vmem:[%s716 + $0x21c] sm:$0xf] %v771
                %v773 = vld [vmem:[%s715 + $0xaf0] sm:$0xf]
                %774 = vst [vmem:[%s716 + $0x230] sm:$0xf] %v773
                %v775 = vld [vmem:[%s715 + $0xb54] sm:$0xf]
                %776 = vst [vmem:[%s716 + $0x244] sm:$0xf] %v775
                %v777 = vld [vmem:[%s715 + $0xbb8] sm:$0xf]
                %778 = vst [vmem:[%s716 + $0x258] sm:$0xf] %v777
                %v779 = vld [vmem:[%s715 + $0xc1c] sm:$0xf]
                %780 = vst [vmem:[%s716 + $0x26c] sm:$0xf] %v779
                %v781 = vld [vmem:[%s715 + $0xc80] sm:$0xf]
                %782 = vst [vmem:[%s716 + $0x280] sm:$0xf] %v781
                %v783 = vld [vmem:[%s715 + $0xce4] sm:$0xf]
                %784 = vst [vmem:[%s716 + $0x294] sm:$0xf] %v783
                %v785 = vld [vmem:[%s715 + $0xd48] sm:$0xf]
                %786 = vst [vmem:[%s716 + $0x2a8] sm:$0xf] %v785
                %v787 = vld [vmem:[%s715 + $0xdac] sm:$0xf]
                %788 = vst [vmem:[%s716 + $0x2bc] sm:$0xf] %v787
                %v789 = vld [vmem:[%s715 + $0xe10] sm:$0xf]
                %790 = vst [vmem:[%s716 + $0x2d0] sm:$0xf] %v789
                %v791 = vld [vmem:[%s715 + $0xe74] sm:$0xf]
                %792 = vst [vmem:[%s716 + $0x2e4] sm:$0xf] %v791
                %v793 = vld [vmem:[%s715 + $0xed8] sm:$0xf]
                %794 = vst [vmem:[%s716 + $0x2f8] sm:$0xf] %v793
                %v795 = vld [vmem:[%s715 + $0xf3c] sm:$0xf]
                %796 = vst [vmem:[%s716 + $0x30c] sm:$0xf] %v795
                %v797 = vld [vmem:[%s715 + $0xfa0] sm:$0xf]
                %798 = vst [vmem:[%s716 + $0x320] sm:$0xf] %v797
                %v799 = vld [vmem:[%s715 + $0x1004] sm:$0xf]
                %800 = vst [vmem:[%s716 + $0x334] sm:$0xf] %v799
                %v801 = vld [vmem:[%s715 + $0x1068] sm:$0xf]
                %802 = vst [vmem:[%s716 + $0x348] sm:$0xf] %v801
                %v803 = vld [vmem:[%s715 + $0x10cc] sm:$0xf]
                %804 = vst [vmem:[%s716 + $0x35c] sm:$0xf] %v803
                %v805 = vld [vmem:[%s715 + $0x1130] sm:$0xf]
                %806 = vst [vmem:[%s716 + $0x370] sm:$0xf] %v805
                %v807 = vld [vmem:[%s715 + $0x1194] sm:$0xf]
                %808 = vst [vmem:[%s716 + $0x384] sm:$0xf] %v807
                %v809 = vld [vmem:[%s715 + $0x11f8] sm:$0xf]
                %810 = vst [vmem:[%s716 + $0x398] sm:$0xf] %v809
                %v811 = vld [vmem:[%s715 + $0x125c] sm:$0xf]
                %812 = vst [vmem:[%s716 + $0x3ac] sm:$0xf] %v811
                %v813 = vld [vmem:[%s715 + $0x12c0] sm:$0xf]
                %814 = vst [vmem:[%s716 + $0x3c0] sm:$0xf] %v813
                %v815 = vld [vmem:[%s715 + $0x1324] sm:$0xf]
                %816 = vst [vmem:[%s716 + $0x3d4] sm:$0xf] %v815
                %v817 = vld [vmem:[%s715 + $0x1388] sm:$0xf]
                %818 = vst [vmem:[%s716 + $0x3e8] sm:$0xf] %v817
                %v819 = vld [vmem:[%s715 + $0x13ec] sm:$0xf]
                %820 = vst [vmem:[%s716 + $0x3fc] sm:$0xf] %v819
                %v821 = vld [vmem:[%s715 + $0x1450] sm:$0xf]
                %822 = vst [vmem:[%s716 + $0x410] sm:$0xf] %v821
                %v823 = vld [vmem:[%s715 + $0x14b4] sm:$0xf]
                %824 = vst [vmem:[%s716 + $0x424] sm:$0xf] %v823
                %v825 = vld [vmem:[%s715 + $0x1518] sm:$0xf]
                %826 = vst [vmem:[%s716 + $0x438] sm:$0xf] %v825
                %v827 = vld [vmem:[%s715 + $0x157c] sm:$0xf]
                %828 = vst [vmem:[%s716 + $0x44c] sm:$0xf] %v827
                %v829 = vld [vmem:[%s715 + $0x15e0] sm:$0xf]
                %830 = vst [vmem:[%s716 + $0x460] sm:$0xf] %v829
                %v831 = vld [vmem:[%s715 + $0x1644] sm:$0xf]
                %832 = vst [vmem:[%s716 + $0x474] sm:$0xf] %v831
                %v833 = vld [vmem:[%s715 + $0x16a8] sm:$0xf]
                %834 = vst [vmem:[%s716 + $0x488] sm:$0xf] %v833
                %v835 = vld [vmem:[%s715 + $0x170c] sm:$0xf]
                %836 = vst [vmem:[%s716 + $0x49c] sm:$0xf] %v835
                %v837 = vld [vmem:[%s715 + $0x1770] sm:$0xf]
                %838 = vst [vmem:[%s716 + $0x4b0] sm:$0xf] %v837
                %v839 = vld [vmem:[%s715 + $0x17d4] sm:$0xf]
                %840 = vst [vmem:[%s716 + $0x4c4] sm:$0xf] %v839
                %v841 = vld [vmem:[%s715 + $0x1838] sm:$0xf]
                %842 = vst [vmem:[%s716 + $0x4d8] sm:$0xf] %v841
                %v843 = vld [vmem:[%s715 + $0x189c] sm:$0xf]
                %844 = vst [vmem:[%s716 + $0x4ec] sm:$0xf] %v843
                %v845 = vld [vmem:[%s715 + $0x1900] sm:$0xf]
                %846 = vst [vmem:[%s716 + $0x500] sm:$0xf] %v845
                %v847 = vld [vmem:[%s715 + $0x1964] sm:$0xf]
                %848 = vst [vmem:[%s716 + $0x514] sm:$0xf] %v847
                %v849 = vld [vmem:[%s715 + $0x19c8] sm:$0xf]
                %850 = vst [vmem:[%s716 + $0x528] sm:$0xf] %v849
                %v851 = vld [vmem:[%s715 + $0x1a2c] sm:$0xf]
                %852 = vst [vmem:[%s716 + $0x53c] sm:$0xf] %v851
                %v853 = vld [vmem:[%s715 + $0x1a90] sm:$0xf]
                %854 = vst [vmem:[%s716 + $0x550] sm:$0xf] %v853
                %v855 = vld [vmem:[%s715 + $0x1af4] sm:$0xf]
                %856 = vst [vmem:[%s716 + $0x564] sm:$0xf] %v855
                %v857 = vld [vmem:[%s715 + $0x1b58] sm:$0xf]
                %858 = vst [vmem:[%s716 + $0x578] sm:$0xf] %v857
                %v859 = vld [vmem:[%s715 + $0x1bbc] sm:$0xf]
                %860 = vst [vmem:[%s716 + $0x58c] sm:$0xf] %v859
                %v861 = vld [vmem:[%s715 + $0x1c20] sm:$0xf]
                %862 = vst [vmem:[%s716 + $0x5a0] sm:$0xf] %v861
                %v863 = vld [vmem:[%s715 + $0x1c84] sm:$0xf]
                %864 = vst [vmem:[%s716 + $0x5b4] sm:$0xf] %v863
                %v865 = vld [vmem:[%s715 + $0x1ce8] sm:$0xf]
                %866 = vst [vmem:[%s716 + $0x5c8] sm:$0xf] %v865
                %v867 = vld [vmem:[%s715 + $0x1d4c] sm:$0xf]
                %868 = vst [vmem:[%s716 + $0x5dc] sm:$0xf] %v867
                %v869 = vld [vmem:[%s715 + $0x1db0] sm:$0xf]
                %870 = vst [vmem:[%s716 + $0x5f0] sm:$0xf] %v869
                %v871 = vld [vmem:[%s715 + $0x1e14] sm:$0xf]
                %872 = vst [vmem:[%s716 + $0x604] sm:$0xf] %v871
                %v873 = vld [vmem:[%s715 + $0x1e78] sm:$0xf]
                %874 = vst [vmem:[%s716 + $0x618] sm:$0xf] %v873
                %v875 = vld [vmem:[%s715 + $0x1edc] sm:$0xf]
                %876 = vst [vmem:[%s716 + $0x62c] sm:$0xf] %v875
                %v877 = vld [vmem:[%s715 + $0x1f40] sm:$0xf]
                %878 = vst [vmem:[%s716 + $0x640] sm:$0xf] %v877
                %v879 = vld [vmem:[%s715 + $0x1fa4] sm:$0xf]
                %880 = vst [vmem:[%s716 + $0x654] sm:$0xf] %v879
                %v881 = vld [vmem:[%s715 + $0x2008] sm:$0xf]
                %882 = vst [vmem:[%s716 + $0x668] sm:$0xf] %v881
                %v883 = vld [vmem:[%s715 + $0x206c] sm:$0xf]
                %884 = vst [vmem:[%s716 + $0x67c] sm:$0xf] %v883
                %v885 = vld [vmem:[%s715 + $0x20d0] sm:$0xf]
                %886 = vst [vmem:[%s716 + $0x690] sm:$0xf] %v885
                %v887 = vld [vmem:[%s715 + $0x2134] sm:$0xf]
                %888 = vst [vmem:[%s716 + $0x6a4] sm:$0xf] %v887
                %v889 = vld [vmem:[%s715 + $0x2198] sm:$0xf]
                %890 = vst [vmem:[%s716 + $0x6b8] sm:$0xf] %v889
                %v891 = vld [vmem:[%s715 + $0x21fc] sm:$0xf]
                %892 = vst [vmem:[%s716 + $0x6cc] sm:$0xf] %v891
                %v893 = vld [vmem:[%s715 + $0x2260] sm:$0xf]
                %894 = vst [vmem:[%s716 + $0x6e0] sm:$0xf] %v893
                %v895 = vld [vmem:[%s715 + $0x22c4] sm:$0xf]
                %896 = vst [vmem:[%s716 + $0x6f4] sm:$0xf] %v895
                %v897 = vld [vmem:[%s715 + $0x2328] sm:$0xf]
                %898 = vst [vmem:[%s716 + $0x708] sm:$0xf] %v897
                %v899 = vld [vmem:[%s715 + $0x238c] sm:$0xf]
                %900 = vst [vmem:[%s716 + $0x71c] sm:$0xf] %v899
                %v901 = vld [vmem:[%s715 + $0x23f0] sm:$0xf]
                %902 = vst [vmem:[%s716 + $0x730] sm:$0xf] %v901
                %v903 = vld [vmem:[%s715 + $0x2454] sm:$0xf]
                %904 = vst [vmem:[%s716 + $0x744] sm:$0xf] %v903
                %v905 = vld [vmem:[%s715 + $0x24b8] sm:$0xf]
                %906 = vst [vmem:[%s716 + $0x758] sm:$0xf] %v905
                %v907 = vld [vmem:[%s715 + $0x251c] sm:$0xf]
                %908 = vst [vmem:[%s716 + $0x76c] sm:$0xf] %v907
                %v909 = vld [vmem:[%s715 + $0x2580] sm:$0xf]
                %910 = vst [vmem:[%s716 + $0x780] sm:$0xf] %v909
                %v911 = vld [vmem:[%s715 + $0x25e4] sm:$0xf]
                %912 = vst [vmem:[%s716 + $0x794] sm:$0xf] %v911
                %v913 = vld [vmem:[%s715 + $0x2648] sm:$0xf]
                %914 = vst [vmem:[%s716 + $0x7a8] sm:$0xf] %v913
                %v915 = vld [vmem:[%s715 + $0x26ac] sm:$0xf]
                %916 = vst [vmem:[%s716 + $0x7bc] sm:$0xf] %v915
                %v917 = vld [vmem:[%s715 + $0x2710] sm:$0xf]
                %918 = vst [vmem:[%s716 + $0x7d0] sm:$0xf] %v917
                %v919 = vld [vmem:[%s715 + $0x2774] sm:$0xf]
                %920 = vst [vmem:[%s716 + $0x7e4] sm:$0xf] %v919
                %v921 = vld [vmem:[%s715 + $0x27d8] sm:$0xf]
                %922 = vst [vmem:[%s716 + $0x7f8] sm:$0xf] %v921
                %v923 = vld [vmem:[%s715 + $0x283c] sm:$0xf]
                %924 = vst [vmem:[%s716 + $0x80c] sm:$0xf] %v923
                %v925 = vld [vmem:[%s715 + $0x28a0] sm:$0xf]
                %926 = vst [vmem:[%s716 + $0x820] sm:$0xf] %v925
                %v927 = vld [vmem:[%s715 + $0x2904] sm:$0xf]
                %928 = vst [vmem:[%s716 + $0x834] sm:$0xf] %v927
                %v929 = vld [vmem:[%s715 + $0x2968] sm:$0xf]
                %930 = vst [vmem:[%s716 + $0x848] sm:$0xf] %v929
                %v931 = vld [vmem:[%s715 + $0x29cc] sm:$0xf]
                %932 = vst [vmem:[%s716 + $0x85c] sm:$0xf] %v931
                %v933 = vld [vmem:[%s715 + $0x2a30] sm:$0xf]
                %934 = vst [vmem:[%s716 + $0x870] sm:$0xf] %v933
                %v935 = vld [vmem:[%s715 + $0x2a94] sm:$0xf]
                %936 = vst [vmem:[%s716 + $0x884] sm:$0xf] %v935
                %v937 = vld [vmem:[%s715 + $0x2af8] sm:$0xf]
                %938 = vst [vmem:[%s716 + $0x898] sm:$0xf] %v937
                %v939 = vld [vmem:[%s715 + $0x2b5c] sm:$0xf]
                %940 = vst [vmem:[%s716 + $0x8ac] sm:$0xf] %v939
                %v941 = vld [vmem:[%s715 + $0x2bc0] sm:$0xf]
                %942 = vst [vmem:[%s716 + $0x8c0] sm:$0xf] %v941
                %v943 = vld [vmem:[%s715 + $0x2c24] sm:$0xf]
                %944 = vst [vmem:[%s716 + $0x8d4] sm:$0xf] %v943
                %v945 = vld [vmem:[%s715 + $0x2c88] sm:$0xf]
                %946 = vst [vmem:[%s716 + $0x8e8] sm:$0xf] %v945
                %v947 = vld [vmem:[%s715 + $0x2cec] sm:$0xf]
                %948 = vst [vmem:[%s716 + $0x8fc] sm:$0xf] %v947
                %v949 = vld [vmem:[%s715 + $0x2d50] sm:$0xf]
                %950 = vst [vmem:[%s716 + $0x910] sm:$0xf] %v949
                %v951 = vld [vmem:[%s715 + $0x2db4] sm:$0xf]
                %952 = vst [vmem:[%s716 + $0x924] sm:$0xf] %v951
                %v953 = vld [vmem:[%s715 + $0x2e18] sm:$0xf]
                %954 = vst [vmem:[%s716 + $0x938] sm:$0xf] %v953
                %v955 = vld [vmem:[%s715 + $0x2e7c] sm:$0xf]
                %956 = vst [vmem:[%s716 + $0x94c] sm:$0xf] %v955
                %v957 = vld [vmem:[%s715 + $0x2ee0] sm:$0xf]
                %958 = vst [vmem:[%s716 + $0x960] sm:$0xf] %v957
                %v959 = vld [vmem:[%s715 + $0x2f44] sm:$0xf]
                %960 = vst [vmem:[%s716 + $0x974] sm:$0xf] %v959
                %v961 = vld [vmem:[%s715 + $0x2fa8] sm:$0xf]
                %962 = vst [vmem:[%s716 + $0x988] sm:$0xf] %v961
                %v963 = vld [vmem:[%s715 + $0x300c] sm:$0xf]
                %964 = vst [vmem:[%s716 + $0x99c] sm:$0xf] %v963
                %v965 = vld [vmem:[%s715 + $0x3070] sm:$0xf]
                %966 = vst [vmem:[%s716 + $0x9b0] sm:$0xf] %v965
                %v967 = vld [vmem:[%s715 + $0x30d4] sm:$0xf]
                %968 = vst [vmem:[%s716 + $0x9c4] sm:$0xf] %v967
                %v969 = vld [vmem:[%s715 + $0x3138] sm:$0xf]
                %970 = vst [vmem:[%s716 + $0x9d8] sm:$0xf] %v969
                %v971 = vld [vmem:[%s715 + $0x319c] sm:$0xf]
                %972 = vst [vmem:[%s716 + $0x9ec] sm:$0xf] %v971
              $region44: #{lenet5_forward.12} parent=31 // loop_footer
                %s714 = sadd.s32 1, %s710
              $region45: #{lenet5_forward.12} parent=31 // loop_footer_branch
                %709 = sbr.rel target = $region41
              $region46: #{lenet5_forward.12} parent=31 // loop_exit
                _
            $region32: #{lenet5_forward.12} parent=27 // pred_fallthru
              _
          $region28: #{lenet5_forward.12} parent=23 // pred_fallthru
            _
          %973 = vnop
        $region24: #{lenet5_forward.12} parent=19 // pred_fallthru
          _
        // Predicated region
        $region47: #{lenet5_forward.12} parent=19 // pred_check
          %p974 = pneg %p104
        $region48: #{lenet5_forward.12} parent=19 // pred_check_branch
          %976 = sbr.rel (%p974) target = $region50
        $region49: #{lenet5_forward.12} parent=19 // pred_region
          %s977 = smul.u32 5, %s17
          %p978 = scmp.lt.s32.totalorder %s977, 24
          %s979 = scalar_select %p978, %s977, 24
          %s980 = scalar_lea.vmem %s2, %s979
          %s981 = smul.u32 5, %s17
        $region50: #{lenet5_forward.12} parent=19 // pred_fallthru
          _
      $region20: #{lenet5_forward.12} parent=5 // pred_fallthru
        _
      %p982 = scmp.le.s32.totalorder 1, %s9
      %p983 = scmp.lt.s32.totalorder %s9, 6
      %p984 = pnand %p982, %p983
      %p985 = pneg %p984
      // Predicated region
      $region51: #{lenet5_forward.12} parent=5 // pred_check
        _
      $region52: #{lenet5_forward.12} parent=5 // pred_check_branch
        %987 = sbr.rel (%p984) target = $region54
      $region53: #{lenet5_forward.12} parent=5 // pred_region
        %s988 = ssub.s32 %s9, 1
        %s989 = sand.u32 %s71, 1
        %s990 = sand.u32 %s71, 1
        %s991 = smul.addr %s990, 2560
        %s992 = scalar_lea.vmem [#allocation3], %s991
        // Predicated region
        $region55: #{lenet5_forward.12} parent=53 // pred_check
          %p993 = pneg %p84
        $region56: #{lenet5_forward.12} parent=53 // pred_check_branch
          %995 = sbr.rel (%p993) target = $region58
        $region57: #{lenet5_forward.12} parent=53 // pred_region
          _
        $region58: #{lenet5_forward.12} parent=53 // pred_fallthru
          _
        %s996 = smul.u32 8, %s21
        %p997 = scmp.lt.s32.totalorder %s19, 0
        %s998 = scalar_select %p997, %s19, 0
        %p999 = scmp.lt.s32.totalorder %s996, 7
        %s1000 = scalar_select %p999, %s996, 7
        %s1001 = smul.addr %s998, 8
        %s1002 = sadd.s32 %s1000, %s1001
        %s1003 = scalar_lea.vmem %s0, %s1002
        %p1004 = pneg %p56
        %p1005 = pneg %p53
        %s1006 = sand.u32 %s71, 1
        %s1007 = sand.u32 %s71, 1
        %s1008 = smul.addr %s1007, 2560
        %s1009 = scalar_lea.vmem [#allocation3], %s1008
        %p1010 = pneg %p84
        %p1011 = pneg %p81
        %s1012 = smul.u32 5, %s20
        %p1013 = scmp.lt.s32.totalorder %s1012, 24
        %s1014 = scalar_select %p1013, %s1012, 24
        %s1015 = scalar_lea.vmem %s2, %s1014
        %p1016 = pneg %p110
        %p1017 = pneg %p107
        %p1018 = pneg %p138
        %p1019 = pneg %p135
        %s1020 = smul.u32 5, %s20
        %p1021 = scmp.lt.s32.totalorder %s19, 0
        %s1022 = scalar_select %p1021, %s19, 0
        %p1023 = scmp.lt.s32.totalorder %s1020, 24
        %s1024 = scalar_select %p1023, %s1020, 24
        %s1025 = smul.addr %s1022, 25
        %s1026 = sadd.s32 %s1024, %s1025
        %s1027 = scalar_lea.vmem %s3, %s1026
        %s1028 = smul.u32 8, %s21
        %p1029 = scmp.lt.s32.totalorder %s19, 0
        %s1030 = scalar_select %p1029, %s19, 0
        %p1031 = scmp.lt.s32.totalorder %s1028, 7
        %s1032 = scalar_select %p1031, %s1028, 7
        %s1033 = smul.addr %s1030, 8
        %s1034 = sadd.s32 %s1032, %s1033
        %s1035 = scalar_lea.vmem %s0, %s1034
        %s1036 = smul.u32 8, %s21
        %s1037 = smul.u32 128, %s21
        %s1038 = smul.u32 5, %s20
        %s1039 = smul.u32 5, %s20
        %p1040 = scmp.lt.s32.totalorder %s1039, 24
        %s1041 = scalar_select %p1040, %s1039, 24
        %s1042 = scalar_lea.vmem %s2, %s1041
        %s1043 = smul.u32 5, %s20
        %s1044 = smul.u32 5, %s20
        %p1045 = scmp.lt.s32.totalorder %s19, 0
        %s1046 = scalar_select %p1045, %s19, 0
        %p1047 = scmp.lt.s32.totalorder %s1044, 24
        %s1048 = scalar_select %p1047, %s1044, 24
        %s1049 = smul.addr %s1046, 25
        %s1050 = sadd.s32 %s1048, %s1049
        %s1051 = scalar_lea.vmem %s3, %s1050
        %s1052 = smul.u32 5, %s20
        %p1054 = scmp.eq.s32.totalorder %s21, 0
        // Predicated region
        $region59: #{lenet5_forward.12} parent=53 // pred_check
          %p1055 = pneg %p1054
        $region60: #{lenet5_forward.12} parent=53 // pred_check_branch
          %1057 = sbr.rel (%p1055) target = $region62
        $region61: #{lenet5_forward.12} parent=53 // pred_region
          %1058 = vst [vmem:[#allocation2] sm:$0xff] 0.0
          %1059 = vst [vmem:[#allocation2 + $0x8] sm:$0x3] 0.0
        $region62: #{lenet5_forward.12} parent=53 // pred_fallthru
          _
        %v1060 = vld [vmem:[#allocation2] sm:$0xff]
        %v1061 = vld [vmem:[#allocation2 + $0x8] sm:$0x3]
        %v1062 = vld [vmem:[%s1035] sm:$0xff]
        %v1063 = vld [vmem:[%s992] sm:$0xff]
        %v1064 = vld [vmem:[%s992 + $0x8] sm:$0xff]
        %v1065 = vld [vmem:[%s992 + $0x10] sm:$0xf]
        %v1066 = vld [vmem:[%s992 + $0x14] sm:$0xff]
        %v1067 = vld [vmem:[%s992 + $0x1c] sm:$0xff]
        %v1068 = vld [vmem:[%s992 + $0x24] sm:$0xf]
        %v1069 = vld [vmem:[%s992 + $0x28] sm:$0xff]
        %v1070 = vld [vmem:[%s992 + $0x30] sm:$0xff]
        %v1071 = vld [vmem:[%s992 + $0x38] sm:$0xf]
        %v1072 = vld [vmem:[%s992 + $0x3c] sm:$0xff]
        %v1073 = vld [vmem:[%s992 + $0x44] sm:$0xff]
        %v1074 = vld [vmem:[%s992 + $0x4c] sm:$0xf]
        %v1075 = vld [vmem:[%s992 + $0x50] sm:$0xff]
        %v1076 = vld [vmem:[%s992 + $0x58] sm:$0xff]
        %v1077 = vld [vmem:[%s992 + $0x60] sm:$0xf]
        %v1078 = vld [vmem:[%s992 + $0x64] sm:$0xff]
        %v1079 = vld [vmem:[%s992 + $0x6c] sm:$0xff]
        %v1080 = vld [vmem:[%s992 + $0x74] sm:$0xf]
        %v1081 = vld [vmem:[%s992 + $0x78] sm:$0xff]
        %v1082 = vld [vmem:[%s992 + $0x80] sm:$0xff]
        %v1083 = vld [vmem:[%s992 + $0x88] sm:$0xf]
        %v1084 = vld [vmem:[%s992 + $0x8c] sm:$0xff]
        %v1085 = vld [vmem:[%s992 + $0x94] sm:$0xff]
        %v1086 = vld [vmem:[%s992 + $0x9c] sm:$0xf]
        %v1087 = vld [vmem:[%s992 + $0xa0] sm:$0xff]
        %v1088 = vld [vmem:[%s992 + $0xa8] sm:$0xff]
        %v1089 = vld [vmem:[%s992 + $0xb0] sm:$0xf]
        %v1090 = vld [vmem:[%s992 + $0xb4] sm:$0xff]
        %v1091 = vld [vmem:[%s992 + $0xbc] sm:$0xff]
        %v1092 = vld [vmem:[%s992 + $0xc4] sm:$0xf]
        %v1093 = vld [vmem:[%s992 + $0xc8] sm:$0xff]
        %v1094 = vld [vmem:[%s992 + $0xd0] sm:$0xff]
        %v1095 = vld [vmem:[%s992 + $0xd8] sm:$0xf]
        %v1096 = vld [vmem:[%s992 + $0xdc] sm:$0xff]
        %v1097 = vld [vmem:[%s992 + $0xe4] sm:$0xff]
        %v1098 = vld [vmem:[%s992 + $0xec] sm:$0xf]
        %v1099 = vld [vmem:[%s992 + $0xf0] sm:$0xff]
        %v1100 = vld [vmem:[%s992 + $0xf8] sm:$0xff]
        %v1101 = vld [vmem:[%s992 + $0x100] sm:$0xf]
        %v1102 = vld [vmem:[%s992 + $0x104] sm:$0xff]
        %v1103 = vld [vmem:[%s992 + $0x10c] sm:$0xff]
        %v1104 = vld [vmem:[%s992 + $0x114] sm:$0xf]
        %v1105 = vld [vmem:[%s992 + $0x118] sm:$0xff]
        %v1106 = vld [vmem:[%s992 + $0x120] sm:$0xff]
        %v1107 = vld [vmem:[%s992 + $0x128] sm:$0xf]
        %v1108 = vld [vmem:[%s992 + $0x12c] sm:$0xff]
        %v1109 = vld [vmem:[%s992 + $0x134] sm:$0xff]
        %v1110 = vld [vmem:[%s992 + $0x13c] sm:$0xf]
        %v1111 = vld [vmem:[%s992 + $0x140] sm:$0xff]
        %v1112 = vld [vmem:[%s992 + $0x148] sm:$0xff]
        %v1113 = vld [vmem:[%s992 + $0x150] sm:$0xf]
        %v1114 = vld [vmem:[%s992 + $0x154] sm:$0xff]
        %v1115 = vld [vmem:[%s992 + $0x15c] sm:$0xff]
        %v1116 = vld [vmem:[%s992 + $0x164] sm:$0xf]
        %v1117 = vld [vmem:[%s992 + $0x168] sm:$0xff]
        %v1118 = vld [vmem:[%s992 + $0x170] sm:$0xff]
        %v1119 = vld [vmem:[%s992 + $0x178] sm:$0xf]
        %v1120 = vld [vmem:[%s992 + $0x17c] sm:$0xff]
        %v1121 = vld [vmem:[%s992 + $0x184] sm:$0xff]
        %v1122 = vld [vmem:[%s992 + $0x18c] sm:$0xf]
        %v1123 = vld [vmem:[%s992 + $0x190] sm:$0xff]
        %v1124 = vld [vmem:[%s992 + $0x198] sm:$0xff]
        %v1125 = vld [vmem:[%s992 + $0x1a0] sm:$0xf]
        %v1126 = vld [vmem:[%s992 + $0x1a4] sm:$0xff]
        %v1127 = vld [vmem:[%s992 + $0x1ac] sm:$0xff]
        %v1128 = vld [vmem:[%s992 + $0x1b4] sm:$0xf]
        %v1129 = vld [vmem:[%s992 + $0x1b8] sm:$0xff]
        %v1130 = vld [vmem:[%s992 + $0x1c0] sm:$0xff]
        %v1131 = vld [vmem:[%s992 + $0x1c8] sm:$0xf]
        %v1132 = vld [vmem:[%s992 + $0x1cc] sm:$0xff]
        %v1133 = vld [vmem:[%s992 + $0x1d4] sm:$0xff]
        %v1134 = vld [vmem:[%s992 + $0x1dc] sm:$0xf]
        %v1135 = vld [vmem:[%s992 + $0x1e0] sm:$0xff]
        %v1136 = vld [vmem:[%s992 + $0x1e8] sm:$0xff]
        %v1137 = vld [vmem:[%s992 + $0x1f0] sm:$0xf]
        %v1138 = vld [vmem:[%s992 + $0x1f4] sm:$0xff]
        %v1139 = vld [vmem:[%s992 + $0x1fc] sm:$0xff]
        %v1140 = vld [vmem:[%s992 + $0x204] sm:$0xf]
        %v1141 = vld [vmem:[%s992 + $0x208] sm:$0xff]
        %v1142 = vld [vmem:[%s992 + $0x210] sm:$0xff]
        %v1143 = vld [vmem:[%s992 + $0x218] sm:$0xf]
        %v1144 = vld [vmem:[%s992 + $0x21c] sm:$0xff]
        %v1145 = vld [vmem:[%s992 + $0x224] sm:$0xff]
        %v1146 = vld [vmem:[%s992 + $0x22c] sm:$0xf]
        %v1147 = vld [vmem:[%s992 + $0x230] sm:$0xff]
        %v1148 = vld [vmem:[%s992 + $0x238] sm:$0xff]
        %v1149 = vld [vmem:[%s992 + $0x240] sm:$0xf]
        %v1150 = vld [vmem:[%s992 + $0x244] sm:$0xff]
        %v1151 = vld [vmem:[%s992 + $0x24c] sm:$0xff]
        %v1152 = vld [vmem:[%s992 + $0x254] sm:$0xf]
        %v1153 = vld [vmem:[%s992 + $0x258] sm:$0xff]
        %v1154 = vld [vmem:[%s992 + $0x260] sm:$0xff]
        %v1155 = vld [vmem:[%s992 + $0x268] sm:$0xf]
        %v1156 = vld [vmem:[%s992 + $0x26c] sm:$0xff]
        %v1157 = vld [vmem:[%s992 + $0x274] sm:$0xff]
        %v1158 = vld [vmem:[%s992 + $0x27c] sm:$0xf]
        %v1159 = vld [vmem:[%s992 + $0x280] sm:$0xff]
        %v1160 = vld [vmem:[%s992 + $0x288] sm:$0xff]
        %v1161 = vld [vmem:[%s992 + $0x290] sm:$0xf]
        %v1162 = vld [vmem:[%s992 + $0x294] sm:$0xff]
        %v1163 = vld [vmem:[%s992 + $0x29c] sm:$0xff]
        %v1164 = vld [vmem:[%s992 + $0x2a4] sm:$0xf]
        %v1165 = vld [vmem:[%s992 + $0x2a8] sm:$0xff]
        %v1166 = vld [vmem:[%s992 + $0x2b0] sm:$0xff]
        %v1167 = vld [vmem:[%s992 + $0x2b8] sm:$0xf]
        %v1168 = vld [vmem:[%s992 + $0x2bc] sm:$0xff]
        %v1169 = vld [vmem:[%s992 + $0x2c4] sm:$0xff]
        %v1170 = vld [vmem:[%s992 + $0x2cc] sm:$0xf]
        %v1171 = vld [vmem:[%s992 + $0x2d0] sm:$0xff]
        %v1172 = vld [vmem:[%s992 + $0x2d8] sm:$0xff]
        %v1173 = vld [vmem:[%s992 + $0x2e0] sm:$0xf]
        %v1174 = vld [vmem:[%s992 + $0x2e4] sm:$0xff]
        %v1175 = vld [vmem:[%s992 + $0x2ec] sm:$0xff]
        %v1176 = vld [vmem:[%s992 + $0x2f4] sm:$0xf]
        %v1177 = vld [vmem:[%s992 + $0x2f8] sm:$0xff]
        %v1178 = vld [vmem:[%s992 + $0x300] sm:$0xff]
        %v1179 = vld [vmem:[%s992 + $0x308] sm:$0xf]
        %v1180 = vld [vmem:[%s992 + $0x30c] sm:$0xff]
        %v1181 = vld [vmem:[%s992 + $0x314] sm:$0xff]
        %v1182 = vld [vmem:[%s992 + $0x31c] sm:$0xf]
        %v1183 = vld [vmem:[%s992 + $0x320] sm:$0xff]
        %v1184 = vld [vmem:[%s992 + $0x328] sm:$0xff]
        %v1185 = vld [vmem:[%s992 + $0x330] sm:$0xf]
        %v1186 = vld [vmem:[%s992 + $0x334] sm:$0xff]
        %v1187 = vld [vmem:[%s992 + $0x33c] sm:$0xff]
        %v1188 = vld [vmem:[%s992 + $0x344] sm:$0xf]
        %v1189 = vld [vmem:[%s992 + $0x348] sm:$0xff]
        %v1190 = vld [vmem:[%s992 + $0x350] sm:$0xff]
        %v1191 = vld [vmem:[%s992 + $0x358] sm:$0xf]
        %v1192 = vld [vmem:[%s992 + $0x35c] sm:$0xff]
        %v1193 = vld [vmem:[%s992 + $0x364] sm:$0xff]
        %v1194 = vld [vmem:[%s992 + $0x36c] sm:$0xf]
        %v1195 = vld [vmem:[%s992 + $0x370] sm:$0xff]
        %v1196 = vld [vmem:[%s992 + $0x378] sm:$0xff]
        %v1197 = vld [vmem:[%s992 + $0x380] sm:$0xf]
        %v1198 = vld [vmem:[%s992 + $0x384] sm:$0xff]
        %v1199 = vld [vmem:[%s992 + $0x38c] sm:$0xff]
        %v1200 = vld [vmem:[%s992 + $0x394] sm:$0xf]
        %v1201 = vld [vmem:[%s992 + $0x398] sm:$0xff]
        %v1202 = vld [vmem:[%s992 + $0x3a0] sm:$0xff]
        %v1203 = vld [vmem:[%s992 + $0x3a8] sm:$0xf]
        %v1204 = vld [vmem:[%s992 + $0x3ac] sm:$0xff]
        %v1205 = vld [vmem:[%s992 + $0x3b4] sm:$0xff]
        %v1206 = vld [vmem:[%s992 + $0x3bc] sm:$0xf]
        %v1207 = vld [vmem:[%s992 + $0x3c0] sm:$0xff]
        %v1208 = vld [vmem:[%s992 + $0x3c8] sm:$0xff]
        %v1209 = vld [vmem:[%s992 + $0x3d0] sm:$0xf]
        %v1210 = vld [vmem:[%s992 + $0x3d4] sm:$0xff]
        %v1211 = vld [vmem:[%s992 + $0x3dc] sm:$0xff]
        %v1212 = vld [vmem:[%s992 + $0x3e4] sm:$0xf]
        %v1213 = vld [vmem:[%s992 + $0x3e8] sm:$0xff]
        %v1214 = vld [vmem:[%s992 + $0x3f0] sm:$0xff]
        %v1215 = vld [vmem:[%s992 + $0x3f8] sm:$0xf]
        %v1216 = vld [vmem:[%s992 + $0x3fc] sm:$0xff]
        %v1217 = vld [vmem:[%s992 + $0x404] sm:$0xff]
        %v1218 = vld [vmem:[%s992 + $0x40c] sm:$0xf]
        %v1219 = vld [vmem:[%s992 + $0x410] sm:$0xff]
        %v1220 = vld [vmem:[%s992 + $0x418] sm:$0xff]
        %v1221 = vld [vmem:[%s992 + $0x420] sm:$0xf]
        %v1222 = vld [vmem:[%s992 + $0x424] sm:$0xff]
        %v1223 = vld [vmem:[%s992 + $0x42c] sm:$0xff]
        %v1224 = vld [vmem:[%s992 + $0x434] sm:$0xf]
        %v1225 = vld [vmem:[%s992 + $0x438] sm:$0xff]
        %v1226 = vld [vmem:[%s992 + $0x440] sm:$0xff]
        %v1227 = vld [vmem:[%s992 + $0x448] sm:$0xf]
        %v1228 = vld [vmem:[%s992 + $0x44c] sm:$0xff]
        %v1229 = vld [vmem:[%s992 + $0x454] sm:$0xff]
        %v1230 = vld [vmem:[%s992 + $0x45c] sm:$0xf]
        %v1231 = vld [vmem:[%s992 + $0x460] sm:$0xff]
        %v1232 = vld [vmem:[%s992 + $0x468] sm:$0xff]
        %v1233 = vld [vmem:[%s992 + $0x470] sm:$0xf]
        %v1234 = vld [vmem:[%s992 + $0x474] sm:$0xff]
        %v1235 = vld [vmem:[%s992 + $0x47c] sm:$0xff]
        %v1236 = vld [vmem:[%s992 + $0x484] sm:$0xf]
        %v1237 = vld [vmem:[%s992 + $0x488] sm:$0xff]
        %v1238 = vld [vmem:[%s992 + $0x490] sm:$0xff]
        %v1239 = vld [vmem:[%s992 + $0x498] sm:$0xf]
        %v1240 = vld [vmem:[%s992 + $0x49c] sm:$0xff]
        %v1241 = vld [vmem:[%s992 + $0x4a4] sm:$0xff]
        %v1242 = vld [vmem:[%s992 + $0x4ac] sm:$0xf]
        %v1243 = vld [vmem:[%s992 + $0x4b0] sm:$0xff]
        %v1244 = vld [vmem:[%s992 + $0x4b8] sm:$0xff]
        %v1245 = vld [vmem:[%s992 + $0x4c0] sm:$0xf]
        %v1246 = vld [vmem:[%s992 + $0x4c4] sm:$0xff]
        %v1247 = vld [vmem:[%s992 + $0x4cc] sm:$0xff]
        %v1248 = vld [vmem:[%s992 + $0x4d4] sm:$0xf]
        %v1249 = vld [vmem:[%s992 + $0x4d8] sm:$0xff]
        %v1250 = vld [vmem:[%s992 + $0x4e0] sm:$0xff]
        %v1251 = vld [vmem:[%s992 + $0x4e8] sm:$0xf]
        %v1252 = vld [vmem:[%s992 + $0x4ec] sm:$0xff]
        %v1253 = vld [vmem:[%s992 + $0x4f4] sm:$0xff]
        %v1254 = vld [vmem:[%s992 + $0x4fc] sm:$0xf]
        %v1255 = vld [vmem:[%s992 + $0x500] sm:$0xff]
        %v1256 = vld [vmem:[%s992 + $0x508] sm:$0xff]
        %v1257 = vld [vmem:[%s992 + $0x510] sm:$0xf]
        %v1258 = vld [vmem:[%s992 + $0x514] sm:$0xff]
        %v1259 = vld [vmem:[%s992 + $0x51c] sm:$0xff]
        %v1260 = vld [vmem:[%s992 + $0x524] sm:$0xf]
        %v1261 = vld [vmem:[%s992 + $0x528] sm:$0xff]
        %v1262 = vld [vmem:[%s992 + $0x530] sm:$0xff]
        %v1263 = vld [vmem:[%s992 + $0x538] sm:$0xf]
        %v1264 = vld [vmem:[%s992 + $0x53c] sm:$0xff]
        %v1265 = vld [vmem:[%s992 + $0x544] sm:$0xff]
        %v1266 = vld [vmem:[%s992 + $0x54c] sm:$0xf]
        %v1267 = vld [vmem:[%s992 + $0x550] sm:$0xff]
        %v1268 = vld [vmem:[%s992 + $0x558] sm:$0xff]
        %v1269 = vld [vmem:[%s992 + $0x560] sm:$0xf]
        %v1270 = vld [vmem:[%s992 + $0x564] sm:$0xff]
        %v1271 = vld [vmem:[%s992 + $0x56c] sm:$0xff]
        %v1272 = vld [vmem:[%s992 + $0x574] sm:$0xf]
        %v1273 = vld [vmem:[%s992 + $0x578] sm:$0xff]
        %v1274 = vld [vmem:[%s992 + $0x580] sm:$0xff]
        %v1275 = vld [vmem:[%s992 + $0x588] sm:$0xf]
        %v1276 = vld [vmem:[%s992 + $0x58c] sm:$0xff]
        %v1277 = vld [vmem:[%s992 + $0x594] sm:$0xff]
        %v1278 = vld [vmem:[%s992 + $0x59c] sm:$0xf]
        %v1279 = vld [vmem:[%s992 + $0x5a0] sm:$0xff]
        %v1280 = vld [vmem:[%s992 + $0x5a8] sm:$0xff]
        %v1281 = vld [vmem:[%s992 + $0x5b0] sm:$0xf]
        %v1282 = vld [vmem:[%s992 + $0x5b4] sm:$0xff]
        %v1283 = vld [vmem:[%s992 + $0x5bc] sm:$0xff]
        %v1284 = vld [vmem:[%s992 + $0x5c4] sm:$0xf]
        %v1285 = vld [vmem:[%s992 + $0x5c8] sm:$0xff]
        %v1286 = vld [vmem:[%s992 + $0x5d0] sm:$0xff]
        %v1287 = vld [vmem:[%s992 + $0x5d8] sm:$0xf]
        %v1288 = vld [vmem:[%s992 + $0x5dc] sm:$0xff]
        %v1289 = vld [vmem:[%s992 + $0x5e4] sm:$0xff]
        %v1290 = vld [vmem:[%s992 + $0x5ec] sm:$0xf]
        %v1291 = vld [vmem:[%s992 + $0x5f0] sm:$0xff]
        %v1292 = vld [vmem:[%s992 + $0x5f8] sm:$0xff]
        %v1293 = vld [vmem:[%s992 + $0x600] sm:$0xf]
        %v1294 = vld [vmem:[%s992 + $0x604] sm:$0xff]
        %v1295 = vld [vmem:[%s992 + $0x60c] sm:$0xff]
        %v1296 = vld [vmem:[%s992 + $0x614] sm:$0xf]
        %v1297 = vld [vmem:[%s992 + $0x618] sm:$0xff]
        %v1298 = vld [vmem:[%s992 + $0x620] sm:$0xff]
        %v1299 = vld [vmem:[%s992 + $0x628] sm:$0xf]
        %v1300 = vld [vmem:[%s992 + $0x62c] sm:$0xff]
        %v1301 = vld [vmem:[%s992 + $0x634] sm:$0xff]
        %v1302 = vld [vmem:[%s992 + $0x63c] sm:$0xf]
        %v1303 = vld [vmem:[%s992 + $0x640] sm:$0xff]
        %v1304 = vld [vmem:[%s992 + $0x648] sm:$0xff]
        %v1305 = vld [vmem:[%s992 + $0x650] sm:$0xf]
        %v1306 = vld [vmem:[%s992 + $0x654] sm:$0xff]
        %v1307 = vld [vmem:[%s992 + $0x65c] sm:$0xff]
        %v1308 = vld [vmem:[%s992 + $0x664] sm:$0xf]
        %v1309 = vld [vmem:[%s992 + $0x668] sm:$0xff]
        %v1310 = vld [vmem:[%s992 + $0x670] sm:$0xff]
        %v1311 = vld [vmem:[%s992 + $0x678] sm:$0xf]
        %v1312 = vld [vmem:[%s992 + $0x67c] sm:$0xff]
        %v1313 = vld [vmem:[%s992 + $0x684] sm:$0xff]
        %v1314 = vld [vmem:[%s992 + $0x68c] sm:$0xf]
        %v1315 = vld [vmem:[%s992 + $0x690] sm:$0xff]
        %v1316 = vld [vmem:[%s992 + $0x698] sm:$0xff]
        %v1317 = vld [vmem:[%s992 + $0x6a0] sm:$0xf]
        %v1318 = vld [vmem:[%s992 + $0x6a4] sm:$0xff]
        %v1319 = vld [vmem:[%s992 + $0x6ac] sm:$0xff]
        %v1320 = vld [vmem:[%s992 + $0x6b4] sm:$0xf]
        %v1321 = vld [vmem:[%s992 + $0x6b8] sm:$0xff]
        %v1322 = vld [vmem:[%s992 + $0x6c0] sm:$0xff]
        %v1323 = vld [vmem:[%s992 + $0x6c8] sm:$0xf]
        %v1324 = vld [vmem:[%s992 + $0x6cc] sm:$0xff]
        %v1325 = vld [vmem:[%s992 + $0x6d4] sm:$0xff]
        %v1326 = vld [vmem:[%s992 + $0x6dc] sm:$0xf]
        %v1327 = vld [vmem:[%s992 + $0x6e0] sm:$0xff]
        %v1328 = vld [vmem:[%s992 + $0x6e8] sm:$0xff]
        %v1329 = vld [vmem:[%s992 + $0x6f0] sm:$0xf]
        %v1330 = vld [vmem:[%s992 + $0x6f4] sm:$0xff]
        %v1331 = vld [vmem:[%s992 + $0x6fc] sm:$0xff]
        %v1332 = vld [vmem:[%s992 + $0x704] sm:$0xf]
        %v1333 = vld [vmem:[%s992 + $0x708] sm:$0xff]
        %v1334 = vld [vmem:[%s992 + $0x710] sm:$0xff]
        %v1335 = vld [vmem:[%s992 + $0x718] sm:$0xf]
        %v1336 = vld [vmem:[%s992 + $0x71c] sm:$0xff]
        %v1337 = vld [vmem:[%s992 + $0x724] sm:$0xff]
        %v1338 = vld [vmem:[%s992 + $0x72c] sm:$0xf]
        %v1339 = vld [vmem:[%s992 + $0x730] sm:$0xff]
        %v1340 = vld [vmem:[%s992 + $0x738] sm:$0xff]
        %v1341 = vld [vmem:[%s992 + $0x740] sm:$0xf]
        %v1342 = vld [vmem:[%s992 + $0x744] sm:$0xff]
        %v1343 = vld [vmem:[%s992 + $0x74c] sm:$0xff]
        %v1344 = vld [vmem:[%s992 + $0x754] sm:$0xf]
        %v1345 = vld [vmem:[%s992 + $0x758] sm:$0xff]
        %v1346 = vld [vmem:[%s992 + $0x760] sm:$0xff]
        %v1347 = vld [vmem:[%s992 + $0x768] sm:$0xf]
        %v1348 = vld [vmem:[%s992 + $0x76c] sm:$0xff]
        %v1349 = vld [vmem:[%s992 + $0x774] sm:$0xff]
        %v1350 = vld [vmem:[%s992 + $0x77c] sm:$0xf]
        %v1351 = vld [vmem:[%s992 + $0x780] sm:$0xff]
        %v1352 = vld [vmem:[%s992 + $0x788] sm:$0xff]
        %v1353 = vld [vmem:[%s992 + $0x790] sm:$0xf]
        %v1354 = vld [vmem:[%s992 + $0x794] sm:$0xff]
        %v1355 = vld [vmem:[%s992 + $0x79c] sm:$0xff]
        %v1356 = vld [vmem:[%s992 + $0x7a4] sm:$0xf]
        %v1357 = vld [vmem:[%s992 + $0x7a8] sm:$0xff]
        %v1358 = vld [vmem:[%s992 + $0x7b0] sm:$0xff]
        %v1359 = vld [vmem:[%s992 + $0x7b8] sm:$0xf]
        %v1360 = vld [vmem:[%s992 + $0x7bc] sm:$0xff]
        %v1361 = vld [vmem:[%s992 + $0x7c4] sm:$0xff]
        %v1362 = vld [vmem:[%s992 + $0x7cc] sm:$0xf]
        %v1363 = vld [vmem:[%s992 + $0x7d0] sm:$0xff]
        %v1364 = vld [vmem:[%s992 + $0x7d8] sm:$0xff]
        %v1365 = vld [vmem:[%s992 + $0x7e0] sm:$0xf]
        %v1366 = vld [vmem:[%s992 + $0x7e4] sm:$0xff]
        %v1367 = vld [vmem:[%s992 + $0x7ec] sm:$0xff]
        %v1368 = vld [vmem:[%s992 + $0x7f4] sm:$0xf]
        %v1369 = vld [vmem:[%s992 + $0x7f8] sm:$0xff]
        %v1370 = vld [vmem:[%s992 + $0x800] sm:$0xff]
        %v1371 = vld [vmem:[%s992 + $0x808] sm:$0xf]
        %v1372 = vld [vmem:[%s992 + $0x80c] sm:$0xff]
        %v1373 = vld [vmem:[%s992 + $0x814] sm:$0xff]
        %v1374 = vld [vmem:[%s992 + $0x81c] sm:$0xf]
        %v1375 = vld [vmem:[%s992 + $0x820] sm:$0xff]
        %v1376 = vld [vmem:[%s992 + $0x828] sm:$0xff]
        %v1377 = vld [vmem:[%s992 + $0x830] sm:$0xf]
        %v1378 = vld [vmem:[%s992 + $0x834] sm:$0xff]
        %v1379 = vld [vmem:[%s992 + $0x83c] sm:$0xff]
        %v1380 = vld [vmem:[%s992 + $0x844] sm:$0xf]
        %v1381 = vld [vmem:[%s992 + $0x848] sm:$0xff]
        %v1382 = vld [vmem:[%s992 + $0x850] sm:$0xff]
        %v1383 = vld [vmem:[%s992 + $0x858] sm:$0xf]
        %v1384 = vld [vmem:[%s992 + $0x85c] sm:$0xff]
        %v1385 = vld [vmem:[%s992 + $0x864] sm:$0xff]
        %v1386 = vld [vmem:[%s992 + $0x86c] sm:$0xf]
        %v1387 = vld [vmem:[%s992 + $0x870] sm:$0xff]
        %v1388 = vld [vmem:[%s992 + $0x878] sm:$0xff]
        %v1389 = vld [vmem:[%s992 + $0x880] sm:$0xf]
        %v1390 = vld [vmem:[%s992 + $0x884] sm:$0xff]
        %v1391 = vld [vmem:[%s992 + $0x88c] sm:$0xff]
        %v1392 = vld [vmem:[%s992 + $0x894] sm:$0xf]
        %v1393 = vld [vmem:[%s992 + $0x898] sm:$0xff]
        %v1394 = vld [vmem:[%s992 + $0x8a0] sm:$0xff]
        %v1395 = vld [vmem:[%s992 + $0x8a8] sm:$0xf]
        %v1396 = vld [vmem:[%s992 + $0x8ac] sm:$0xff]
        %v1397 = vld [vmem:[%s992 + $0x8b4] sm:$0xff]
        %v1398 = vld [vmem:[%s992 + $0x8bc] sm:$0xf]
        %v1399 = vld [vmem:[%s992 + $0x8c0] sm:$0xff]
        %v1400 = vld [vmem:[%s992 + $0x8c8] sm:$0xff]
        %v1401 = vld [vmem:[%s992 + $0x8d0] sm:$0xf]
        %v1402 = vld [vmem:[%s992 + $0x8d4] sm:$0xff]
        %v1403 = vld [vmem:[%s992 + $0x8dc] sm:$0xff]
        %v1404 = vld [vmem:[%s992 + $0x8e4] sm:$0xf]
        %v1405 = vld [vmem:[%s992 + $0x8e8] sm:$0xff]
        %v1406 = vld [vmem:[%s992 + $0x8f0] sm:$0xff]
        %v1407 = vld [vmem:[%s992 + $0x8f8] sm:$0xf]
        %v1408 = vld [vmem:[%s992 + $0x8fc] sm:$0xff]
        %v1409 = vld [vmem:[%s992 + $0x904] sm:$0xff]
        %v1410 = vld [vmem:[%s992 + $0x90c] sm:$0xf]
        %v1411 = vld [vmem:[%s992 + $0x910] sm:$0xff]
        %v1412 = vld [vmem:[%s992 + $0x918] sm:$0xff]
        %v1413 = vld [vmem:[%s992 + $0x920] sm:$0xf]
        %v1414 = vld [vmem:[%s992 + $0x924] sm:$0xff]
        %v1415 = vld [vmem:[%s992 + $0x92c] sm:$0xff]
        %v1416 = vld [vmem:[%s992 + $0x934] sm:$0xf]
        %v1417 = vld [vmem:[%s992 + $0x938] sm:$0xff]
        %v1418 = vld [vmem:[%s992 + $0x940] sm:$0xff]
        %v1419 = vld [vmem:[%s992 + $0x948] sm:$0xf]
        %v1420 = vld [vmem:[%s992 + $0x94c] sm:$0xff]
        %v1421 = vld [vmem:[%s992 + $0x954] sm:$0xff]
        %v1422 = vld [vmem:[%s992 + $0x95c] sm:$0xf]
        %v1423 = vld [vmem:[%s992 + $0x960] sm:$0xff]
        %v1424 = vld [vmem:[%s992 + $0x968] sm:$0xff]
        %v1425 = vld [vmem:[%s992 + $0x970] sm:$0xf]
        %v1426 = vld [vmem:[%s992 + $0x974] sm:$0xff]
        %v1427 = vld [vmem:[%s992 + $0x97c] sm:$0xff]
        %v1428 = vld [vmem:[%s992 + $0x984] sm:$0xf]
        %v1429 = vld [vmem:[%s992 + $0x988] sm:$0xff]
        %v1430 = vld [vmem:[%s992 + $0x990] sm:$0xff]
        %v1431 = vld [vmem:[%s992 + $0x998] sm:$0xf]
        %v1432 = vld [vmem:[%s992 + $0x99c] sm:$0xff]
        %v1433 = vld [vmem:[%s992 + $0x9a4] sm:$0xff]
        %v1434 = vld [vmem:[%s992 + $0x9ac] sm:$0xf]
        %v1435 = vld [vmem:[%s992 + $0x9b0] sm:$0xff]
        %v1436 = vld [vmem:[%s992 + $0x9b8] sm:$0xff]
        %v1437 = vld [vmem:[%s992 + $0x9c0] sm:$0xf]
        %v1438 = vld [vmem:[%s992 + $0x9c4] sm:$0xff]
        %v1439 = vld [vmem:[%s992 + $0x9cc] sm:$0xff]
        %v1440 = vld [vmem:[%s992 + $0x9d4] sm:$0xf]
        %v1441 = vld [vmem:[%s992 + $0x9d8] sm:$0xff]
        %v1442 = vld [vmem:[%s992 + $0x9e0] sm:$0xff]
        %v1443 = vld [vmem:[%s992 + $0x9e8] sm:$0xf]
        %v1444 = vld [vmem:[%s992 + $0x9ec] sm:$0xff]
        %v1445 = vld [vmem:[%s992 + $0x9f4] sm:$0xff]
        %v1446 = vld [vmem:[%s992 + $0x9fc] sm:$0xf]
        %v1448 = vcombine.high %v1062, %v1062
        %v1450 = vunpack.c.l.s4 1966171168
        %v1451 = vunpack.c.0.s8 %v1450
        %v1452 = vlaneseq
        %v1453 = vshrl.u32 %v1452, 7
        %v1454 = vsub.s32 %v1451, %v1453
        %v1455 = vrot.slane %v1062, %v1454
        %v1457 = vunpack.c.l.s4 1966171168
        %v1458 = vunpack.c.0.s8 %v1457
        %v1459 = vlaneseq
        %v1460 = vshrl.u32 %v1459, 7
        %v1461 = vsub.s32 %v1458, %v1460
        %v1462 = vrot.slane %v1448, %v1461
        %v1463 = vcombine.high %v1455, %v1455
        %v1464 = vcombine.high %v1462, %v1462
        %v1466 = vunpack.c.l.s4 1966171168
        %v1467 = vunpack.c.0.s8 %v1466
        %v1468 = vlaneseq
        %v1469 = vshrl.u32 %v1468, 7
        %v1470 = vsub.s32 %v1467, %v1469
        %v1471 = vrot.slane %v1455, %v1470
        %v1473 = vunpack.c.l.s4 1966171168
        %v1474 = vunpack.c.0.s8 %v1473
        %v1475 = vlaneseq
        %v1476 = vshrl.u32 %v1475, 7
        %v1477 = vsub.s32 %v1474, %v1476
        %v1478 = vrot.slane %v1462, %v1477
        %v1480 = vunpack.c.l.s4 1966171168
        %v1481 = vunpack.c.0.s8 %v1480
        %v1482 = vlaneseq
        %v1483 = vshrl.u32 %v1482, 7
        %v1484 = vsub.s32 %v1481, %v1483
        %v1485 = vrot.slane %v1463, %v1484
        %v1487 = vunpack.c.l.s4 1966171168
        %v1488 = vunpack.c.0.s8 %v1487
        %v1489 = vlaneseq
        %v1490 = vshrl.u32 %v1489, 7
        %v1491 = vsub.s32 %v1488, %v1490
        %v1492 = vrot.slane %v1464, %v1491
        %v1493 = vcombine.high %v1471, %v1471
        %v1494 = vcombine.high %v1478, %v1478
        %v1495 = vcombine.high %v1485, %v1485
        %v1496 = vcombine.high %v1492, %v1492
        %v1889 = vunpack.c.l.b16 %v1063
        %v1890 = vunpack.c.h.b16 %v1063
        %v1891 = vunpack.c.l.b16 %v1064
        %v1892 = vunpack.c.h.b16 %v1064
        %v1893 = vunpack.c.l.b16 %v1065
        %v1894 = vunpack.c.l.b16 %v1066
        %v1895 = vunpack.c.h.b16 %v1066
        %v1896 = vunpack.c.l.b16 %v1067
        %v1897 = vunpack.c.h.b16 %v1067
        %v1898 = vunpack.c.l.b16 %v1068
        %v1899 = vunpack.c.l.b16 %v1069
        %v1900 = vunpack.c.h.b16 %v1069
        %v1901 = vunpack.c.l.b16 %v1070
        %v1902 = vunpack.c.h.b16 %v1070
        %v1903 = vunpack.c.l.b16 %v1071
        %v1904 = vunpack.c.l.b16 %v1072
        %v1905 = vunpack.c.h.b16 %v1072
        %v1906 = vunpack.c.l.b16 %v1073
        %v1907 = vunpack.c.h.b16 %v1073
        %v1908 = vunpack.c.l.b16 %v1074
        %v1909 = vunpack.c.l.b16 %v1075
        %v1910 = vunpack.c.h.b16 %v1075
        %v1911 = vunpack.c.l.b16 %v1076
        %v1912 = vunpack.c.h.b16 %v1076
        %v1913 = vunpack.c.l.b16 %v1077
        %v1914 = vunpack.c.l.b16 %v1078
        %v1915 = vunpack.c.h.b16 %v1078
        %v1916 = vunpack.c.l.b16 %v1079
        %v1917 = vunpack.c.h.b16 %v1079
        %v1918 = vunpack.c.l.b16 %v1080
        %v1919 = vunpack.c.l.b16 %v1081
        %v1920 = vunpack.c.h.b16 %v1081
        %v1921 = vunpack.c.l.b16 %v1082
        %v1922 = vunpack.c.h.b16 %v1082
        %v1923 = vunpack.c.l.b16 %v1083
        %v1924 = vunpack.c.l.b16 %v1084
        %v1925 = vunpack.c.h.b16 %v1084
        %v1926 = vunpack.c.l.b16 %v1085
        %v1927 = vunpack.c.h.b16 %v1085
        %v1928 = vunpack.c.l.b16 %v1086
        %v1929 = vunpack.c.l.b16 %v1087
        %v1930 = vunpack.c.h.b16 %v1087
        %v1931 = vunpack.c.l.b16 %v1088
        %v1932 = vunpack.c.h.b16 %v1088
        %v1933 = vunpack.c.l.b16 %v1089
        %v1934 = vunpack.c.l.b16 %v1090
        %v1935 = vunpack.c.h.b16 %v1090
        %v1936 = vunpack.c.l.b16 %v1091
        %v1937 = vunpack.c.h.b16 %v1091
        %v1938 = vunpack.c.l.b16 %v1092
        %v1939 = vunpack.c.l.b16 %v1093
        %v1940 = vunpack.c.h.b16 %v1093
        %v1941 = vunpack.c.l.b16 %v1094
        %v1942 = vunpack.c.h.b16 %v1094
        %v1943 = vunpack.c.l.b16 %v1095
        %v1944 = vunpack.c.l.b16 %v1096
        %v1945 = vunpack.c.h.b16 %v1096
        %v1946 = vunpack.c.l.b16 %v1097
        %v1947 = vunpack.c.h.b16 %v1097
        %v1948 = vunpack.c.l.b16 %v1098
        %v1949 = vunpack.c.l.b16 %v1099
        %v1950 = vunpack.c.h.b16 %v1099
        %v1951 = vunpack.c.l.b16 %v1100
        %v1952 = vunpack.c.h.b16 %v1100
        %v1953 = vunpack.c.l.b16 %v1101
        %v1954 = vunpack.c.l.b16 %v1102
        %v1955 = vunpack.c.h.b16 %v1102
        %v1956 = vunpack.c.l.b16 %v1103
        %v1957 = vunpack.c.h.b16 %v1103
        %v1958 = vunpack.c.l.b16 %v1104
        %v1959 = vunpack.c.l.b16 %v1105
        %v1960 = vunpack.c.h.b16 %v1105
        %v1961 = vunpack.c.l.b16 %v1106
        %v1962 = vunpack.c.h.b16 %v1106
        %v1963 = vunpack.c.l.b16 %v1107
        %v1964 = vunpack.c.l.b16 %v1108
        %v1965 = vunpack.c.h.b16 %v1108
        %v1966 = vunpack.c.l.b16 %v1109
        %v1967 = vunpack.c.h.b16 %v1109
        %v1968 = vunpack.c.l.b16 %v1110
        %v1969 = vunpack.c.l.b16 %v1111
        %v1970 = vunpack.c.h.b16 %v1111
        %v1971 = vunpack.c.l.b16 %v1112
        %v1972 = vunpack.c.h.b16 %v1112
        %v1973 = vunpack.c.l.b16 %v1113
        %v1974 = vunpack.c.l.b16 %v1114
        %v1975 = vunpack.c.h.b16 %v1114
        %v1976 = vunpack.c.l.b16 %v1115
        %v1977 = vunpack.c.h.b16 %v1115
        %v1978 = vunpack.c.l.b16 %v1116
        %v1979 = vunpack.c.l.b16 %v1117
        %v1980 = vunpack.c.h.b16 %v1117
        %v1981 = vunpack.c.l.b16 %v1118
        %v1982 = vunpack.c.h.b16 %v1118
        %v1983 = vunpack.c.l.b16 %v1119
        %v1984 = vunpack.c.l.b16 %v1120
        %v1985 = vunpack.c.h.b16 %v1120
        %v1986 = vunpack.c.l.b16 %v1121
        %v1987 = vunpack.c.h.b16 %v1121
        %v1988 = vunpack.c.l.b16 %v1122
        %v1989 = vunpack.c.l.b16 %v1123
        %v1990 = vunpack.c.h.b16 %v1123
        %v1991 = vunpack.c.l.b16 %v1124
        %v1992 = vunpack.c.h.b16 %v1124
        %v1993 = vunpack.c.l.b16 %v1125
        %v1994 = vunpack.c.l.b16 %v1126
        %v1995 = vunpack.c.h.b16 %v1126
        %v1996 = vunpack.c.l.b16 %v1127
        %v1997 = vunpack.c.h.b16 %v1127
        %v1998 = vunpack.c.l.b16 %v1128
        %v1999 = vunpack.c.l.b16 %v1129
        %v2000 = vunpack.c.h.b16 %v1129
        %v2001 = vunpack.c.l.b16 %v1130
        %v2002 = vunpack.c.h.b16 %v1130
        %v2003 = vunpack.c.l.b16 %v1131
        %v2004 = vunpack.c.l.b16 %v1132
        %v2005 = vunpack.c.h.b16 %v1132
        %v2006 = vunpack.c.l.b16 %v1133
        %v2007 = vunpack.c.h.b16 %v1133
        %v2008 = vunpack.c.l.b16 %v1134
        %v2009 = vunpack.c.l.b16 %v1135
        %v2010 = vunpack.c.h.b16 %v1135
        %v2011 = vunpack.c.l.b16 %v1136
        %v2012 = vunpack.c.h.b16 %v1136
        %v2013 = vunpack.c.l.b16 %v1137
        %v2014 = vunpack.c.l.b16 %v1138
        %v2015 = vunpack.c.h.b16 %v1138
        %v2016 = vunpack.c.l.b16 %v1139
        %v2017 = vunpack.c.h.b16 %v1139
        %v2018 = vunpack.c.l.b16 %v1140
        %v2019 = vunpack.c.l.b16 %v1141
        %v2020 = vunpack.c.h.b16 %v1141
        %v2021 = vunpack.c.l.b16 %v1142
        %v2022 = vunpack.c.h.b16 %v1142
        %v2023 = vunpack.c.l.b16 %v1143
        %v2024 = vunpack.c.l.b16 %v1144
        %v2025 = vunpack.c.h.b16 %v1144
        %v2026 = vunpack.c.l.b16 %v1145
        %v2027 = vunpack.c.h.b16 %v1145
        %v2028 = vunpack.c.l.b16 %v1146
        %v2029 = vunpack.c.l.b16 %v1147
        %v2030 = vunpack.c.h.b16 %v1147
        %v2031 = vunpack.c.l.b16 %v1148
        %v2032 = vunpack.c.h.b16 %v1148
        %v2033 = vunpack.c.l.b16 %v1149
        %v2034 = vunpack.c.l.b16 %v1150
        %v2035 = vunpack.c.h.b16 %v1150
        %v2036 = vunpack.c.l.b16 %v1151
        %v2037 = vunpack.c.h.b16 %v1151
        %v2038 = vunpack.c.l.b16 %v1152
        %v2039 = vunpack.c.l.b16 %v1153
        %v2040 = vunpack.c.h.b16 %v1153
        %v2041 = vunpack.c.l.b16 %v1154
        %v2042 = vunpack.c.h.b16 %v1154
        %v2043 = vunpack.c.l.b16 %v1155
        %v2044 = vunpack.c.l.b16 %v1156
        %v2045 = vunpack.c.h.b16 %v1156
        %v2046 = vunpack.c.l.b16 %v1157
        %v2047 = vunpack.c.h.b16 %v1157
        %v2048 = vunpack.c.l.b16 %v1158
        %v2049 = vunpack.c.l.b16 %v1159
        %v2050 = vunpack.c.h.b16 %v1159
        %v2051 = vunpack.c.l.b16 %v1160
        %v2052 = vunpack.c.h.b16 %v1160
        %v2053 = vunpack.c.l.b16 %v1161
        %v2054 = vunpack.c.l.b16 %v1162
        %v2055 = vunpack.c.h.b16 %v1162
        %v2056 = vunpack.c.l.b16 %v1163
        %v2057 = vunpack.c.h.b16 %v1163
        %v2058 = vunpack.c.l.b16 %v1164
        %v2059 = vunpack.c.l.b16 %v1165
        %v2060 = vunpack.c.h.b16 %v1165
        %v2061 = vunpack.c.l.b16 %v1166
        %v2062 = vunpack.c.h.b16 %v1166
        %v2063 = vunpack.c.l.b16 %v1167
        %v2064 = vunpack.c.l.b16 %v1168
        %v2065 = vunpack.c.h.b16 %v1168
        %v2066 = vunpack.c.l.b16 %v1169
        %v2067 = vunpack.c.h.b16 %v1169
        %v2068 = vunpack.c.l.b16 %v1170
        %v2069 = vunpack.c.l.b16 %v1171
        %v2070 = vunpack.c.h.b16 %v1171
        %v2071 = vunpack.c.l.b16 %v1172
        %v2072 = vunpack.c.h.b16 %v1172
        %v2073 = vunpack.c.l.b16 %v1173
        %v2074 = vunpack.c.l.b16 %v1174
        %v2075 = vunpack.c.h.b16 %v1174
        %v2076 = vunpack.c.l.b16 %v1175
        %v2077 = vunpack.c.h.b16 %v1175
        %v2078 = vunpack.c.l.b16 %v1176
        %v2079 = vunpack.c.l.b16 %v1177
        %v2080 = vunpack.c.h.b16 %v1177
        %v2081 = vunpack.c.l.b16 %v1178
        %v2082 = vunpack.c.h.b16 %v1178
        %v2083 = vunpack.c.l.b16 %v1179
        %v2084 = vunpack.c.l.b16 %v1180
        %v2085 = vunpack.c.h.b16 %v1180
        %v2086 = vunpack.c.l.b16 %v1181
        %v2087 = vunpack.c.h.b16 %v1181
        %v2088 = vunpack.c.l.b16 %v1182
        %v2089 = vunpack.c.l.b16 %v1183
        %v2090 = vunpack.c.h.b16 %v1183
        %v2091 = vunpack.c.l.b16 %v1184
        %v2092 = vunpack.c.h.b16 %v1184
        %v2093 = vunpack.c.l.b16 %v1185
        %v2094 = vunpack.c.l.b16 %v1186
        %v2095 = vunpack.c.h.b16 %v1186
        %v2096 = vunpack.c.l.b16 %v1187
        %v2097 = vunpack.c.h.b16 %v1187
        %v2098 = vunpack.c.l.b16 %v1188
        %v2099 = vunpack.c.l.b16 %v1189
        %v2100 = vunpack.c.h.b16 %v1189
        %v2101 = vunpack.c.l.b16 %v1190
        %v2102 = vunpack.c.h.b16 %v1190
        %v2103 = vunpack.c.l.b16 %v1191
        %v2104 = vunpack.c.l.b16 %v1192
        %v2105 = vunpack.c.h.b16 %v1192
        %v2106 = vunpack.c.l.b16 %v1193
        %v2107 = vunpack.c.h.b16 %v1193
        %v2108 = vunpack.c.l.b16 %v1194
        %v2109 = vunpack.c.l.b16 %v1195
        %v2110 = vunpack.c.h.b16 %v1195
        %v2111 = vunpack.c.l.b16 %v1196
        %v2112 = vunpack.c.h.b16 %v1196
        %v2113 = vunpack.c.l.b16 %v1197
        %v2114 = vunpack.c.l.b16 %v1198
        %v2115 = vunpack.c.h.b16 %v1198
        %v2116 = vunpack.c.l.b16 %v1199
        %v2117 = vunpack.c.h.b16 %v1199
        %v2118 = vunpack.c.l.b16 %v1200
        %v2119 = vunpack.c.l.b16 %v1201
        %v2120 = vunpack.c.h.b16 %v1201
        %v2121 = vunpack.c.l.b16 %v1202
        %v2122 = vunpack.c.h.b16 %v1202
        %v2123 = vunpack.c.l.b16 %v1203
        %v2124 = vunpack.c.l.b16 %v1204
        %v2125 = vunpack.c.h.b16 %v1204
        %v2126 = vunpack.c.l.b16 %v1205
        %v2127 = vunpack.c.h.b16 %v1205
        %v2128 = vunpack.c.l.b16 %v1206
        %v2129 = vunpack.c.l.b16 %v1207
        %v2130 = vunpack.c.h.b16 %v1207
        %v2131 = vunpack.c.l.b16 %v1208
        %v2132 = vunpack.c.h.b16 %v1208
        %v2133 = vunpack.c.l.b16 %v1209
        %v2134 = vunpack.c.l.b16 %v1210
        %v2135 = vunpack.c.h.b16 %v1210
        %v2136 = vunpack.c.l.b16 %v1211
        %v2137 = vunpack.c.h.b16 %v1211
        %v2138 = vunpack.c.l.b16 %v1212
        %v2139 = vunpack.c.l.b16 %v1213
        %v2140 = vunpack.c.h.b16 %v1213
        %v2141 = vunpack.c.l.b16 %v1214
        %v2142 = vunpack.c.h.b16 %v1214
        %v2143 = vunpack.c.l.b16 %v1215
        %v2144 = vunpack.c.l.b16 %v1216
        %v2145 = vunpack.c.h.b16 %v1216
        %v2146 = vunpack.c.l.b16 %v1217
        %v2147 = vunpack.c.h.b16 %v1217
        %v2148 = vunpack.c.l.b16 %v1218
        %v2149 = vunpack.c.l.b16 %v1219
        %v2150 = vunpack.c.h.b16 %v1219
        %v2151 = vunpack.c.l.b16 %v1220
        %v2152 = vunpack.c.h.b16 %v1220
        %v2153 = vunpack.c.l.b16 %v1221
        %v2154 = vunpack.c.l.b16 %v1222
        %v2155 = vunpack.c.h.b16 %v1222
        %v2156 = vunpack.c.l.b16 %v1223
        %v2157 = vunpack.c.h.b16 %v1223
        %v2158 = vunpack.c.l.b16 %v1224
        %v2159 = vunpack.c.l.b16 %v1225
        %v2160 = vunpack.c.h.b16 %v1225
        %v2161 = vunpack.c.l.b16 %v1226
        %v2162 = vunpack.c.h.b16 %v1226
        %v2163 = vunpack.c.l.b16 %v1227
        %v2164 = vunpack.c.l.b16 %v1228
        %v2165 = vunpack.c.h.b16 %v1228
        %v2166 = vunpack.c.l.b16 %v1229
        %v2167 = vunpack.c.h.b16 %v1229
        %v2168 = vunpack.c.l.b16 %v1230
        %v2169 = vunpack.c.l.b16 %v1231
        %v2170 = vunpack.c.h.b16 %v1231
        %v2171 = vunpack.c.l.b16 %v1232
        %v2172 = vunpack.c.h.b16 %v1232
        %v2173 = vunpack.c.l.b16 %v1233
        %v2174 = vunpack.c.l.b16 %v1234
        %v2175 = vunpack.c.h.b16 %v1234
        %v2176 = vunpack.c.l.b16 %v1235
        %v2177 = vunpack.c.h.b16 %v1235
        %v2178 = vunpack.c.l.b16 %v1236
        %v2179 = vunpack.c.l.b16 %v1237
        %v2180 = vunpack.c.h.b16 %v1237
        %v2181 = vunpack.c.l.b16 %v1238
        %v2182 = vunpack.c.h.b16 %v1238
        %v2183 = vunpack.c.l.b16 %v1239
        %v2184 = vunpack.c.l.b16 %v1240
        %v2185 = vunpack.c.h.b16 %v1240
        %v2186 = vunpack.c.l.b16 %v1241
        %v2187 = vunpack.c.h.b16 %v1241
        %v2188 = vunpack.c.l.b16 %v1242
        %v2189 = vunpack.c.l.b16 %v1243
        %v2190 = vunpack.c.h.b16 %v1243
        %v2191 = vunpack.c.l.b16 %v1244
        %v2192 = vunpack.c.h.b16 %v1244
        %v2193 = vunpack.c.l.b16 %v1245
        %v2194 = vunpack.c.l.b16 %v1246
        %v2195 = vunpack.c.h.b16 %v1246
        %v2196 = vunpack.c.l.b16 %v1247
        %v2197 = vunpack.c.h.b16 %v1247
        %v2198 = vunpack.c.l.b16 %v1248
        %v2199 = vunpack.c.l.b16 %v1249
        %v2200 = vunpack.c.h.b16 %v1249
        %v2201 = vunpack.c.l.b16 %v1250
        %v2202 = vunpack.c.h.b16 %v1250
        %v2203 = vunpack.c.l.b16 %v1251
        %v2204 = vunpack.c.l.b16 %v1252
        %v2205 = vunpack.c.h.b16 %v1252
        %v2206 = vunpack.c.l.b16 %v1253
        %v2207 = vunpack.c.h.b16 %v1253
        %v2208 = vunpack.c.l.b16 %v1254
        %v2209 = vunpack.c.l.b16 %v1255
        %v2210 = vunpack.c.h.b16 %v1255
        %v2211 = vunpack.c.l.b16 %v1256
        %v2212 = vunpack.c.h.b16 %v1256
        %v2213 = vunpack.c.l.b16 %v1257
        %v2214 = vunpack.c.l.b16 %v1258
        %v2215 = vunpack.c.h.b16 %v1258
        %v2216 = vunpack.c.l.b16 %v1259
        %v2217 = vunpack.c.h.b16 %v1259
        %v2218 = vunpack.c.l.b16 %v1260
        %v2219 = vunpack.c.l.b16 %v1261
        %v2220 = vunpack.c.h.b16 %v1261
        %v2221 = vunpack.c.l.b16 %v1262
        %v2222 = vunpack.c.h.b16 %v1262
        %v2223 = vunpack.c.l.b16 %v1263
        %v2224 = vunpack.c.l.b16 %v1264
        %v2225 = vunpack.c.h.b16 %v1264
        %v2226 = vunpack.c.l.b16 %v1265
        %v2227 = vunpack.c.h.b16 %v1265
        %v2228 = vunpack.c.l.b16 %v1266
        %v2229 = vunpack.c.l.b16 %v1267
        %v2230 = vunpack.c.h.b16 %v1267
        %v2231 = vunpack.c.l.b16 %v1268
        %v2232 = vunpack.c.h.b16 %v1268
        %v2233 = vunpack.c.l.b16 %v1269
        %v2234 = vunpack.c.l.b16 %v1270
        %v2235 = vunpack.c.h.b16 %v1270
        %v2236 = vunpack.c.l.b16 %v1271
        %v2237 = vunpack.c.h.b16 %v1271
        %v2238 = vunpack.c.l.b16 %v1272
        %v2239 = vunpack.c.l.b16 %v1273
        %v2240 = vunpack.c.h.b16 %v1273
        %v2241 = vunpack.c.l.b16 %v1274
        %v2242 = vunpack.c.h.b16 %v1274
        %v2243 = vunpack.c.l.b16 %v1275
        %v2244 = vunpack.c.l.b16 %v1276
        %v2245 = vunpack.c.h.b16 %v1276
        %v2246 = vunpack.c.l.b16 %v1277
        %v2247 = vunpack.c.h.b16 %v1277
        %v2248 = vunpack.c.l.b16 %v1278
        %v2249 = vunpack.c.l.b16 %v1279
        %v2250 = vunpack.c.h.b16 %v1279
        %v2251 = vunpack.c.l.b16 %v1280
        %v2252 = vunpack.c.h.b16 %v1280
        %v2253 = vunpack.c.l.b16 %v1281
        %v2254 = vunpack.c.l.b16 %v1282
        %v2255 = vunpack.c.h.b16 %v1282
        %v2256 = vunpack.c.l.b16 %v1283
        %v2257 = vunpack.c.h.b16 %v1283
        %v2258 = vunpack.c.l.b16 %v1284
        %v2259 = vunpack.c.l.b16 %v1285
        %v2260 = vunpack.c.h.b16 %v1285
        %v2261 = vunpack.c.l.b16 %v1286
        %v2262 = vunpack.c.h.b16 %v1286
        %v2263 = vunpack.c.l.b16 %v1287
        %v2264 = vunpack.c.l.b16 %v1288
        %v2265 = vunpack.c.h.b16 %v1288
        %v2266 = vunpack.c.l.b16 %v1289
        %v2267 = vunpack.c.h.b16 %v1289
        %v2268 = vunpack.c.l.b16 %v1290
        %v2269 = vunpack.c.l.b16 %v1291
        %v2270 = vunpack.c.h.b16 %v1291
        %v2271 = vunpack.c.l.b16 %v1292
        %v2272 = vunpack.c.h.b16 %v1292
        %v2273 = vunpack.c.l.b16 %v1293
        %v2274 = vunpack.c.l.b16 %v1294
        %v2275 = vunpack.c.h.b16 %v1294
        %v2276 = vunpack.c.l.b16 %v1295
        %v2277 = vunpack.c.h.b16 %v1295
        %v2278 = vunpack.c.l.b16 %v1296
        %v2279 = vunpack.c.l.b16 %v1297
        %v2280 = vunpack.c.h.b16 %v1297
        %v2281 = vunpack.c.l.b16 %v1298
        %v2282 = vunpack.c.h.b16 %v1298
        %v2283 = vunpack.c.l.b16 %v1299
        %v2284 = vunpack.c.l.b16 %v1300
        %v2285 = vunpack.c.h.b16 %v1300
        %v2286 = vunpack.c.l.b16 %v1301
        %v2287 = vunpack.c.h.b16 %v1301
        %v2288 = vunpack.c.l.b16 %v1302
        %v2289 = vunpack.c.l.b16 %v1303
        %v2290 = vunpack.c.h.b16 %v1303
        %v2291 = vunpack.c.l.b16 %v1304
        %v2292 = vunpack.c.h.b16 %v1304
        %v2293 = vunpack.c.l.b16 %v1305
        %v2294 = vunpack.c.l.b16 %v1306
        %v2295 = vunpack.c.h.b16 %v1306
        %v2296 = vunpack.c.l.b16 %v1307
        %v2297 = vunpack.c.h.b16 %v1307
        %v2298 = vunpack.c.l.b16 %v1308
        %v2299 = vunpack.c.l.b16 %v1309
        %v2300 = vunpack.c.h.b16 %v1309
        %v2301 = vunpack.c.l.b16 %v1310
        %v2302 = vunpack.c.h.b16 %v1310
        %v2303 = vunpack.c.l.b16 %v1311
        %v2304 = vunpack.c.l.b16 %v1312
        %v2305 = vunpack.c.h.b16 %v1312
        %v2306 = vunpack.c.l.b16 %v1313
        %v2307 = vunpack.c.h.b16 %v1313
        %v2308 = vunpack.c.l.b16 %v1314
        %v2309 = vunpack.c.l.b16 %v1315
        %v2310 = vunpack.c.h.b16 %v1315
        %v2311 = vunpack.c.l.b16 %v1316
        %v2312 = vunpack.c.h.b16 %v1316
        %v2313 = vunpack.c.l.b16 %v1317
        %v2314 = vunpack.c.l.b16 %v1318
        %v2315 = vunpack.c.h.b16 %v1318
        %v2316 = vunpack.c.l.b16 %v1319
        %v2317 = vunpack.c.h.b16 %v1319
        %v2318 = vunpack.c.l.b16 %v1320
        %v2319 = vunpack.c.l.b16 %v1321
        %v2320 = vunpack.c.h.b16 %v1321
        %v2321 = vunpack.c.l.b16 %v1322
        %v2322 = vunpack.c.h.b16 %v1322
        %v2323 = vunpack.c.l.b16 %v1323
        %v2324 = vunpack.c.l.b16 %v1324
        %v2325 = vunpack.c.h.b16 %v1324
        %v2326 = vunpack.c.l.b16 %v1325
        %v2327 = vunpack.c.h.b16 %v1325
        %v2328 = vunpack.c.l.b16 %v1326
        %v2329 = vunpack.c.l.b16 %v1327
        %v2330 = vunpack.c.h.b16 %v1327
        %v2331 = vunpack.c.l.b16 %v1328
        %v2332 = vunpack.c.h.b16 %v1328
        %v2333 = vunpack.c.l.b16 %v1329
        %v2334 = vunpack.c.l.b16 %v1330
        %v2335 = vunpack.c.h.b16 %v1330
        %v2336 = vunpack.c.l.b16 %v1331
        %v2337 = vunpack.c.h.b16 %v1331
        %v2338 = vunpack.c.l.b16 %v1332
        %v2339 = vunpack.c.l.b16 %v1333
        %v2340 = vunpack.c.h.b16 %v1333
        %v2341 = vunpack.c.l.b16 %v1334
        %v2342 = vunpack.c.h.b16 %v1334
        %v2343 = vunpack.c.l.b16 %v1335
        %v2344 = vunpack.c.l.b16 %v1336
        %v2345 = vunpack.c.h.b16 %v1336
        %v2346 = vunpack.c.l.b16 %v1337
        %v2347 = vunpack.c.h.b16 %v1337
        %v2348 = vunpack.c.l.b16 %v1338
        %v2349 = vunpack.c.l.b16 %v1339
        %v2350 = vunpack.c.h.b16 %v1339
        %v2351 = vunpack.c.l.b16 %v1340
        %v2352 = vunpack.c.h.b16 %v1340
        %v2353 = vunpack.c.l.b16 %v1341
        %v2354 = vunpack.c.l.b16 %v1342
        %v2355 = vunpack.c.h.b16 %v1342
        %v2356 = vunpack.c.l.b16 %v1343
        %v2357 = vunpack.c.h.b16 %v1343
        %v2358 = vunpack.c.l.b16 %v1344
        %v2359 = vunpack.c.l.b16 %v1345
        %v2360 = vunpack.c.h.b16 %v1345
        %v2361 = vunpack.c.l.b16 %v1346
        %v2362 = vunpack.c.h.b16 %v1346
        %v2363 = vunpack.c.l.b16 %v1347
        %v2364 = vunpack.c.l.b16 %v1348
        %v2365 = vunpack.c.h.b16 %v1348
        %v2366 = vunpack.c.l.b16 %v1349
        %v2367 = vunpack.c.h.b16 %v1349
        %v2368 = vunpack.c.l.b16 %v1350
        %v2369 = vunpack.c.l.b16 %v1351
        %v2370 = vunpack.c.h.b16 %v1351
        %v2371 = vunpack.c.l.b16 %v1352
        %v2372 = vunpack.c.h.b16 %v1352
        %v2373 = vunpack.c.l.b16 %v1353
        %v2374 = vunpack.c.l.b16 %v1354
        %v2375 = vunpack.c.h.b16 %v1354
        %v2376 = vunpack.c.l.b16 %v1355
        %v2377 = vunpack.c.h.b16 %v1355
        %v2378 = vunpack.c.l.b16 %v1356
        %v2379 = vunpack.c.l.b16 %v1357
        %v2380 = vunpack.c.h.b16 %v1357
        %v2381 = vunpack.c.l.b16 %v1358
        %v2382 = vunpack.c.h.b16 %v1358
        %v2383 = vunpack.c.l.b16 %v1359
        %v2384 = vunpack.c.l.b16 %v1360
        %v2385 = vunpack.c.h.b16 %v1360
        %v2386 = vunpack.c.l.b16 %v1361
        %v2387 = vunpack.c.h.b16 %v1361
        %v2388 = vunpack.c.l.b16 %v1362
        %v2389 = vunpack.c.l.b16 %v1363
        %v2390 = vunpack.c.h.b16 %v1363
        %v2391 = vunpack.c.l.b16 %v1364
        %v2392 = vunpack.c.h.b16 %v1364
        %v2393 = vunpack.c.l.b16 %v1365
        %v2394 = vunpack.c.l.b16 %v1366
        %v2395 = vunpack.c.h.b16 %v1366
        %v2396 = vunpack.c.l.b16 %v1367
        %v2397 = vunpack.c.h.b16 %v1367
        %v2398 = vunpack.c.l.b16 %v1368
        %v2399 = vunpack.c.l.b16 %v1369
        %v2400 = vunpack.c.h.b16 %v1369
        %v2401 = vunpack.c.l.b16 %v1370
        %v2402 = vunpack.c.h.b16 %v1370
        %v2403 = vunpack.c.l.b16 %v1371
        %v2404 = vunpack.c.l.b16 %v1372
        %v2405 = vunpack.c.h.b16 %v1372
        %v2406 = vunpack.c.l.b16 %v1373
        %v2407 = vunpack.c.h.b16 %v1373
        %v2408 = vunpack.c.l.b16 %v1374
        %v2409 = vunpack.c.l.b16 %v1375
        %v2410 = vunpack.c.h.b16 %v1375
        %v2411 = vunpack.c.l.b16 %v1376
        %v2412 = vunpack.c.h.b16 %v1376
        %v2413 = vunpack.c.l.b16 %v1377
        %v2414 = vunpack.c.l.b16 %v1378
        %v2415 = vunpack.c.h.b16 %v1378
        %v2416 = vunpack.c.l.b16 %v1379
        %v2417 = vunpack.c.h.b16 %v1379
        %v2418 = vunpack.c.l.b16 %v1380
        %v2419 = vunpack.c.l.b16 %v1381
        %v2420 = vunpack.c.h.b16 %v1381
        %v2421 = vunpack.c.l.b16 %v1382
        %v2422 = vunpack.c.h.b16 %v1382
        %v2423 = vunpack.c.l.b16 %v1383
        %v2424 = vunpack.c.l.b16 %v1384
        %v2425 = vunpack.c.h.b16 %v1384
        %v2426 = vunpack.c.l.b16 %v1385
        %v2427 = vunpack.c.h.b16 %v1385
        %v2428 = vunpack.c.l.b16 %v1386
        %v2429 = vunpack.c.l.b16 %v1387
        %v2430 = vunpack.c.h.b16 %v1387
        %v2431 = vunpack.c.l.b16 %v1388
        %v2432 = vunpack.c.h.b16 %v1388
        %v2433 = vunpack.c.l.b16 %v1389
        %v2434 = vunpack.c.l.b16 %v1390
        %v2435 = vunpack.c.h.b16 %v1390
        %v2436 = vunpack.c.l.b16 %v1391
        %v2437 = vunpack.c.h.b16 %v1391
        %v2438 = vunpack.c.l.b16 %v1392
        %v2439 = vunpack.c.l.b16 %v1393
        %v2440 = vunpack.c.h.b16 %v1393
        %v2441 = vunpack.c.l.b16 %v1394
        %v2442 = vunpack.c.h.b16 %v1394
        %v2443 = vunpack.c.l.b16 %v1395
        %v2444 = vunpack.c.l.b16 %v1396
        %v2445 = vunpack.c.h.b16 %v1396
        %v2446 = vunpack.c.l.b16 %v1397
        %v2447 = vunpack.c.h.b16 %v1397
        %v2448 = vunpack.c.l.b16 %v1398
        %v2449 = vunpack.c.l.b16 %v1399
        %v2450 = vunpack.c.h.b16 %v1399
        %v2451 = vunpack.c.l.b16 %v1400
        %v2452 = vunpack.c.h.b16 %v1400
        %v2453 = vunpack.c.l.b16 %v1401
        %v2454 = vunpack.c.l.b16 %v1402
        %v2455 = vunpack.c.h.b16 %v1402
        %v2456 = vunpack.c.l.b16 %v1403
        %v2457 = vunpack.c.h.b16 %v1403
        %v2458 = vunpack.c.l.b16 %v1404
        %v2459 = vunpack.c.l.b16 %v1405
        %v2460 = vunpack.c.h.b16 %v1405
        %v2461 = vunpack.c.l.b16 %v1406
        %v2462 = vunpack.c.h.b16 %v1406
        %v2463 = vunpack.c.l.b16 %v1407
        %v2464 = vunpack.c.l.b16 %v1408
        %v2465 = vunpack.c.h.b16 %v1408
        %v2466 = vunpack.c.l.b16 %v1409
        %v2467 = vunpack.c.h.b16 %v1409
        %v2468 = vunpack.c.l.b16 %v1410
        %v2469 = vunpack.c.l.b16 %v1411
        %v2470 = vunpack.c.h.b16 %v1411
        %v2471 = vunpack.c.l.b16 %v1412
        %v2472 = vunpack.c.h.b16 %v1412
        %v2473 = vunpack.c.l.b16 %v1413
        %v2474 = vunpack.c.l.b16 %v1414
        %v2475 = vunpack.c.h.b16 %v1414
        %v2476 = vunpack.c.l.b16 %v1415
        %v2477 = vunpack.c.h.b16 %v1415
        %v2478 = vunpack.c.l.b16 %v1416
        %v2479 = vunpack.c.l.b16 %v1417
        %v2480 = vunpack.c.h.b16 %v1417
        %v2481 = vunpack.c.l.b16 %v1418
        %v2482 = vunpack.c.h.b16 %v1418
        %v2483 = vunpack.c.l.b16 %v1419
        %v2484 = vunpack.c.l.b16 %v1420
        %v2485 = vunpack.c.h.b16 %v1420
        %v2486 = vunpack.c.l.b16 %v1421
        %v2487 = vunpack.c.h.b16 %v1421
        %v2488 = vunpack.c.l.b16 %v1422
        %v2489 = vunpack.c.l.b16 %v1423
        %v2490 = vunpack.c.h.b16 %v1423
        %v2491 = vunpack.c.l.b16 %v1424
        %v2492 = vunpack.c.h.b16 %v1424
        %v2493 = vunpack.c.l.b16 %v1425
        %v2494 = vunpack.c.l.b16 %v1426
        %v2495 = vunpack.c.h.b16 %v1426
        %v2496 = vunpack.c.l.b16 %v1427
        %v2497 = vunpack.c.h.b16 %v1427
        %v2498 = vunpack.c.l.b16 %v1428
        %v2499 = vunpack.c.l.b16 %v1429
        %v2500 = vunpack.c.h.b16 %v1429
        %v2501 = vunpack.c.l.b16 %v1430
        %v2502 = vunpack.c.h.b16 %v1430
        %v2503 = vunpack.c.l.b16 %v1431
        %v2504 = vunpack.c.l.b16 %v1432
        %v2505 = vunpack.c.h.b16 %v1432
        %v2506 = vunpack.c.l.b16 %v1433
        %v2507 = vunpack.c.h.b16 %v1433
        %v2508 = vunpack.c.l.b16 %v1434
        %v2509 = vunpack.c.l.b16 %v1435
        %v2510 = vunpack.c.h.b16 %v1435
        %v2511 = vunpack.c.l.b16 %v1436
        %v2512 = vunpack.c.h.b16 %v1436
        %v2513 = vunpack.c.l.b16 %v1437
        %v2514 = vunpack.c.l.b16 %v1438
        %v2515 = vunpack.c.h.b16 %v1438
        %v2516 = vunpack.c.l.b16 %v1439
        %v2517 = vunpack.c.h.b16 %v1439
        %v2518 = vunpack.c.l.b16 %v1440
        %v2519 = vunpack.c.l.b16 %v1441
        %v2520 = vunpack.c.h.b16 %v1441
        %v2521 = vunpack.c.l.b16 %v1442
        %v2522 = vunpack.c.h.b16 %v1442
        %v2523 = vunpack.c.l.b16 %v1443
        %v2524 = vunpack.c.l.b16 %v1444
        %v2525 = vunpack.c.h.b16 %v1444
        %v2526 = vunpack.c.l.b16 %v1445
        %v2527 = vunpack.c.h.b16 %v1445
        %v2528 = vunpack.c.l.b16 %v1446
        %v2529 = vpack.c.b16 %v1894, %v1889
        %v2530 = vpack.c.b16 %v1895, %v1890
        %v2531 = vpack.c.b16 %v1896, %v1891
        %v2532 = vpack.c.b16 %v1897, %v1892
        %v2533 = vpack.c.b16 %v1898, %v1893
        %v2534 = vpack.c.b16 %v1904, %v1899
        %v2535 = vpack.c.b16 %v1905, %v1900
        %v2536 = vpack.c.b16 %v1906, %v1901
        %v2537 = vpack.c.b16 %v1907, %v1902
        %v2538 = vpack.c.b16 %v1908, %v1903
        %v2539 = vpack.c.b16 %v1914, %v1909
        %v2540 = vpack.c.b16 %v1915, %v1910
        %v2541 = vpack.c.b16 %v1916, %v1911
        %v2542 = vpack.c.b16 %v1917, %v1912
        %v2543 = vpack.c.b16 %v1918, %v1913
        %v2544 = vpack.c.b16 %v1924, %v1919
        %v2545 = vpack.c.b16 %v1925, %v1920
        %v2546 = vpack.c.b16 %v1926, %v1921
        %v2547 = vpack.c.b16 %v1927, %v1922
        %v2548 = vpack.c.b16 %v1928, %v1923
        %v2549 = vpack.c.b16 %v1934, %v1929
        %v2550 = vpack.c.b16 %v1935, %v1930
        %v2551 = vpack.c.b16 %v1936, %v1931
        %v2552 = vpack.c.b16 %v1937, %v1932
        %v2553 = vpack.c.b16 %v1938, %v1933
        %v2554 = vpack.c.b16 %v1944, %v1939
        %v2555 = vpack.c.b16 %v1945, %v1940
        %v2556 = vpack.c.b16 %v1946, %v1941
        %v2557 = vpack.c.b16 %v1947, %v1942
        %v2558 = vpack.c.b16 %v1948, %v1943
        %v2559 = vpack.c.b16 %v1954, %v1949
        %v2560 = vpack.c.b16 %v1955, %v1950
        %v2561 = vpack.c.b16 %v1956, %v1951
        %v2562 = vpack.c.b16 %v1957, %v1952
        %v2563 = vpack.c.b16 %v1958, %v1953
        %v2564 = vpack.c.b16 %v1964, %v1959
        %v2565 = vpack.c.b16 %v1965, %v1960
        %v2566 = vpack.c.b16 %v1966, %v1961
        %v2567 = vpack.c.b16 %v1967, %v1962
        %v2568 = vpack.c.b16 %v1968, %v1963
        %v2569 = vpack.c.b16 %v1974, %v1969
        %v2570 = vpack.c.b16 %v1975, %v1970
        %v2571 = vpack.c.b16 %v1976, %v1971
        %v2572 = vpack.c.b16 %v1977, %v1972
        %v2573 = vpack.c.b16 %v1978, %v1973
        %v2574 = vpack.c.b16 %v1984, %v1979
        %v2575 = vpack.c.b16 %v1985, %v1980
        %v2576 = vpack.c.b16 %v1986, %v1981
        %v2577 = vpack.c.b16 %v1987, %v1982
        %v2578 = vpack.c.b16 %v1988, %v1983
        %v2579 = vpack.c.b16 %v1994, %v1989
        %v2580 = vpack.c.b16 %v1995, %v1990
        %v2581 = vpack.c.b16 %v1996, %v1991
        %v2582 = vpack.c.b16 %v1997, %v1992
        %v2583 = vpack.c.b16 %v1998, %v1993
        %v2584 = vpack.c.b16 %v2004, %v1999
        %v2585 = vpack.c.b16 %v2005, %v2000
        %v2586 = vpack.c.b16 %v2006, %v2001
        %v2587 = vpack.c.b16 %v2007, %v2002
        %v2588 = vpack.c.b16 %v2008, %v2003
        %v2589 = vpack.c.b16 %v2014, %v2009
        %v2590 = vpack.c.b16 %v2015, %v2010
        %v2591 = vpack.c.b16 %v2016, %v2011
        %v2592 = vpack.c.b16 %v2017, %v2012
        %v2593 = vpack.c.b16 %v2018, %v2013
        %v2594 = vpack.c.b16 %v2024, %v2019
        %v2595 = vpack.c.b16 %v2025, %v2020
        %v2596 = vpack.c.b16 %v2026, %v2021
        %v2597 = vpack.c.b16 %v2027, %v2022
        %v2598 = vpack.c.b16 %v2028, %v2023
        %v2599 = vpack.c.b16 %v2034, %v2029
        %v2600 = vpack.c.b16 %v2035, %v2030
        %v2601 = vpack.c.b16 %v2036, %v2031
        %v2602 = vpack.c.b16 %v2037, %v2032
        %v2603 = vpack.c.b16 %v2038, %v2033
        %v2604 = vpack.c.b16 %v2044, %v2039
        %v2605 = vpack.c.b16 %v2045, %v2040
        %v2606 = vpack.c.b16 %v2046, %v2041
        %v2607 = vpack.c.b16 %v2047, %v2042
        %v2608 = vpack.c.b16 %v2048, %v2043
        %v2609 = vpack.c.b16 %v2054, %v2049
        %v2610 = vpack.c.b16 %v2055, %v2050
        %v2611 = vpack.c.b16 %v2056, %v2051
        %v2612 = vpack.c.b16 %v2057, %v2052
        %v2613 = vpack.c.b16 %v2058, %v2053
        %v2614 = vpack.c.b16 %v2064, %v2059
        %v2615 = vpack.c.b16 %v2065, %v2060
        %v2616 = vpack.c.b16 %v2066, %v2061
        %v2617 = vpack.c.b16 %v2067, %v2062
        %v2618 = vpack.c.b16 %v2068, %v2063
        %v2619 = vpack.c.b16 %v2074, %v2069
        %v2620 = vpack.c.b16 %v2075, %v2070
        %v2621 = vpack.c.b16 %v2076, %v2071
        %v2622 = vpack.c.b16 %v2077, %v2072
        %v2623 = vpack.c.b16 %v2078, %v2073
        %v2624 = vpack.c.b16 %v2084, %v2079
        %v2625 = vpack.c.b16 %v2085, %v2080
        %v2626 = vpack.c.b16 %v2086, %v2081
        %v2627 = vpack.c.b16 %v2087, %v2082
        %v2628 = vpack.c.b16 %v2088, %v2083
        %v2629 = vpack.c.b16 %v2094, %v2089
        %v2630 = vpack.c.b16 %v2095, %v2090
        %v2631 = vpack.c.b16 %v2096, %v2091
        %v2632 = vpack.c.b16 %v2097, %v2092
        %v2633 = vpack.c.b16 %v2098, %v2093
        %v2634 = vpack.c.b16 %v2104, %v2099
        %v2635 = vpack.c.b16 %v2105, %v2100
        %v2636 = vpack.c.b16 %v2106, %v2101
        %v2637 = vpack.c.b16 %v2107, %v2102
        %v2638 = vpack.c.b16 %v2108, %v2103
        %v2639 = vpack.c.b16 %v2114, %v2109
        %v2640 = vpack.c.b16 %v2115, %v2110
        %v2641 = vpack.c.b16 %v2116, %v2111
        %v2642 = vpack.c.b16 %v2117, %v2112
        %v2643 = vpack.c.b16 %v2118, %v2113
        %v2644 = vpack.c.b16 %v2124, %v2119
        %v2645 = vpack.c.b16 %v2125, %v2120
        %v2646 = vpack.c.b16 %v2126, %v2121
        %v2647 = vpack.c.b16 %v2127, %v2122
        %v2648 = vpack.c.b16 %v2128, %v2123
        %v2649 = vpack.c.b16 %v2134, %v2129
        %v2650 = vpack.c.b16 %v2135, %v2130
        %v2651 = vpack.c.b16 %v2136, %v2131
        %v2652 = vpack.c.b16 %v2137, %v2132
        %v2653 = vpack.c.b16 %v2138, %v2133
        %v2654 = vpack.c.b16 %v2144, %v2139
        %v2655 = vpack.c.b16 %v2145, %v2140
        %v2656 = vpack.c.b16 %v2146, %v2141
        %v2657 = vpack.c.b16 %v2147, %v2142
        %v2658 = vpack.c.b16 %v2148, %v2143
        %v2659 = vpack.c.b16 %v2154, %v2149
        %v2660 = vpack.c.b16 %v2155, %v2150
        %v2661 = vpack.c.b16 %v2156, %v2151
        %v2662 = vpack.c.b16 %v2157, %v2152
        %v2663 = vpack.c.b16 %v2158, %v2153
        %v2664 = vpack.c.b16 %v2164, %v2159
        %v2665 = vpack.c.b16 %v2165, %v2160
        %v2666 = vpack.c.b16 %v2166, %v2161
        %v2667 = vpack.c.b16 %v2167, %v2162
        %v2668 = vpack.c.b16 %v2168, %v2163
        %v2669 = vpack.c.b16 %v2174, %v2169
        %v2670 = vpack.c.b16 %v2175, %v2170
        %v2671 = vpack.c.b16 %v2176, %v2171
        %v2672 = vpack.c.b16 %v2177, %v2172
        %v2673 = vpack.c.b16 %v2178, %v2173
        %v2674 = vpack.c.b16 %v2184, %v2179
        %v2675 = vpack.c.b16 %v2185, %v2180
        %v2676 = vpack.c.b16 %v2186, %v2181
        %v2677 = vpack.c.b16 %v2187, %v2182
        %v2678 = vpack.c.b16 %v2188, %v2183
        %v2679 = vpack.c.b16 %v2194, %v2189
        %v2680 = vpack.c.b16 %v2195, %v2190
        %v2681 = vpack.c.b16 %v2196, %v2191
        %v2682 = vpack.c.b16 %v2197, %v2192
        %v2683 = vpack.c.b16 %v2198, %v2193
        %v2684 = vpack.c.b16 %v2204, %v2199
        %v2685 = vpack.c.b16 %v2205, %v2200
        %v2686 = vpack.c.b16 %v2206, %v2201
        %v2687 = vpack.c.b16 %v2207, %v2202
        %v2688 = vpack.c.b16 %v2208, %v2203
        %v2689 = vpack.c.b16 %v2214, %v2209
        %v2690 = vpack.c.b16 %v2215, %v2210
        %v2691 = vpack.c.b16 %v2216, %v2211
        %v2692 = vpack.c.b16 %v2217, %v2212
        %v2693 = vpack.c.b16 %v2218, %v2213
        %v2694 = vpack.c.b16 %v2224, %v2219
        %v2695 = vpack.c.b16 %v2225, %v2220
        %v2696 = vpack.c.b16 %v2226, %v2221
        %v2697 = vpack.c.b16 %v2227, %v2222
        %v2698 = vpack.c.b16 %v2228, %v2223
        %v2699 = vpack.c.b16 %v2234, %v2229
        %v2700 = vpack.c.b16 %v2235, %v2230
        %v2701 = vpack.c.b16 %v2236, %v2231
        %v2702 = vpack.c.b16 %v2237, %v2232
        %v2703 = vpack.c.b16 %v2238, %v2233
        %v2704 = vpack.c.b16 %v2244, %v2239
        %v2705 = vpack.c.b16 %v2245, %v2240
        %v2706 = vpack.c.b16 %v2246, %v2241
        %v2707 = vpack.c.b16 %v2247, %v2242
        %v2708 = vpack.c.b16 %v2248, %v2243
        %v2709 = vpack.c.b16 %v2254, %v2249
        %v2710 = vpack.c.b16 %v2255, %v2250
        %v2711 = vpack.c.b16 %v2256, %v2251
        %v2712 = vpack.c.b16 %v2257, %v2252
        %v2713 = vpack.c.b16 %v2258, %v2253
        %v2714 = vpack.c.b16 %v2264, %v2259
        %v2715 = vpack.c.b16 %v2265, %v2260
        %v2716 = vpack.c.b16 %v2266, %v2261
        %v2717 = vpack.c.b16 %v2267, %v2262
        %v2718 = vpack.c.b16 %v2268, %v2263
        %v2719 = vpack.c.b16 %v2274, %v2269
        %v2720 = vpack.c.b16 %v2275, %v2270
        %v2721 = vpack.c.b16 %v2276, %v2271
        %v2722 = vpack.c.b16 %v2277, %v2272
        %v2723 = vpack.c.b16 %v2278, %v2273
        %v2724 = vpack.c.b16 %v2284, %v2279
        %v2725 = vpack.c.b16 %v2285, %v2280
        %v2726 = vpack.c.b16 %v2286, %v2281
        %v2727 = vpack.c.b16 %v2287, %v2282
        %v2728 = vpack.c.b16 %v2288, %v2283
        %v2729 = vpack.c.b16 %v2294, %v2289
        %v2730 = vpack.c.b16 %v2295, %v2290
        %v2731 = vpack.c.b16 %v2296, %v2291
        %v2732 = vpack.c.b16 %v2297, %v2292
        %v2733 = vpack.c.b16 %v2298, %v2293
        %v2734 = vpack.c.b16 %v2304, %v2299
        %v2735 = vpack.c.b16 %v2305, %v2300
        %v2736 = vpack.c.b16 %v2306, %v2301
        %v2737 = vpack.c.b16 %v2307, %v2302
        %v2738 = vpack.c.b16 %v2308, %v2303
        %v2739 = vpack.c.b16 %v2314, %v2309
        %v2740 = vpack.c.b16 %v2315, %v2310
        %v2741 = vpack.c.b16 %v2316, %v2311
        %v2742 = vpack.c.b16 %v2317, %v2312
        %v2743 = vpack.c.b16 %v2318, %v2313
        %v2744 = vpack.c.b16 %v2324, %v2319
        %v2745 = vpack.c.b16 %v2325, %v2320
        %v2746 = vpack.c.b16 %v2326, %v2321
        %v2747 = vpack.c.b16 %v2327, %v2322
        %v2748 = vpack.c.b16 %v2328, %v2323
        %v2749 = vpack.c.b16 %v2334, %v2329
        %v2750 = vpack.c.b16 %v2335, %v2330
        %v2751 = vpack.c.b16 %v2336, %v2331
        %v2752 = vpack.c.b16 %v2337, %v2332
        %v2753 = vpack.c.b16 %v2338, %v2333
        %v2754 = vpack.c.b16 %v2344, %v2339
        %v2755 = vpack.c.b16 %v2345, %v2340
        %v2756 = vpack.c.b16 %v2346, %v2341
        %v2757 = vpack.c.b16 %v2347, %v2342
        %v2758 = vpack.c.b16 %v2348, %v2343
        %v2759 = vpack.c.b16 %v2354, %v2349
        %v2760 = vpack.c.b16 %v2355, %v2350
        %v2761 = vpack.c.b16 %v2356, %v2351
        %v2762 = vpack.c.b16 %v2357, %v2352
        %v2763 = vpack.c.b16 %v2358, %v2353
        %v2764 = vpack.c.b16 %v2364, %v2359
        %v2765 = vpack.c.b16 %v2365, %v2360
        %v2766 = vpack.c.b16 %v2366, %v2361
        %v2767 = vpack.c.b16 %v2367, %v2362
        %v2768 = vpack.c.b16 %v2368, %v2363
        %v2769 = vpack.c.b16 %v2374, %v2369
        %v2770 = vpack.c.b16 %v2375, %v2370
        %v2771 = vpack.c.b16 %v2376, %v2371
        %v2772 = vpack.c.b16 %v2377, %v2372
        %v2773 = vpack.c.b16 %v2378, %v2373
        %v2774 = vpack.c.b16 %v2384, %v2379
        %v2775 = vpack.c.b16 %v2385, %v2380
        %v2776 = vpack.c.b16 %v2386, %v2381
        %v2777 = vpack.c.b16 %v2387, %v2382
        %v2778 = vpack.c.b16 %v2388, %v2383
        %v2779 = vpack.c.b16 %v2394, %v2389
        %v2780 = vpack.c.b16 %v2395, %v2390
        %v2781 = vpack.c.b16 %v2396, %v2391
        %v2782 = vpack.c.b16 %v2397, %v2392
        %v2783 = vpack.c.b16 %v2398, %v2393
        %v2784 = vpack.c.b16 %v2404, %v2399
        %v2785 = vpack.c.b16 %v2405, %v2400
        %v2786 = vpack.c.b16 %v2406, %v2401
        %v2787 = vpack.c.b16 %v2407, %v2402
        %v2788 = vpack.c.b16 %v2408, %v2403
        %v2789 = vpack.c.b16 %v2414, %v2409
        %v2790 = vpack.c.b16 %v2415, %v2410
        %v2791 = vpack.c.b16 %v2416, %v2411
        %v2792 = vpack.c.b16 %v2417, %v2412
        %v2793 = vpack.c.b16 %v2418, %v2413
        %v2794 = vpack.c.b16 %v2424, %v2419
        %v2795 = vpack.c.b16 %v2425, %v2420
        %v2796 = vpack.c.b16 %v2426, %v2421
        %v2797 = vpack.c.b16 %v2427, %v2422
        %v2798 = vpack.c.b16 %v2428, %v2423
        %v2799 = vpack.c.b16 %v2434, %v2429
        %v2800 = vpack.c.b16 %v2435, %v2430
        %v2801 = vpack.c.b16 %v2436, %v2431
        %v2802 = vpack.c.b16 %v2437, %v2432
        %v2803 = vpack.c.b16 %v2438, %v2433
        %v2804 = vpack.c.b16 %v2444, %v2439
        %v2805 = vpack.c.b16 %v2445, %v2440
        %v2806 = vpack.c.b16 %v2446, %v2441
        %v2807 = vpack.c.b16 %v2447, %v2442
        %v2808 = vpack.c.b16 %v2448, %v2443
        %v2809 = vpack.c.b16 %v2454, %v2449
        %v2810 = vpack.c.b16 %v2455, %v2450
        %v2811 = vpack.c.b16 %v2456, %v2451
        %v2812 = vpack.c.b16 %v2457, %v2452
        %v2813 = vpack.c.b16 %v2458, %v2453
        %v2814 = vpack.c.b16 %v2464, %v2459
        %v2815 = vpack.c.b16 %v2465, %v2460
        %v2816 = vpack.c.b16 %v2466, %v2461
        %v2817 = vpack.c.b16 %v2467, %v2462
        %v2818 = vpack.c.b16 %v2468, %v2463
        %v2819 = vpack.c.b16 %v2474, %v2469
        %v2820 = vpack.c.b16 %v2475, %v2470
        %v2821 = vpack.c.b16 %v2476, %v2471
        %v2822 = vpack.c.b16 %v2477, %v2472
        %v2823 = vpack.c.b16 %v2478, %v2473
        %v2824 = vpack.c.b16 %v2484, %v2479
        %v2825 = vpack.c.b16 %v2485, %v2480
        %v2826 = vpack.c.b16 %v2486, %v2481
        %v2827 = vpack.c.b16 %v2487, %v2482
        %v2828 = vpack.c.b16 %v2488, %v2483
        %v2829 = vpack.c.b16 %v2494, %v2489
        %v2830 = vpack.c.b16 %v2495, %v2490
        %v2831 = vpack.c.b16 %v2496, %v2491
        %v2832 = vpack.c.b16 %v2497, %v2492
        %v2833 = vpack.c.b16 %v2498, %v2493
        %v2834 = vpack.c.b16 %v2504, %v2499
        %v2835 = vpack.c.b16 %v2505, %v2500
        %v2836 = vpack.c.b16 %v2506, %v2501
        %v2837 = vpack.c.b16 %v2507, %v2502
        %v2838 = vpack.c.b16 %v2508, %v2503
        %v2839 = vpack.c.b16 %v2514, %v2509
        %v2840 = vpack.c.b16 %v2515, %v2510
        %v2841 = vpack.c.b16 %v2516, %v2511
        %v2842 = vpack.c.b16 %v2517, %v2512
        %v2843 = vpack.c.b16 %v2518, %v2513
        %v2844 = vpack.c.b16 %v2524, %v2519
        %v2845 = vpack.c.b16 %v2525, %v2520
        %v2846 = vpack.c.b16 %v2526, %v2521
        %v2847 = vpack.c.b16 %v2527, %v2522
        %v2848 = vpack.c.b16 %v2528, %v2523
        %3169 = vmatprep.subr.bf16.mxu0 %v2530
        %3170 = vmatpush1.bf16.msra.mxu0 %v2529
        %3171 = vmatprep.subr.bf16.mxu0 %v2535
        %3172 = vmatpush1.bf16.msra.mxu0 %v2534
        %3173 = vmatprep.subr.bf16.mxu0 %v2540
        %3174 = vmatpush1.bf16.msra.mxu0 %v2539
        %3175 = vmatprep.subr.bf16.mxu0 %v2545
        %3176 = vmatpush1.bf16.msra.mxu0 %v2544
        %3177 = vmatprep.subr.bf16.mxu0 %v2550
        %3178 = vmatpush1.bf16.msra.mxu0 %v2549
        %3179 = vmatprep.subr.bf16.mxu0 %v2555
        %3180 = vmatpush1.bf16.msra.mxu0 %v2554
        %3181 = vmatprep.subr.bf16.mxu0 %v2560
        %3182 = vmatpush1.bf16.msra.mxu0 %v2559
        %3183 = vmatprep.subr.bf16.mxu0 %v2565
        %3184 = vmatpush1.bf16.msra.mxu0 %v2564
        %3185 = vmatprep.subr.bf16.mxu0 %v2570
        %3186 = vmatpush1.bf16.msra.mxu0 %v2569
        %3187 = vmatprep.subr.bf16.mxu0 %v2575
        %3188 = vmatpush1.bf16.msra.mxu0 %v2574
        %3189 = vmatprep.subr.bf16.mxu0 %v2580
        %3190 = vmatpush1.bf16.msra.mxu0 %v2579
        %3191 = vmatprep.subr.bf16.mxu0 %v2585
        %3192 = vmatpush1.bf16.msra.mxu0 %v2584
        %3193 = vmatprep.subr.bf16.mxu0 %v2590
        %3194 = vmatpush1.bf16.msra.mxu0 %v2589
        %3195 = vmatprep.subr.bf16.mxu0 %v2595
        %3196 = vmatpush1.bf16.msra.mxu0 %v2594
        %3197 = vmatprep.subr.bf16.mxu0 %v2600
        %3198 = vmatpush1.bf16.msra.mxu0 %v2599
        %3199 = vmatprep.subr.bf16.mxu0 %v2605
        %3200 = vmatpush1.bf16.msra.mxu0 %v2604
        %3201 = vmatprep.mubr.bf16.mxu0 %v1485
        %3202 = vmatmul.mubr.bf16.gmra.mrb[0].mxu0 %v1471
        %v3203 = vpop.f32.mrb[0].mxu0
        %v3204 = vadd.f32 0.0, %v3203
        %v3205 = vpop.f32.mrb[0].mxu0
        %v3206 = vadd.f32 0.0, %v3205
        %v3207 = vpop.f32.mrb[0].mxu0
        %v3208 = vpop.f32.mrb[0].mxu0
        %3209 = vdwg.mxu0
        %3210 = vmatprep.subr.bf16.mxu0 %v2610
        %3211 = vmatpush1.bf16.msra.mxu0 %v2609
        %3212 = vmatprep.subr.bf16.mxu0 %v2615
        %3213 = vmatpush1.bf16.msra.mxu0 %v2614
        %3214 = vmatprep.subr.bf16.mxu0 %v2620
        %3215 = vmatpush1.bf16.msra.mxu0 %v2619
        %3216 = vmatprep.subr.bf16.mxu0 %v2625
        %3217 = vmatpush1.bf16.msra.mxu0 %v2624
        %3218 = vmatprep.subr.bf16.mxu0 %v2630
        %3219 = vmatpush1.bf16.msra.mxu0 %v2629
        %3220 = vmatprep.subr.bf16.mxu0 %v2635
        %3221 = vmatpush1.bf16.msra.mxu0 %v2634
        %3222 = vmatprep.subr.bf16.mxu0 %v2640
        %3223 = vmatpush1.bf16.msra.mxu0 %v2639
        %3224 = vmatprep.subr.bf16.mxu0 %v2645
        %3225 = vmatpush1.bf16.msra.mxu0 %v2644
        %3226 = vmatprep.subr.bf16.mxu0 %v2650
        %3227 = vmatpush1.bf16.msra.mxu0 %v2649
        %3228 = vmatprep.subr.bf16.mxu0 %v2655
        %3229 = vmatpush1.bf16.msra.mxu0 %v2654
        %3230 = vmatprep.subr.bf16.mxu0 %v2660
        %3231 = vmatpush1.bf16.msra.mxu0 %v2659
        %3232 = vmatprep.subr.bf16.mxu0 %v2665
        %3233 = vmatpush1.bf16.msra.mxu0 %v2664
        %3234 = vmatprep.subr.bf16.mxu0 %v2670
        %3235 = vmatpush1.bf16.msra.mxu0 %v2669
        %3236 = vmatprep.subr.bf16.mxu0 %v2675
        %3237 = vmatpush1.bf16.msra.mxu0 %v2674
        %3238 = vmatprep.subr.bf16.mxu0 %v2680
        %3239 = vmatpush1.bf16.msra.mxu0 %v2679
        %3240 = vmatprep.subr.bf16.mxu0 %v2685
        %3241 = vmatpush1.bf16.msra.mxu0 %v2684
        %3242 = vmatprep.mubr.bf16.mxu0 %v1495
        %3243 = vmatmul.mubr.bf16.gmra.mrb[0].mxu0 %v1493
        %v3244 = vpop.f32.mrb[0].mxu0
        %v3245 = vadd.f32 %v3204, %v3244
        %v3246 = vpop.f32.mrb[0].mxu0
        %v3247 = vadd.f32 %v3206, %v3246
        %v3248 = vpop.f32.mrb[0].mxu0
        %v3249 = vpop.f32.mrb[0].mxu0
        %3250 = vdwg.mxu0
        %3251 = vmatprep.subr.bf16.mxu0 %v2690
        %3252 = vmatpush1.bf16.msra.mxu0 %v2689
        %3253 = vmatprep.subr.bf16.mxu0 %v2695
        %3254 = vmatpush1.bf16.msra.mxu0 %v2694
        %3255 = vmatprep.subr.bf16.mxu0 %v2700
        %3256 = vmatpush1.bf16.msra.mxu0 %v2699
        %3257 = vmatprep.subr.bf16.mxu0 %v2705
        %3258 = vmatpush1.bf16.msra.mxu0 %v2704
        %3259 = vmatprep.subr.bf16.mxu0 %v2710
        %3260 = vmatpush1.bf16.msra.mxu0 %v2709
        %3261 = vmatprep.subr.bf16.mxu0 %v2715
        %3262 = vmatpush1.bf16.msra.mxu0 %v2714
        %3263 = vmatprep.subr.bf16.mxu0 %v2720
        %3264 = vmatpush1.bf16.msra.mxu0 %v2719
        %3265 = vmatprep.subr.bf16.mxu0 %v2725
        %3266 = vmatpush1.bf16.msra.mxu0 %v2724
        %3267 = vmatprep.subr.bf16.mxu0 %v2730
        %3268 = vmatpush1.bf16.msra.mxu0 %v2729
        %3269 = vmatprep.subr.bf16.mxu0 %v2735
        %3270 = vmatpush1.bf16.msra.mxu0 %v2734
        %3271 = vmatprep.subr.bf16.mxu0 %v2740
        %3272 = vmatpush1.bf16.msra.mxu0 %v2739
        %3273 = vmatprep.subr.bf16.mxu0 %v2745
        %3274 = vmatpush1.bf16.msra.mxu0 %v2744
        %3275 = vmatprep.subr.bf16.mxu0 %v2750
        %3276 = vmatpush1.bf16.msra.mxu0 %v2749
        %3277 = vmatprep.subr.bf16.mxu0 %v2755
        %3278 = vmatpush1.bf16.msra.mxu0 %v2754
        %3279 = vmatprep.subr.bf16.mxu0 %v2760
        %3280 = vmatpush1.bf16.msra.mxu0 %v2759
        %3281 = vmatprep.subr.bf16.mxu0 %v2765
        %3282 = vmatpush1.bf16.msra.mxu0 %v2764
        %3283 = vmatprep.mubr.bf16.mxu0 %v1492
        %3284 = vmatmul.mubr.bf16.gmra.mrb[0].mxu0 %v1478
        %v3285 = vpop.f32.mrb[0].mxu0
        %v3286 = vadd.f32 %v3245, %v3285
        %v3287 = vpop.f32.mrb[0].mxu0
        %v3288 = vadd.f32 %v3247, %v3287
        %v3289 = vpop.f32.mrb[0].mxu0
        %v3290 = vpop.f32.mrb[0].mxu0
        %3291 = vdwg.mxu0
        %3292 = vmatprep.subr.bf16.mxu0 %v2770
        %3293 = vmatpush1.bf16.msra.mxu0 %v2769
        %3294 = vmatprep.subr.bf16.mxu0 %v2775
        %3295 = vmatpush1.bf16.msra.mxu0 %v2774
        %3296 = vmatprep.subr.bf16.mxu0 %v2780
        %3297 = vmatpush1.bf16.msra.mxu0 %v2779
        %3298 = vmatprep.subr.bf16.mxu0 %v2785
        %3299 = vmatpush1.bf16.msra.mxu0 %v2784
        %3300 = vmatprep.subr.bf16.mxu0 %v2790
        %3301 = vmatpush1.bf16.msra.mxu0 %v2789
        %3302 = vmatprep.subr.bf16.mxu0 %v2795
        %3303 = vmatpush1.bf16.msra.mxu0 %v2794
        %3304 = vmatprep.subr.bf16.mxu0 %v2800
        %3305 = vmatpush1.bf16.msra.mxu0 %v2799
        %3306 = vmatprep.subr.bf16.mxu0 %v2805
        %3307 = vmatpush1.bf16.msra.mxu0 %v2804
        %3308 = vmatprep.subr.bf16.mxu0 %v2810
        %3309 = vmatpush1.bf16.msra.mxu0 %v2809
        %3310 = vmatprep.subr.bf16.mxu0 %v2815
        %3311 = vmatpush1.bf16.msra.mxu0 %v2814
        %3312 = vmatprep.subr.bf16.mxu0 %v2820
        %3313 = vmatpush1.bf16.msra.mxu0 %v2819
        %3314 = vmatprep.subr.bf16.mxu0 %v2825
        %3315 = vmatpush1.bf16.msra.mxu0 %v2824
        %3316 = vmatprep.subr.bf16.mxu0 %v2830
        %3317 = vmatpush1.bf16.msra.mxu0 %v2829
        %3318 = vmatprep.subr.bf16.mxu0 %v2835
        %3319 = vmatpush1.bf16.msra.mxu0 %v2834
        %3320 = vmatprep.subr.bf16.mxu0 %v2840
        %3321 = vmatpush1.bf16.msra.mxu0 %v2839
        %3322 = vmatprep.subr.bf16.mxu0 %v2845
        %3323 = vmatpush1.bf16.msra.mxu0 %v2844
        %3324 = vmatprep.mubr.bf16.mxu0 %v1496
        %3325 = vmatmul.mubr.bf16.gmra.mrb[0].mxu0 %v1494
        %v3326 = vpop.f32.mrb[0].mxu0
        %v3327 = vadd.f32 %v3286, %v3326
        %v3328 = vpop.f32.mrb[0].mxu0
        %v3329 = vadd.f32 %v3288, %v3328
        %v3330 = vpop.f32.mrb[0].mxu0
        %v3331 = vpop.f32.mrb[0].mxu0
        %3332 = vdwg.mxu0
        %3333 = vmatprep.subr.bf16.mxu0 %v2532
        %3334 = vmatpush1.bf16.msra.mxu0 %v2531
        %3335 = vmatprep.subr.bf16.mxu0 %v2537
        %3336 = vmatpush1.bf16.msra.mxu0 %v2536
        %3337 = vmatprep.subr.bf16.mxu0 %v2542
        %3338 = vmatpush1.bf16.msra.mxu0 %v2541
        %3339 = vmatprep.subr.bf16.mxu0 %v2547
        %3340 = vmatpush1.bf16.msra.mxu0 %v2546
        %3341 = vmatprep.subr.bf16.mxu0 %v2552
        %3342 = vmatpush1.bf16.msra.mxu0 %v2551
        %3343 = vmatprep.subr.bf16.mxu0 %v2557
        %3344 = vmatpush1.bf16.msra.mxu0 %v2556
        %3345 = vmatprep.subr.bf16.mxu0 %v2562
        %3346 = vmatpush1.bf16.msra.mxu0 %v2561
        %3347 = vmatprep.subr.bf16.mxu0 %v2567
        %3348 = vmatpush1.bf16.msra.mxu0 %v2566
        %3349 = vmatprep.subr.bf16.mxu0 %v2572
        %3350 = vmatpush1.bf16.msra.mxu0 %v2571
        %3351 = vmatprep.subr.bf16.mxu0 %v2577
        %3352 = vmatpush1.bf16.msra.mxu0 %v2576
        %3353 = vmatprep.subr.bf16.mxu0 %v2582
        %3354 = vmatpush1.bf16.msra.mxu0 %v2581
        %3355 = vmatprep.subr.bf16.mxu0 %v2587
        %3356 = vmatpush1.bf16.msra.mxu0 %v2586
        %3357 = vmatprep.subr.bf16.mxu0 %v2592
        %3358 = vmatpush1.bf16.msra.mxu0 %v2591
        %3359 = vmatprep.subr.bf16.mxu0 %v2597
        %3360 = vmatpush1.bf16.msra.mxu0 %v2596
        %3361 = vmatprep.subr.bf16.mxu0 %v2602
        %3362 = vmatpush1.bf16.msra.mxu0 %v2601
        %3363 = vmatprep.subr.bf16.mxu0 %v2607
        %3364 = vmatpush1.bf16.msra.mxu0 %v2606
        %3365 = vmatprep.mubr.bf16.mxu0 %v1485
        %3366 = vmatmul.mubr.bf16.gmra.mrb[0].mxu0 %v1471
        %v3367 = vpop.f32.mrb[0].mxu0
        %v3368 = vadd.f32 0.0, %v3367
        %v3369 = vpop.f32.mrb[0].mxu0
        %v3370 = vadd.f32 0.0, %v3369
        %v3371 = vpop.f32.mrb[0].mxu0
        %v3372 = vpop.f32.mrb[0].mxu0
        %3373 = vdwg.mxu0
        %3374 = vmatprep.subr.bf16.mxu0 %v2612
        %3375 = vmatpush1.bf16.msra.mxu0 %v2611
        %3376 = vmatprep.subr.bf16.mxu0 %v2617
        %3377 = vmatpush1.bf16.msra.mxu0 %v2616
        %3378 = vmatprep.subr.bf16.mxu0 %v2622
        %3379 = vmatpush1.bf16.msra.mxu0 %v2621
        %3380 = vmatprep.subr.bf16.mxu0 %v2627
        %3381 = vmatpush1.bf16.msra.mxu0 %v2626
        %3382 = vmatprep.subr.bf16.mxu0 %v2632
        %3383 = vmatpush1.bf16.msra.mxu0 %v2631
        %3384 = vmatprep.subr.bf16.mxu0 %v2637
        %3385 = vmatpush1.bf16.msra.mxu0 %v2636
        %3386 = vmatprep.subr.bf16.mxu0 %v2642
        %3387 = vmatpush1.bf16.msra.mxu0 %v2641
        %3388 = vmatprep.subr.bf16.mxu0 %v2647
        %3389 = vmatpush1.bf16.msra.mxu0 %v2646
        %3390 = vmatprep.subr.bf16.mxu0 %v2652
        %3391 = vmatpush1.bf16.msra.mxu0 %v2651
        %3392 = vmatprep.subr.bf16.mxu0 %v2657
        %3393 = vmatpush1.bf16.msra.mxu0 %v2656
        %3394 = vmatprep.subr.bf16.mxu0 %v2662
        %3395 = vmatpush1.bf16.msra.mxu0 %v2661
        %3396 = vmatprep.subr.bf16.mxu0 %v2667
        %3397 = vmatpush1.bf16.msra.mxu0 %v2666
        %3398 = vmatprep.subr.bf16.mxu0 %v2672
        %3399 = vmatpush1.bf16.msra.mxu0 %v2671
        %3400 = vmatprep.subr.bf16.mxu0 %v2677
        %3401 = vmatpush1.bf16.msra.mxu0 %v2676
        %3402 = vmatprep.subr.bf16.mxu0 %v2682
        %3403 = vmatpush1.bf16.msra.mxu0 %v2681
        %3404 = vmatprep.subr.bf16.mxu0 %v2687
        %3405 = vmatpush1.bf16.msra.mxu0 %v2686
        %3406 = vmatprep.mubr.bf16.mxu0 %v1495
        %3407 = vmatmul.mubr.bf16.gmra.mrb[0].mxu0 %v1493
        %v3408 = vpop.f32.mrb[0].mxu0
        %v3409 = vadd.f32 %v3368, %v3408
        %v3410 = vpop.f32.mrb[0].mxu0
        %v3411 = vadd.f32 %v3370, %v3410
        %v3412 = vpop.f32.mrb[0].mxu0
        %v3413 = vpop.f32.mrb[0].mxu0
        %3414 = vdwg.mxu0
        %3415 = vmatprep.subr.bf16.mxu0 %v2692
        %3416 = vmatpush1.bf16.msra.mxu0 %v2691
        %3417 = vmatprep.subr.bf16.mxu0 %v2697
        %3418 = vmatpush1.bf16.msra.mxu0 %v2696
        %3419 = vmatprep.subr.bf16.mxu0 %v2702
        %3420 = vmatpush1.bf16.msra.mxu0 %v2701
        %3421 = vmatprep.subr.bf16.mxu0 %v2707
        %3422 = vmatpush1.bf16.msra.mxu0 %v2706
        %3423 = vmatprep.subr.bf16.mxu0 %v2712
        %3424 = vmatpush1.bf16.msra.mxu0 %v2711
        %3425 = vmatprep.subr.bf16.mxu0 %v2717
        %3426 = vmatpush1.bf16.msra.mxu0 %v2716
        %3427 = vmatprep.subr.bf16.mxu0 %v2722
        %3428 = vmatpush1.bf16.msra.mxu0 %v2721
        %3429 = vmatprep.subr.bf16.mxu0 %v2727
        %3430 = vmatpush1.bf16.msra.mxu0 %v2726
        %3431 = vmatprep.subr.bf16.mxu0 %v2732
        %3432 = vmatpush1.bf16.msra.mxu0 %v2731
        %3433 = vmatprep.subr.bf16.mxu0 %v2737
        %3434 = vmatpush1.bf16.msra.mxu0 %v2736
        %3435 = vmatprep.subr.bf16.mxu0 %v2742
        %3436 = vmatpush1.bf16.msra.mxu0 %v2741
        %3437 = vmatprep.subr.bf16.mxu0 %v2747
        %3438 = vmatpush1.bf16.msra.mxu0 %v2746
        %3439 = vmatprep.subr.bf16.mxu0 %v2752
        %3440 = vmatpush1.bf16.msra.mxu0 %v2751
        %3441 = vmatprep.subr.bf16.mxu0 %v2757
        %3442 = vmatpush1.bf16.msra.mxu0 %v2756
        %3443 = vmatprep.subr.bf16.mxu0 %v2762
        %3444 = vmatpush1.bf16.msra.mxu0 %v2761
        %3445 = vmatprep.subr.bf16.mxu0 %v2767
        %3446 = vmatpush1.bf16.msra.mxu0 %v2766
        %3447 = vmatprep.mubr.bf16.mxu0 %v1492
        %3448 = vmatmul.mubr.bf16.gmra.mrb[0].mxu0 %v1478
        %v3449 = vpop.f32.mrb[0].mxu0
        %v3450 = vadd.f32 %v3409, %v3449
        %v3451 = vpop.f32.mrb[0].mxu0
        %v3452 = vadd.f32 %v3411, %v3451
        %v3453 = vpop.f32.mrb[0].mxu0
        %v3454 = vpop.f32.mrb[0].mxu0
        %3455 = vdwg.mxu0
        %3456 = vmatprep.subr.bf16.mxu0 %v2772
        %3457 = vmatpush1.bf16.msra.mxu0 %v2771
        %3458 = vmatprep.subr.bf16.mxu0 %v2777
        %3459 = vmatpush1.bf16.msra.mxu0 %v2776
        %3460 = vmatprep.subr.bf16.mxu0 %v2782
        %3461 = vmatpush1.bf16.msra.mxu0 %v2781
        %3462 = vmatprep.subr.bf16.mxu0 %v2787
        %3463 = vmatpush1.bf16.msra.mxu0 %v2786
        %3464 = vmatprep.subr.bf16.mxu0 %v2792
        %3465 = vmatpush1.bf16.msra.mxu0 %v2791
        %3466 = vmatprep.subr.bf16.mxu0 %v2797
        %3467 = vmatpush1.bf16.msra.mxu0 %v2796
        %3468 = vmatprep.subr.bf16.mxu0 %v2802
        %3469 = vmatpush1.bf16.msra.mxu0 %v2801
        %3470 = vmatprep.subr.bf16.mxu0 %v2807
        %3471 = vmatpush1.bf16.msra.mxu0 %v2806
        %3472 = vmatprep.subr.bf16.mxu0 %v2812
        %3473 = vmatpush1.bf16.msra.mxu0 %v2811
        %3474 = vmatprep.subr.bf16.mxu0 %v2817
        %3475 = vmatpush1.bf16.msra.mxu0 %v2816
        %3476 = vmatprep.subr.bf16.mxu0 %v2822
        %3477 = vmatpush1.bf16.msra.mxu0 %v2821
        %3478 = vmatprep.subr.bf16.mxu0 %v2827
        %3479 = vmatpush1.bf16.msra.mxu0 %v2826
        %3480 = vmatprep.subr.bf16.mxu0 %v2832
        %3481 = vmatpush1.bf16.msra.mxu0 %v2831
        %3482 = vmatprep.subr.bf16.mxu0 %v2837
        %3483 = vmatpush1.bf16.msra.mxu0 %v2836
        %3484 = vmatprep.subr.bf16.mxu0 %v2842
        %3485 = vmatpush1.bf16.msra.mxu0 %v2841
        %3486 = vmatprep.subr.bf16.mxu0 %v2847
        %3487 = vmatpush1.bf16.msra.mxu0 %v2846
        %3488 = vmatprep.mubr.bf16.mxu0 %v1496
        %3489 = vmatmul.mubr.bf16.gmra.mrb[0].mxu0 %v1494
        %v3490 = vpop.f32.mrb[0].mxu0
        %v3491 = vadd.f32 %v3450, %v3490
        %v3492 = vpop.f32.mrb[0].mxu0
        %v3493 = vadd.f32 %v3452, %v3492
        %v3494 = vpop.f32.mrb[0].mxu0
        %v3495 = vpop.f32.mrb[0].mxu0
        %3496 = vdwg.mxu0
        %3497 = vmatprep.subr.bf16.mxu0 0
        %3498 = vmatpush1.bf16.msra.mxu0 %v2533
        %3499 = vmatprep.subr.bf16.mxu0 0
        %3500 = vmatpush1.bf16.msra.mxu0 %v2538
        %3501 = vmatprep.subr.bf16.mxu0 0
        %3502 = vmatpush1.bf16.msra.mxu0 %v2543
        %3503 = vmatprep.subr.bf16.mxu0 0
        %3504 = vmatpush1.bf16.msra.mxu0 %v2548
        %3505 = vmatprep.subr.bf16.mxu0 0
        %3506 = vmatpush1.bf16.msra.mxu0 %v2553
        %3507 = vmatprep.subr.bf16.mxu0 0
        %3508 = vmatpush1.bf16.msra.mxu0 %v2558
        %3509 = vmatprep.subr.bf16.mxu0 0
        %3510 = vmatpush1.bf16.msra.mxu0 %v2563
        %3511 = vmatprep.subr.bf16.mxu0 0
        %3512 = vmatpush1.bf16.msra.mxu0 %v2568
        %3513 = vmatprep.subr.bf16.mxu0 0
        %3514 = vmatpush1.bf16.msra.mxu0 %v2573
        %3515 = vmatprep.subr.bf16.mxu0 0
        %3516 = vmatpush1.bf16.msra.mxu0 %v2578
        %3517 = vmatprep.subr.bf16.mxu0 0
        %3518 = vmatpush1.bf16.msra.mxu0 %v2583
        %3519 = vmatprep.subr.bf16.mxu0 0
        %3520 = vmatpush1.bf16.msra.mxu0 %v2588
        %3521 = vmatprep.subr.bf16.mxu0 0
        %3522 = vmatpush1.bf16.msra.mxu0 %v2593
        %3523 = vmatprep.subr.bf16.mxu0 0
        %3524 = vmatpush1.bf16.msra.mxu0 %v2598
        %3525 = vmatprep.subr.bf16.mxu0 0
        %3526 = vmatpush1.bf16.msra.mxu0 %v2603
        %3527 = vmatprep.subr.bf16.mxu0 0
        %3528 = vmatpush1.bf16.msra.mxu0 %v2608
        %3529 = vmatprep.mubr.bf16.mxu0 %v1485
        %3530 = vmatmul.mubr.bf16.gmra.mrb[0].mxu0 %v1471
        %v3531 = vpop.f32.mrb[0].mxu0
        %v3532 = vadd.f32 0.0, %v3531
        %v3533 = vpop.f32.mrb[0].mxu0
        %v3534 = vpop.f32.mrb[0].mxu0
        %v3535 = vpop.f32.mrb[0].mxu0
        %3536 = vdwg.mxu0
        %3537 = vmatprep.subr.bf16.mxu0 0
        %3538 = vmatpush1.bf16.msra.mxu0 %v2613
        %3539 = vmatprep.subr.bf16.mxu0 0
        %3540 = vmatpush1.bf16.msra.mxu0 %v2618
        %3541 = vmatprep.subr.bf16.mxu0 0
        %3542 = vmatpush1.bf16.msra.mxu0 %v2623
        %3543 = vmatprep.subr.bf16.mxu0 0
        %3544 = vmatpush1.bf16.msra.mxu0 %v2628
        %3545 = vmatprep.subr.bf16.mxu0 0
        %3546 = vmatpush1.bf16.msra.mxu0 %v2633
        %3547 = vmatprep.subr.bf16.mxu0 0
        %3548 = vmatpush1.bf16.msra.mxu0 %v2638
        %3549 = vmatprep.subr.bf16.mxu0 0
        %3550 = vmatpush1.bf16.msra.mxu0 %v2643
        %3551 = vmatprep.subr.bf16.mxu0 0
        %3552 = vmatpush1.bf16.msra.mxu0 %v2648
        %3553 = vmatprep.subr.bf16.mxu0 0
        %3554 = vmatpush1.bf16.msra.mxu0 %v2653
        %3555 = vmatprep.subr.bf16.mxu0 0
        %3556 = vmatpush1.bf16.msra.mxu0 %v2658
        %3557 = vmatprep.subr.bf16.mxu0 0
        %3558 = vmatpush1.bf16.msra.mxu0 %v2663
        %3559 = vmatprep.subr.bf16.mxu0 0
        %3560 = vmatpush1.bf16.msra.mxu0 %v2668
        %3561 = vmatprep.subr.bf16.mxu0 0
        %3562 = vmatpush1.bf16.msra.mxu0 %v2673
        %3563 = vmatprep.subr.bf16.mxu0 0
        %3564 = vmatpush1.bf16.msra.mxu0 %v2678
        %3565 = vmatprep.subr.bf16.mxu0 0
        %3566 = vmatpush1.bf16.msra.mxu0 %v2683
        %3567 = vmatprep.subr.bf16.mxu0 0
        %3568 = vmatpush1.bf16.msra.mxu0 %v2688
        %3569 = vmatprep.mubr.bf16.mxu0 %v1495
        %3570 = vmatmul.mubr.bf16.gmra.mrb[0].mxu0 %v1493
        %v3571 = vpop.f32.mrb[0].mxu0
        %v3572 = vadd.f32 %v3532, %v3571
        %v3573 = vpop.f32.mrb[0].mxu0
        %v3574 = vpop.f32.mrb[0].mxu0
        %v3575 = vpop.f32.mrb[0].mxu0
        %3576 = vdwg.mxu0
        %3577 = vmatprep.subr.bf16.mxu0 0
        %3578 = vmatpush1.bf16.msra.mxu0 %v2693
        %3579 = vmatprep.subr.bf16.mxu0 0
        %3580 = vmatpush1.bf16.msra.mxu0 %v2698
        %3581 = vmatprep.subr.bf16.mxu0 0
        %3582 = vmatpush1.bf16.msra.mxu0 %v2703
        %3583 = vmatprep.subr.bf16.mxu0 0
        %3584 = vmatpush1.bf16.msra.mxu0 %v2708
        %3585 = vmatprep.subr.bf16.mxu0 0
        %3586 = vmatpush1.bf16.msra.mxu0 %v2713
        %3587 = vmatprep.subr.bf16.mxu0 0
        %3588 = vmatpush1.bf16.msra.mxu0 %v2718
        %3589 = vmatprep.subr.bf16.mxu0 0
        %3590 = vmatpush1.bf16.msra.mxu0 %v2723
        %3591 = vmatprep.subr.bf16.mxu0 0
        %3592 = vmatpush1.bf16.msra.mxu0 %v2728
        %3593 = vmatprep.subr.bf16.mxu0 0
        %3594 = vmatpush1.bf16.msra.mxu0 %v2733
        %3595 = vmatprep.subr.bf16.mxu0 0
        %3596 = vmatpush1.bf16.msra.mxu0 %v2738
        %3597 = vmatprep.subr.bf16.mxu0 0
        %3598 = vmatpush1.bf16.msra.mxu0 %v2743
        %3599 = vmatprep.subr.bf16.mxu0 0
        %3600 = vmatpush1.bf16.msra.mxu0 %v2748
        %3601 = vmatprep.subr.bf16.mxu0 0
        %3602 = vmatpush1.bf16.msra.mxu0 %v2753
        %3603 = vmatprep.subr.bf16.mxu0 0
        %3604 = vmatpush1.bf16.msra.mxu0 %v2758
        %3605 = vmatprep.subr.bf16.mxu0 0
        %3606 = vmatpush1.bf16.msra.mxu0 %v2763
        %3607 = vmatprep.subr.bf16.mxu0 0
        %3608 = vmatpush1.bf16.msra.mxu0 %v2768
        %3609 = vmatprep.mubr.bf16.mxu0 %v1492
        %3610 = vmatmul.mubr.bf16.gmra.mrb[0].mxu0 %v1478
        %v3611 = vpop.f32.mrb[0].mxu0
        %v3612 = vadd.f32 %v3572, %v3611
        %v3613 = vpop.f32.mrb[0].mxu0
        %v3614 = vpop.f32.mrb[0].mxu0
        %v3615 = vpop.f32.mrb[0].mxu0
        %3616 = vdwg.mxu0
        %3617 = vmatprep.subr.bf16.mxu0 0
        %3618 = vmatpush1.bf16.msra.mxu0 %v2773
        %3619 = vmatprep.subr.bf16.mxu0 0
        %3620 = vmatpush1.bf16.msra.mxu0 %v2778
        %3621 = vmatprep.subr.bf16.mxu0 0
        %3622 = vmatpush1.bf16.msra.mxu0 %v2783
        %3623 = vmatprep.subr.bf16.mxu0 0
        %3624 = vmatpush1.bf16.msra.mxu0 %v2788
        %3625 = vmatprep.subr.bf16.mxu0 0
        %3626 = vmatpush1.bf16.msra.mxu0 %v2793
        %3627 = vmatprep.subr.bf16.mxu0 0
        %3628 = vmatpush1.bf16.msra.mxu0 %v2798
        %3629 = vmatprep.subr.bf16.mxu0 0
        %3630 = vmatpush1.bf16.msra.mxu0 %v2803
        %3631 = vmatprep.subr.bf16.mxu0 0
        %3632 = vmatpush1.bf16.msra.mxu0 %v2808
        %3633 = vmatprep.subr.bf16.mxu0 0
        %3634 = vmatpush1.bf16.msra.mxu0 %v2813
        %3635 = vmatprep.subr.bf16.mxu0 0
        %3636 = vmatpush1.bf16.msra.mxu0 %v2818
        %3637 = vmatprep.subr.bf16.mxu0 0
        %3638 = vmatpush1.bf16.msra.mxu0 %v2823
        %3639 = vmatprep.subr.bf16.mxu0 0
        %3640 = vmatpush1.bf16.msra.mxu0 %v2828
        %3641 = vmatprep.subr.bf16.mxu0 0
        %3642 = vmatpush1.bf16.msra.mxu0 %v2833
        %3643 = vmatprep.subr.bf16.mxu0 0
        %3644 = vmatpush1.bf16.msra.mxu0 %v2838
        %3645 = vmatprep.subr.bf16.mxu0 0
        %3646 = vmatpush1.bf16.msra.mxu0 %v2843
        %3647 = vmatprep.subr.bf16.mxu0 0
        %3648 = vmatpush1.bf16.msra.mxu0 %v2848
        %3649 = vmatprep.mubr.bf16.mxu0 %v1496
        %3650 = vmatmul.mubr.bf16.gmra.mrb[0].mxu0 %v1494
        %v3651 = vpop.f32.mrb[0].mxu0
        %v3652 = vadd.f32 %v3612, %v3651
        %v3653 = vpop.f32.mrb[0].mxu0
        %v3654 = vpop.f32.mrb[0].mxu0
        %v3655 = vpop.f32.mrb[0].mxu0
        %3656 = vdwg.mxu0
        %v3662 = vcombine.low %v3327, %v3329
        %v3663 = vcombine.low %v3491, %v3493
        %v3665 = vunpack.c.l.s4 1983009808
        %v3666 = vunpack.c.0.s8 %v3665
        %v3667 = vlaneseq
        %v3668 = vshrl.u32 %v3667, 7
        %v3669 = vsub.s32 %v3666, %v3668
        %v3670 = vrot.slane %v3662, %v3669
        %v3672 = vunpack.c.l.s4 1983009808
        %v3673 = vunpack.c.0.s8 %v3672
        %v3674 = vlaneseq
        %v3675 = vshrl.u32 %v3674, 7
        %v3676 = vsub.s32 %v3673, %v3675
        %v3677 = vrot.slane %v3663, %v3676
        %v3678 = vcombine.low %v3670, %v3677
        %v3680 = vunpack.c.l.s4 1983009808
        %v3681 = vunpack.c.0.s8 %v3680
        %v3682 = vlaneseq
        %v3683 = vshrl.u32 %v3682, 7
        %v3684 = vsub.s32 %v3681, %v3683
        %v3685 = vrot.slane %v3652, %v3684
        %v3688 = vadd.f32 %v1060, %v3678
        %v3689 = vadd.f32 %v1061, %v3685
        %3690 = vst [vmem:[#allocation2] sm:$0xff] %v3688
        %3691 = vst [vmem:[#allocation2 + $0x8] sm:$0x3] %v3689
        // Predicated region
        $region63: #{lenet5_forward.12} parent=53 // pred_check
          %p3692 = pneg %p1054
        $region64: #{lenet5_forward.12} parent=53 // pred_check_branch
          %3694 = sbr.rel (%p3692) target = $region66
        $region65: #{lenet5_forward.12} parent=53 // pred_region
          %v3695 = vld [vmem:[#allocation2] sm:$0xff]
          %v3696 = vld [vmem:[#allocation2 + $0x8] sm:$0x3]
          %v3697 = vld [vmem:[%s1042] sm:$0x1f]
          %v3699 = vlaneseq
          %v3700 = vshrl.u32 %v3699, 7
          %v3701 = vsub.s32 0, %v3700
          %v3702 = vrot.slane %v3697, %v3701
          %v3703 = vlaneseq
          %v3704 = vshrl.u32 %v3703, 7
          %v3705 = vsub.s32 1, %v3704
          %v3706 = vrot.slane %v3697, %v3705
          %v3707 = vlaneseq
          %v3708 = vshrl.u32 %v3707, 7
          %v3709 = vsub.s32 2, %v3708
          %v3710 = vrot.slane %v3697, %v3709
          %v3711 = vlaneseq
          %v3712 = vshrl.u32 %v3711, 7
          %v3713 = vsub.s32 3, %v3712
          %v3714 = vrot.slane %v3697, %v3713
          %v3715 = vlaneseq
          %v3716 = vshrl.u32 %v3715, 7
          %v3717 = vsub.s32 4, %v3716
          %v3718 = vrot.slane %v3697, %v3717
          %v3719 = vcombine.low %v3702, %v3706
          %v3720 = vcombine.low %v3710, %v3714
          %v3722 = vunpack.c.l.s4 1983009808
          %v3723 = vunpack.c.0.s8 %v3722
          %v3724 = vlaneseq
          %v3725 = vshrl.u32 %v3724, 7
          %v3726 = vsub.s32 %v3723, %v3725
          %v3727 = vrot.slane %v3719, %v3726
          %v3729 = vunpack.c.l.s4 1983009808
          %v3730 = vunpack.c.0.s8 %v3729
          %v3731 = vlaneseq
          %v3732 = vshrl.u32 %v3731, 7
          %v3733 = vsub.s32 %v3730, %v3732
          %v3734 = vrot.slane %v3720, %v3733
          %v3735 = vcombine.low %v3727, %v3734
          %v3737 = vunpack.c.l.s4 1983009808
          %v3738 = vunpack.c.0.s8 %v3737
          %v3739 = vlaneseq
          %v3740 = vshrl.u32 %v3739, 7
          %v3741 = vsub.s32 %v3738, %v3740
          %v3742 = vrot.slane %v3718, %v3741
          %v3745 = vadd.f32 %v3695, %v3735
          %v3746 = vadd.f32 %v3696, %v3742
          %v3747 = vmax.f32 %v3745, 0.0
          %v3748 = vmax.f32 %v3746, 0.0
          %v3751 = vcombine.high %v3747, %v3747
          %v3753 = vunpack.c.l.s4 1983009808
          %v3754 = vunpack.c.0.s8 %v3753
          %v3755 = vlaneseq
          %v3756 = vshrl.u32 %v3755, 7
          %v3757 = vsub.s32 %v3754, %v3756
          %v3758 = vrot.slane %v3747, %v3757
          %v3760 = vunpack.c.l.s4 1983009808
          %v3761 = vunpack.c.0.s8 %v3760
          %v3762 = vlaneseq
          %v3763 = vshrl.u32 %v3762, 7
          %v3764 = vsub.s32 %v3761, %v3763
          %v3765 = vrot.slane %v3751, %v3764
          %v3766 = vcombine.high %v3758, %v3758
          %v3767 = vcombine.high %v3765, %v3765
          %v3769 = vunpack.c.l.s4 1983009808
          %v3770 = vunpack.c.0.s8 %v3769
          %v3771 = vlaneseq
          %v3772 = vshrl.u32 %v3771, 7
          %v3773 = vsub.s32 %v3770, %v3772
          %v3774 = vrot.slane %v3748, %v3773
          %v3780 = vpack.c.bf16 %v3758, %v3758
          %v3781 = vpack.c.bf16 %v3766, %v3766
          %v3782 = vpack.c.bf16 %v3765, %v3765
          %v3783 = vpack.c.bf16 %v3767, %v3767
          %v3784 = vpack.c.bf16 %v3774, %v3774
          %v3790 = vcombine.low %v3780, %v3781
          %v3791 = vcombine.low %v3782, %v3783
          %v3793 = vunpack.c.l.s4 1966171168
          %v3794 = vunpack.c.0.s8 %v3793
          %v3795 = vlaneseq
          %v3796 = vshrl.u32 %v3795, 7
          %v3797 = vsub.s32 %v3794, %v3796
          %v3798 = vrot.slane %v3790, %v3797
          %v3800 = vunpack.c.l.s4 1966171168
          %v3801 = vunpack.c.0.s8 %v3800
          %v3802 = vlaneseq
          %v3803 = vshrl.u32 %v3802, 7
          %v3804 = vsub.s32 %v3801, %v3803
          %v3805 = vrot.slane %v3791, %v3804
          %v3807 = vunpack.c.l.s4 1966171168
          %v3808 = vunpack.c.0.s8 %v3807
          %v3809 = vlaneseq
          %v3810 = vshrl.u32 %v3809, 7
          %v3811 = vsub.s32 %v3808, %v3810
          %v3812 = vrot.slane %v3784, %v3811
          %v3813 = vcombine.low %v3798, %v3805
          %v3815 = vunpack.c.l.s4 1966171168
          %v3816 = vunpack.c.0.s8 %v3815
          %v3817 = vlaneseq
          %v3818 = vshrl.u32 %v3817, 7
          %v3819 = vsub.s32 %v3816, %v3818
          %v3820 = vrot.slane %v3813, %v3819
          %v3822 = vunpack.c.l.s4 1966171168
          %v3823 = vunpack.c.0.s8 %v3822
          %v3824 = vlaneseq
          %v3825 = vshrl.u32 %v3824, 7
          %v3826 = vsub.s32 %v3823, %v3825
          %v3827 = vrot.slane %v3812, %v3826
          %v3828 = vcombine.low %v3820, %v3827
          %3830 = vst [vmem:[%s1051] sm:$0x1f] %v3828
        $region66: #{lenet5_forward.12} parent=53 // pred_fallthru
          _
        %s3831 = smul.u32 5, %s20
        %p3832 = scmp.lt.s32.totalorder %s19, 0
        %s3833 = scalar_select %p3832, %s19, 0
        %p3834 = scmp.lt.s32.totalorder %s3831, 24
        %s3835 = scalar_select %p3834, %s3831, 24
        %s3836 = smul.addr %s3833, 25
        %s3837 = sadd.s32 %s3835, %s3836
        %s3838 = scalar_lea.vmem %s3, %s3837
        // Predicated region
        $region67: #{lenet5_forward.12} parent=53 // pred_check
          %p3839 = pneg %p135
        $region68: #{lenet5_forward.12} parent=53 // pred_check_branch
          %3841 = sbr.rel (%p3839) target = $region70
        $region69: #{lenet5_forward.12} parent=53 // pred_region
          %s3842 = smul.u32 5, %s20
        $region70: #{lenet5_forward.12} parent=53 // pred_fallthru
          _
      $region54: #{lenet5_forward.12} parent=5 // pred_fallthru
        _
      %p3843 = scmp.le.s32.totalorder 2, %s9
      // Predicated region
      $region71: #{lenet5_forward.12} parent=5 // pred_check
        %p3844 = pneg %p3843
      $region72: #{lenet5_forward.12} parent=5 // pred_check_branch
        %3846 = sbr.rel (%p3844) target = $region74
      $region73: #{lenet5_forward.12} parent=5 // pred_region
        %s3847 = ssub.s32 %s9, 2
        // Predicated region
        $region75: #{lenet5_forward.12} parent=73 // pred_check
          %p3848 = pneg %p141
        $region76: #{lenet5_forward.12} parent=73 // pred_check_branch
          %3850 = sbr.rel (%p3848) target = $region78
        $region77: #{lenet5_forward.12} parent=73 // pred_region
          %s3851 = smul.u32 5, %s23
          %p3852 = scmp.lt.s32.totalorder %s22, 0
          %s3853 = scalar_select %p3852, %s22, 0
          %p3854 = scmp.lt.s32.totalorder %s3851, 24
          %s3855 = scalar_select %p3854, %s3851, 24
          %s3856 = smul.addr %s3853, 25
          %s3857 = sadd.s32 %s3855, %s3856
          %s3858 = scalar_lea.vmem %s3, %s3857
        $region78: #{lenet5_forward.12} parent=73 // pred_fallthru
          _
      $region74: #{lenet5_forward.12} parent=5 // pred_fallthru
        _
    $region6: #{lenet5_forward.12} parent=1 // loop_footer
      %s13 = sadd.s32 1, %s9
    $region7: #{lenet5_forward.12} parent=1 // loop_footer_branch
      %8 = sbr.rel target = $region3
    $region8: #{lenet5_forward.12} parent=1 // loop_exit
      _

</llo_original>
